<compile_context>
chip_gen: v7x
topology: tpu7x:2x2x1
jax: 0.10.0
libtpu: 0.0.40
codegen_flags: <defaults>
</compile_context>

<pallas_src>
import functools
import numpy as np
import jax
import jax.numpy as jnp
from jax.experimental import pallas as pl
from jax.experimental.pallas import tpu as pltpu


# ----------------------------------------------------------------------------
# static numpy helpers (replicate the PyTorch reference exactly)
# ----------------------------------------------------------------------------
def window_partition_np(x, ws):
    B, H, W, C = x.shape
    x = x.reshape(B, H // ws, ws, W // ws, ws, C)
    return x.transpose(0, 1, 3, 2, 4, 5).reshape(-1, ws, ws, C)


def create_attn_mask_np(H, W, window_size, shift_size):
    """Replicates SwinTransformerLayer.create_mask, including the reference's
    tuple index `(0, -window_size)` on the h axis (advanced indexing)."""
    Hp = int(np.ceil(H / window_size)) * window_size
    Wp = int(np.ceil(W / window_size)) * window_size
    img_mask = np.zeros((1, Hp, Wp, 1), dtype=np.float32)
    h_slices = ([0, -window_size],                      # tuple index in the reference
                slice(-window_size, -shift_size),
                slice(-shift_size, None))
    w_slices = (slice(0, -window_size),
                slice(-window_size, -shift_size),
                slice(-shift_size, None))
    cnt = 0
    for h in h_slices:
        for w in w_slices:
            img_mask[:, h, w, :] = cnt
            cnt += 1
    mask_windows = window_partition_np(img_mask, window_size)
    mask_windows = mask_windows.reshape(-1, window_size * window_size)
    attn_mask = mask_windows[:, None, :] - mask_windows[:, :, None]
    attn_mask = np.where(attn_mask != 0, -100.0, 0.0).astype(np.float32)
    return attn_mask                                    # (nW, N, N)


def relative_position_index_np(ws):
    coords = np.stack(np.meshgrid(np.arange(ws), np.arange(ws), indexing="ij"))
    coords_flatten = coords.reshape(2, -1)
    rel = coords_flatten[:, :, None] - coords_flatten[:, None, :]
    rel = rel.transpose(1, 2, 0).astype(np.int64)
    rel[:, :, 0] += ws - 1
    rel[:, :, 1] += ws - 1
    rel[:, :, 0] *= 2 * ws - 1
    return rel.sum(-1)                                  # (N, N)


def module_to_window_perm(ws, shift):
    """Map module token index t (t = x1*ws + y1, the module's (b,c,x1,y1) order)
    to the shifted-window token index i (i = row*ws + col with row=y1, col=x1
    after the cyclic shift).  Because LayerNorm/MLP/residuals are per-token and
    attention is permutation-equivariant, the reference's roll + window_partition
    + window_reverse + roll-back sequence is exactly equivalent to plain
    attention in module order with the bias/mask permuted by this map.
    Valid because the whole token grid is a single window."""
    N = ws * ws
    w2m = np.empty(N, dtype=np.int64)
    for i in range(N):
        row, col = i // ws, i % ws                      # window-internal position
        y = (row + shift) % ws                          # original spatial row (=y1)
        x = (col + shift) % ws                          # original spatial col (=x1)
        w2m[i] = x * ws + y                             # module token index (x1-major)
    m2w = np.empty_like(w2m)
    m2w[w2m] = np.arange(N)
    return m2w


# ----------------------------------------------------------------------------
# in-kernel math helpers (all f32)
# ----------------------------------------------------------------------------
def _erf(x):
    # Abramowitz & Stegun 7.1.26 rational approximation, |err| < 1.5e-7.
    # TODO(synk): switch to lax.erf if a native Mosaic erf lowering is exposed.
    a1, a2, a3, a4, a5 = 0.254829592, -0.284496736, 1.421413741, -1.453152027, 1.061405429
    p = 0.3275911
    s = jnp.where(x >= 0, 1.0, -1.0)
    ax = jnp.abs(x)
    t = 1.0 / (1.0 + p * ax)
    poly = ((((a5 * t + a4) * t + a3) * t + a2) * t + a1) * t
    return s * (1.0 - poly * jnp.exp(-ax * ax))


def _gelu_exact(x):
    return 0.5 * x * (1.0 + _erf(x * np.float32(1.0 / np.sqrt(2.0))))


def _layernorm(x, g, b, eps=1e-5):
    mu = jnp.mean(x, axis=-1, keepdims=True)
    var = jnp.mean((x - mu) ** 2, axis=-1, keepdims=True)
    return (x - mu) * jax.lax.rsqrt(var + eps) * g + b


# ----------------------------------------------------------------------------
# The single fused kernel: projection + pos-embedding + all Swin layers
# (one grid step per batch element; everything stays resident in VMEM)
# ----------------------------------------------------------------------------
def _swin_vit_kernel(patches_ref, wp_ref, pos_ref, bias_ref,
                     ln1g_ref, ln1b_ref, wqkv_ref, wpr_ref, bpr_ref,
                     ln2g_ref, ln2b_ref, w1_ref, b1_ref, w2_ref, b2_ref,
                     out_ref, *, num_layers, num_heads):
    H = num_heads

    # Patch projection + positional embedding (nn.Dropout(0.1) = identity in eval).
    x = jnp.dot(patches_ref[0].astype(jnp.bfloat16), wp_ref[...],
                preferred_element_type=jnp.float32) + pos_ref[...]          # (T, C)

    for li in range(num_layers):                       # static unroll over layers
        # ---- W-MSA / SW-MSA branch ------------------------------------------
        xn = _layernorm(x, ln1g_ref[li], ln1b_ref[li])
        xb = jnp.broadcast_to(xn.astype(jnp.bfloat16), (3 * H,) + xn.shape)  # (3H,T,C)
        wqkv = wqkv_ref[li].astype(jnp.bfloat16)                             # (3H,C,hd)
        qkv = jnp.einsum("snc,scd->snd", xb, wqkv,
                         preferred_element_type=jnp.float32)                 # (3H,T,hd)
        q = qkv[0:H].astype(jnp.bfloat16)          # attention scale folded into wq
        k = qkv[H:2 * H].astype(jnp.bfloat16)
        v = qkv[2 * H:3 * H].astype(jnp.bfloat16)

        s = jnp.einsum("hnd,hmd->hnm", q, k,
                       preferred_element_type=jnp.float32)                   # (H,T,T)
        s = s + bias_ref[li]                # rel-pos bias (+ shift mask), pre-permuted
        s = s - jnp.max(s, axis=-1, keepdims=True)
        p = jnp.exp(s)
        p = p * pl.reciprocal(jnp.sum(p, axis=-1, keepdims=True), approx=True)

        o = jnp.einsum("hnm,hmd->hnd", p.astype(jnp.bfloat16), v,
                       preferred_element_type=jnp.float32)                   # (H,T,hd)
        wpr = wpr_ref[li].astype(jnp.bfloat16)                               # (H,hd,C)
        proj = jnp.einsum("hnd,hdc->hnc", o.astype(jnp.bfloat16), wpr,
                          preferred_element_type=jnp.float32)                # (H,T,C)
        x = x + jnp.sum(proj, axis=0) + bpr_ref[li]       # residual 1 (DropPath = id)

        # ---- MLP branch -------------------------------------------------------
        xn2 = _layernorm(x, ln2g_ref[li], ln2b_ref[li])
        hid = jnp.dot(xn2.astype(jnp.bfloat16), w1_ref[li],
                      preferred_element_type=jnp.float32) + b1_ref[li]       # (T,4C)
        hid = _gelu_exact(hid)                            # lane-dense (4C = 128)
        y = jnp.dot(hid.astype(jnp.bfloat16), w2_ref[li],
                    preferred_element_type=jnp.float32) + b2_ref[li]         # (T,C)
        x = x + y                                         # residual 2 (DropPath = id)

    out_ref[0] = x


# ----------------------------------------------------------------------------
# wrapper: patch rearrange -> fused kernel -> final layout transpose
# ----------------------------------------------------------------------------
def swin_vit_forward(x, packed, *, patch_dim, window_size, num_heads, block_num):
    B, Cin, Himg, Wimg = x.shape
    hh, ww = Himg // patch_dim, Wimg // patch_dim
    T = hh * ww
    K = Cin * patch_dim * patch_dim
    C = packed["pos"].shape[-1]
    N = window_size * window_size
    # Whole-net fusion folds the cyclic shift / window partition into the
    # precomputed bias permutation; this requires the token grid == one window.
    assert hh == window_size and ww == window_size, "fused kernel assumes one window"
    # TODO(synk): generalize to multi-window token grids (nW > 1) via a window grid axis.

    # rearrange 'b c (patch_x x) (patch_y y) -> b (x y) (patch_x patch_y c)'
    xr = x.reshape(B, Cin, patch_dim, hh, patch_dim, ww)
    xr = jnp.transpose(xr, (0, 3, 5, 2, 4, 1))
    patches = xr.reshape(B, T, K)

    L = block_num
    Hh = num_heads
    hd = C // num_heads
    Hd = packed["w1"].shape[-1]

    kernel = functools.partial(_swin_vit_kernel, num_layers=block_num,
                               num_heads=num_heads)
    out = pl.pallas_call(
        kernel,
        out_shape=jax.ShapeDtypeStruct((B, T, C), jnp.float32),
        grid=(B,),
        in_specs=[
            pl.BlockSpec((1, T, K), lambda i: (i, 0, 0)),             # patches
            pl.BlockSpec((K, C), lambda i: (0, 0)),                   # w_proj (bf16)
            pl.BlockSpec((T, C), lambda i: (0, 0)),                   # embedding + b_proj
            pl.BlockSpec((L, Hh, N, N), lambda i: (0, 0, 0, 0)),      # bias(+mask), permuted
            pl.BlockSpec((L, 1, C), lambda i: (0, 0, 0)),             # ln1 gamma
            pl.BlockSpec((L, 1, C), lambda i: (0, 0, 0)),             # ln1 beta
            pl.BlockSpec((L, 3 * Hh, C, hd), lambda i: (0, 0, 0, 0)), # wqkv head-major
            pl.BlockSpec((L, Hh, hd, C), lambda i: (0, 0, 0, 0)),     # wproj head-major
            pl.BlockSpec((L, 1, C), lambda i: (0, 0, 0)),             # bproj
            pl.BlockSpec((L, 1, C), lambda i: (0, 0, 0)),             # ln2 gamma
            pl.BlockSpec((L, 1, C), lambda i: (0, 0, 0)),             # ln2 beta
            pl.BlockSpec((L, C, Hd), lambda i: (0, 0, 0)),            # w1 (bf16)
            pl.BlockSpec((L, 1, Hd), lambda i: (0, 0, 0)),            # b1
            pl.BlockSpec((L, Hd, C), lambda i: (0, 0, 0)),            # w2 (bf16)
            pl.BlockSpec((L, 1, C), lambda i: (0, 0, 0)),             # b2
        ],
        out_specs=pl.BlockSpec((1, T, C), lambda i: (i, 0, 0)),
        compiler_params=pltpu.CompilerParams(dimension_semantics=("parallel",)),
    )(patches, packed["w_proj"], packed["pos"], packed["bias"],
      packed["ln1_g"], packed["ln1_b"], packed["wqkv"], packed["wproj"],
      packed["bproj"], packed["ln2_g"], packed["ln2_b"],
      packed["w1"], packed["b1"], packed["w2"], packed["b2"])

    # (B, T, C) -> (B, C, x1, y1); the only wrapper-side op after the kernel.
    return jnp.transpose(out, (0, 2, 1)).reshape(B, C, hh, ww)


# ----------------------------------------------------------------------------
# one-time host-side packing of kernel-ready operands
# ----------------------------------------------------------------------------
def pack_params(params, *, window_size, num_heads, block_num):
    w_proj = np.asarray(params["w_proj"], np.float32)
    C = w_proj.shape[1]
    hd = C // num_heads
    ws = window_size
    N = ws * ws
    scale = float(hd) ** -0.5

    mask = create_attn_mask_np(ws, ws, ws, ws // 2)[0]           # (N, N), nW == 1

    packed = {
        "w_proj": jnp.asarray(w_proj, jnp.bfloat16),
        "pos": jnp.asarray(np.asarray(params["embedding"], np.float32)
                           + np.asarray(params["b_proj"], np.float32)),
    }
    bias_l, ln1g, ln1b, wqkv_l, wproj_l, bproj_l = [], [], [], [], [], []
    ln2g, ln2b, w1_l, b1_l, w2_l, b2_l = [], [], [], [], [], []
    for li in range(block_num):
        lp = params["layers"][li]
        shift = 0 if li % 2 == 0 else ws // 2
        # relative-position bias in window order, plus shift mask for SW-MSA layers
        b_win = np.asarray(lp["rel_bias"], np.float32)           # (H, N, N)
        if shift > 0:
            b_win = b_win + mask[None, :, :]
        # fold shift + window-partition token ordering into a bias permutation
        perm = module_to_window_perm(ws, shift)
        bias_l.append(b_win[:, perm][:, :, perm])
        # head-major qkv weight with the attention scale folded into q
        w = np.asarray(lp["wqkv"], np.float32).reshape(C, 3, num_heads, hd).copy()
        w[:, 0] *= scale
        wqkv_l.append(np.transpose(w, (1, 2, 0, 3)).reshape(3 * num_heads, C, hd))
        # head-major output projection weight
        wproj_l.append(np.asarray(lp["wproj"], np.float32).reshape(num_heads, hd, C))
        ln1g.append(np.asarray(lp["ln1_g"], np.float32))
        ln1b.append(np.asarray(lp["ln1_b"], np.float32))
        bproj_l.append(np.asarray(lp["bproj"], np.float32))
        ln2g.append(np.asarray(lp["ln2_g"], np.float32))
        ln2b.append(np.asarray(lp["ln2_b"], np.float32))
        w1_l.append(np.asarray(lp["w1"], np.float32))
        b1_l.append(np.asarray(lp["b1"], np.float32))
        w2_l.append(np.asarray(lp["w2"], np.float32))
        b2_l.append(np.asarray(lp["b2"], np.float32))

    packed.update({
        "bias": jnp.asarray(np.stack(bias_l)),                   # (L, H, N, N) f32
        "ln1_g": jnp.asarray(np.stack(ln1g)),                    # (L, 1, C)
        "ln1_b": jnp.asarray(np.stack(ln1b)),
        "wqkv": jnp.asarray(np.stack(wqkv_l)),                   # (L, 3H, C, hd) f32
        "wproj": jnp.asarray(np.stack(wproj_l)),                 # (L, H, hd, C) f32
        "bproj": jnp.asarray(np.stack(bproj_l)),
        "ln2_g": jnp.asarray(np.stack(ln2g)),
        "ln2_b": jnp.asarray(np.stack(ln2b)),
        "w1": jnp.asarray(np.stack(w1_l), jnp.bfloat16),         # (L, C, 4C)
        "b1": jnp.asarray(np.stack(b1_l)),
        "w2": jnp.asarray(np.stack(w2_l), jnp.bfloat16),         # (L, 4C, C)
        "b2": jnp.asarray(np.stack(b2_l)),
    })
    return packed


# ----------------------------------------------------------------------------
# deterministic parameter initialization (logical / reference-shaped params)
# ----------------------------------------------------------------------------
def init_params(key, *, img_dim, in_channels, embedding_dim, head_num,
                block_num, patch_dim, window_size):
    h = img_dim // patch_dim
    T = h * h
    token_dim = in_channels * patch_dim ** 2
    C = embedding_dim
    N = window_size * window_size
    keys = iter(jax.random.split(key, 8 + block_num * 16))

    def nrm(shape, std=0.05):
        return jax.random.normal(next(keys), shape, jnp.float32) * std

    params = {
        "w_proj": nrm((token_dim, C)),
        "b_proj": nrm((1, C)),
        "embedding": jax.random.uniform(next(keys), (T, C), jnp.float32),
    }
    rel_idx = relative_position_index_np(window_size)
    layers = []
    for _ in range(block_num):
        table = nrm(((2 * window_size - 1) ** 2, head_num), std=0.02)
        rel_bias = jnp.transpose(
            table[rel_idx.reshape(-1)].reshape(N, N, head_num), (2, 0, 1))
        layers.append({
            "ln1_g": 1.0 + nrm((1, C), 0.02),
            "ln1_b": nrm((1, C), 0.02),
            "wqkv": nrm((C, 3 * C)),          # qkv_bias=False as in the reference
            "rel_bias": rel_bias,             # (head_num, N, N) in window order
            "wproj": nrm((C, C)),
            "bproj": nrm((1, C)),
            "ln2_g": 1.0 + nrm((1, C), 0.02),
            "ln2_b": nrm((1, C), 0.02),
            "w1": nrm((C, 4 * C)),
            "b1": nrm((1, 4 * C)),
            "w2": nrm((4 * C, C)),
            "b2": nrm((1, C)),
        })
    params["layers"] = layers
    return params


if __name__ == "__main__":
    IMG_DIM, IN_CH, EMB, HEADS, BLOCKS, PATCH = 16, 4, 32, 4, 2, 2
    WINDOW = 8                                       # SwinTransformerBlock default

    key = jax.random.PRNGKey(0)
    kp, kx = jax.random.split(key)
    params = init_params(kp, img_dim=IMG_DIM, in_channels=IN_CH,
                         embedding_dim=EMB, head_num=HEADS, block_num=BLOCKS,
                         patch_dim=PATCH, window_size=WINDOW)
    packed = pack_params(params, window_size=WINDOW, num_heads=HEADS,
                         block_num=BLOCKS)
    x = jax.random.normal(kx, (2, IN_CH, IMG_DIM, IMG_DIM), jnp.float32)

    fwd = jax.jit(functools.partial(swin_vit_forward, patch_dim=PATCH,
                                    window_size=WINDOW, num_heads=HEADS,
                                    block_num=BLOCKS))
    out = fwd(x, packed)
    jax.block_until_ready(out)
    assert out.shape == (2, EMB, IMG_DIM // PATCH, IMG_DIM // PATCH), out.shape
    assert bool(jnp.all(jnp.isfinite(out)))
    print("KERNEL_OK")
</pallas_src>

<mosaic_0001>
module attributes {stable_mosaic.version = 11 : i64} {
  func.func @_swin_vit_kernel(%arg0: i32, %arg1: memref<1x64x16xf32, #tpu.memory_space<vmem>>, %arg2: memref<16x32xbf16, #tpu.memory_space<vmem>>, %arg3: memref<64x32xf32, #tpu.memory_space<vmem>>, %arg4: memref<2x4x64x64xf32, #tpu.memory_space<vmem>>, %arg5: memref<2x1x32xf32, #tpu.memory_space<vmem>>, %arg6: memref<2x1x32xf32, #tpu.memory_space<vmem>>, %arg7: memref<2x12x32x8xf32, #tpu.memory_space<vmem>>, %arg8: memref<2x4x8x32xf32, #tpu.memory_space<vmem>>, %arg9: memref<2x1x32xf32, #tpu.memory_space<vmem>>, %arg10: memref<2x1x32xf32, #tpu.memory_space<vmem>>, %arg11: memref<2x1x32xf32, #tpu.memory_space<vmem>>, %arg12: memref<2x32x128xbf16, #tpu.memory_space<vmem>>, %arg13: memref<2x1x128xf32, #tpu.memory_space<vmem>>, %arg14: memref<2x128x32xbf16, #tpu.memory_space<vmem>>, %arg15: memref<2x1x32xf32, #tpu.memory_space<vmem>>, %arg16: memref<1x64x32xf32, #tpu.memory_space<vmem>>) attributes {dimension_semantics = [#tpu.dimension_semantics<parallel>], iteration_bounds = array<i64: 2>, scalar_prefetch = 0 : i64, scratch_operands = 0 : i64, tpu.core_type = #tpu.core_type<tc>, window_params = [{transform_indices = @transform_0, window_bounds = array<i64: 1, 64, 16>}, {pipeline_mode = #tpu.pipeline_mode<synchronous>, transform_indices = @transform_1, window_bounds = array<i64: 16, 32>}, {pipeline_mode = #tpu.pipeline_mode<synchronous>, transform_indices = @transform_2, window_bounds = array<i64: 64, 32>}, {pipeline_mode = #tpu.pipeline_mode<synchronous>, transform_indices = @transform_3, window_bounds = array<i64: 2, 4, 64, 64>}, {pipeline_mode = #tpu.pipeline_mode<synchronous>, transform_indices = @transform_4, window_bounds = array<i64: 2, 1, 32>}, {pipeline_mode = #tpu.pipeline_mode<synchronous>, transform_indices = @transform_5, window_bounds = array<i64: 2, 1, 32>}, {pipeline_mode = #tpu.pipeline_mode<synchronous>, transform_indices = @transform_6, window_bounds = array<i64: 2, 12, 32, 8>}, {pipeline_mode = #tpu.pipeline_mode<synchronous>, transform_indices = @transform_7, window_bounds = array<i64: 2, 4, 8, 32>}, {pipeline_mode = #tpu.pipeline_mode<synchronous>, transform_indices = @transform_8, window_bounds = array<i64: 2, 1, 32>}, {pipeline_mode = #tpu.pipeline_mode<synchronous>, transform_indices = @transform_9, window_bounds = array<i64: 2, 1, 32>}, {pipeline_mode = #tpu.pipeline_mode<synchronous>, transform_indices = @transform_10, window_bounds = array<i64: 2, 1, 32>}, {pipeline_mode = #tpu.pipeline_mode<synchronous>, transform_indices = @transform_11, window_bounds = array<i64: 2, 32, 128>}, {pipeline_mode = #tpu.pipeline_mode<synchronous>, transform_indices = @transform_12, window_bounds = array<i64: 2, 1, 128>}, {pipeline_mode = #tpu.pipeline_mode<synchronous>, transform_indices = @transform_13, window_bounds = array<i64: 2, 128, 32>}, {pipeline_mode = #tpu.pipeline_mode<synchronous>, transform_indices = @transform_14, window_bounds = array<i64: 2, 1, 32>}, {transform_indices = @transform_15, window_bounds = array<i64: 1, 64, 32>}]} {
    %c0 = arith.constant 0 : index
    %c0_0 = arith.constant 0 : index
    %c0_1 = arith.constant 0 : index
    %0 = vector.load %arg1[%c0, %c0_0, %c0_1] : memref<1x64x16xf32, #tpu.memory_space<vmem>>, vector<1x64x16xf32>
    %1 = vector.shape_cast %0 : vector<1x64x16xf32> to vector<64x16xf32>
    %2 = arith.truncf %1 : vector<64x16xf32> to vector<64x16xbf16>
    %c0_2 = arith.constant 0 : index
    %c0_3 = arith.constant 0 : index
    %3 = vector.load %arg2[%c0_2, %c0_3] : memref<16x32xbf16, #tpu.memory_space<vmem>>, vector<16x32xbf16>
    %cst = arith.constant dense<0.000000e+00> : vector<64x32xf32>
    %4 = tpu.matmul %2, %3, %cst {dimension_numbers = #tpu.dot_dimension_numbers<[1], [0], [0], [1], [0, 0, 1, 1], [], []>} : vector<64x16xbf16>, vector<16x32xbf16>, vector<64x32xf32> -> vector<64x32xf32>
    %c0_4 = arith.constant 0 : index
    %c0_5 = arith.constant 0 : index
    %5 = vector.load %arg3[%c0_4, %c0_5] : memref<64x32xf32, #tpu.memory_space<vmem>>, vector<64x32xf32>
    %6 = arith.addf %4, %5 : vector<64x32xf32>
    %c0_6 = arith.constant 0 : index
    %c0_7 = arith.constant 0 : index
    %c0_8 = arith.constant 0 : index
    %7 = vector.load %arg5[%c0_6, %c0_7, %c0_8] : memref<2x1x32xf32, #tpu.memory_space<vmem>>, vector<1x1x32xf32>
    %8 = vector.shape_cast %7 : vector<1x1x32xf32> to vector<1x32xf32>
    %c0_9 = arith.constant 0 : index
    %c0_10 = arith.constant 0 : index
    %c0_11 = arith.constant 0 : index
    %9 = vector.load %arg6[%c0_9, %c0_10, %c0_11] : memref<2x1x32xf32, #tpu.memory_space<vmem>>, vector<1x1x32xf32>
    %10 = vector.shape_cast %9 : vector<1x1x32xf32> to vector<1x32xf32>
    %cst_12 = arith.constant dense<0.000000e+00> : vector<64xf32>
    %11 = vector.multi_reduction <add>, %6, %cst_12 [1] : vector<64x32xf32> to vector<64xf32>
    %12 = vector.shape_cast %11 : vector<64xf32> to vector<64x1xf32>
    %cst_13 = arith.constant 3.200000e+01 : f32
    %13 = vector.broadcast %cst_13 : f32 to vector<64x1xf32>
    %14 = arith.divf %12, %13 : vector<64x1xf32>
    %15 = vector.broadcast %14 : vector<64x1xf32> to vector<64x32xf32>
    %16 = arith.subf %6, %15 : vector<64x32xf32>
    %17 = arith.mulf %16, %16 : vector<64x32xf32>
    %cst_14 = arith.constant dense<0.000000e+00> : vector<64xf32>
    %18 = vector.multi_reduction <add>, %17, %cst_14 [1] : vector<64x32xf32> to vector<64xf32>
    %19 = vector.shape_cast %18 : vector<64xf32> to vector<64x1xf32>
    %cst_15 = arith.constant 3.200000e+01 : f32
    %20 = vector.broadcast %cst_15 : f32 to vector<64x1xf32>
    %21 = arith.divf %19, %20 : vector<64x1xf32>
    %22 = vector.broadcast %14 : vector<64x1xf32> to vector<64x32xf32>
    %23 = arith.subf %6, %22 : vector<64x32xf32>
    %cst_16 = arith.constant 9.99999974E-6 : f32
    %24 = vector.broadcast %cst_16 : f32 to vector<64x1xf32>
    %25 = arith.addf %21, %24 : vector<64x1xf32>
    %26 = math.rsqrt %25 : vector<64x1xf32>
    %27 = vector.broadcast %26 : vector<64x1xf32> to vector<64x32xf32>
    %28 = arith.mulf %23, %27 : vector<64x32xf32>
    %29 = vector.broadcast %8 : vector<1x32xf32> to vector<64x32xf32>
    %30 = arith.mulf %28, %29 : vector<64x32xf32>
    %31 = vector.broadcast %10 : vector<1x32xf32> to vector<64x32xf32>
    %32 = arith.addf %30, %31 : vector<64x32xf32>
    %33 = arith.truncf %32 : vector<64x32xf32> to vector<64x32xbf16>
    %34 = vector.shape_cast %33 : vector<64x32xbf16> to vector<1x64x32xbf16>
    %35 = vector.broadcast %34 : vector<1x64x32xbf16> to vector<12x64x32xbf16>
    %c0_17 = arith.constant 0 : index
    %c0_18 = arith.constant 0 : index
    %c0_19 = arith.constant 0 : index
    %c0_20 = arith.constant 0 : index
    %36 = vector.load %arg7[%c0_17, %c0_18, %c0_19, %c0_20] : memref<2x12x32x8xf32, #tpu.memory_space<vmem>>, vector<1x12x32x8xf32>
    %37 = vector.shape_cast %36 : vector<1x12x32x8xf32> to vector<12x32x8xf32>
    %38 = arith.truncf %37 : vector<12x32x8xf32> to vector<12x32x8xbf16>
    "tpu.trace_start"() <{level = 10 : i32, message = "snc,scd->snd"}> : () -> ()
    %cst_21 = arith.constant dense<0.000000e+00> : vector<12x64x8xf32>
    %39 = tpu.matmul %35, %38, %cst_21 {dimension_numbers = #tpu.dot_dimension_numbers<[2], [1], [1], [2], [0, 0, 0, 1, 1, 2], [0], [0]>} : vector<12x64x32xbf16>, vector<12x32x8xbf16>, vector<12x64x8xf32> -> vector<12x64x8xf32>
    "tpu.trace_stop"() : () -> ()
    %40 = vector.extract_strided_slice %39 {offsets = [0, 0, 0], sizes = [4, 64, 8], strides = [1, 1, 1]} : vector<12x64x8xf32> to vector<4x64x8xf32>
    %41 = arith.truncf %40 : vector<4x64x8xf32> to vector<4x64x8xbf16>
    %42 = vector.extract_strided_slice %39 {offsets = [4, 0, 0], sizes = [4, 64, 8], strides = [1, 1, 1]} : vector<12x64x8xf32> to vector<4x64x8xf32>
    %43 = arith.truncf %42 : vector<4x64x8xf32> to vector<4x64x8xbf16>
    %44 = vector.extract_strided_slice %39 {offsets = [8, 0, 0], sizes = [4, 64, 8], strides = [1, 1, 1]} : vector<12x64x8xf32> to vector<4x64x8xf32>
    %45 = arith.truncf %44 : vector<4x64x8xf32> to vector<4x64x8xbf16>
    "tpu.trace_start"() <{level = 10 : i32, message = "hnd,hmd->hnm"}> : () -> ()
    %cst_22 = arith.constant dense<0.000000e+00> : vector<4x64x64xf32>
    %46 = tpu.matmul %41, %43, %cst_22 {dimension_numbers = #tpu.dot_dimension_numbers<[2], [2], [1], [1], [0, 0, 0, 1, 1, 1], [0], [0]>} : vector<4x64x8xbf16>, vector<4x64x8xbf16>, vector<4x64x64xf32> -> vector<4x64x64xf32>
    "tpu.trace_stop"() : () -> ()
    %c0_23 = arith.constant 0 : index
    %c0_24 = arith.constant 0 : index
    %c0_25 = arith.constant 0 : index
    %c0_26 = arith.constant 0 : index
    %47 = vector.load %arg4[%c0_23, %c0_24, %c0_25, %c0_26] : memref<2x4x64x64xf32, #tpu.memory_space<vmem>>, vector<1x4x64x64xf32>
    %48 = vector.shape_cast %47 : vector<1x4x64x64xf32> to vector<4x64x64xf32>
    %49 = arith.addf %46, %48 : vector<4x64x64xf32>
    %cst_27 = arith.constant dense<0xFF800000> : vector<4x64xf32>
    %50 = vector.multi_reduction <maximumf>, %49, %cst_27 [2] : vector<4x64x64xf32> to vector<4x64xf32>
    %51 = vector.shape_cast %50 : vector<4x64xf32> to vector<4x64x1xf32>
    %52 = vector.broadcast %51 : vector<4x64x1xf32> to vector<4x64x64xf32>
    %53 = arith.subf %49, %52 : vector<4x64x64xf32>
    %54 = math.exp %53 : vector<4x64x64xf32>
    %cst_28 = arith.constant dense<0.000000e+00> : vector<4x64xf32>
    %55 = vector.multi_reduction <add>, %54, %cst_28 [2] : vector<4x64x64xf32> to vector<4x64xf32>
    %56 = vector.shape_cast %55 : vector<4x64xf32> to vector<4x64x1xf32>
    %57 = tpu.reciprocal %56 {approx = true} : vector<4x64x1xf32> -> vector<4x64x1xf32>
    %58 = vector.broadcast %57 : vector<4x64x1xf32> to vector<4x64x64xf32>
    %59 = arith.mulf %54, %58 : vector<4x64x64xf32>
    %60 = arith.truncf %59 : vector<4x64x64xf32> to vector<4x64x64xbf16>
    "tpu.trace_start"() <{level = 10 : i32, message = "hnm,hmd->hnd"}> : () -> ()
    %cst_29 = arith.constant dense<0.000000e+00> : vector<4x64x8xf32>
    %61 = tpu.matmul %60, %45, %cst_29 {dimension_numbers = #tpu.dot_dimension_numbers<[2], [1], [1], [2], [0, 0, 0, 1, 1, 2], [0], [0]>} : vector<4x64x64xbf16>, vector<4x64x8xbf16>, vector<4x64x8xf32> -> vector<4x64x8xf32>
    "tpu.trace_stop"() : () -> ()
    %c0_30 = arith.constant 0 : index
    %c0_31 = arith.constant 0 : index
    %c0_32 = arith.constant 0 : index
    %c0_33 = arith.constant 0 : index
    %62 = vector.load %arg8[%c0_30, %c0_31, %c0_32, %c0_33] : memref<2x4x8x32xf32, #tpu.memory_space<vmem>>, vector<1x4x8x32xf32>
    %63 = vector.shape_cast %62 : vector<1x4x8x32xf32> to vector<4x8x32xf32>
    %64 = arith.truncf %63 : vector<4x8x32xf32> to vector<4x8x32xbf16>
    %65 = arith.truncf %61 : vector<4x64x8xf32> to vector<4x64x8xbf16>
    "tpu.trace_start"() <{level = 10 : i32, message = "hnd,hdc->hnc"}> : () -> ()
    %cst_34 = arith.constant dense<0.000000e+00> : vector<4x64x32xf32>
    %66 = tpu.matmul %65, %64, %cst_34 {dimension_numbers = #tpu.dot_dimension_numbers<[2], [1], [1], [2], [0, 0, 0, 1, 1, 2], [0], [0]>} : vector<4x64x8xbf16>, vector<4x8x32xbf16>, vector<4x64x32xf32> -> vector<4x64x32xf32>
    "tpu.trace_stop"() : () -> ()
    %cst_35 = arith.constant dense<0.000000e+00> : vector<64x32xf32>
    %67 = vector.multi_reduction <add>, %66, %cst_35 [0] : vector<4x64x32xf32> to vector<64x32xf32>
    %68 = arith.addf %6, %67 : vector<64x32xf32>
    %c0_36 = arith.constant 0 : index
    %c0_37 = arith.constant 0 : index
    %c0_38 = arith.constant 0 : index
    %69 = vector.load %arg9[%c0_36, %c0_37, %c0_38] : memref<2x1x32xf32, #tpu.memory_space<vmem>>, vector<1x1x32xf32>
    %70 = vector.shape_cast %69 : vector<1x1x32xf32> to vector<1x32xf32>
    %71 = vector.broadcast %70 : vector<1x32xf32> to vector<64x32xf32>
    %72 = arith.addf %68, %71 : vector<64x32xf32>
    %c0_39 = arith.constant 0 : index
    %c0_40 = arith.constant 0 : index
    %c0_41 = arith.constant 0 : index
    %73 = vector.load %arg10[%c0_39, %c0_40, %c0_41] : memref<2x1x32xf32, #tpu.memory_space<vmem>>, vector<1x1x32xf32>
    %74 = vector.shape_cast %73 : vector<1x1x32xf32> to vector<1x32xf32>
    %c0_42 = arith.constant 0 : index
    %c0_43 = arith.constant 0 : index
    %c0_44 = arith.constant 0 : index
    %75 = vector.load %arg11[%c0_42, %c0_43, %c0_44] : memref<2x1x32xf32, #tpu.memory_space<vmem>>, vector<1x1x32xf32>
    %76 = vector.shape_cast %75 : vector<1x1x32xf32> to vector<1x32xf32>
    %cst_45 = arith.constant dense<0.000000e+00> : vector<64xf32>
    %77 = vector.multi_reduction <add>, %72, %cst_45 [1] : vector<64x32xf32> to vector<64xf32>
    %78 = vector.shape_cast %77 : vector<64xf32> to vector<64x1xf32>
    %cst_46 = arith.constant 3.200000e+01 : f32
    %79 = vector.broadcast %cst_46 : f32 to vector<64x1xf32>
    %80 = arith.divf %78, %79 : vector<64x1xf32>
    %81 = vector.broadcast %80 : vector<64x1xf32> to vector<64x32xf32>
    %82 = arith.subf %72, %81 : vector<64x32xf32>
    %83 = arith.mulf %82, %82 : vector<64x32xf32>
    %cst_47 = arith.constant dense<0.000000e+00> : vector<64xf32>
    %84 = vector.multi_reduction <add>, %83, %cst_47 [1] : vector<64x32xf32> to vector<64xf32>
    %85 = vector.shape_cast %84 : vector<64xf32> to vector<64x1xf32>
    %cst_48 = arith.constant 3.200000e+01 : f32
    %86 = vector.broadcast %cst_48 : f32 to vector<64x1xf32>
    %87 = arith.divf %85, %86 : vector<64x1xf32>
    %88 = vector.broadcast %80 : vector<64x1xf32> to vector<64x32xf32>
    %89 = arith.subf %72, %88 : vector<64x32xf32>
    %cst_49 = arith.constant 9.99999974E-6 : f32
    %90 = vector.broadcast %cst_49 : f32 to vector<64x1xf32>
    %91 = arith.addf %87, %90 : vector<64x1xf32>
    %92 = math.rsqrt %91 : vector<64x1xf32>
    %93 = vector.broadcast %92 : vector<64x1xf32> to vector<64x32xf32>
    %94 = arith.mulf %89, %93 : vector<64x32xf32>
    %95 = vector.broadcast %74 : vector<1x32xf32> to vector<64x32xf32>
    %96 = arith.mulf %94, %95 : vector<64x32xf32>
    %97 = vector.broadcast %76 : vector<1x32xf32> to vector<64x32xf32>
    %98 = arith.addf %96, %97 : vector<64x32xf32>
    %99 = arith.truncf %98 : vector<64x32xf32> to vector<64x32xbf16>
    %c0_50 = arith.constant 0 : index
    %c0_51 = arith.constant 0 : index
    %c0_52 = arith.constant 0 : index
    %100 = vector.load %arg12[%c0_50, %c0_51, %c0_52] : memref<2x32x128xbf16, #tpu.memory_space<vmem>>, vector<1x32x128xbf16>
    %101 = vector.shape_cast %100 : vector<1x32x128xbf16> to vector<32x128xbf16>
    %cst_53 = arith.constant dense<0.000000e+00> : vector<64x128xf32>
    %102 = tpu.matmul %99, %101, %cst_53 {dimension_numbers = #tpu.dot_dimension_numbers<[1], [0], [0], [1], [0, 0, 1, 1], [], []>} : vector<64x32xbf16>, vector<32x128xbf16>, vector<64x128xf32> -> vector<64x128xf32>
    %c0_54 = arith.constant 0 : index
    %c0_55 = arith.constant 0 : index
    %c0_56 = arith.constant 0 : index
    %103 = vector.load %arg13[%c0_54, %c0_55, %c0_56] : memref<2x1x128xf32, #tpu.memory_space<vmem>>, vector<1x1x128xf32>
    %104 = vector.shape_cast %103 : vector<1x1x128xf32> to vector<1x128xf32>
    %105 = vector.broadcast %104 : vector<1x128xf32> to vector<64x128xf32>
    %106 = arith.addf %102, %105 : vector<64x128xf32>
    %cst_57 = arith.constant 5.000000e-01 : f32
    %107 = vector.broadcast %cst_57 : f32 to vector<64x128xf32>
    %108 = arith.mulf %107, %106 : vector<64x128xf32>
    %cst_58 = arith.constant 0.707106769 : f32
    %109 = vector.broadcast %cst_58 : f32 to vector<64x128xf32>
    %110 = arith.mulf %106, %109 : vector<64x128xf32>
    %cst_59 = arith.constant 0.000000e+00 : f32
    %111 = vector.broadcast %cst_59 : f32 to vector<64x128xf32>
    %112 = arith.cmpf oge, %110, %111 : vector<64x128xf32>
    %cst_60 = arith.constant 1.000000e+00 : f32
    %cst_61 = arith.constant -1.000000e+00 : f32
    %113 = vector.broadcast %cst_60 : f32 to vector<64x128xf32>
    %114 = vector.broadcast %cst_61 : f32 to vector<64x128xf32>
    %115 = arith.select %112, %113, %114 : vector<64x128xi1>, vector<64x128xf32>
    %116 = math.absf %110 : vector<64x128xf32>
    %cst_62 = arith.constant 0.327591091 : f32
    %117 = vector.broadcast %cst_62 : f32 to vector<64x128xf32>
    %118 = arith.mulf %117, %116 : vector<64x128xf32>
    %cst_63 = arith.constant 1.000000e+00 : f32
    %119 = vector.broadcast %cst_63 : f32 to vector<64x128xf32>
    %120 = arith.addf %119, %118 : vector<64x128xf32>
    %cst_64 = arith.constant 1.000000e+00 : f32
    %121 = vector.broadcast %cst_64 : f32 to vector<64x128xf32>
    %122 = arith.divf %121, %120 : vector<64x128xf32>
    %cst_65 = arith.constant 1.06140542 : f32
    %123 = vector.broadcast %cst_65 : f32 to vector<64x128xf32>
    %124 = arith.mulf %123, %122 : vector<64x128xf32>
    %cst_66 = arith.constant -1.45315206 : f32
    %125 = vector.broadcast %cst_66 : f32 to vector<64x128xf32>
    %126 = arith.addf %124, %125 : vector<64x128xf32>
    %127 = arith.mulf %126, %122 : vector<64x128xf32>
    %cst_67 = arith.constant 1.42141378 : f32
    %128 = vector.broadcast %cst_67 : f32 to vector<64x128xf32>
    %129 = arith.addf %127, %128 : vector<64x128xf32>
    %130 = arith.mulf %129, %122 : vector<64x128xf32>
    %cst_68 = arith.constant -0.284496725 : f32
    %131 = vector.broadcast %cst_68 : f32 to vector<64x128xf32>
    %132 = arith.addf %130, %131 : vector<64x128xf32>
    %133 = arith.mulf %132, %122 : vector<64x128xf32>
    %cst_69 = arith.constant 0.254829586 : f32
    %134 = vector.broadcast %cst_69 : f32 to vector<64x128xf32>
    %135 = arith.addf %133, %134 : vector<64x128xf32>
    %136 = arith.mulf %135, %122 : vector<64x128xf32>
    %cst_70 = arith.constant 0.000000e+00 : f32
    %137 = vector.broadcast %cst_70 : f32 to vector<64x128xf32>
    %138 = arith.subf %137, %116 : vector<64x128xf32>
    %139 = arith.mulf %138, %116 : vector<64x128xf32>
    %140 = math.exp %139 : vector<64x128xf32>
    %141 = arith.mulf %136, %140 : vector<64x128xf32>
    %cst_71 = arith.constant 1.000000e+00 : f32
    %142 = vector.broadcast %cst_71 : f32 to vector<64x128xf32>
    %143 = arith.subf %142, %141 : vector<64x128xf32>
    %144 = arith.mulf %115, %143 : vector<64x128xf32>
    %cst_72 = arith.constant 1.000000e+00 : f32
    %145 = vector.broadcast %cst_72 : f32 to vector<64x128xf32>
    %146 = arith.addf %145, %144 : vector<64x128xf32>
    %147 = arith.mulf %108, %146 : vector<64x128xf32>
    %148 = arith.truncf %147 : vector<64x128xf32> to vector<64x128xbf16>
    %c0_73 = arith.constant 0 : index
    %c0_74 = arith.constant 0 : index
    %c0_75 = arith.constant 0 : index
    %149 = vector.load %arg14[%c0_73, %c0_74, %c0_75] : memref<2x128x32xbf16, #tpu.memory_space<vmem>>, vector<1x128x32xbf16>
    %150 = vector.shape_cast %149 : vector<1x128x32xbf16> to vector<128x32xbf16>
    %cst_76 = arith.constant dense<0.000000e+00> : vector<64x32xf32>
    %151 = tpu.matmul %148, %150, %cst_76 {dimension_numbers = #tpu.dot_dimension_numbers<[1], [0], [0], [1], [0, 0, 1, 1], [], []>} : vector<64x128xbf16>, vector<128x32xbf16>, vector<64x32xf32> -> vector<64x32xf32>
    %c0_77 = arith.constant 0 : index
    %c0_78 = arith.constant 0 : index
    %c0_79 = arith.constant 0 : index
    %152 = vector.load %arg15[%c0_77, %c0_78, %c0_79] : memref<2x1x32xf32, #tpu.memory_space<vmem>>, vector<1x1x32xf32>
    %153 = vector.shape_cast %152 : vector<1x1x32xf32> to vector<1x32xf32>
    %154 = vector.broadcast %153 : vector<1x32xf32> to vector<64x32xf32>
    %155 = arith.addf %151, %154 : vector<64x32xf32>
    %156 = arith.addf %72, %155 : vector<64x32xf32>
    %c1 = arith.constant 1 : index
    %c0_80 = arith.constant 0 : index
    %c0_81 = arith.constant 0 : index
    %157 = vector.load %arg5[%c1, %c0_80, %c0_81] : memref<2x1x32xf32, #tpu.memory_space<vmem>>, vector<1x1x32xf32>
    %158 = vector.shape_cast %157 : vector<1x1x32xf32> to vector<1x32xf32>
    %c1_82 = arith.constant 1 : index
    %c0_83 = arith.constant 0 : index
    %c0_84 = arith.constant 0 : index
    %159 = vector.load %arg6[%c1_82, %c0_83, %c0_84] : memref<2x1x32xf32, #tpu.memory_space<vmem>>, vector<1x1x32xf32>
    %160 = vector.shape_cast %159 : vector<1x1x32xf32> to vector<1x32xf32>
    %cst_85 = arith.constant dense<0.000000e+00> : vector<64xf32>
    %161 = vector.multi_reduction <add>, %156, %cst_85 [1] : vector<64x32xf32> to vector<64xf32>
    %162 = vector.shape_cast %161 : vector<64xf32> to vector<64x1xf32>
    %cst_86 = arith.constant 3.200000e+01 : f32
    %163 = vector.broadcast %cst_86 : f32 to vector<64x1xf32>
    %164 = arith.divf %162, %163 : vector<64x1xf32>
    %165 = vector.broadcast %164 : vector<64x1xf32> to vector<64x32xf32>
    %166 = arith.subf %156, %165 : vector<64x32xf32>
    %167 = arith.mulf %166, %166 : vector<64x32xf32>
    %cst_87 = arith.constant dense<0.000000e+00> : vector<64xf32>
    %168 = vector.multi_reduction <add>, %167, %cst_87 [1] : vector<64x32xf32> to vector<64xf32>
    %169 = vector.shape_cast %168 : vector<64xf32> to vector<64x1xf32>
    %cst_88 = arith.constant 3.200000e+01 : f32
    %170 = vector.broadcast %cst_88 : f32 to vector<64x1xf32>
    %171 = arith.divf %169, %170 : vector<64x1xf32>
    %172 = vector.broadcast %164 : vector<64x1xf32> to vector<64x32xf32>
    %173 = arith.subf %156, %172 : vector<64x32xf32>
    %cst_89 = arith.constant 9.99999974E-6 : f32
    %174 = vector.broadcast %cst_89 : f32 to vector<64x1xf32>
    %175 = arith.addf %171, %174 : vector<64x1xf32>
    %176 = math.rsqrt %175 : vector<64x1xf32>
    %177 = vector.broadcast %176 : vector<64x1xf32> to vector<64x32xf32>
    %178 = arith.mulf %173, %177 : vector<64x32xf32>
    %179 = vector.broadcast %158 : vector<1x32xf32> to vector<64x32xf32>
    %180 = arith.mulf %178, %179 : vector<64x32xf32>
    %181 = vector.broadcast %160 : vector<1x32xf32> to vector<64x32xf32>
    %182 = arith.addf %180, %181 : vector<64x32xf32>
    %183 = arith.truncf %182 : vector<64x32xf32> to vector<64x32xbf16>
    %184 = vector.shape_cast %183 : vector<64x32xbf16> to vector<1x64x32xbf16>
    %185 = vector.broadcast %184 : vector<1x64x32xbf16> to vector<12x64x32xbf16>
    %c1_90 = arith.constant 1 : index
    %c0_91 = arith.constant 0 : index
    %c0_92 = arith.constant 0 : index
    %c0_93 = arith.constant 0 : index
    %186 = vector.load %arg7[%c1_90, %c0_91, %c0_92, %c0_93] : memref<2x12x32x8xf32, #tpu.memory_space<vmem>>, vector<1x12x32x8xf32>
    %187 = vector.shape_cast %186 : vector<1x12x32x8xf32> to vector<12x32x8xf32>
    %188 = arith.truncf %187 : vector<12x32x8xf32> to vector<12x32x8xbf16>
    "tpu.trace_start"() <{level = 10 : i32, message = "snc,scd->snd"}> : () -> ()
    %cst_94 = arith.constant dense<0.000000e+00> : vector<12x64x8xf32>
    %189 = tpu.matmul %185, %188, %cst_94 {dimension_numbers = #tpu.dot_dimension_numbers<[2], [1], [1], [2], [0, 0, 0, 1, 1, 2], [0], [0]>} : vector<12x64x32xbf16>, vector<12x32x8xbf16>, vector<12x64x8xf32> -> vector<12x64x8xf32>
    "tpu.trace_stop"() : () -> ()
    %190 = vector.extract_strided_slice %189 {offsets = [0, 0, 0], sizes = [4, 64, 8], strides = [1, 1, 1]} : vector<12x64x8xf32> to vector<4x64x8xf32>
    %191 = arith.truncf %190 : vector<4x64x8xf32> to vector<4x64x8xbf16>
    %192 = vector.extract_strided_slice %189 {offsets = [4, 0, 0], sizes = [4, 64, 8], strides = [1, 1, 1]} : vector<12x64x8xf32> to vector<4x64x8xf32>
    %193 = arith.truncf %192 : vector<4x64x8xf32> to vector<4x64x8xbf16>
    %194 = vector.extract_strided_slice %189 {offsets = [8, 0, 0], sizes = [4, 64, 8], strides = [1, 1, 1]} : vector<12x64x8xf32> to vector<4x64x8xf32>
    %195 = arith.truncf %194 : vector<4x64x8xf32> to vector<4x64x8xbf16>
    "tpu.trace_start"() <{level = 10 : i32, message = "hnd,hmd->hnm"}> : () -> ()
    %cst_95 = arith.constant dense<0.000000e+00> : vector<4x64x64xf32>
    %196 = tpu.matmul %191, %193, %cst_95 {dimension_numbers = #tpu.dot_dimension_numbers<[2], [2], [1], [1], [0, 0, 0, 1, 1, 1], [0], [0]>} : vector<4x64x8xbf16>, vector<4x64x8xbf16>, vector<4x64x64xf32> -> vector<4x64x64xf32>
    "tpu.trace_stop"() : () -> ()
    %c1_96 = arith.constant 1 : index
    %c0_97 = arith.constant 0 : index
    %c0_98 = arith.constant 0 : index
    %c0_99 = arith.constant 0 : index
    %197 = vector.load %arg4[%c1_96, %c0_97, %c0_98, %c0_99] : memref<2x4x64x64xf32, #tpu.memory_space<vmem>>, vector<1x4x64x64xf32>
    %198 = vector.shape_cast %197 : vector<1x4x64x64xf32> to vector<4x64x64xf32>
    %199 = arith.addf %196, %198 : vector<4x64x64xf32>
    %cst_100 = arith.constant dense<0xFF800000> : vector<4x64xf32>
    %200 = vector.multi_reduction <maximumf>, %199, %cst_100 [2] : vector<4x64x64xf32> to vector<4x64xf32>
    %201 = vector.shape_cast %200 : vector<4x64xf32> to vector<4x64x1xf32>
    %202 = vector.broadcast %201 : vector<4x64x1xf32> to vector<4x64x64xf32>
    %203 = arith.subf %199, %202 : vector<4x64x64xf32>
    %204 = math.exp %203 : vector<4x64x64xf32>
    %cst_101 = arith.constant dense<0.000000e+00> : vector<4x64xf32>
    %205 = vector.multi_reduction <add>, %204, %cst_101 [2] : vector<4x64x64xf32> to vector<4x64xf32>
    %206 = vector.shape_cast %205 : vector<4x64xf32> to vector<4x64x1xf32>
    %207 = tpu.reciprocal %206 {approx = true} : vector<4x64x1xf32> -> vector<4x64x1xf32>
    %208 = vector.broadcast %207 : vector<4x64x1xf32> to vector<4x64x64xf32>
    %209 = arith.mulf %204, %208 : vector<4x64x64xf32>
    %210 = arith.truncf %209 : vector<4x64x64xf32> to vector<4x64x64xbf16>
    "tpu.trace_start"() <{level = 10 : i32, message = "hnm,hmd->hnd"}> : () -> ()
    %cst_102 = arith.constant dense<0.000000e+00> : vector<4x64x8xf32>
    %211 = tpu.matmul %210, %195, %cst_102 {dimension_numbers = #tpu.dot_dimension_numbers<[2], [1], [1], [2], [0, 0, 0, 1, 1, 2], [0], [0]>} : vector<4x64x64xbf16>, vector<4x64x8xbf16>, vector<4x64x8xf32> -> vector<4x64x8xf32>
    "tpu.trace_stop"() : () -> ()
    %c1_103 = arith.constant 1 : index
    %c0_104 = arith.constant 0 : index
    %c0_105 = arith.constant 0 : index
    %c0_106 = arith.constant 0 : index
    %212 = vector.load %arg8[%c1_103, %c0_104, %c0_105, %c0_106] : memref<2x4x8x32xf32, #tpu.memory_space<vmem>>, vector<1x4x8x32xf32>
    %213 = vector.shape_cast %212 : vector<1x4x8x32xf32> to vector<4x8x32xf32>
    %214 = arith.truncf %213 : vector<4x8x32xf32> to vector<4x8x32xbf16>
    %215 = arith.truncf %211 : vector<4x64x8xf32> to vector<4x64x8xbf16>
    "tpu.trace_start"() <{level = 10 : i32, message = "hnd,hdc->hnc"}> : () -> ()
    %cst_107 = arith.constant dense<0.000000e+00> : vector<4x64x32xf32>
    %216 = tpu.matmul %215, %214, %cst_107 {dimension_numbers = #tpu.dot_dimension_numbers<[2], [1], [1], [2], [0, 0, 0, 1, 1, 2], [0], [0]>} : vector<4x64x8xbf16>, vector<4x8x32xbf16>, vector<4x64x32xf32> -> vector<4x64x32xf32>
    "tpu.trace_stop"() : () -> ()
    %cst_108 = arith.constant dense<0.000000e+00> : vector<64x32xf32>
    %217 = vector.multi_reduction <add>, %216, %cst_108 [0] : vector<4x64x32xf32> to vector<64x32xf32>
    %218 = arith.addf %156, %217 : vector<64x32xf32>
    %c1_109 = arith.constant 1 : index
    %c0_110 = arith.constant 0 : index
    %c0_111 = arith.constant 0 : index
    %219 = vector.load %arg9[%c1_109, %c0_110, %c0_111] : memref<2x1x32xf32, #tpu.memory_space<vmem>>, vector<1x1x32xf32>
    %220 = vector.shape_cast %219 : vector<1x1x32xf32> to vector<1x32xf32>
    %221 = vector.broadcast %220 : vector<1x32xf32> to vector<64x32xf32>
    %222 = arith.addf %218, %221 : vector<64x32xf32>
    %c1_112 = arith.constant 1 : index
    %c0_113 = arith.constant 0 : index
    %c0_114 = arith.constant 0 : index
    %223 = vector.load %arg10[%c1_112, %c0_113, %c0_114] : memref<2x1x32xf32, #tpu.memory_space<vmem>>, vector<1x1x32xf32>
    %224 = vector.shape_cast %223 : vector<1x1x32xf32> to vector<1x32xf32>
    %c1_115 = arith.constant 1 : index
    %c0_116 = arith.constant 0 : index
    %c0_117 = arith.constant 0 : index
    %225 = vector.load %arg11[%c1_115, %c0_116, %c0_117] : memref<2x1x32xf32, #tpu.memory_space<vmem>>, vector<1x1x32xf32>
    %226 = vector.shape_cast %225 : vector<1x1x32xf32> to vector<1x32xf32>
    %cst_118 = arith.constant dense<0.000000e+00> : vector<64xf32>
    %227 = vector.multi_reduction <add>, %222, %cst_118 [1] : vector<64x32xf32> to vector<64xf32>
    %228 = vector.shape_cast %227 : vector<64xf32> to vector<64x1xf32>
    %cst_119 = arith.constant 3.200000e+01 : f32
    %229 = vector.broadcast %cst_119 : f32 to vector<64x1xf32>
    %230 = arith.divf %228, %229 : vector<64x1xf32>
    %231 = vector.broadcast %230 : vector<64x1xf32> to vector<64x32xf32>
    %232 = arith.subf %222, %231 : vector<64x32xf32>
    %233 = arith.mulf %232, %232 : vector<64x32xf32>
    %cst_120 = arith.constant dense<0.000000e+00> : vector<64xf32>
    %234 = vector.multi_reduction <add>, %233, %cst_120 [1] : vector<64x32xf32> to vector<64xf32>
    %235 = vector.shape_cast %234 : vector<64xf32> to vector<64x1xf32>
    %cst_121 = arith.constant 3.200000e+01 : f32
    %236 = vector.broadcast %cst_121 : f32 to vector<64x1xf32>
    %237 = arith.divf %235, %236 : vector<64x1xf32>
    %238 = vector.broadcast %230 : vector<64x1xf32> to vector<64x32xf32>
    %239 = arith.subf %222, %238 : vector<64x32xf32>
    %cst_122 = arith.constant 9.99999974E-6 : f32
    %240 = vector.broadcast %cst_122 : f32 to vector<64x1xf32>
    %241 = arith.addf %237, %240 : vector<64x1xf32>
    %242 = math.rsqrt %241 : vector<64x1xf32>
    %243 = vector.broadcast %242 : vector<64x1xf32> to vector<64x32xf32>
    %244 = arith.mulf %239, %243 : vector<64x32xf32>
    %245 = vector.broadcast %224 : vector<1x32xf32> to vector<64x32xf32>
    %246 = arith.mulf %244, %245 : vector<64x32xf32>
    %247 = vector.broadcast %226 : vector<1x32xf32> to vector<64x32xf32>
    %248 = arith.addf %246, %247 : vector<64x32xf32>
    %249 = arith.truncf %248 : vector<64x32xf32> to vector<64x32xbf16>
    %c1_123 = arith.constant 1 : index
    %c0_124 = arith.constant 0 : index
    %c0_125 = arith.constant 0 : index
    %250 = vector.load %arg12[%c1_123, %c0_124, %c0_125] : memref<2x32x128xbf16, #tpu.memory_space<vmem>>, vector<1x32x128xbf16>
    %251 = vector.shape_cast %250 : vector<1x32x128xbf16> to vector<32x128xbf16>
    %cst_126 = arith.constant dense<0.000000e+00> : vector<64x128xf32>
    %252 = tpu.matmul %249, %251, %cst_126 {dimension_numbers = #tpu.dot_dimension_numbers<[1], [0], [0], [1], [0, 0, 1, 1], [], []>} : vector<64x32xbf16>, vector<32x128xbf16>, vector<64x128xf32> -> vector<64x128xf32>
    %c1_127 = arith.constant 1 : index
    %c0_128 = arith.constant 0 : index
    %c0_129 = arith.constant 0 : index
    %253 = vector.load %arg13[%c1_127, %c0_128, %c0_129] : memref<2x1x128xf32, #tpu.memory_space<vmem>>, vector<1x1x128xf32>
    %254 = vector.shape_cast %253 : vector<1x1x128xf32> to vector<1x128xf32>
    %255 = vector.broadcast %254 : vector<1x128xf32> to vector<64x128xf32>
    %256 = arith.addf %252, %255 : vector<64x128xf32>
    %cst_130 = arith.constant 5.000000e-01 : f32
    %257 = vector.broadcast %cst_130 : f32 to vector<64x128xf32>
    %258 = arith.mulf %257, %256 : vector<64x128xf32>
    %cst_131 = arith.constant 0.707106769 : f32
    %259 = vector.broadcast %cst_131 : f32 to vector<64x128xf32>
    %260 = arith.mulf %256, %259 : vector<64x128xf32>
    %cst_132 = arith.constant 0.000000e+00 : f32
    %261 = vector.broadcast %cst_132 : f32 to vector<64x128xf32>
    %262 = arith.cmpf oge, %260, %261 : vector<64x128xf32>
    %cst_133 = arith.constant 1.000000e+00 : f32
    %cst_134 = arith.constant -1.000000e+00 : f32
    %263 = vector.broadcast %cst_133 : f32 to vector<64x128xf32>
    %264 = vector.broadcast %cst_134 : f32 to vector<64x128xf32>
    %265 = arith.select %262, %263, %264 : vector<64x128xi1>, vector<64x128xf32>
    %266 = math.absf %260 : vector<64x128xf32>
    %cst_135 = arith.constant 0.327591091 : f32
    %267 = vector.broadcast %cst_135 : f32 to vector<64x128xf32>
    %268 = arith.mulf %267, %266 : vector<64x128xf32>
    %cst_136 = arith.constant 1.000000e+00 : f32
    %269 = vector.broadcast %cst_136 : f32 to vector<64x128xf32>
    %270 = arith.addf %269, %268 : vector<64x128xf32>
    %cst_137 = arith.constant 1.000000e+00 : f32
    %271 = vector.broadcast %cst_137 : f32 to vector<64x128xf32>
    %272 = arith.divf %271, %270 : vector<64x128xf32>
    %cst_138 = arith.constant 1.06140542 : f32
    %273 = vector.broadcast %cst_138 : f32 to vector<64x128xf32>
    %274 = arith.mulf %273, %272 : vector<64x128xf32>
    %cst_139 = arith.constant -1.45315206 : f32
    %275 = vector.broadcast %cst_139 : f32 to vector<64x128xf32>
    %276 = arith.addf %274, %275 : vector<64x128xf32>
    %277 = arith.mulf %276, %272 : vector<64x128xf32>
    %cst_140 = arith.constant 1.42141378 : f32
    %278 = vector.broadcast %cst_140 : f32 to vector<64x128xf32>
    %279 = arith.addf %277, %278 : vector<64x128xf32>
    %280 = arith.mulf %279, %272 : vector<64x128xf32>
    %cst_141 = arith.constant -0.284496725 : f32
    %281 = vector.broadcast %cst_141 : f32 to vector<64x128xf32>
    %282 = arith.addf %280, %281 : vector<64x128xf32>
    %283 = arith.mulf %282, %272 : vector<64x128xf32>
    %cst_142 = arith.constant 0.254829586 : f32
    %284 = vector.broadcast %cst_142 : f32 to vector<64x128xf32>
    %285 = arith.addf %283, %284 : vector<64x128xf32>
    %286 = arith.mulf %285, %272 : vector<64x128xf32>
    %cst_143 = arith.constant 0.000000e+00 : f32
    %287 = vector.broadcast %cst_143 : f32 to vector<64x128xf32>
    %288 = arith.subf %287, %266 : vector<64x128xf32>
    %289 = arith.mulf %288, %266 : vector<64x128xf32>
    %290 = math.exp %289 : vector<64x128xf32>
    %291 = arith.mulf %286, %290 : vector<64x128xf32>
    %cst_144 = arith.constant 1.000000e+00 : f32
    %292 = vector.broadcast %cst_144 : f32 to vector<64x128xf32>
    %293 = arith.subf %292, %291 : vector<64x128xf32>
    %294 = arith.mulf %265, %293 : vector<64x128xf32>
    %cst_145 = arith.constant 1.000000e+00 : f32
    %295 = vector.broadcast %cst_145 : f32 to vector<64x128xf32>
    %296 = arith.addf %295, %294 : vector<64x128xf32>
    %297 = arith.mulf %258, %296 : vector<64x128xf32>
    %298 = arith.truncf %297 : vector<64x128xf32> to vector<64x128xbf16>
    %c1_146 = arith.constant 1 : index
    %c0_147 = arith.constant 0 : index
    %c0_148 = arith.constant 0 : index
    %299 = vector.load %arg14[%c1_146, %c0_147, %c0_148] : memref<2x128x32xbf16, #tpu.memory_space<vmem>>, vector<1x128x32xbf16>
    %300 = vector.shape_cast %299 : vector<1x128x32xbf16> to vector<128x32xbf16>
    %cst_149 = arith.constant dense<0.000000e+00> : vector<64x32xf32>
    %301 = tpu.matmul %298, %300, %cst_149 {dimension_numbers = #tpu.dot_dimension_numbers<[1], [0], [0], [1], [0, 0, 1, 1], [], []>} : vector<64x128xbf16>, vector<128x32xbf16>, vector<64x32xf32> -> vector<64x32xf32>
    %c1_150 = arith.constant 1 : index
    %c0_151 = arith.constant 0 : index
    %c0_152 = arith.constant 0 : index
    %302 = vector.load %arg15[%c1_150, %c0_151, %c0_152] : memref<2x1x32xf32, #tpu.memory_space<vmem>>, vector<1x1x32xf32>
    %303 = vector.shape_cast %302 : vector<1x1x32xf32> to vector<1x32xf32>
    %304 = vector.broadcast %303 : vector<1x32xf32> to vector<64x32xf32>
    %305 = arith.addf %301, %304 : vector<64x32xf32>
    %306 = arith.addf %222, %305 : vector<64x32xf32>
    %c0_153 = arith.constant 0 : index
    %c0_154 = arith.constant 0 : index
    %c0_155 = arith.constant 0 : index
    %307 = vector.load %arg16[%c0_153, %c0_154, %c0_155] : memref<1x64x32xf32, #tpu.memory_space<vmem>>, vector<1x64x32xf32>
    %308 = vector.shape_cast %307 : vector<1x64x32xf32> to vector<64x32xf32>
    %309 = vector.shape_cast %306 : vector<64x32xf32> to vector<1x64x32xf32>
    tpu.vector_store %arg16[%c0_153, %c0_154, %c0_155], %309 {strides = array<i32>} : memref<1x64x32xf32, #tpu.memory_space<vmem>>, vector<1x64x32xf32>,
    return
  }
  func.func @transform_0(%arg0: i32) -> (i32, i32, i32) {
    %c0_i32 = arith.constant 0 : i32
    %c0_i32_0 = arith.constant 0 : i32
    %c0_i32_1 = arith.constant 0 : i32
    return %arg0, %c0_i32, %c0_i32_0 : i32, i32, i32
  }
  func.func @transform_1(%arg0: i32) -> (i32, i32) {
    %c0_i32 = arith.constant 0 : i32
    %c0_i32_0 = arith.constant 0 : i32
    %c0_i32_1 = arith.constant 0 : i32
    return %c0_i32, %c0_i32_0 : i32, i32
  }
  func.func @transform_2(%arg0: i32) -> (i32, i32) {
    %c0_i32 = arith.constant 0 : i32
    %c0_i32_0 = arith.constant 0 : i32
    %c0_i32_1 = arith.constant 0 : i32
    return %c0_i32, %c0_i32_0 : i32, i32
  }
  func.func @transform_3(%arg0: i32) -> (i32, i32, i32, i32) {
    %c0_i32 = arith.constant 0 : i32
    %c0_i32_0 = arith.constant 0 : i32
    %c0_i32_1 = arith.constant 0 : i32
    %c0_i32_2 = arith.constant 0 : i32
    %c0_i32_3 = arith.constant 0 : i32
    return %c0_i32, %c0_i32_0, %c0_i32_1, %c0_i32_2 : i32, i32, i32, i32
  }
  func.func @transform_4(%arg0: i32) -> (i32, i32, i32) {
    %c0_i32 = arith.constant 0 : i32
    %c0_i32_0 = arith.constant 0 : i32
    %c0_i32_1 = arith.constant 0 : i32
    %c0_i32_2 = arith.constant 0 : i32
    return %c0_i32, %c0_i32_0, %c0_i32_1 : i32, i32, i32
  }
  func.func @transform_5(%arg0: i32) -> (i32, i32, i32) {
    %c0_i32 = arith.constant 0 : i32
    %c0_i32_0 = arith.constant 0 : i32
    %c0_i32_1 = arith.constant 0 : i32
    %c0_i32_2 = arith.constant 0 : i32
    return %c0_i32, %c0_i32_0, %c0_i32_1 : i32, i32, i32
  }
  func.func @transform_6(%arg0: i32) -> (i32, i32, i32, i32) {
    %c0_i32 = arith.constant 0 : i32
    %c0_i32_0 = arith.constant 0 : i32
    %c0_i32_1 = arith.constant 0 : i32
    %c0_i32_2 = arith.constant 0 : i32
    %c0_i32_3 = arith.constant 0 : i32
    return %c0_i32, %c0_i32_0, %c0_i32_1, %c0_i32_2 : i32, i32, i32, i32
  }
  func.func @transform_7(%arg0: i32) -> (i32, i32, i32, i32) {
    %c0_i32 = arith.constant 0 : i32
    %c0_i32_0 = arith.constant 0 : i32
    %c0_i32_1 = arith.constant 0 : i32
    %c0_i32_2 = arith.constant 0 : i32
    %c0_i32_3 = arith.constant 0 : i32
    return %c0_i32, %c0_i32_0, %c0_i32_1, %c0_i32_2 : i32, i32, i32, i32
  }
  func.func @transform_8(%arg0: i32) -> (i32, i32, i32) {
    %c0_i32 = arith.constant 0 : i32
    %c0_i32_0 = arith.constant 0 : i32
    %c0_i32_1 = arith.constant 0 : i32
    %c0_i32_2 = arith.constant 0 : i32
    return %c0_i32, %c0_i32_0, %c0_i32_1 : i32, i32, i32
  }
  func.func @transform_9(%arg0: i32) -> (i32, i32, i32) {
    %c0_i32 = arith.constant 0 : i32
    %c0_i32_0 = arith.constant 0 : i32
    %c0_i32_1 = arith.constant 0 : i32
    %c0_i32_2 = arith.constant 0 : i32
    return %c0_i32, %c0_i32_0, %c0_i32_1 : i32, i32, i32
  }
  func.func @transform_10(%arg0: i32) -> (i32, i32, i32) {
    %c0_i32 = arith.constant 0 : i32
    %c0_i32_0 = arith.constant 0 : i32
    %c0_i32_1 = arith.constant 0 : i32
    %c0_i32_2 = arith.constant 0 : i32
    return %c0_i32, %c0_i32_0, %c0_i32_1 : i32, i32, i32
  }
  func.func @transform_11(%arg0: i32) -> (i32, i32, i32) {
    %c0_i32 = arith.constant 0 : i32
    %c0_i32_0 = arith.constant 0 : i32
    %c0_i32_1 = arith.constant 0 : i32
    %c0_i32_2 = arith.constant 0 : i32
    return %c0_i32, %c0_i32_0, %c0_i32_1 : i32, i32, i32
  }
  func.func @transform_12(%arg0: i32) -> (i32, i32, i32) {
    %c0_i32 = arith.constant 0 : i32
    %c0_i32_0 = arith.constant 0 : i32
    %c0_i32_1 = arith.constant 0 : i32
    %c0_i32_2 = arith.constant 0 : i32
    return %c0_i32, %c0_i32_0, %c0_i32_1 : i32, i32, i32
  }
  func.func @transform_13(%arg0: i32) -> (i32, i32, i32) {
    %c0_i32 = arith.constant 0 : i32
    %c0_i32_0 = arith.constant 0 : i32
    %c0_i32_1 = arith.constant 0 : i32
    %c0_i32_2 = arith.constant 0 : i32
    return %c0_i32, %c0_i32_0, %c0_i32_1 : i32, i32, i32
  }
  func.func @transform_14(%arg0: i32) -> (i32, i32, i32) {
    %c0_i32 = arith.constant 0 : i32
    %c0_i32_0 = arith.constant 0 : i32
    %c0_i32_1 = arith.constant 0 : i32
    %c0_i32_2 = arith.constant 0 : i32
    return %c0_i32, %c0_i32_0, %c0_i32_1 : i32, i32, i32
  }
  func.func @transform_15(%arg0: i32) -> (i32, i32, i32) {
    %c0_i32 = arith.constant 0 : i32
    %c0_i32_0 = arith.constant 0 : i32
    %c0_i32_1 = arith.constant 0 : i32
    return %arg0, %c0_i32, %c0_i32_0 : i32, i32, i32
  }
}

</mosaic_0001>

<llo_original>
// kernel: swin_vit_forward.1
$region0: #{swin_vit_forward.1}
  #allocation0 [shape = 'u32[]', space=smem, size = 0x4, offset = 0x4, fixed_abs, tag = 'smem constant byte address 0x4 - core index']
  #allocation1 [shape = 'u32[144,128]{1,0:T(1,128)}', space=vmem, size = 0x12000, scoped, tag = 'internal scratch']
  %s0 = inlined_call_operand.vmem [shape: f32[2,64,16], index: 0, kind: input, shape index: {}]
  %s1 = inlined_call_operand.vmem [shape: bf16[16,32], index: 1, kind: input, shape index: {}]
  %s2 = inlined_call_operand.vmem [shape: f32[64,32], index: 2, kind: input, shape index: {}]
  %s3 = inlined_call_operand.vmem [shape: f32[2,4,64,64], index: 3, kind: input, shape index: {}]
  %s4 = inlined_call_operand.vmem [shape: f32[2,1,32], index: 4, kind: input, shape index: {}]
  %s5 = inlined_call_operand.vmem [shape: f32[2,1,32], index: 5, kind: input, shape index: {}]
  %s6 = inlined_call_operand.vmem [shape: f32[2,12,32,8], index: 6, kind: input, shape index: {}]
  %s7 = inlined_call_operand.vmem [shape: f32[2,4,8,32], index: 7, kind: input, shape index: {}]
  %s8 = inlined_call_operand.vmem [shape: f32[2,1,32], index: 8, kind: input, shape index: {}]
  %s9 = inlined_call_operand.vmem [shape: f32[2,1,32], index: 9, kind: input, shape index: {}]
  %s10 = inlined_call_operand.vmem [shape: f32[2,1,32], index: 10, kind: input, shape index: {}]
  %s11 = inlined_call_operand.vmem [shape: bf16[2,32,128], index: 11, kind: input, shape index: {}]
  %s12 = inlined_call_operand.vmem [shape: f32[2,1,128], index: 12, kind: input, shape index: {}]
  %s13 = inlined_call_operand.vmem [shape: bf16[2,128,32], index: 13, kind: input, shape index: {}]
  %s14 = inlined_call_operand.vmem [shape: f32[2,1,32], index: 14, kind: input, shape index: {}]
  %s15 = inlined_call_operand.hbm [shape: f32[2,64,32], index: 15, kind: output, shape index: {}]
  %s16 = sld [smem:[#allocation0]]
  $region93: #{swin_vit_forward.1} parent=0
    _
  %s18 = ssub.s32 1, %s16
  %s19 = scalar_select 0, %s18, %s16
  $region1: #{swin_vit_forward.1} parent=0
    #allocation2 [shape = 'u8[65536]{0}', space=vmem, size = 0x10000, scoped, tag = 'output window, operand 0']
    #allocation3 [shape = 's32[2]{0}', space=sflag, size = 0x8, scoped, tag = 'scoped memory for swin_vit_forward.1']
    %20 = vsyncpa [#allocation3], 0
    %s21 = scalar_lea.sflag [#allocation3], 1
    %22 = vsyncpa %s21, 0
    loop: start=0, step=1, limit=4
    $region2: #{swin_vit_forward.1} parent=1 // loop_pre_header
      _
    $region3: #{swin_vit_forward.1} parent=1 // loop_header
      %s24 = sphi 0, %s28
      %p25 = scmp.ge.s32.totalorder %s24, 4
      %s34 = sphi 0, %s36
      %s37 = sphi 0, %s34
      %s38 = sphi 0, %s37
      %s54 = sphi 0, %s38
      %s58 = sphi 0, %s58
      %s60 = sphi 0, %s58
      %s61 = sphi 0, %s60
      %s75 = sphi 0, %s61
      %s79 = sphi 0, %s79
      %s81 = sphi 0, %s79
      %s82 = sphi 0, %s81
      %s96 = sphi 0, %s82
      %s100 = sphi 0, %s100
      %s102 = sphi 0, %s100
      %s103 = sphi 0, %s102
      %s117 = sphi 0, %s103
      %s121 = sphi 0, %s121
      %s123 = sphi 0, %s121
      %s124 = sphi 0, %s123
      %s138 = sphi 0, %s124
      %s142 = sphi 0, %s142
      %s144 = sphi 0, %s142
      %s145 = sphi 0, %s144
      %s159 = sphi 0, %s145
      %s163 = sphi 0, %s163
      %s165 = sphi 0, %s163
      %s166 = sphi 0, %s165
      %s180 = sphi 0, %s166
      %s184 = sphi 0, %s184
      %s186 = sphi 0, %s184
      %s187 = sphi 0, %s186
      %s201 = sphi 0, %s187
      %s205 = sphi 0, %s205
      %s207 = sphi 0, %s205
      %s208 = sphi 0, %s207
      %s222 = sphi 0, %s208
      %s226 = sphi 0, %s226
      %s228 = sphi 0, %s226
      %s229 = sphi 0, %s228
      %s243 = sphi 0, %s229
      %s247 = sphi 0, %s247
      %s249 = sphi 0, %s247
      %s250 = sphi 0, %s249
      %s264 = sphi 0, %s250
      %s268 = sphi 0, %s268
      %s270 = sphi 0, %s268
      %s271 = sphi 0, %s270
      %s285 = sphi 0, %s271
      %s289 = sphi 0, %s289
      %s291 = sphi 0, %s289
      %s292 = sphi 0, %s291
      %s306 = sphi 0, %s292
      %s310 = sphi 0, %s310
      %s312 = sphi 0, %s310
      %s313 = sphi 0, %s312
      %s327 = sphi 0, %s313
      %s331 = sphi 0, %s331
      %s333 = sphi 0, %s331
      %s334 = sphi 0, %s333
      %s348 = sphi 0, %s334
      %s354 = sphi 0, %s356
      %s357 = sphi 0, %s354
      %s358 = sphi 0, %s357
      %s374 = sphi 0, %s358
    $region4: #{swin_vit_forward.1} parent=1 // loop_header_branch
      %27 = sbr.rel (%p25) target = $region8
    $region5: #{swin_vit_forward.1} parent=1 // loop_body
      %s29 = ssub.s32 %s24, 1
      %s30 = ssub.s32 %s24, 2
      %s31 = sadd.s32 %s24, 1
      %s32 = ssub.s32 %s24, %s31
      %p33 = scmp.eq.s32.totalorder %s32, 0
      %s35 = sadd.s32 %s34, 1
      %s36 = scalar_select %p33, %s34, %s35
      %p39 = pneg %p33
      %p40 = scmp.eq.s32.totalorder %s24, 1
      %p41 = por %p39, %p40
      %p42 = scmp.ne.s32.totalorder %s34, %s37
      %p43 = scmp.eq.s32.totalorder %s24, 0
      %p44 = por %p42, %p43
      %p45 = scmp.ne.s32.totalorder %s34, %s37
      %p46 = scmp.eq.s32.totalorder %s29, 1
      %p47 = por %p45, %p46
      %p48 = scmp.ne.s32.totalorder %s37, %s38
      %p49 = scmp.eq.s32.totalorder %s29, 0
      %p50 = por %p48, %p49
      %p51 = scmp.ne.s32.totalorder %s37, %s38
      %p52 = scmp.eq.s32.totalorder %s30, 1
      %p53 = por %p51, %p52
      %p55 = scmp.ne.s32.totalorder %s38, %s54
      %p56 = scmp.eq.s32.totalorder %s30, 0
      %p57 = por %p55, %p56
      %s59 = sadd.s32 %s58, 1
      %p62 = scmp.eq.s32.totalorder %s24, 1
      %p63 = scmp.ne.s32.totalorder %s58, %s60
      %p64 = scmp.eq.s32.totalorder %s24, 0
      %p65 = por %p63, %p64
      %p66 = scmp.ne.s32.totalorder %s58, %s60
      %p67 = scmp.eq.s32.totalorder %s29, 1
      %p68 = por %p66, %p67
      %p69 = scmp.ne.s32.totalorder %s60, %s61
      %p70 = scmp.eq.s32.totalorder %s29, 0
      %p71 = por %p69, %p70
      %p72 = scmp.ne.s32.totalorder %s60, %s61
      %p73 = scmp.eq.s32.totalorder %s30, 1
      %p74 = por %p72, %p73
      %p76 = scmp.ne.s32.totalorder %s61, %s75
      %p77 = scmp.eq.s32.totalorder %s30, 0
      %p78 = por %p76, %p77
      %s80 = sadd.s32 %s79, 1
      %p83 = scmp.eq.s32.totalorder %s24, 1
      %p84 = scmp.ne.s32.totalorder %s79, %s81
      %p85 = scmp.eq.s32.totalorder %s24, 0
      %p86 = por %p84, %p85
      %p87 = scmp.ne.s32.totalorder %s79, %s81
      %p88 = scmp.eq.s32.totalorder %s29, 1
      %p89 = por %p87, %p88
      %p90 = scmp.ne.s32.totalorder %s81, %s82
      %p91 = scmp.eq.s32.totalorder %s29, 0
      %p92 = por %p90, %p91
      %p93 = scmp.ne.s32.totalorder %s81, %s82
      %p94 = scmp.eq.s32.totalorder %s30, 1
      %p95 = por %p93, %p94
      %p97 = scmp.ne.s32.totalorder %s82, %s96
      %p98 = scmp.eq.s32.totalorder %s30, 0
      %p99 = por %p97, %p98
      %s101 = sadd.s32 %s100, 1
      %p104 = scmp.eq.s32.totalorder %s24, 1
      %p105 = scmp.ne.s32.totalorder %s100, %s102
      %p106 = scmp.eq.s32.totalorder %s24, 0
      %p107 = por %p105, %p106
      %p108 = scmp.ne.s32.totalorder %s100, %s102
      %p109 = scmp.eq.s32.totalorder %s29, 1
      %p110 = por %p108, %p109
      %p111 = scmp.ne.s32.totalorder %s102, %s103
      %p112 = scmp.eq.s32.totalorder %s29, 0
      %p113 = por %p111, %p112
      %p114 = scmp.ne.s32.totalorder %s102, %s103
      %p115 = scmp.eq.s32.totalorder %s30, 1
      %p116 = por %p114, %p115
      %p118 = scmp.ne.s32.totalorder %s103, %s117
      %p119 = scmp.eq.s32.totalorder %s30, 0
      %p120 = por %p118, %p119
      %s122 = sadd.s32 %s121, 1
      %p125 = scmp.eq.s32.totalorder %s24, 1
      %p126 = scmp.ne.s32.totalorder %s121, %s123
      %p127 = scmp.eq.s32.totalorder %s24, 0
      %p128 = por %p126, %p127
      %p129 = scmp.ne.s32.totalorder %s121, %s123
      %p130 = scmp.eq.s32.totalorder %s29, 1
      %p131 = por %p129, %p130
      %p132 = scmp.ne.s32.totalorder %s123, %s124
      %p133 = scmp.eq.s32.totalorder %s29, 0
      %p134 = por %p132, %p133
      %p135 = scmp.ne.s32.totalorder %s123, %s124
      %p136 = scmp.eq.s32.totalorder %s30, 1
      %p137 = por %p135, %p136
      %p139 = scmp.ne.s32.totalorder %s124, %s138
      %p140 = scmp.eq.s32.totalorder %s30, 0
      %p141 = por %p139, %p140
      %s143 = sadd.s32 %s142, 1
      %p146 = scmp.eq.s32.totalorder %s24, 1
      %p147 = scmp.ne.s32.totalorder %s142, %s144
      %p148 = scmp.eq.s32.totalorder %s24, 0
      %p149 = por %p147, %p148
      %p150 = scmp.ne.s32.totalorder %s142, %s144
      %p151 = scmp.eq.s32.totalorder %s29, 1
      %p152 = por %p150, %p151
      %p153 = scmp.ne.s32.totalorder %s144, %s145
      %p154 = scmp.eq.s32.totalorder %s29, 0
      %p155 = por %p153, %p154
      %p156 = scmp.ne.s32.totalorder %s144, %s145
      %p157 = scmp.eq.s32.totalorder %s30, 1
      %p158 = por %p156, %p157
      %p160 = scmp.ne.s32.totalorder %s145, %s159
      %p161 = scmp.eq.s32.totalorder %s30, 0
      %p162 = por %p160, %p161
      %s164 = sadd.s32 %s163, 1
      %p167 = scmp.eq.s32.totalorder %s24, 1
      %p168 = scmp.ne.s32.totalorder %s163, %s165
      %p169 = scmp.eq.s32.totalorder %s24, 0
      %p170 = por %p168, %p169
      %p171 = scmp.ne.s32.totalorder %s163, %s165
      %p172 = scmp.eq.s32.totalorder %s29, 1
      %p173 = por %p171, %p172
      %p174 = scmp.ne.s32.totalorder %s165, %s166
      %p175 = scmp.eq.s32.totalorder %s29, 0
      %p176 = por %p174, %p175
      %p177 = scmp.ne.s32.totalorder %s165, %s166
      %p178 = scmp.eq.s32.totalorder %s30, 1
      %p179 = por %p177, %p178
      %p181 = scmp.ne.s32.totalorder %s166, %s180
      %p182 = scmp.eq.s32.totalorder %s30, 0
      %p183 = por %p181, %p182
      %s185 = sadd.s32 %s184, 1
      %p188 = scmp.eq.s32.totalorder %s24, 1
      %p189 = scmp.ne.s32.totalorder %s184, %s186
      %p190 = scmp.eq.s32.totalorder %s24, 0
      %p191 = por %p189, %p190
      %p192 = scmp.ne.s32.totalorder %s184, %s186
      %p193 = scmp.eq.s32.totalorder %s29, 1
      %p194 = por %p192, %p193
      %p195 = scmp.ne.s32.totalorder %s186, %s187
      %p196 = scmp.eq.s32.totalorder %s29, 0
      %p197 = por %p195, %p196
      %p198 = scmp.ne.s32.totalorder %s186, %s187
      %p199 = scmp.eq.s32.totalorder %s30, 1
      %p200 = por %p198, %p199
      %p202 = scmp.ne.s32.totalorder %s187, %s201
      %p203 = scmp.eq.s32.totalorder %s30, 0
      %p204 = por %p202, %p203
      %s206 = sadd.s32 %s205, 1
      %p209 = scmp.eq.s32.totalorder %s24, 1
      %p210 = scmp.ne.s32.totalorder %s205, %s207
      %p211 = scmp.eq.s32.totalorder %s24, 0
      %p212 = por %p210, %p211
      %p213 = scmp.ne.s32.totalorder %s205, %s207
      %p214 = scmp.eq.s32.totalorder %s29, 1
      %p215 = por %p213, %p214
      %p216 = scmp.ne.s32.totalorder %s207, %s208
      %p217 = scmp.eq.s32.totalorder %s29, 0
      %p218 = por %p216, %p217
      %p219 = scmp.ne.s32.totalorder %s207, %s208
      %p220 = scmp.eq.s32.totalorder %s30, 1
      %p221 = por %p219, %p220
      %p223 = scmp.ne.s32.totalorder %s208, %s222
      %p224 = scmp.eq.s32.totalorder %s30, 0
      %p225 = por %p223, %p224
      %s227 = sadd.s32 %s226, 1
      %p230 = scmp.eq.s32.totalorder %s24, 1
      %p231 = scmp.ne.s32.totalorder %s226, %s228
      %p232 = scmp.eq.s32.totalorder %s24, 0
      %p233 = por %p231, %p232
      %p234 = scmp.ne.s32.totalorder %s226, %s228
      %p235 = scmp.eq.s32.totalorder %s29, 1
      %p236 = por %p234, %p235
      %p237 = scmp.ne.s32.totalorder %s228, %s229
      %p238 = scmp.eq.s32.totalorder %s29, 0
      %p239 = por %p237, %p238
      %p240 = scmp.ne.s32.totalorder %s228, %s229
      %p241 = scmp.eq.s32.totalorder %s30, 1
      %p242 = por %p240, %p241
      %p244 = scmp.ne.s32.totalorder %s229, %s243
      %p245 = scmp.eq.s32.totalorder %s30, 0
      %p246 = por %p244, %p245
      %s248 = sadd.s32 %s247, 1
      %p251 = scmp.eq.s32.totalorder %s24, 1
      %p252 = scmp.ne.s32.totalorder %s247, %s249
      %p253 = scmp.eq.s32.totalorder %s24, 0
      %p254 = por %p252, %p253
      %p255 = scmp.ne.s32.totalorder %s247, %s249
      %p256 = scmp.eq.s32.totalorder %s29, 1
      %p257 = por %p255, %p256
      %p258 = scmp.ne.s32.totalorder %s249, %s250
      %p259 = scmp.eq.s32.totalorder %s29, 0
      %p260 = por %p258, %p259
      %p261 = scmp.ne.s32.totalorder %s249, %s250
      %p262 = scmp.eq.s32.totalorder %s30, 1
      %p263 = por %p261, %p262
      %p265 = scmp.ne.s32.totalorder %s250, %s264
      %p266 = scmp.eq.s32.totalorder %s30, 0
      %p267 = por %p265, %p266
      %s269 = sadd.s32 %s268, 1
      %p272 = scmp.eq.s32.totalorder %s24, 1
      %p273 = scmp.ne.s32.totalorder %s268, %s270
      %p274 = scmp.eq.s32.totalorder %s24, 0
      %p275 = por %p273, %p274
      %p276 = scmp.ne.s32.totalorder %s268, %s270
      %p277 = scmp.eq.s32.totalorder %s29, 1
      %p278 = por %p276, %p277
      %p279 = scmp.ne.s32.totalorder %s270, %s271
      %p280 = scmp.eq.s32.totalorder %s29, 0
      %p281 = por %p279, %p280
      %p282 = scmp.ne.s32.totalorder %s270, %s271
      %p283 = scmp.eq.s32.totalorder %s30, 1
      %p284 = por %p282, %p283
      %p286 = scmp.ne.s32.totalorder %s271, %s285
      %p287 = scmp.eq.s32.totalorder %s30, 0
      %p288 = por %p286, %p287
      %s290 = sadd.s32 %s289, 1
      %p293 = scmp.eq.s32.totalorder %s24, 1
      %p294 = scmp.ne.s32.totalorder %s289, %s291
      %p295 = scmp.eq.s32.totalorder %s24, 0
      %p296 = por %p294, %p295
      %p297 = scmp.ne.s32.totalorder %s289, %s291
      %p298 = scmp.eq.s32.totalorder %s29, 1
      %p299 = por %p297, %p298
      %p300 = scmp.ne.s32.totalorder %s291, %s292
      %p301 = scmp.eq.s32.totalorder %s29, 0
      %p302 = por %p300, %p301
      %p303 = scmp.ne.s32.totalorder %s291, %s292
      %p304 = scmp.eq.s32.totalorder %s30, 1
      %p305 = por %p303, %p304
      %p307 = scmp.ne.s32.totalorder %s292, %s306
      %p308 = scmp.eq.s32.totalorder %s30, 0
      %p309 = por %p307, %p308
      %s311 = sadd.s32 %s310, 1
      %p314 = scmp.eq.s32.totalorder %s24, 1
      %p315 = scmp.ne.s32.totalorder %s310, %s312
      %p316 = scmp.eq.s32.totalorder %s24, 0
      %p317 = por %p315, %p316
      %p318 = scmp.ne.s32.totalorder %s310, %s312
      %p319 = scmp.eq.s32.totalorder %s29, 1
      %p320 = por %p318, %p319
      %p321 = scmp.ne.s32.totalorder %s312, %s313
      %p322 = scmp.eq.s32.totalorder %s29, 0
      %p323 = por %p321, %p322
      %p324 = scmp.ne.s32.totalorder %s312, %s313
      %p325 = scmp.eq.s32.totalorder %s30, 1
      %p326 = por %p324, %p325
      %p328 = scmp.ne.s32.totalorder %s313, %s327
      %p329 = scmp.eq.s32.totalorder %s30, 0
      %p330 = por %p328, %p329
      %s332 = sadd.s32 %s331, 1
      %p335 = scmp.eq.s32.totalorder %s24, 1
      %p336 = scmp.ne.s32.totalorder %s331, %s333
      %p337 = scmp.eq.s32.totalorder %s24, 0
      %p338 = por %p336, %p337
      %p339 = scmp.ne.s32.totalorder %s331, %s333
      %p340 = scmp.eq.s32.totalorder %s29, 1
      %p341 = por %p339, %p340
      %p342 = scmp.ne.s32.totalorder %s333, %s334
      %p343 = scmp.eq.s32.totalorder %s29, 0
      %p344 = por %p342, %p343
      %p345 = scmp.ne.s32.totalorder %s333, %s334
      %p346 = scmp.eq.s32.totalorder %s30, 1
      %p347 = por %p345, %p346
      %p349 = scmp.ne.s32.totalorder %s334, %s348
      %p350 = scmp.eq.s32.totalorder %s30, 0
      %p351 = por %p349, %p350
      %s352 = ssub.s32 %s24, %s31
      %p353 = scmp.eq.s32.totalorder %s352, 0
      %s355 = sadd.s32 %s354, 1
      %s356 = scalar_select %p353, %s354, %s355
      %p359 = pneg %p353
      %p360 = scmp.eq.s32.totalorder %s24, 1
      %p361 = por %p359, %p360
      %p362 = scmp.ne.s32.totalorder %s354, %s357
      %p363 = scmp.eq.s32.totalorder %s24, 0
      %p364 = por %p362, %p363
      %p365 = scmp.ne.s32.totalorder %s354, %s357
      %p366 = scmp.eq.s32.totalorder %s29, 1
      %p367 = por %p365, %p366
      %p368 = scmp.ne.s32.totalorder %s357, %s358
      %p369 = scmp.eq.s32.totalorder %s29, 0
      %p370 = por %p368, %p369
      %p371 = scmp.ne.s32.totalorder %s357, %s358
      %p372 = scmp.eq.s32.totalorder %s30, 1
      %p373 = por %p371, %p372
      %p375 = scmp.ne.s32.totalorder %s358, %s374
      %p376 = scmp.eq.s32.totalorder %s30, 0
      %p377 = por %p375, %p376
      %p378 = scmp.le.s32.totalorder 1, %s24
      %p379 = scmp.lt.s32.totalorder %s24, 3
      %p380 = pnand %p378, %p379
      %p381 = pneg %p380
      // Predicated region
      $region9: #{swin_vit_forward.1} parent=5 // pred_check
        _
      $region10: #{swin_vit_forward.1} parent=5 // pred_check_branch
        %383 = sbr.rel (%p380) target = $region12
      $region11: #{swin_vit_forward.1} parent=5 // pred_region
        %s384 = ssub.s32 %s24, 1
        // Predicated region
        $region13: #{swin_vit_forward.1} parent=11 // pred_check
          %p385 = pneg %p71
        $region14: #{swin_vit_forward.1} parent=11 // pred_check_branch
          %387 = sbr.rel (%p385) target = $region16
        $region15: #{swin_vit_forward.1} parent=11 // pred_region
          _
        $region16: #{swin_vit_forward.1} parent=11 // pred_fallthru
          _
        // Predicated region
        $region17: #{swin_vit_forward.1} parent=11 // pred_check
          %p388 = pneg %p92
        $region18: #{swin_vit_forward.1} parent=11 // pred_check_branch
          %390 = sbr.rel (%p388) target = $region20
        $region19: #{swin_vit_forward.1} parent=11 // pred_region
          _
        $region20: #{swin_vit_forward.1} parent=11 // pred_fallthru
          _
        // Predicated region
        $region21: #{swin_vit_forward.1} parent=11 // pred_check
          %p391 = pneg %p113
        $region22: #{swin_vit_forward.1} parent=11 // pred_check_branch
          %393 = sbr.rel (%p391) target = $region24
        $region23: #{swin_vit_forward.1} parent=11 // pred_region
          _
        $region24: #{swin_vit_forward.1} parent=11 // pred_fallthru
          _
        // Predicated region
        $region25: #{swin_vit_forward.1} parent=11 // pred_check
          %p394 = pneg %p134
        $region26: #{swin_vit_forward.1} parent=11 // pred_check_branch
          %396 = sbr.rel (%p394) target = $region28
        $region27: #{swin_vit_forward.1} parent=11 // pred_region
          _
        $region28: #{swin_vit_forward.1} parent=11 // pred_fallthru
          _
        // Predicated region
        $region29: #{swin_vit_forward.1} parent=11 // pred_check
          %p397 = pneg %p155
        $region30: #{swin_vit_forward.1} parent=11 // pred_check_branch
          %399 = sbr.rel (%p397) target = $region32
        $region31: #{swin_vit_forward.1} parent=11 // pred_region
          _
        $region32: #{swin_vit_forward.1} parent=11 // pred_fallthru
          _
        // Predicated region
        $region33: #{swin_vit_forward.1} parent=11 // pred_check
          %p400 = pneg %p176
        $region34: #{swin_vit_forward.1} parent=11 // pred_check_branch
          %402 = sbr.rel (%p400) target = $region36
        $region35: #{swin_vit_forward.1} parent=11 // pred_region
          _
        $region36: #{swin_vit_forward.1} parent=11 // pred_fallthru
          _
        // Predicated region
        $region37: #{swin_vit_forward.1} parent=11 // pred_check
          %p403 = pneg %p197
        $region38: #{swin_vit_forward.1} parent=11 // pred_check_branch
          %405 = sbr.rel (%p403) target = $region40
        $region39: #{swin_vit_forward.1} parent=11 // pred_region
          _
        $region40: #{swin_vit_forward.1} parent=11 // pred_fallthru
          _
        // Predicated region
        $region41: #{swin_vit_forward.1} parent=11 // pred_check
          %p406 = pneg %p218
        $region42: #{swin_vit_forward.1} parent=11 // pred_check_branch
          %408 = sbr.rel (%p406) target = $region44
        $region43: #{swin_vit_forward.1} parent=11 // pred_region
          _
        $region44: #{swin_vit_forward.1} parent=11 // pred_fallthru
          _
        // Predicated region
        $region45: #{swin_vit_forward.1} parent=11 // pred_check
          %p409 = pneg %p239
        $region46: #{swin_vit_forward.1} parent=11 // pred_check_branch
          %411 = sbr.rel (%p409) target = $region48
        $region47: #{swin_vit_forward.1} parent=11 // pred_region
          _
        $region48: #{swin_vit_forward.1} parent=11 // pred_fallthru
          _
        // Predicated region
        $region49: #{swin_vit_forward.1} parent=11 // pred_check
          %p412 = pneg %p260
        $region50: #{swin_vit_forward.1} parent=11 // pred_check_branch
          %414 = sbr.rel (%p412) target = $region52
        $region51: #{swin_vit_forward.1} parent=11 // pred_region
          _
        $region52: #{swin_vit_forward.1} parent=11 // pred_fallthru
          _
        // Predicated region
        $region53: #{swin_vit_forward.1} parent=11 // pred_check
          %p415 = pneg %p281
        $region54: #{swin_vit_forward.1} parent=11 // pred_check_branch
          %417 = sbr.rel (%p415) target = $region56
        $region55: #{swin_vit_forward.1} parent=11 // pred_region
          _
        $region56: #{swin_vit_forward.1} parent=11 // pred_fallthru
          _
        // Predicated region
        $region57: #{swin_vit_forward.1} parent=11 // pred_check
          %p418 = pneg %p302
        $region58: #{swin_vit_forward.1} parent=11 // pred_check_branch
          %420 = sbr.rel (%p418) target = $region60
        $region59: #{swin_vit_forward.1} parent=11 // pred_region
          _
        $region60: #{swin_vit_forward.1} parent=11 // pred_fallthru
          _
        // Predicated region
        $region61: #{swin_vit_forward.1} parent=11 // pred_check
          %p421 = pneg %p323
        $region62: #{swin_vit_forward.1} parent=11 // pred_check_branch
          %423 = sbr.rel (%p421) target = $region64
        $region63: #{swin_vit_forward.1} parent=11 // pred_region
          _
        $region64: #{swin_vit_forward.1} parent=11 // pred_fallthru
          _
        // Predicated region
        $region65: #{swin_vit_forward.1} parent=11 // pred_check
          %p424 = pneg %p344
        $region66: #{swin_vit_forward.1} parent=11 // pred_check_branch
          %426 = sbr.rel (%p424) target = $region68
        $region67: #{swin_vit_forward.1} parent=11 // pred_region
          _
        $region68: #{swin_vit_forward.1} parent=11 // pred_fallthru
          _
      $region12: #{swin_vit_forward.1} parent=5 // pred_fallthru
        _
      %p427 = scmp.lt.s32.totalorder %s24, 2
      // Predicated region
      $region69: #{swin_vit_forward.1} parent=5 // pred_check
        %p428 = pneg %p427
      $region70: #{swin_vit_forward.1} parent=5 // pred_check_branch
        %430 = sbr.rel (%p428) target = $region72
      $region71: #{swin_vit_forward.1} parent=5 // pred_region
        // Predicated region
        $region73: #{swin_vit_forward.1} parent=71 // pred_check
          %p431 = pneg %p44
        $region74: #{swin_vit_forward.1} parent=71 // pred_check_branch
          %433 = sbr.rel (%p431) target = $region76
        $region75: #{swin_vit_forward.1} parent=71 // pred_region
          %p434 = scmp.lt.s32.totalorder %s24, 1
          %s435 = scalar_select %p434, %s24, 1
          %s436 = smul.addr %s435, 8
          %s437 = smul.addr %s436, 8
          %s438 = scalar_lea.vmem %s0, %s437
        $region76: #{swin_vit_forward.1} parent=71 // pred_fallthru
          _
      $region72: #{swin_vit_forward.1} parent=5 // pred_fallthru
        _
      %p439 = scmp.le.s32.totalorder 1, %s24
      %p440 = scmp.lt.s32.totalorder %s24, 3
      %p441 = pnand %p439, %p440
      %p442 = pneg %p441
      // Predicated region
      $region77: #{swin_vit_forward.1} parent=5 // pred_check
        _
      $region78: #{swin_vit_forward.1} parent=5 // pred_check_branch
        %444 = sbr.rel (%p441) target = $region80
      $region79: #{swin_vit_forward.1} parent=5 // pred_region
        %s445 = ssub.s32 %s24, 1
        %p446 = scmp.lt.s32.totalorder %s29, 1
        %s447 = scalar_select %p446, %s29, 1
        %s448 = smul.addr %s447, 8
        %s449 = smul.addr %s448, 8
        %s450 = scalar_lea.vmem %s0, %s449
        %p451 = pneg %p50
        %p452 = pneg %p47
        %p453 = pneg %p71
        %p454 = pneg %p68
        %p455 = pneg %p92
        %p456 = pneg %p89
        %p457 = pneg %p113
        %p458 = pneg %p110
        %p459 = pneg %p134
        %p460 = pneg %p131
        %p461 = pneg %p155
        %p462 = pneg %p152
        %p463 = pneg %p176
        %p464 = pneg %p173
        %p465 = pneg %p197
        %p466 = pneg %p194
        %p467 = pneg %p218
        %p468 = pneg %p215
        %p469 = pneg %p239
        %p470 = pneg %p236
        %p471 = pneg %p260
        %p472 = pneg %p257
        %p473 = pneg %p281
        %p474 = pneg %p278
        %p475 = pneg %p302
        %p476 = pneg %p299
        %p477 = pneg %p323
        %p478 = pneg %p320
        %p479 = pneg %p344
        %p480 = pneg %p341
        %p481 = pneg %p370
        %p482 = pneg %p367
        %s483 = sand.u32 %s357, 1
        %s484 = scalar_lea.sflag [#allocation3], %s483
        %s485 = sand.u32 %s357, 1
        %s486 = smul.addr %s485, 64
        %s487 = scalar_lea.vmem [#allocation2], %s486
        %p488 = scmp.lt.s32.totalorder %s29, 1
        %s489 = scalar_select %p488, %s29, 1
        %s490 = smul.addr %s489, 8
        %s491 = smul.addr %s490, 8
        %s492 = scalar_lea.vmem %s0, %s491
        %v494 = vld [vmem:[%s492] sm:$0xff]
        %v495 = vld [vmem:[%s492 + $0x8] sm:$0xff]
        %v496 = vld [vmem:[%s492 + $0x10] sm:$0xff]
        %v497 = vld [vmem:[%s492 + $0x18] sm:$0xff]
        %v498 = vld [vmem:[%s492 + $0x20] sm:$0xff]
        %v499 = vld [vmem:[%s492 + $0x28] sm:$0xff]
        %v500 = vld [vmem:[%s492 + $0x30] sm:$0xff]
        %v501 = vld [vmem:[%s492 + $0x38] sm:$0xff]
        %v502 = vpack.c.bf16 %v495, %v494
        %v503 = vpack.c.bf16 %v497, %v496
        %v504 = vpack.c.bf16 %v499, %v498
        %v505 = vpack.c.bf16 %v501, %v500
        %v506 = vld [vmem:[%s1] sm:$0xf]
        %v507 = vld [vmem:[%s1 + $0x4] sm:$0xf]
        %v508 = vld [vmem:[%s2] sm:$0xff]
        %v509 = vld [vmem:[%s2 + $0x8] sm:$0xff]
        %v510 = vld [vmem:[%s2 + $0x10] sm:$0xff]
        %v511 = vld [vmem:[%s2 + $0x18] sm:$0xff]
        %v512 = vld [vmem:[%s2 + $0x20] sm:$0xff]
        %v513 = vld [vmem:[%s2 + $0x28] sm:$0xff]
        %v514 = vld [vmem:[%s2 + $0x30] sm:$0xff]
        %v515 = vld [vmem:[%s2 + $0x38] sm:$0xff]
        %v518 = vunpack.c.l.b16 %v506
        %v519 = vunpack.c.l.b16 %v507
        %v520 = vpack.c.b16 %v519, %v518
        %vm522 = vcmask 130048
        %v524 = vsel %vm522, %v502, 0
        %v527 = vsel %vm522, %v503, 0
        %v530 = vsel %vm522, %v504, 0
        %v533 = vsel %vm522, %v505, 0
        %535 = vmatprep.subr.bf16.mxu0 0
        %536 = vmatpush1.bf16.msra.mxu0 %v520
        %537 = vmatprep.subr.bf16.mxu0 0
        %538 = vmatpush1.bf16.msra.mxu0 0
        %539 = vmatprep.subr.bf16.mxu0 0
        %540 = vmatpush1.bf16.msra.mxu0 0
        %541 = vmatprep.subr.bf16.mxu0 0
        %542 = vmatpush1.bf16.msra.mxu0 0
        %543 = vmatprep.subr.bf16.mxu0 0
        %544 = vmatpush1.bf16.msra.mxu0 0
        %545 = vmatprep.subr.bf16.mxu0 0
        %546 = vmatpush1.bf16.msra.mxu0 0
        %547 = vmatprep.subr.bf16.mxu0 0
        %548 = vmatpush1.bf16.msra.mxu0 0
        %549 = vmatprep.subr.bf16.mxu0 0
        %550 = vmatpush1.bf16.msra.mxu0 0
        %551 = vmatprep.subr.bf16.mxu0 0
        %552 = vmatpush1.bf16.msra.mxu0 0
        %553 = vmatprep.subr.bf16.mxu0 0
        %554 = vmatpush1.bf16.msra.mxu0 0
        %555 = vmatprep.subr.bf16.mxu0 0
        %556 = vmatpush1.bf16.msra.mxu0 0
        %557 = vmatprep.subr.bf16.mxu0 0
        %558 = vmatpush1.bf16.msra.mxu0 0
        %559 = vmatprep.subr.bf16.mxu0 0
        %560 = vmatpush1.bf16.msra.mxu0 0
        %561 = vmatprep.subr.bf16.mxu0 0
        %562 = vmatpush1.bf16.msra.mxu0 0
        %563 = vmatprep.subr.bf16.mxu0 0
        %564 = vmatpush1.bf16.msra.mxu0 0
        %565 = vmatprep.subr.bf16.mxu0 0
        %566 = vmatpush1.bf16.msra.mxu0 0
        %567 = vmatprep.mubr.bf16.mxu0 0
        %568 = vmatmul.mubr.bf16.gmra.mrb[0].mxu0 %v524
        %v569 = vpop.f32.mrb[0].mxu0
        %v570 = vadd.f32 %v508, %v569
        %v571 = vpop.f32.mrb[0].mxu0
        %v572 = vpop.f32.mrb[0].mxu0
        %v573 = vadd.f32 %v509, %v572
        %v574 = vpop.f32.mrb[0].mxu0
        %575 = vmatprep.mubr.bf16.mxu0 0
        %576 = vmatmul.mubr.bf16.gmra.mrb[0].mxu0 %v527
        %v577 = vpop.f32.mrb[0].mxu0
        %v578 = vadd.f32 %v510, %v577
        %v579 = vpop.f32.mrb[0].mxu0
        %v580 = vpop.f32.mrb[0].mxu0
        %v581 = vadd.f32 %v511, %v580
        %v582 = vpop.f32.mrb[0].mxu0
        %583 = vmatprep.mubr.bf16.mxu0 0
        %584 = vmatmul.mubr.bf16.gmra.mrb[0].mxu0 %v530
        %v585 = vpop.f32.mrb[0].mxu0
        %v586 = vadd.f32 %v512, %v585
        %v587 = vpop.f32.mrb[0].mxu0
        %v588 = vpop.f32.mrb[0].mxu0
        %v589 = vadd.f32 %v513, %v588
        %v590 = vpop.f32.mrb[0].mxu0
        %591 = vmatprep.mubr.bf16.mxu0 0
        %592 = vmatmul.mubr.bf16.gmra.mrb[0].mxu0 %v533
        %v593 = vpop.f32.mrb[0].mxu0
        %v594 = vadd.f32 %v514, %v593
        %v595 = vpop.f32.mrb[0].mxu0
        %v596 = vpop.f32.mrb[0].mxu0
        %v597 = vadd.f32 %v515, %v596
        %v598 = vpop.f32.mrb[0].mxu0
        %599 = vdwg.mxu0
        %v600 = vld [vmem:[%s4] sm:$0x1]
        %v601 = vld [vmem:[%s5] sm:$0x1]
        %vm602 = vcmask 261120
        %v603 = vsel %vm602, %v570, 0.0
        %604 = vadd.xlane.f32.xlu0 %v603
        %v605 = vpop.xlane.xlu0 %604
        %v606 = vsel %vm602, %v573, 0.0
        %607 = vadd.xlane.f32.xlu0 %v606
        %v608 = vpop.xlane.xlu0 %607
        %v609 = vsel %vm602, %v578, 0.0
        %610 = vadd.xlane.f32.xlu0 %v609
        %v611 = vpop.xlane.xlu0 %610
        %v612 = vsel %vm602, %v581, 0.0
        %613 = vadd.xlane.f32.xlu0 %v612
        %v614 = vpop.xlane.xlu0 %613
        %v615 = vsel %vm602, %v586, 0.0
        %616 = vadd.xlane.f32.xlu0 %v615
        %v617 = vpop.xlane.xlu0 %616
        %v618 = vsel %vm602, %v589, 0.0
        %619 = vadd.xlane.f32.xlu0 %v618
        %v620 = vpop.xlane.xlu0 %619
        %v621 = vsel %vm602, %v594, 0.0
        %622 = vadd.xlane.f32.xlu0 %v621
        %v623 = vpop.xlane.xlu0 %622
        %v624 = vsel %vm602, %v597, 0.0
        %625 = vadd.xlane.f32.xlu0 %v624
        %v626 = vpop.xlane.xlu0 %625
        %v627 = vrcp.pop 32.0
        %v628 = vmul.f32 %v605, %v627
        %v629 = vmul.f32 %v608, %v627
        %v630 = vmul.f32 %v611, %v627
        %v631 = vmul.f32 %v614, %v627
        %v632 = vmul.f32 %v617, %v627
        %v633 = vmul.f32 %v620, %v627
        %v634 = vmul.f32 %v623, %v627
        %v635 = vmul.f32 %v626, %v627
        %v636 = vsub.f32 %v570, %v628
        %v637 = vsub.f32 %v573, %v629
        %v638 = vsub.f32 %v578, %v630
        %v639 = vsub.f32 %v581, %v631
        %v640 = vsub.f32 %v586, %v632
        %v641 = vsub.f32 %v589, %v633
        %v642 = vsub.f32 %v594, %v634
        %v643 = vsub.f32 %v597, %v635
        %v644 = vmul.f32 %v636, %v636
        %v645 = vmul.f32 %v637, %v637
        %v646 = vmul.f32 %v638, %v638
        %v647 = vmul.f32 %v639, %v639
        %v648 = vmul.f32 %v640, %v640
        %v649 = vmul.f32 %v641, %v641
        %v650 = vmul.f32 %v642, %v642
        %v651 = vmul.f32 %v643, %v643
        %v652 = vsel %vm602, %v644, 0.0
        %653 = vadd.xlane.f32.xlu0 %v652
        %v654 = vpop.xlane.xlu0 %653
        %v655 = vsel %vm602, %v645, 0.0
        %656 = vadd.xlane.f32.xlu0 %v655
        %v657 = vpop.xlane.xlu0 %656
        %v658 = vsel %vm602, %v646, 0.0
        %659 = vadd.xlane.f32.xlu0 %v658
        %v660 = vpop.xlane.xlu0 %659
        %v661 = vsel %vm602, %v647, 0.0
        %662 = vadd.xlane.f32.xlu0 %v661
        %v663 = vpop.xlane.xlu0 %662
        %v664 = vsel %vm602, %v648, 0.0
        %665 = vadd.xlane.f32.xlu0 %v664
        %v666 = vpop.xlane.xlu0 %665
        %v667 = vsel %vm602, %v649, 0.0
        %668 = vadd.xlane.f32.xlu0 %v667
        %v669 = vpop.xlane.xlu0 %668
        %v670 = vsel %vm602, %v650, 0.0
        %671 = vadd.xlane.f32.xlu0 %v670
        %v672 = vpop.xlane.xlu0 %671
        %v673 = vsel %vm602, %v651, 0.0
        %674 = vadd.xlane.f32.xlu0 %v673
        %v675 = vpop.xlane.xlu0 %674
        %v676 = vmul.f32 %v654, %v627
        %v677 = vmul.f32 %v657, %v627
        %v678 = vmul.f32 %v660, %v627
        %v679 = vmul.f32 %v663, %v627
        %v680 = vmul.f32 %v666, %v627
        %v681 = vmul.f32 %v669, %v627
        %v682 = vmul.f32 %v672, %v627
        %v683 = vmul.f32 %v675, %v627
        %v684 = vadd.f32 %v676, 1e-05
        %v685 = vadd.f32 %v677, 1e-05
        %v686 = vadd.f32 %v678, 1e-05
        %v687 = vadd.f32 %v679, 1e-05
        %v688 = vadd.f32 %v680, 1e-05
        %v689 = vadd.f32 %v681, 1e-05
        %v690 = vadd.f32 %v682, 1e-05
        %v691 = vadd.f32 %v683, 1e-05
        %v692 = vrsqrt.pop %v684
        %v693 = vrsqrt.pop %v685
        %v694 = vrsqrt.pop %v686
        %v695 = vrsqrt.pop %v687
        %v696 = vrsqrt.pop %v688
        %v697 = vrsqrt.pop %v689
        %v698 = vrsqrt.pop %v690
        %v699 = vrsqrt.pop %v691
        %v700 = vmul.f32 %v636, %v692
        %v701 = vmul.f32 %v637, %v693
        %v702 = vmul.f32 %v638, %v694
        %v703 = vmul.f32 %v639, %v695
        %v704 = vmul.f32 %v640, %v696
        %v705 = vmul.f32 %v641, %v697
        %v706 = vmul.f32 %v642, %v698
        %v707 = vmul.f32 %v643, %v699
        %v709 = vlaneseq
        %v710 = vshrl.u32 %v709, 7
        %v711 = vsub.s32 0, %v710
        %v712 = vrot.slane %v600, %v711
        %v714 = vmul.f32 %v700, %v712
        %v715 = vmul.f32 %v701, %v712
        %v716 = vmul.f32 %v702, %v712
        %v717 = vmul.f32 %v703, %v712
        %v718 = vmul.f32 %v704, %v712
        %v719 = vmul.f32 %v705, %v712
        %v720 = vmul.f32 %v706, %v712
        %v721 = vmul.f32 %v707, %v712
        %v723 = vlaneseq
        %v724 = vshrl.u32 %v723, 7
        %v725 = vsub.s32 0, %v724
        %v726 = vrot.slane %v601, %v725
        %v728 = vadd.f32 %v714, %v726
        %v729 = vadd.f32 %v715, %v726
        %v730 = vadd.f32 %v716, %v726
        %v731 = vadd.f32 %v717, %v726
        %v732 = vadd.f32 %v718, %v726
        %v733 = vadd.f32 %v719, %v726
        %v734 = vadd.f32 %v720, %v726
        %v735 = vadd.f32 %v721, %v726
        %v736 = vpack.c.bf16 %v729, %v728
        %v737 = vpack.c.bf16 %v731, %v730
        %v738 = vpack.c.bf16 %v733, %v732
        %v739 = vpack.c.bf16 %v735, %v734
        %v740 = vld [vmem:[%s6] sm:$0xff]
        %v741 = vld [vmem:[%s6 + $0x8] sm:$0xff]
        %v742 = vld [vmem:[%s6 + $0x10] sm:$0xff]
        %v743 = vld [vmem:[%s6 + $0x18] sm:$0xff]
        %v744 = vld [vmem:[%s6 + $0x20] sm:$0xff]
        %v745 = vld [vmem:[%s6 + $0x28] sm:$0xff]
        %v746 = vld [vmem:[%s6 + $0x30] sm:$0xff]
        %v747 = vld [vmem:[%s6 + $0x38] sm:$0xff]
        %v748 = vld [vmem:[%s6 + $0x40] sm:$0xff]
        %v749 = vld [vmem:[%s6 + $0x48] sm:$0xff]
        %v750 = vld [vmem:[%s6 + $0x50] sm:$0xff]
        %v751 = vld [vmem:[%s6 + $0x58] sm:$0xff]
        %v752 = vld [vmem:[%s6 + $0x60] sm:$0xff]
        %v753 = vld [vmem:[%s6 + $0x68] sm:$0xff]
        %v754 = vld [vmem:[%s6 + $0x70] sm:$0xff]
        %v755 = vld [vmem:[%s6 + $0x78] sm:$0xff]
        %v756 = vld [vmem:[%s6 + $0x80] sm:$0xff]
        %v757 = vld [vmem:[%s6 + $0x88] sm:$0xff]
        %v758 = vld [vmem:[%s6 + $0x90] sm:$0xff]
        %v759 = vld [vmem:[%s6 + $0x98] sm:$0xff]
        %v760 = vld [vmem:[%s6 + $0xa0] sm:$0xff]
        %v761 = vld [vmem:[%s6 + $0xa8] sm:$0xff]
        %v762 = vld [vmem:[%s6 + $0xb0] sm:$0xff]
        %v763 = vld [vmem:[%s6 + $0xb8] sm:$0xff]
        %v764 = vld [vmem:[%s6 + $0xc0] sm:$0xff]
        %v765 = vld [vmem:[%s6 + $0xc8] sm:$0xff]
        %v766 = vld [vmem:[%s6 + $0xd0] sm:$0xff]
        %v767 = vld [vmem:[%s6 + $0xd8] sm:$0xff]
        %v768 = vld [vmem:[%s6 + $0xe0] sm:$0xff]
        %v769 = vld [vmem:[%s6 + $0xe8] sm:$0xff]
        %v770 = vld [vmem:[%s6 + $0xf0] sm:$0xff]
        %v771 = vld [vmem:[%s6 + $0xf8] sm:$0xff]
        %v772 = vld [vmem:[%s6 + $0x100] sm:$0xff]
        %v773 = vld [vmem:[%s6 + $0x108] sm:$0xff]
        %v774 = vld [vmem:[%s6 + $0x110] sm:$0xff]
        %v775 = vld [vmem:[%s6 + $0x118] sm:$0xff]
        %v776 = vld [vmem:[%s6 + $0x120] sm:$0xff]
        %v777 = vld [vmem:[%s6 + $0x128] sm:$0xff]
        %v778 = vld [vmem:[%s6 + $0x130] sm:$0xff]
        %v779 = vld [vmem:[%s6 + $0x138] sm:$0xff]
        %v780 = vld [vmem:[%s6 + $0x140] sm:$0xff]
        %v781 = vld [vmem:[%s6 + $0x148] sm:$0xff]
        %v782 = vld [vmem:[%s6 + $0x150] sm:$0xff]
        %v783 = vld [vmem:[%s6 + $0x158] sm:$0xff]
        %v784 = vld [vmem:[%s6 + $0x160] sm:$0xff]
        %v785 = vld [vmem:[%s6 + $0x168] sm:$0xff]
        %v786 = vld [vmem:[%s6 + $0x170] sm:$0xff]
        %v787 = vld [vmem:[%s6 + $0x178] sm:$0xff]
        %v788 = vpack.c.bf16 %v741, %v740
        %v789 = vpack.c.bf16 %v743, %v742
        %v790 = vpack.c.bf16 %v745, %v744
        %v791 = vpack.c.bf16 %v747, %v746
        %v792 = vpack.c.bf16 %v749, %v748
        %v793 = vpack.c.bf16 %v751, %v750
        %v794 = vpack.c.bf16 %v753, %v752
        %v795 = vpack.c.bf16 %v755, %v754
        %v796 = vpack.c.bf16 %v757, %v756
        %v797 = vpack.c.bf16 %v759, %v758
        %v798 = vpack.c.bf16 %v761, %v760
        %v799 = vpack.c.bf16 %v763, %v762
        %v800 = vpack.c.bf16 %v765, %v764
        %v801 = vpack.c.bf16 %v767, %v766
        %v802 = vpack.c.bf16 %v769, %v768
        %v803 = vpack.c.bf16 %v771, %v770
        %v804 = vpack.c.bf16 %v773, %v772
        %v805 = vpack.c.bf16 %v775, %v774
        %v806 = vpack.c.bf16 %v777, %v776
        %v807 = vpack.c.bf16 %v779, %v778
        %v808 = vpack.c.bf16 %v781, %v780
        %v809 = vpack.c.bf16 %v783, %v782
        %v810 = vpack.c.bf16 %v785, %v784
        %v811 = vpack.c.bf16 %v787, %v786
        %v813 = vsel %vm602, %v736, 0
        %v816 = vsel %vm602, %v737, 0
        %v819 = vsel %vm602, %v738, 0
        %v822 = vsel %vm602, %v739, 0
        %824 = vmatprep.subr.bf16.mxu0 0
        %825 = vmatpush1.bf16.msra.mxu0 %v788
        %826 = vmatprep.subr.bf16.mxu0 0
        %827 = vmatpush1.bf16.msra.mxu0 %v789
        %828 = vmatprep.subr.bf16.mxu0 0
        %829 = vmatpush1.bf16.msra.mxu0 0
        %830 = vmatprep.subr.bf16.mxu0 0
        %831 = vmatpush1.bf16.msra.mxu0 0
        %832 = vmatprep.subr.bf16.mxu0 0
        %833 = vmatpush1.bf16.msra.mxu0 0
        %834 = vmatprep.subr.bf16.mxu0 0
        %835 = vmatpush1.bf16.msra.mxu0 0
        %836 = vmatprep.subr.bf16.mxu0 0
        %837 = vmatpush1.bf16.msra.mxu0 0
        %838 = vmatprep.subr.bf16.mxu0 0
        %839 = vmatpush1.bf16.msra.mxu0 0
        %840 = vmatprep.subr.bf16.mxu0 0
        %841 = vmatpush1.bf16.msra.mxu0 0
        %842 = vmatprep.subr.bf16.mxu0 0
        %843 = vmatpush1.bf16.msra.mxu0 0
        %844 = vmatprep.subr.bf16.mxu0 0
        %845 = vmatpush1.bf16.msra.mxu0 0
        %846 = vmatprep.subr.bf16.mxu0 0
        %847 = vmatpush1.bf16.msra.mxu0 0
        %848 = vmatprep.subr.bf16.mxu0 0
        %849 = vmatpush1.bf16.msra.mxu0 0
        %850 = vmatprep.subr.bf16.mxu0 0
        %851 = vmatpush1.bf16.msra.mxu0 0
        %852 = vmatprep.subr.bf16.mxu0 0
        %853 = vmatpush1.bf16.msra.mxu0 0
        %854 = vmatprep.subr.bf16.mxu0 0
        %855 = vmatpush1.bf16.msra.mxu0 0
        %856 = vmatprep.mubr.bf16.mxu0 0
        %857 = vmatmul.mubr.bf16.gmra.mrb[0].mxu0 %v813
        %v858 = vpop.f32.mrb[0].mxu0
        %v859 = vadd.f32 0.0, %v858
        %v860 = vpop.f32.mrb[0].mxu0
        %v861 = vpop.f32.mrb[0].mxu0
        %v862 = vadd.f32 0.0, %v861
        %v863 = vpop.f32.mrb[0].mxu0
        %864 = vmatprep.mubr.bf16.mxu0 0
        %865 = vmatmul.mubr.bf16.gmra.mrb[0].mxu0 %v816
        %v866 = vpop.f32.mrb[0].mxu0
        %v867 = vadd.f32 0.0, %v866
        %v868 = vpop.f32.mrb[0].mxu0
        %v869 = vpop.f32.mrb[0].mxu0
        %v870 = vadd.f32 0.0, %v869
        %v871 = vpop.f32.mrb[0].mxu0
        %872 = vmatprep.mubr.bf16.mxu0 0
        %873 = vmatmul.mubr.bf16.gmra.mrb[0].mxu0 %v819
        %v874 = vpop.f32.mrb[0].mxu0
        %v875 = vadd.f32 0.0, %v874
        %v876 = vpop.f32.mrb[0].mxu0
        %v877 = vpop.f32.mrb[0].mxu0
        %v878 = vadd.f32 0.0, %v877
        %v879 = vpop.f32.mrb[0].mxu0
        %880 = vmatprep.mubr.bf16.mxu0 0
        %881 = vmatmul.mubr.bf16.gmra.mrb[0].mxu0 %v822
        %v882 = vpop.f32.mrb[0].mxu0
        %v883 = vadd.f32 0.0, %v882
        %v884 = vpop.f32.mrb[0].mxu0
        %v885 = vpop.f32.mrb[0].mxu0
        %v886 = vadd.f32 0.0, %v885
        %v887 = vpop.f32.mrb[0].mxu0
        %888 = vdwg.mxu0
        %889 = vmatprep.subr.bf16.mxu0 0
        %890 = vmatpush1.bf16.msra.mxu0 %v790
        %891 = vmatprep.subr.bf16.mxu0 0
        %892 = vmatpush1.bf16.msra.mxu0 %v791
        %893 = vmatprep.subr.bf16.mxu0 0
        %894 = vmatpush1.bf16.msra.mxu0 0
        %895 = vmatprep.subr.bf16.mxu0 0
        %896 = vmatpush1.bf16.msra.mxu0 0
        %897 = vmatprep.subr.bf16.mxu0 0
        %898 = vmatpush1.bf16.msra.mxu0 0
        %899 = vmatprep.subr.bf16.mxu0 0
        %900 = vmatpush1.bf16.msra.mxu0 0
        %901 = vmatprep.subr.bf16.mxu0 0
        %902 = vmatpush1.bf16.msra.mxu0 0
        %903 = vmatprep.subr.bf16.mxu0 0
        %904 = vmatpush1.bf16.msra.mxu0 0
        %905 = vmatprep.subr.bf16.mxu0 0
        %906 = vmatpush1.bf16.msra.mxu0 0
        %907 = vmatprep.subr.bf16.mxu0 0
        %908 = vmatpush1.bf16.msra.mxu0 0
        %909 = vmatprep.subr.bf16.mxu0 0
        %910 = vmatpush1.bf16.msra.mxu0 0
        %911 = vmatprep.subr.bf16.mxu0 0
        %912 = vmatpush1.bf16.msra.mxu0 0
        %913 = vmatprep.subr.bf16.mxu0 0
        %914 = vmatpush1.bf16.msra.mxu0 0
        %915 = vmatprep.subr.bf16.mxu0 0
        %916 = vmatpush1.bf16.msra.mxu0 0
        %917 = vmatprep.subr.bf16.mxu0 0
        %918 = vmatpush1.bf16.msra.mxu0 0
        %919 = vmatprep.subr.bf16.mxu0 0
        %920 = vmatpush1.bf16.msra.mxu0 0
        %921 = vmatprep.mubr.bf16.mxu0 0
        %922 = vmatmul.mubr.bf16.gmra.mrb[0].mxu0 %v813
        %v923 = vpop.f32.mrb[0].mxu0
        %v924 = vadd.f32 0.0, %v923
        %v925 = vpop.f32.mrb[0].mxu0
        %v926 = vpop.f32.mrb[0].mxu0
        %v927 = vadd.f32 0.0, %v926
        %v928 = vpop.f32.mrb[0].mxu0
        %929 = vmatprep.mubr.bf16.mxu0 0
        %930 = vmatmul.mubr.bf16.gmra.mrb[0].mxu0 %v816
        %v931 = vpop.f32.mrb[0].mxu0
        %v932 = vadd.f32 0.0, %v931
        %v933 = vpop.f32.mrb[0].mxu0
        %v934 = vpop.f32.mrb[0].mxu0
        %v935 = vadd.f32 0.0, %v934
        %v936 = vpop.f32.mrb[0].mxu0
        %937 = vmatprep.mubr.bf16.mxu0 0
        %938 = vmatmul.mubr.bf16.gmra.mrb[0].mxu0 %v819
        %v939 = vpop.f32.mrb[0].mxu0
        %v940 = vadd.f32 0.0, %v939
        %v941 = vpop.f32.mrb[0].mxu0
        %v942 = vpop.f32.mrb[0].mxu0
        %v943 = vadd.f32 0.0, %v942
        %v944 = vpop.f32.mrb[0].mxu0
        %945 = vmatprep.mubr.bf16.mxu0 0
        %946 = vmatmul.mubr.bf16.gmra.mrb[0].mxu0 %v822
        %v947 = vpop.f32.mrb[0].mxu0
        %v948 = vadd.f32 0.0, %v947
        %v949 = vpop.f32.mrb[0].mxu0
        %v950 = vpop.f32.mrb[0].mxu0
        %v951 = vadd.f32 0.0, %v950
        %v952 = vpop.f32.mrb[0].mxu0
        %953 = vdwg.mxu0
        %954 = vmatprep.subr.bf16.mxu0 0
        %955 = vmatpush1.bf16.msra.mxu0 %v792
        %956 = vmatprep.subr.bf16.mxu0 0
        %957 = vmatpush1.bf16.msra.mxu0 %v793
        %958 = vmatprep.subr.bf16.mxu0 0
        %959 = vmatpush1.bf16.msra.mxu0 0
        %960 = vmatprep.subr.bf16.mxu0 0
        %961 = vmatpush1.bf16.msra.mxu0 0
        %962 = vmatprep.subr.bf16.mxu0 0
        %963 = vmatpush1.bf16.msra.mxu0 0
        %964 = vmatprep.subr.bf16.mxu0 0
        %965 = vmatpush1.bf16.msra.mxu0 0
        %966 = vmatprep.subr.bf16.mxu0 0
        %967 = vmatpush1.bf16.msra.mxu0 0
        %968 = vmatprep.subr.bf16.mxu0 0
        %969 = vmatpush1.bf16.msra.mxu0 0
        %970 = vmatprep.subr.bf16.mxu0 0
        %971 = vmatpush1.bf16.msra.mxu0 0
        %972 = vmatprep.subr.bf16.mxu0 0
        %973 = vmatpush1.bf16.msra.mxu0 0
        %974 = vmatprep.subr.bf16.mxu0 0
        %975 = vmatpush1.bf16.msra.mxu0 0
        %976 = vmatprep.subr.bf16.mxu0 0
        %977 = vmatpush1.bf16.msra.mxu0 0
        %978 = vmatprep.subr.bf16.mxu0 0
        %979 = vmatpush1.bf16.msra.mxu0 0
        %980 = vmatprep.subr.bf16.mxu0 0
        %981 = vmatpush1.bf16.msra.mxu0 0
        %982 = vmatprep.subr.bf16.mxu0 0
        %983 = vmatpush1.bf16.msra.mxu0 0
        %984 = vmatprep.subr.bf16.mxu0 0
        %985 = vmatpush1.bf16.msra.mxu0 0
        %986 = vmatprep.mubr.bf16.mxu0 0
        %987 = vmatmul.mubr.bf16.gmra.mrb[0].mxu0 %v813
        %v988 = vpop.f32.mrb[0].mxu0
        %v989 = vadd.f32 0.0, %v988
        %v990 = vpop.f32.mrb[0].mxu0
        %v991 = vpop.f32.mrb[0].mxu0
        %v992 = vadd.f32 0.0, %v991
        %v993 = vpop.f32.mrb[0].mxu0
        %994 = vmatprep.mubr.bf16.mxu0 0
        %995 = vmatmul.mubr.bf16.gmra.mrb[0].mxu0 %v816
        %v996 = vpop.f32.mrb[0].mxu0
        %v997 = vadd.f32 0.0, %v996
        %v998 = vpop.f32.mrb[0].mxu0
        %v999 = vpop.f32.mrb[0].mxu0
        %v1000 = vadd.f32 0.0, %v999
        %v1001 = vpop.f32.mrb[0].mxu0
        %1002 = vmatprep.mubr.bf16.mxu0 0
        %1003 = vmatmul.mubr.bf16.gmra.mrb[0].mxu0 %v819
        %v1004 = vpop.f32.mrb[0].mxu0
        %v1005 = vadd.f32 0.0, %v1004
        %v1006 = vpop.f32.mrb[0].mxu0
        %v1007 = vpop.f32.mrb[0].mxu0
        %v1008 = vadd.f32 0.0, %v1007
        %v1009 = vpop.f32.mrb[0].mxu0
        %1010 = vmatprep.mubr.bf16.mxu0 0
        %1011 = vmatmul.mubr.bf16.gmra.mrb[0].mxu0 %v822
        %v1012 = vpop.f32.mrb[0].mxu0
        %v1013 = vadd.f32 0.0, %v1012
        %v1014 = vpop.f32.mrb[0].mxu0
        %v1015 = vpop.f32.mrb[0].mxu0
        %v1016 = vadd.f32 0.0, %v1015
        %v1017 = vpop.f32.mrb[0].mxu0
        %1018 = vdwg.mxu0
        %1019 = vmatprep.subr.bf16.mxu0 0
        %1020 = vmatpush1.bf16.msra.mxu0 %v794
        %1021 = vmatprep.subr.bf16.mxu0 0
        %1022 = vmatpush1.bf16.msra.mxu0 %v795
        %1023 = vmatprep.subr.bf16.mxu0 0
        %1024 = vmatpush1.bf16.msra.mxu0 0
        %1025 = vmatprep.subr.bf16.mxu0 0
        %1026 = vmatpush1.bf16.msra.mxu0 0
        %1027 = vmatprep.subr.bf16.mxu0 0
        %1028 = vmatpush1.bf16.msra.mxu0 0
        %1029 = vmatprep.subr.bf16.mxu0 0
        %1030 = vmatpush1.bf16.msra.mxu0 0
        %1031 = vmatprep.subr.bf16.mxu0 0
        %1032 = vmatpush1.bf16.msra.mxu0 0
        %1033 = vmatprep.subr.bf16.mxu0 0
        %1034 = vmatpush1.bf16.msra.mxu0 0
        %1035 = vmatprep.subr.bf16.mxu0 0
        %1036 = vmatpush1.bf16.msra.mxu0 0
        %1037 = vmatprep.subr.bf16.mxu0 0
        %1038 = vmatpush1.bf16.msra.mxu0 0
        %1039 = vmatprep.subr.bf16.mxu0 0
        %1040 = vmatpush1.bf16.msra.mxu0 0
        %1041 = vmatprep.subr.bf16.mxu0 0
        %1042 = vmatpush1.bf16.msra.mxu0 0
        %1043 = vmatprep.subr.bf16.mxu0 0
        %1044 = vmatpush1.bf16.msra.mxu0 0
        %1045 = vmatprep.subr.bf16.mxu0 0
        %1046 = vmatpush1.bf16.msra.mxu0 0
        %1047 = vmatprep.subr.bf16.mxu0 0
        %1048 = vmatpush1.bf16.msra.mxu0 0
        %1049 = vmatprep.subr.bf16.mxu0 0
        %1050 = vmatpush1.bf16.msra.mxu0 0
        %1051 = vmatprep.mubr.bf16.mxu0 0
        %1052 = vmatmul.mubr.bf16.gmra.mrb[0].mxu0 %v813
        %v1053 = vpop.f32.mrb[0].mxu0
        %v1054 = vadd.f32 0.0, %v1053
        %v1055 = vpop.f32.mrb[0].mxu0
        %v1056 = vpop.f32.mrb[0].mxu0
        %v1057 = vadd.f32 0.0, %v1056
        %v1058 = vpop.f32.mrb[0].mxu0
        %1059 = vmatprep.mubr.bf16.mxu0 0
        %1060 = vmatmul.mubr.bf16.gmra.mrb[0].mxu0 %v816
        %v1061 = vpop.f32.mrb[0].mxu0
        %v1062 = vadd.f32 0.0, %v1061
        %v1063 = vpop.f32.mrb[0].mxu0
        %v1064 = vpop.f32.mrb[0].mxu0
        %v1065 = vadd.f32 0.0, %v1064
        %v1066 = vpop.f32.mrb[0].mxu0
        %1067 = vmatprep.mubr.bf16.mxu0 0
        %1068 = vmatmul.mubr.bf16.gmra.mrb[0].mxu0 %v819
        %v1069 = vpop.f32.mrb[0].mxu0
        %v1070 = vadd.f32 0.0, %v1069
        %v1071 = vpop.f32.mrb[0].mxu0
        %v1072 = vpop.f32.mrb[0].mxu0
        %v1073 = vadd.f32 0.0, %v1072
        %v1074 = vpop.f32.mrb[0].mxu0
        %1075 = vmatprep.mubr.bf16.mxu0 0
        %1076 = vmatmul.mubr.bf16.gmra.mrb[0].mxu0 %v822
        %v1077 = vpop.f32.mrb[0].mxu0
        %v1078 = vadd.f32 0.0, %v1077
        %v1079 = vpop.f32.mrb[0].mxu0
        %v1080 = vpop.f32.mrb[0].mxu0
        %v1081 = vadd.f32 0.0, %v1080
        %v1082 = vpop.f32.mrb[0].mxu0
        %1083 = vdwg.mxu0
        %1084 = vmatprep.subr.bf16.mxu0 0
        %1085 = vmatpush1.bf16.msra.mxu0 %v796
        %1086 = vmatprep.subr.bf16.mxu0 0
        %1087 = vmatpush1.bf16.msra.mxu0 %v797
        %1088 = vmatprep.subr.bf16.mxu0 0
        %1089 = vmatpush1.bf16.msra.mxu0 0
        %1090 = vmatprep.subr.bf16.mxu0 0
        %1091 = vmatpush1.bf16.msra.mxu0 0
        %1092 = vmatprep.subr.bf16.mxu0 0
        %1093 = vmatpush1.bf16.msra.mxu0 0
        %1094 = vmatprep.subr.bf16.mxu0 0
        %1095 = vmatpush1.bf16.msra.mxu0 0
        %1096 = vmatprep.subr.bf16.mxu0 0
        %1097 = vmatpush1.bf16.msra.mxu0 0
        %1098 = vmatprep.subr.bf16.mxu0 0
        %1099 = vmatpush1.bf16.msra.mxu0 0
        %1100 = vmatprep.subr.bf16.mxu0 0
        %1101 = vmatpush1.bf16.msra.mxu0 0
        %1102 = vmatprep.subr.bf16.mxu0 0
        %1103 = vmatpush1.bf16.msra.mxu0 0
        %1104 = vmatprep.subr.bf16.mxu0 0
        %1105 = vmatpush1.bf16.msra.mxu0 0
        %1106 = vmatprep.subr.bf16.mxu0 0
        %1107 = vmatpush1.bf16.msra.mxu0 0
        %1108 = vmatprep.subr.bf16.mxu0 0
        %1109 = vmatpush1.bf16.msra.mxu0 0
        %1110 = vmatprep.subr.bf16.mxu0 0
        %1111 = vmatpush1.bf16.msra.mxu0 0
        %1112 = vmatprep.subr.bf16.mxu0 0
        %1113 = vmatpush1.bf16.msra.mxu0 0
        %1114 = vmatprep.subr.bf16.mxu0 0
        %1115 = vmatpush1.bf16.msra.mxu0 0
        %1116 = vmatprep.mubr.bf16.mxu0 0
        %1117 = vmatmul.mubr.bf16.gmra.mrb[0].mxu0 %v813
        %v1118 = vpop.f32.mrb[0].mxu0
        %v1119 = vadd.f32 0.0, %v1118
        %v1120 = vpop.f32.mrb[0].mxu0
        %v1121 = vpop.f32.mrb[0].mxu0
        %v1122 = vadd.f32 0.0, %v1121
        %v1123 = vpop.f32.mrb[0].mxu0
        %1124 = vmatprep.mubr.bf16.mxu0 0
        %1125 = vmatmul.mubr.bf16.gmra.mrb[0].mxu0 %v816
        %v1126 = vpop.f32.mrb[0].mxu0
        %v1127 = vadd.f32 0.0, %v1126
        %v1128 = vpop.f32.mrb[0].mxu0
        %v1129 = vpop.f32.mrb[0].mxu0
        %v1130 = vadd.f32 0.0, %v1129
        %v1131 = vpop.f32.mrb[0].mxu0
        %1132 = vmatprep.mubr.bf16.mxu0 0
        %1133 = vmatmul.mubr.bf16.gmra.mrb[0].mxu0 %v819
        %v1134 = vpop.f32.mrb[0].mxu0
        %v1135 = vadd.f32 0.0, %v1134
        %v1136 = vpop.f32.mrb[0].mxu0
        %v1137 = vpop.f32.mrb[0].mxu0
        %v1138 = vadd.f32 0.0, %v1137
        %v1139 = vpop.f32.mrb[0].mxu0
        %1140 = vmatprep.mubr.bf16.mxu0 0
        %1141 = vmatmul.mubr.bf16.gmra.mrb[0].mxu0 %v822
        %v1142 = vpop.f32.mrb[0].mxu0
        %v1143 = vadd.f32 0.0, %v1142
        %v1144 = vpop.f32.mrb[0].mxu0
        %v1145 = vpop.f32.mrb[0].mxu0
        %v1146 = vadd.f32 0.0, %v1145
        %v1147 = vpop.f32.mrb[0].mxu0
        %1148 = vdwg.mxu0
        %1149 = vmatprep.subr.bf16.mxu0 0
        %1150 = vmatpush1.bf16.msra.mxu0 %v798
        %1151 = vmatprep.subr.bf16.mxu0 0
        %1152 = vmatpush1.bf16.msra.mxu0 %v799
        %1153 = vmatprep.subr.bf16.mxu0 0
        %1154 = vmatpush1.bf16.msra.mxu0 0
        %1155 = vmatprep.subr.bf16.mxu0 0
        %1156 = vmatpush1.bf16.msra.mxu0 0
        %1157 = vmatprep.subr.bf16.mxu0 0
        %1158 = vmatpush1.bf16.msra.mxu0 0
        %1159 = vmatprep.subr.bf16.mxu0 0
        %1160 = vmatpush1.bf16.msra.mxu0 0
        %1161 = vmatprep.subr.bf16.mxu0 0
        %1162 = vmatpush1.bf16.msra.mxu0 0
        %1163 = vmatprep.subr.bf16.mxu0 0
        %1164 = vmatpush1.bf16.msra.mxu0 0
        %1165 = vmatprep.subr.bf16.mxu0 0
        %1166 = vmatpush1.bf16.msra.mxu0 0
        %1167 = vmatprep.subr.bf16.mxu0 0
        %1168 = vmatpush1.bf16.msra.mxu0 0
        %1169 = vmatprep.subr.bf16.mxu0 0
        %1170 = vmatpush1.bf16.msra.mxu0 0
        %1171 = vmatprep.subr.bf16.mxu0 0
        %1172 = vmatpush1.bf16.msra.mxu0 0
        %1173 = vmatprep.subr.bf16.mxu0 0
        %1174 = vmatpush1.bf16.msra.mxu0 0
        %1175 = vmatprep.subr.bf16.mxu0 0
        %1176 = vmatpush1.bf16.msra.mxu0 0
        %1177 = vmatprep.subr.bf16.mxu0 0
        %1178 = vmatpush1.bf16.msra.mxu0 0
        %1179 = vmatprep.subr.bf16.mxu0 0
        %1180 = vmatpush1.bf16.msra.mxu0 0
        %1181 = vmatprep.mubr.bf16.mxu0 0
        %1182 = vmatmul.mubr.bf16.gmra.mrb[0].mxu0 %v813
        %v1183 = vpop.f32.mrb[0].mxu0
        %v1184 = vadd.f32 0.0, %v1183
        %v1185 = vpop.f32.mrb[0].mxu0
        %v1186 = vpop.f32.mrb[0].mxu0
        %v1187 = vadd.f32 0.0, %v1186
        %v1188 = vpop.f32.mrb[0].mxu0
        %1189 = vmatprep.mubr.bf16.mxu0 0
        %1190 = vmatmul.mubr.bf16.gmra.mrb[0].mxu0 %v816
        %v1191 = vpop.f32.mrb[0].mxu0
        %v1192 = vadd.f32 0.0, %v1191
        %v1193 = vpop.f32.mrb[0].mxu0
        %v1194 = vpop.f32.mrb[0].mxu0
        %v1195 = vadd.f32 0.0, %v1194
        %v1196 = vpop.f32.mrb[0].mxu0
        %1197 = vmatprep.mubr.bf16.mxu0 0
        %1198 = vmatmul.mubr.bf16.gmra.mrb[0].mxu0 %v819
        %v1199 = vpop.f32.mrb[0].mxu0
        %v1200 = vadd.f32 0.0, %v1199
        %v1201 = vpop.f32.mrb[0].mxu0
        %v1202 = vpop.f32.mrb[0].mxu0
        %v1203 = vadd.f32 0.0, %v1202
        %v1204 = vpop.f32.mrb[0].mxu0
        %1205 = vmatprep.mubr.bf16.mxu0 0
        %1206 = vmatmul.mubr.bf16.gmra.mrb[0].mxu0 %v822
        %v1207 = vpop.f32.mrb[0].mxu0
        %v1208 = vadd.f32 0.0, %v1207
        %v1209 = vpop.f32.mrb[0].mxu0
        %v1210 = vpop.f32.mrb[0].mxu0
        %v1211 = vadd.f32 0.0, %v1210
        %v1212 = vpop.f32.mrb[0].mxu0
        %1213 = vdwg.mxu0
        %1214 = vmatprep.subr.bf16.mxu0 0
        %1215 = vmatpush1.bf16.msra.mxu0 %v800
        %1216 = vmatprep.subr.bf16.mxu0 0
        %1217 = vmatpush1.bf16.msra.mxu0 %v801
        %1218 = vmatprep.subr.bf16.mxu0 0
        %1219 = vmatpush1.bf16.msra.mxu0 0
        %1220 = vmatprep.subr.bf16.mxu0 0
        %1221 = vmatpush1.bf16.msra.mxu0 0
        %1222 = vmatprep.subr.bf16.mxu0 0
        %1223 = vmatpush1.bf16.msra.mxu0 0
        %1224 = vmatprep.subr.bf16.mxu0 0
        %1225 = vmatpush1.bf16.msra.mxu0 0
        %1226 = vmatprep.subr.bf16.mxu0 0
        %1227 = vmatpush1.bf16.msra.mxu0 0
        %1228 = vmatprep.subr.bf16.mxu0 0
        %1229 = vmatpush1.bf16.msra.mxu0 0
        %1230 = vmatprep.subr.bf16.mxu0 0
        %1231 = vmatpush1.bf16.msra.mxu0 0
        %1232 = vmatprep.subr.bf16.mxu0 0
        %1233 = vmatpush1.bf16.msra.mxu0 0
        %1234 = vmatprep.subr.bf16.mxu0 0
        %1235 = vmatpush1.bf16.msra.mxu0 0
        %1236 = vmatprep.subr.bf16.mxu0 0
        %1237 = vmatpush1.bf16.msra.mxu0 0
        %1238 = vmatprep.subr.bf16.mxu0 0
        %1239 = vmatpush1.bf16.msra.mxu0 0
        %1240 = vmatprep.subr.bf16.mxu0 0
        %1241 = vmatpush1.bf16.msra.mxu0 0
        %1242 = vmatprep.subr.bf16.mxu0 0
        %1243 = vmatpush1.bf16.msra.mxu0 0
        %1244 = vmatprep.subr.bf16.mxu0 0
        %1245 = vmatpush1.bf16.msra.mxu0 0
        %1246 = vmatprep.mubr.bf16.mxu0 0
        %1247 = vmatmul.mubr.bf16.gmra.mrb[0].mxu0 %v813
        %v1248 = vpop.f32.mrb[0].mxu0
        %v1249 = vadd.f32 0.0, %v1248
        %v1250 = vpop.f32.mrb[0].mxu0
        %v1251 = vpop.f32.mrb[0].mxu0
        %v1252 = vadd.f32 0.0, %v1251
        %v1253 = vpop.f32.mrb[0].mxu0
        %1254 = vmatprep.mubr.bf16.mxu0 0
        %1255 = vmatmul.mubr.bf16.gmra.mrb[0].mxu0 %v816
        %v1256 = vpop.f32.mrb[0].mxu0
        %v1257 = vadd.f32 0.0, %v1256
        %v1258 = vpop.f32.mrb[0].mxu0
        %v1259 = vpop.f32.mrb[0].mxu0
        %v1260 = vadd.f32 0.0, %v1259
        %v1261 = vpop.f32.mrb[0].mxu0
        %1262 = vmatprep.mubr.bf16.mxu0 0
        %1263 = vmatmul.mubr.bf16.gmra.mrb[0].mxu0 %v819
        %v1264 = vpop.f32.mrb[0].mxu0
        %v1265 = vadd.f32 0.0, %v1264
        %v1266 = vpop.f32.mrb[0].mxu0
        %v1267 = vpop.f32.mrb[0].mxu0
        %v1268 = vadd.f32 0.0, %v1267
        %v1269 = vpop.f32.mrb[0].mxu0
        %1270 = vmatprep.mubr.bf16.mxu0 0
        %1271 = vmatmul.mubr.bf16.gmra.mrb[0].mxu0 %v822
        %v1272 = vpop.f32.mrb[0].mxu0
        %v1273 = vadd.f32 0.0, %v1272
        %v1274 = vpop.f32.mrb[0].mxu0
        %v1275 = vpop.f32.mrb[0].mxu0
        %v1276 = vadd.f32 0.0, %v1275
        %v1277 = vpop.f32.mrb[0].mxu0
        %1278 = vdwg.mxu0
        %1279 = vmatprep.subr.bf16.mxu0 0
        %1280 = vmatpush1.bf16.msra.mxu0 %v802
        %1281 = vmatprep.subr.bf16.mxu0 0
        %1282 = vmatpush1.bf16.msra.mxu0 %v803
        %1283 = vmatprep.subr.bf16.mxu0 0
        %1284 = vmatpush1.bf16.msra.mxu0 0
        %1285 = vmatprep.subr.bf16.mxu0 0
        %1286 = vmatpush1.bf16.msra.mxu0 0
        %1287 = vmatprep.subr.bf16.mxu0 0
        %1288 = vmatpush1.bf16.msra.mxu0 0
        %1289 = vmatprep.subr.bf16.mxu0 0
        %1290 = vmatpush1.bf16.msra.mxu0 0
        %1291 = vmatprep.subr.bf16.mxu0 0
        %1292 = vmatpush1.bf16.msra.mxu0 0
        %1293 = vmatprep.subr.bf16.mxu0 0
        %1294 = vmatpush1.bf16.msra.mxu0 0
        %1295 = vmatprep.subr.bf16.mxu0 0
        %1296 = vmatpush1.bf16.msra.mxu0 0
        %1297 = vmatprep.subr.bf16.mxu0 0
        %1298 = vmatpush1.bf16.msra.mxu0 0
        %1299 = vmatprep.subr.bf16.mxu0 0
        %1300 = vmatpush1.bf16.msra.mxu0 0
        %1301 = vmatprep.subr.bf16.mxu0 0
        %1302 = vmatpush1.bf16.msra.mxu0 0
        %1303 = vmatprep.subr.bf16.mxu0 0
        %1304 = vmatpush1.bf16.msra.mxu0 0
        %1305 = vmatprep.subr.bf16.mxu0 0
        %1306 = vmatpush1.bf16.msra.mxu0 0
        %1307 = vmatprep.subr.bf16.mxu0 0
        %1308 = vmatpush1.bf16.msra.mxu0 0
        %1309 = vmatprep.subr.bf16.mxu0 0
        %1310 = vmatpush1.bf16.msra.mxu0 0
        %1311 = vmatprep.mubr.bf16.mxu0 0
        %1312 = vmatmul.mubr.bf16.gmra.mrb[0].mxu0 %v813
        %v1313 = vpop.f32.mrb[0].mxu0
        %v1314 = vadd.f32 0.0, %v1313
        %v1315 = vpop.f32.mrb[0].mxu0
        %v1316 = vpop.f32.mrb[0].mxu0
        %v1317 = vadd.f32 0.0, %v1316
        %v1318 = vpop.f32.mrb[0].mxu0
        %1319 = vmatprep.mubr.bf16.mxu0 0
        %1320 = vmatmul.mubr.bf16.gmra.mrb[0].mxu0 %v816
        %v1321 = vpop.f32.mrb[0].mxu0
        %v1322 = vadd.f32 0.0, %v1321
        %v1323 = vpop.f32.mrb[0].mxu0
        %v1324 = vpop.f32.mrb[0].mxu0
        %v1325 = vadd.f32 0.0, %v1324
        %v1326 = vpop.f32.mrb[0].mxu0
        %1327 = vmatprep.mubr.bf16.mxu0 0
        %1328 = vmatmul.mubr.bf16.gmra.mrb[0].mxu0 %v819
        %v1329 = vpop.f32.mrb[0].mxu0
        %v1330 = vadd.f32 0.0, %v1329
        %v1331 = vpop.f32.mrb[0].mxu0
        %v1332 = vpop.f32.mrb[0].mxu0
        %v1333 = vadd.f32 0.0, %v1332
        %v1334 = vpop.f32.mrb[0].mxu0
        %1335 = vmatprep.mubr.bf16.mxu0 0
        %1336 = vmatmul.mubr.bf16.gmra.mrb[0].mxu0 %v822
        %v1337 = vpop.f32.mrb[0].mxu0
        %v1338 = vadd.f32 0.0, %v1337
        %v1339 = vpop.f32.mrb[0].mxu0
        %v1340 = vpop.f32.mrb[0].mxu0
        %v1341 = vadd.f32 0.0, %v1340
        %v1342 = vpop.f32.mrb[0].mxu0
        %1343 = vdwg.mxu0
        %1344 = vmatprep.subr.bf16.mxu0 0
        %1345 = vmatpush1.bf16.msra.mxu0 %v804
        %1346 = vmatprep.subr.bf16.mxu0 0
        %1347 = vmatpush1.bf16.msra.mxu0 %v805
        %1348 = vmatprep.subr.bf16.mxu0 0
        %1349 = vmatpush1.bf16.msra.mxu0 0
        %1350 = vmatprep.subr.bf16.mxu0 0
        %1351 = vmatpush1.bf16.msra.mxu0 0
        %1352 = vmatprep.subr.bf16.mxu0 0
        %1353 = vmatpush1.bf16.msra.mxu0 0
        %1354 = vmatprep.subr.bf16.mxu0 0
        %1355 = vmatpush1.bf16.msra.mxu0 0
        %1356 = vmatprep.subr.bf16.mxu0 0
        %1357 = vmatpush1.bf16.msra.mxu0 0
        %1358 = vmatprep.subr.bf16.mxu0 0
        %1359 = vmatpush1.bf16.msra.mxu0 0
        %1360 = vmatprep.subr.bf16.mxu0 0
        %1361 = vmatpush1.bf16.msra.mxu0 0
        %1362 = vmatprep.subr.bf16.mxu0 0
        %1363 = vmatpush1.bf16.msra.mxu0 0
        %1364 = vmatprep.subr.bf16.mxu0 0
        %1365 = vmatpush1.bf16.msra.mxu0 0
        %1366 = vmatprep.subr.bf16.mxu0 0
        %1367 = vmatpush1.bf16.msra.mxu0 0
        %1368 = vmatprep.subr.bf16.mxu0 0
        %1369 = vmatpush1.bf16.msra.mxu0 0
        %1370 = vmatprep.subr.bf16.mxu0 0
        %1371 = vmatpush1.bf16.msra.mxu0 0
        %1372 = vmatprep.subr.bf16.mxu0 0
        %1373 = vmatpush1.bf16.msra.mxu0 0
        %1374 = vmatprep.subr.bf16.mxu0 0
        %1375 = vmatpush1.bf16.msra.mxu0 0
        %1376 = vmatprep.mubr.bf16.mxu0 0
        %1377 = vmatmul.mubr.bf16.gmra.mrb[0].mxu0 %v813
        %v1378 = vpop.f32.mrb[0].mxu0
        %v1379 = vadd.f32 0.0, %v1378
        %v1380 = vpop.f32.mrb[0].mxu0
        %v1381 = vpop.f32.mrb[0].mxu0
        %v1382 = vadd.f32 0.0, %v1381
        %v1383 = vpop.f32.mrb[0].mxu0
        %1384 = vmatprep.mubr.bf16.mxu0 0
        %1385 = vmatmul.mubr.bf16.gmra.mrb[0].mxu0 %v816
        %v1386 = vpop.f32.mrb[0].mxu0
        %v1387 = vadd.f32 0.0, %v1386
        %v1388 = vpop.f32.mrb[0].mxu0
        %v1389 = vpop.f32.mrb[0].mxu0
        %v1390 = vadd.f32 0.0, %v1389
        %v1391 = vpop.f32.mrb[0].mxu0
        %1392 = vmatprep.mubr.bf16.mxu0 0
        %1393 = vmatmul.mubr.bf16.gmra.mrb[0].mxu0 %v819
        %v1394 = vpop.f32.mrb[0].mxu0
        %v1395 = vadd.f32 0.0, %v1394
        %v1396 = vpop.f32.mrb[0].mxu0
        %v1397 = vpop.f32.mrb[0].mxu0
        %v1398 = vadd.f32 0.0, %v1397
        %v1399 = vpop.f32.mrb[0].mxu0
        %1400 = vmatprep.mubr.bf16.mxu0 0
        %1401 = vmatmul.mubr.bf16.gmra.mrb[0].mxu0 %v822
        %v1402 = vpop.f32.mrb[0].mxu0
        %v1403 = vadd.f32 0.0, %v1402
        %v1404 = vpop.f32.mrb[0].mxu0
        %v1405 = vpop.f32.mrb[0].mxu0
        %v1406 = vadd.f32 0.0, %v1405
        %v1407 = vpop.f32.mrb[0].mxu0
        %1408 = vdwg.mxu0
        %1409 = vmatprep.subr.bf16.mxu0 0
        %1410 = vmatpush1.bf16.msra.mxu0 %v806
        %1411 = vmatprep.subr.bf16.mxu0 0
        %1412 = vmatpush1.bf16.msra.mxu0 %v807
        %1413 = vmatprep.subr.bf16.mxu0 0
        %1414 = vmatpush1.bf16.msra.mxu0 0
        %1415 = vmatprep.subr.bf16.mxu0 0
        %1416 = vmatpush1.bf16.msra.mxu0 0
        %1417 = vmatprep.subr.bf16.mxu0 0
        %1418 = vmatpush1.bf16.msra.mxu0 0
        %1419 = vmatprep.subr.bf16.mxu0 0
        %1420 = vmatpush1.bf16.msra.mxu0 0
        %1421 = vmatprep.subr.bf16.mxu0 0
        %1422 = vmatpush1.bf16.msra.mxu0 0
        %1423 = vmatprep.subr.bf16.mxu0 0
        %1424 = vmatpush1.bf16.msra.mxu0 0
        %1425 = vmatprep.subr.bf16.mxu0 0
        %1426 = vmatpush1.bf16.msra.mxu0 0
        %1427 = vmatprep.subr.bf16.mxu0 0
        %1428 = vmatpush1.bf16.msra.mxu0 0
        %1429 = vmatprep.subr.bf16.mxu0 0
        %1430 = vmatpush1.bf16.msra.mxu0 0
        %1431 = vmatprep.subr.bf16.mxu0 0
        %1432 = vmatpush1.bf16.msra.mxu0 0
        %1433 = vmatprep.subr.bf16.mxu0 0
        %1434 = vmatpush1.bf16.msra.mxu0 0
        %1435 = vmatprep.subr.bf16.mxu0 0
        %1436 = vmatpush1.bf16.msra.mxu0 0
        %1437 = vmatprep.subr.bf16.mxu0 0
        %1438 = vmatpush1.bf16.msra.mxu0 0
        %1439 = vmatprep.subr.bf16.mxu0 0
        %1440 = vmatpush1.bf16.msra.mxu0 0
        %1441 = vmatprep.mubr.bf16.mxu0 0
        %1442 = vmatmul.mubr.bf16.gmra.mrb[0].mxu0 %v813
        %v1443 = vpop.f32.mrb[0].mxu0
        %v1444 = vadd.f32 0.0, %v1443
        %v1445 = vpop.f32.mrb[0].mxu0
        %v1446 = vpop.f32.mrb[0].mxu0
        %v1447 = vadd.f32 0.0, %v1446
        %v1448 = vpop.f32.mrb[0].mxu0
        %1449 = vmatprep.mubr.bf16.mxu0 0
        %1450 = vmatmul.mubr.bf16.gmra.mrb[0].mxu0 %v816
        %v1451 = vpop.f32.mrb[0].mxu0
        %v1452 = vadd.f32 0.0, %v1451
        %v1453 = vpop.f32.mrb[0].mxu0
        %v1454 = vpop.f32.mrb[0].mxu0
        %v1455 = vadd.f32 0.0, %v1454
        %v1456 = vpop.f32.mrb[0].mxu0
        %1457 = vmatprep.mubr.bf16.mxu0 0
        %1458 = vmatmul.mubr.bf16.gmra.mrb[0].mxu0 %v819
        %v1459 = vpop.f32.mrb[0].mxu0
        %v1460 = vadd.f32 0.0, %v1459
        %v1461 = vpop.f32.mrb[0].mxu0
        %v1462 = vpop.f32.mrb[0].mxu0
        %v1463 = vadd.f32 0.0, %v1462
        %v1464 = vpop.f32.mrb[0].mxu0
        %1465 = vmatprep.mubr.bf16.mxu0 0
        %1466 = vmatmul.mubr.bf16.gmra.mrb[0].mxu0 %v822
        %v1467 = vpop.f32.mrb[0].mxu0
        %v1468 = vadd.f32 0.0, %v1467
        %v1469 = vpop.f32.mrb[0].mxu0
        %v1470 = vpop.f32.mrb[0].mxu0
        %v1471 = vadd.f32 0.0, %v1470
        %v1472 = vpop.f32.mrb[0].mxu0
        %1473 = vdwg.mxu0
        %1474 = vmatprep.subr.bf16.mxu0 0
        %1475 = vmatpush1.bf16.msra.mxu0 %v808
        %1476 = vmatprep.subr.bf16.mxu0 0
        %1477 = vmatpush1.bf16.msra.mxu0 %v809
        %1478 = vmatprep.subr.bf16.mxu0 0
        %1479 = vmatpush1.bf16.msra.mxu0 0
        %1480 = vmatprep.subr.bf16.mxu0 0
        %1481 = vmatpush1.bf16.msra.mxu0 0
        %1482 = vmatprep.subr.bf16.mxu0 0
        %1483 = vmatpush1.bf16.msra.mxu0 0
        %1484 = vmatprep.subr.bf16.mxu0 0
        %1485 = vmatpush1.bf16.msra.mxu0 0
        %1486 = vmatprep.subr.bf16.mxu0 0
        %1487 = vmatpush1.bf16.msra.mxu0 0
        %1488 = vmatprep.subr.bf16.mxu0 0
        %1489 = vmatpush1.bf16.msra.mxu0 0
        %1490 = vmatprep.subr.bf16.mxu0 0
        %1491 = vmatpush1.bf16.msra.mxu0 0
        %1492 = vmatprep.subr.bf16.mxu0 0
        %1493 = vmatpush1.bf16.msra.mxu0 0
        %1494 = vmatprep.subr.bf16.mxu0 0
        %1495 = vmatpush1.bf16.msra.mxu0 0
        %1496 = vmatprep.subr.bf16.mxu0 0
        %1497 = vmatpush1.bf16.msra.mxu0 0
        %1498 = vmatprep.subr.bf16.mxu0 0
        %1499 = vmatpush1.bf16.msra.mxu0 0
        %1500 = vmatprep.subr.bf16.mxu0 0
        %1501 = vmatpush1.bf16.msra.mxu0 0
        %1502 = vmatprep.subr.bf16.mxu0 0
        %1503 = vmatpush1.bf16.msra.mxu0 0
        %1504 = vmatprep.subr.bf16.mxu0 0
        %1505 = vmatpush1.bf16.msra.mxu0 0
        %1506 = vmatprep.mubr.bf16.mxu0 0
        %1507 = vmatmul.mubr.bf16.gmra.mrb[0].mxu0 %v813
        %v1508 = vpop.f32.mrb[0].mxu0
        %v1509 = vadd.f32 0.0, %v1508
        %v1510 = vpop.f32.mrb[0].mxu0
        %v1511 = vpop.f32.mrb[0].mxu0
        %v1512 = vadd.f32 0.0, %v1511
        %v1513 = vpop.f32.mrb[0].mxu0
        %1514 = vmatprep.mubr.bf16.mxu0 0
        %1515 = vmatmul.mubr.bf16.gmra.mrb[0].mxu0 %v816
        %v1516 = vpop.f32.mrb[0].mxu0
        %v1517 = vadd.f32 0.0, %v1516
        %v1518 = vpop.f32.mrb[0].mxu0
        %v1519 = vpop.f32.mrb[0].mxu0
        %v1520 = vadd.f32 0.0, %v1519
        %v1521 = vpop.f32.mrb[0].mxu0
        %1522 = vmatprep.mubr.bf16.mxu0 0
        %1523 = vmatmul.mubr.bf16.gmra.mrb[0].mxu0 %v819
        %v1524 = vpop.f32.mrb[0].mxu0
        %v1525 = vadd.f32 0.0, %v1524
        %v1526 = vpop.f32.mrb[0].mxu0
        %v1527 = vpop.f32.mrb[0].mxu0
        %v1528 = vadd.f32 0.0, %v1527
        %v1529 = vpop.f32.mrb[0].mxu0
        %1530 = vmatprep.mubr.bf16.mxu0 0
        %1531 = vmatmul.mubr.bf16.gmra.mrb[0].mxu0 %v822
        %v1532 = vpop.f32.mrb[0].mxu0
        %v1533 = vadd.f32 0.0, %v1532
        %v1534 = vpop.f32.mrb[0].mxu0
        %v1535 = vpop.f32.mrb[0].mxu0
        %v1536 = vadd.f32 0.0, %v1535
        %v1537 = vpop.f32.mrb[0].mxu0
        %1538 = vdwg.mxu0
        %1539 = vmatprep.subr.bf16.mxu0 0
        %1540 = vmatpush1.bf16.msra.mxu0 %v810
        %1541 = vmatprep.subr.bf16.mxu0 0
        %1542 = vmatpush1.bf16.msra.mxu0 %v811
        %1543 = vmatprep.subr.bf16.mxu0 0
        %1544 = vmatpush1.bf16.msra.mxu0 0
        %1545 = vmatprep.subr.bf16.mxu0 0
        %1546 = vmatpush1.bf16.msra.mxu0 0
        %1547 = vmatprep.subr.bf16.mxu0 0
        %1548 = vmatpush1.bf16.msra.mxu0 0
        %1549 = vmatprep.subr.bf16.mxu0 0
        %1550 = vmatpush1.bf16.msra.mxu0 0
        %1551 = vmatprep.subr.bf16.mxu0 0
        %1552 = vmatpush1.bf16.msra.mxu0 0
        %1553 = vmatprep.subr.bf16.mxu0 0
        %1554 = vmatpush1.bf16.msra.mxu0 0
        %1555 = vmatprep.subr.bf16.mxu0 0
        %1556 = vmatpush1.bf16.msra.mxu0 0
        %1557 = vmatprep.subr.bf16.mxu0 0
        %1558 = vmatpush1.bf16.msra.mxu0 0
        %1559 = vmatprep.subr.bf16.mxu0 0
        %1560 = vmatpush1.bf16.msra.mxu0 0
        %1561 = vmatprep.subr.bf16.mxu0 0
        %1562 = vmatpush1.bf16.msra.mxu0 0
        %1563 = vmatprep.subr.bf16.mxu0 0
        %1564 = vmatpush1.bf16.msra.mxu0 0
        %1565 = vmatprep.subr.bf16.mxu0 0
        %1566 = vmatpush1.bf16.msra.mxu0 0
        %1567 = vmatprep.subr.bf16.mxu0 0
        %1568 = vmatpush1.bf16.msra.mxu0 0
        %1569 = vmatprep.subr.bf16.mxu0 0
        %1570 = vmatpush1.bf16.msra.mxu0 0
        %1571 = vmatprep.mubr.bf16.mxu0 0
        %1572 = vmatmul.mubr.bf16.gmra.mrb[0].mxu0 %v813
        %v1573 = vpop.f32.mrb[0].mxu0
        %v1574 = vadd.f32 0.0, %v1573
        %v1575 = vpop.f32.mrb[0].mxu0
        %v1576 = vpop.f32.mrb[0].mxu0
        %v1577 = vadd.f32 0.0, %v1576
        %v1578 = vpop.f32.mrb[0].mxu0
        %1579 = vmatprep.mubr.bf16.mxu0 0
        %1580 = vmatmul.mubr.bf16.gmra.mrb[0].mxu0 %v816
        %v1581 = vpop.f32.mrb[0].mxu0
        %v1582 = vadd.f32 0.0, %v1581
        %v1583 = vpop.f32.mrb[0].mxu0
        %v1584 = vpop.f32.mrb[0].mxu0
        %v1585 = vadd.f32 0.0, %v1584
        %v1586 = vpop.f32.mrb[0].mxu0
        %1587 = vmatprep.mubr.bf16.mxu0 0
        %1588 = vmatmul.mubr.bf16.gmra.mrb[0].mxu0 %v819
        %v1589 = vpop.f32.mrb[0].mxu0
        %v1590 = vadd.f32 0.0, %v1589
        %v1591 = vpop.f32.mrb[0].mxu0
        %v1592 = vpop.f32.mrb[0].mxu0
        %v1593 = vadd.f32 0.0, %v1592
        %v1594 = vpop.f32.mrb[0].mxu0
        %1595 = vmatprep.mubr.bf16.mxu0 0
        %1596 = vmatmul.mubr.bf16.gmra.mrb[0].mxu0 %v822
        %v1597 = vpop.f32.mrb[0].mxu0
        %v1598 = vadd.f32 0.0, %v1597
        %v1599 = vpop.f32.mrb[0].mxu0
        %v1600 = vpop.f32.mrb[0].mxu0
        %v1601 = vadd.f32 0.0, %v1600
        %v1602 = vpop.f32.mrb[0].mxu0
        %1603 = vdwg.mxu0
        %v1604 = vpack.c.bf16 %v862, %v859
        %v1605 = vpack.c.bf16 %v870, %v867
        %v1606 = vpack.c.bf16 %v878, %v875
        %v1607 = vpack.c.bf16 %v886, %v883
        %v1608 = vpack.c.bf16 %v927, %v924
        %v1609 = vpack.c.bf16 %v935, %v932
        %v1610 = vpack.c.bf16 %v943, %v940
        %v1611 = vpack.c.bf16 %v951, %v948
        %v1612 = vpack.c.bf16 %v992, %v989
        %v1613 = vpack.c.bf16 %v1000, %v997
        %v1614 = vpack.c.bf16 %v1008, %v1005
        %v1615 = vpack.c.bf16 %v1016, %v1013
        %v1616 = vpack.c.bf16 %v1057, %v1054
        %v1617 = vpack.c.bf16 %v1065, %v1062
        %v1618 = vpack.c.bf16 %v1073, %v1070
        %v1619 = vpack.c.bf16 %v1081, %v1078
        %v1620 = vpack.c.bf16 %v1122, %v1119
        %v1621 = vpack.c.bf16 %v1130, %v1127
        %v1622 = vpack.c.bf16 %v1138, %v1135
        %v1623 = vpack.c.bf16 %v1146, %v1143
        %v1624 = vpack.c.bf16 %v1187, %v1184
        %v1625 = vpack.c.bf16 %v1195, %v1192
        %v1626 = vpack.c.bf16 %v1203, %v1200
        %v1627 = vpack.c.bf16 %v1211, %v1208
        %v1628 = vpack.c.bf16 %v1252, %v1249
        %v1629 = vpack.c.bf16 %v1260, %v1257
        %v1630 = vpack.c.bf16 %v1268, %v1265
        %v1631 = vpack.c.bf16 %v1276, %v1273
        %v1632 = vpack.c.bf16 %v1317, %v1314
        %v1633 = vpack.c.bf16 %v1325, %v1322
        %v1634 = vpack.c.bf16 %v1333, %v1330
        %v1635 = vpack.c.bf16 %v1341, %v1338
        %v1636 = vpack.c.bf16 %v1382, %v1379
        %v1637 = vpack.c.bf16 %v1390, %v1387
        %v1638 = vpack.c.bf16 %v1398, %v1395
        %v1639 = vpack.c.bf16 %v1406, %v1403
        %v1640 = vpack.c.bf16 %v1447, %v1444
        %v1641 = vpack.c.bf16 %v1455, %v1452
        %v1642 = vpack.c.bf16 %v1463, %v1460
        %v1643 = vpack.c.bf16 %v1471, %v1468
        %v1644 = vpack.c.bf16 %v1512, %v1509
        %v1645 = vpack.c.bf16 %v1520, %v1517
        %v1646 = vpack.c.bf16 %v1528, %v1525
        %v1647 = vpack.c.bf16 %v1536, %v1533
        %v1648 = vpack.c.bf16 %v1577, %v1574
        %v1649 = vpack.c.bf16 %v1585, %v1582
        %v1650 = vpack.c.bf16 %v1593, %v1590
        %v1651 = vpack.c.bf16 %v1601, %v1598
        %v1652 = vld [vmem:[%s3] sm:$0xff]
        %v1653 = vld [vmem:[%s3 + $0x8] sm:$0xff]
        %v1654 = vld [vmem:[%s3 + $0x10] sm:$0xff]
        %v1655 = vld [vmem:[%s3 + $0x18] sm:$0xff]
        %v1656 = vld [vmem:[%s3 + $0x20] sm:$0xff]
        %v1657 = vld [vmem:[%s3 + $0x28] sm:$0xff]
        %v1658 = vld [vmem:[%s3 + $0x30] sm:$0xff]
        %v1659 = vld [vmem:[%s3 + $0x38] sm:$0xff]
        %v1660 = vld [vmem:[%s3 + $0x40] sm:$0xff]
        %v1661 = vld [vmem:[%s3 + $0x48] sm:$0xff]
        %v1662 = vld [vmem:[%s3 + $0x50] sm:$0xff]
        %v1663 = vld [vmem:[%s3 + $0x58] sm:$0xff]
        %v1664 = vld [vmem:[%s3 + $0x60] sm:$0xff]
        %v1665 = vld [vmem:[%s3 + $0x68] sm:$0xff]
        %v1666 = vld [vmem:[%s3 + $0x70] sm:$0xff]
        %v1667 = vld [vmem:[%s3 + $0x78] sm:$0xff]
        %v1668 = vld [vmem:[%s3 + $0x80] sm:$0xff]
        %v1669 = vld [vmem:[%s3 + $0x88] sm:$0xff]
        %v1670 = vld [vmem:[%s3 + $0x90] sm:$0xff]
        %v1671 = vld [vmem:[%s3 + $0x98] sm:$0xff]
        %v1672 = vld [vmem:[%s3 + $0xa0] sm:$0xff]
        %v1673 = vld [vmem:[%s3 + $0xa8] sm:$0xff]
        %v1674 = vld [vmem:[%s3 + $0xb0] sm:$0xff]
        %v1675 = vld [vmem:[%s3 + $0xb8] sm:$0xff]
        %v1676 = vld [vmem:[%s3 + $0xc0] sm:$0xff]
        %v1677 = vld [vmem:[%s3 + $0xc8] sm:$0xff]
        %v1678 = vld [vmem:[%s3 + $0xd0] sm:$0xff]
        %v1679 = vld [vmem:[%s3 + $0xd8] sm:$0xff]
        %v1680 = vld [vmem:[%s3 + $0xe0] sm:$0xff]
        %v1681 = vld [vmem:[%s3 + $0xe8] sm:$0xff]
        %v1682 = vld [vmem:[%s3 + $0xf0] sm:$0xff]
        %v1683 = vld [vmem:[%s3 + $0xf8] sm:$0xff]
        %vm1684 = vcmask 64512
        %v1686 = vsel %vm1684, %v1604, 0
        %v1689 = vsel %vm1684, %v1605, 0
        %v1692 = vsel %vm1684, %v1606, 0
        %v1695 = vsel %vm1684, %v1607, 0
        %v1698 = vsel %vm1684, %v1620, 0
        %v1701 = vsel %vm1684, %v1621, 0
        %v1704 = vsel %vm1684, %v1622, 0
        %v1707 = vsel %vm1684, %v1623, 0
        %1709 = vmatprep.subr.bf16.mxu0 0
        %1710 = vmatpush1.bf16.xpose.msra.mxu0 %v1698
        %1711 = vmatprep.subr.bf16.mxu0 0
        %1712 = vmatpush1.bf16.xpose.msra.mxu0 %v1701
        %1713 = vmatprep.subr.bf16.mxu0 0
        %1714 = vmatpush1.bf16.xpose.msra.mxu0 %v1704
        %1715 = vmatprep.subr.bf16.mxu0 0
        %1716 = vmatpush1.bf16.xpose.msra.mxu0 %v1707
        %1717 = vmatprep.subr.bf16.mxu0 0
        %1718 = vmatpush1.bf16.xpose.msra.mxu0 0
        %1719 = vmatprep.subr.bf16.mxu0 0
        %1720 = vmatpush1.bf16.xpose.msra.mxu0 0
        %1721 = vmatprep.subr.bf16.mxu0 0
        %1722 = vmatpush1.bf16.xpose.msra.mxu0 0
        %1723 = vmatprep.subr.bf16.mxu0 0
        %1724 = vmatpush1.bf16.xpose.msra.mxu0 0
        %1725 = vmatprep.subr.bf16.mxu0 0
        %1726 = vmatpush1.bf16.xpose.msra.mxu0 0
        %1727 = vmatprep.subr.bf16.mxu0 0
        %1728 = vmatpush1.bf16.xpose.msra.mxu0 0
        %1729 = vmatprep.subr.bf16.mxu0 0
        %1730 = vmatpush1.bf16.xpose.msra.mxu0 0
        %1731 = vmatprep.subr.bf16.mxu0 0
        %1732 = vmatpush1.bf16.xpose.msra.mxu0 0
        %1733 = vmatprep.subr.bf16.mxu0 0
        %1734 = vmatpush1.bf16.xpose.msra.mxu0 0
        %1735 = vmatprep.subr.bf16.mxu0 0
        %1736 = vmatpush1.bf16.xpose.msra.mxu0 0
        %1737 = vmatprep.subr.bf16.mxu0 0
        %1738 = vmatpush1.bf16.xpose.msra.mxu0 0
        %1739 = vmatprep.subr.bf16.mxu0 0
        %1740 = vmatpush1.bf16.xpose.msra.mxu0 0
        %1741 = vmatprep.mubr.bf16.mxu0 0
        %1742 = vmatmul.mubr.bf16.gmra.mrb[0].mxu0 %v1686
        %v1743 = vpop.f32.mrb[0].mxu0
        %v1744 = vadd.f32 %v1652, %v1743
        %v1745 = vpop.f32.mrb[0].mxu0
        %v1746 = vpop.f32.mrb[0].mxu0
        %v1747 = vadd.f32 %v1653, %v1746
        %v1748 = vpop.f32.mrb[0].mxu0
        %1749 = vmatprep.mubr.bf16.mxu0 0
        %1750 = vmatmul.mubr.bf16.gmra.mrb[0].mxu0 %v1689
        %v1751 = vpop.f32.mrb[0].mxu0
        %v1752 = vadd.f32 %v1654, %v1751
        %v1753 = vpop.f32.mrb[0].mxu0
        %v1754 = vpop.f32.mrb[0].mxu0
        %v1755 = vadd.f32 %v1655, %v1754
        %v1756 = vpop.f32.mrb[0].mxu0
        %1757 = vmatprep.mubr.bf16.mxu0 0
        %1758 = vmatmul.mubr.bf16.gmra.mrb[0].mxu0 %v1692
        %v1759 = vpop.f32.mrb[0].mxu0
        %v1760 = vadd.f32 %v1656, %v1759
        %v1761 = vpop.f32.mrb[0].mxu0
        %v1762 = vpop.f32.mrb[0].mxu0
        %v1763 = vadd.f32 %v1657, %v1762
        %v1764 = vpop.f32.mrb[0].mxu0
        %1765 = vmatprep.mubr.bf16.mxu0 0
        %1766 = vmatmul.mubr.bf16.gmra.mrb[0].mxu0 %v1695
        %v1767 = vpop.f32.mrb[0].mxu0
        %v1768 = vadd.f32 %v1658, %v1767
        %v1769 = vpop.f32.mrb[0].mxu0
        %v1770 = vpop.f32.mrb[0].mxu0
        %v1771 = vadd.f32 %v1659, %v1770
        %v1772 = vpop.f32.mrb[0].mxu0
        %1773 = vdwg.mxu0
        %v1775 = vsel %vm1684, %v1608, 0
        %v1778 = vsel %vm1684, %v1609, 0
        %v1781 = vsel %vm1684, %v1610, 0
        %v1784 = vsel %vm1684, %v1611, 0
        %v1787 = vsel %vm1684, %v1624, 0
        %v1790 = vsel %vm1684, %v1625, 0
        %v1793 = vsel %vm1684, %v1626, 0
        %v1796 = vsel %vm1684, %v1627, 0
        %1798 = vmatprep.subr.bf16.mxu0 0
        %1799 = vmatpush1.bf16.xpose.msra.mxu0 %v1787
        %1800 = vmatprep.subr.bf16.mxu0 0
        %1801 = vmatpush1.bf16.xpose.msra.mxu0 %v1790
        %1802 = vmatprep.subr.bf16.mxu0 0
        %1803 = vmatpush1.bf16.xpose.msra.mxu0 %v1793
        %1804 = vmatprep.subr.bf16.mxu0 0
        %1805 = vmatpush1.bf16.xpose.msra.mxu0 %v1796
        %1806 = vmatprep.subr.bf16.mxu0 0
        %1807 = vmatpush1.bf16.xpose.msra.mxu0 0
        %1808 = vmatprep.subr.bf16.mxu0 0
        %1809 = vmatpush1.bf16.xpose.msra.mxu0 0
        %1810 = vmatprep.subr.bf16.mxu0 0
        %1811 = vmatpush1.bf16.xpose.msra.mxu0 0
        %1812 = vmatprep.subr.bf16.mxu0 0
        %1813 = vmatpush1.bf16.xpose.msra.mxu0 0
        %1814 = vmatprep.subr.bf16.mxu0 0
        %1815 = vmatpush1.bf16.xpose.msra.mxu0 0
        %1816 = vmatprep.subr.bf16.mxu0 0
        %1817 = vmatpush1.bf16.xpose.msra.mxu0 0
        %1818 = vmatprep.subr.bf16.mxu0 0
        %1819 = vmatpush1.bf16.xpose.msra.mxu0 0
        %1820 = vmatprep.subr.bf16.mxu0 0
        %1821 = vmatpush1.bf16.xpose.msra.mxu0 0
        %1822 = vmatprep.subr.bf16.mxu0 0
        %1823 = vmatpush1.bf16.xpose.msra.mxu0 0
        %1824 = vmatprep.subr.bf16.mxu0 0
        %1825 = vmatpush1.bf16.xpose.msra.mxu0 0
        %1826 = vmatprep.subr.bf16.mxu0 0
        %1827 = vmatpush1.bf16.xpose.msra.mxu0 0
        %1828 = vmatprep.subr.bf16.mxu0 0
        %1829 = vmatpush1.bf16.xpose.msra.mxu0 0
        %1830 = vmatprep.mubr.bf16.mxu0 0
        %1831 = vmatmul.mubr.bf16.gmra.mrb[0].mxu0 %v1775
        %v1832 = vpop.f32.mrb[0].mxu0
        %v1833 = vadd.f32 %v1660, %v1832
        %v1834 = vpop.f32.mrb[0].mxu0
        %v1835 = vpop.f32.mrb[0].mxu0
        %v1836 = vadd.f32 %v1661, %v1835
        %v1837 = vpop.f32.mrb[0].mxu0
        %1838 = vmatprep.mubr.bf16.mxu0 0
        %1839 = vmatmul.mubr.bf16.gmra.mrb[0].mxu0 %v1778
        %v1840 = vpop.f32.mrb[0].mxu0
        %v1841 = vadd.f32 %v1662, %v1840
        %v1842 = vpop.f32.mrb[0].mxu0
        %v1843 = vpop.f32.mrb[0].mxu0
        %v1844 = vadd.f32 %v1663, %v1843
        %v1845 = vpop.f32.mrb[0].mxu0
        %1846 = vmatprep.mubr.bf16.mxu0 0
        %1847 = vmatmul.mubr.bf16.gmra.mrb[0].mxu0 %v1781
        %v1848 = vpop.f32.mrb[0].mxu0
        %v1849 = vadd.f32 %v1664, %v1848
        %v1850 = vpop.f32.mrb[0].mxu0
        %v1851 = vpop.f32.mrb[0].mxu0
        %v1852 = vadd.f32 %v1665, %v1851
        %v1853 = vpop.f32.mrb[0].mxu0
        %1854 = vmatprep.mubr.bf16.mxu0 0
        %1855 = vmatmul.mubr.bf16.gmra.mrb[0].mxu0 %v1784
        %v1856 = vpop.f32.mrb[0].mxu0
        %v1857 = vadd.f32 %v1666, %v1856
        %v1858 = vpop.f32.mrb[0].mxu0
        %v1859 = vpop.f32.mrb[0].mxu0
        %v1860 = vadd.f32 %v1667, %v1859
        %v1861 = vpop.f32.mrb[0].mxu0
        %1862 = vdwg.mxu0
        %v1864 = vsel %vm1684, %v1612, 0
        %v1867 = vsel %vm1684, %v1613, 0
        %v1870 = vsel %vm1684, %v1614, 0
        %v1873 = vsel %vm1684, %v1615, 0
        %v1876 = vsel %vm1684, %v1628, 0
        %v1879 = vsel %vm1684, %v1629, 0
        %v1882 = vsel %vm1684, %v1630, 0
        %v1885 = vsel %vm1684, %v1631, 0
        %1887 = vmatprep.subr.bf16.mxu0 0
        %1888 = vmatpush1.bf16.xpose.msra.mxu0 %v1876
        %1889 = vmatprep.subr.bf16.mxu0 0
        %1890 = vmatpush1.bf16.xpose.msra.mxu0 %v1879
        %1891 = vmatprep.subr.bf16.mxu0 0
        %1892 = vmatpush1.bf16.xpose.msra.mxu0 %v1882
        %1893 = vmatprep.subr.bf16.mxu0 0
        %1894 = vmatpush1.bf16.xpose.msra.mxu0 %v1885
        %1895 = vmatprep.subr.bf16.mxu0 0
        %1896 = vmatpush1.bf16.xpose.msra.mxu0 0
        %1897 = vmatprep.subr.bf16.mxu0 0
        %1898 = vmatpush1.bf16.xpose.msra.mxu0 0
        %1899 = vmatprep.subr.bf16.mxu0 0
        %1900 = vmatpush1.bf16.xpose.msra.mxu0 0
        %1901 = vmatprep.subr.bf16.mxu0 0
        %1902 = vmatpush1.bf16.xpose.msra.mxu0 0
        %1903 = vmatprep.subr.bf16.mxu0 0
        %1904 = vmatpush1.bf16.xpose.msra.mxu0 0
        %1905 = vmatprep.subr.bf16.mxu0 0
        %1906 = vmatpush1.bf16.xpose.msra.mxu0 0
        %1907 = vmatprep.subr.bf16.mxu0 0
        %1908 = vmatpush1.bf16.xpose.msra.mxu0 0
        %1909 = vmatprep.subr.bf16.mxu0 0
        %1910 = vmatpush1.bf16.xpose.msra.mxu0 0
        %1911 = vmatprep.subr.bf16.mxu0 0
        %1912 = vmatpush1.bf16.xpose.msra.mxu0 0
        %1913 = vmatprep.subr.bf16.mxu0 0
        %1914 = vmatpush1.bf16.xpose.msra.mxu0 0
        %1915 = vmatprep.subr.bf16.mxu0 0
        %1916 = vmatpush1.bf16.xpose.msra.mxu0 0
        %1917 = vmatprep.subr.bf16.mxu0 0
        %1918 = vmatpush1.bf16.xpose.msra.mxu0 0
        %1919 = vmatprep.mubr.bf16.mxu0 0
        %1920 = vmatmul.mubr.bf16.gmra.mrb[0].mxu0 %v1864
        %v1921 = vpop.f32.mrb[0].mxu0
        %v1922 = vadd.f32 %v1668, %v1921
        %v1923 = vpop.f32.mrb[0].mxu0
        %v1924 = vpop.f32.mrb[0].mxu0
        %v1925 = vadd.f32 %v1669, %v1924
        %v1926 = vpop.f32.mrb[0].mxu0
        %1927 = vmatprep.mubr.bf16.mxu0 0
        %1928 = vmatmul.mubr.bf16.gmra.mrb[0].mxu0 %v1867
        %v1929 = vpop.f32.mrb[0].mxu0
        %v1930 = vadd.f32 %v1670, %v1929
        %v1931 = vpop.f32.mrb[0].mxu0
        %v1932 = vpop.f32.mrb[0].mxu0
        %v1933 = vadd.f32 %v1671, %v1932
        %v1934 = vpop.f32.mrb[0].mxu0
        %1935 = vmatprep.mubr.bf16.mxu0 0
        %1936 = vmatmul.mubr.bf16.gmra.mrb[0].mxu0 %v1870
        %v1937 = vpop.f32.mrb[0].mxu0
        %v1938 = vadd.f32 %v1672, %v1937
        %v1939 = vpop.f32.mrb[0].mxu0
        %v1940 = vpop.f32.mrb[0].mxu0
        %v1941 = vadd.f32 %v1673, %v1940
        %v1942 = vpop.f32.mrb[0].mxu0
        %1943 = vmatprep.mubr.bf16.mxu0 0
        %1944 = vmatmul.mubr.bf16.gmra.mrb[0].mxu0 %v1873
        %v1945 = vpop.f32.mrb[0].mxu0
        %v1946 = vadd.f32 %v1674, %v1945
        %v1947 = vpop.f32.mrb[0].mxu0
        %v1948 = vpop.f32.mrb[0].mxu0
        %v1949 = vadd.f32 %v1675, %v1948
        %v1950 = vpop.f32.mrb[0].mxu0
        %1951 = vdwg.mxu0
        %v1953 = vsel %vm1684, %v1616, 0
        %v1956 = vsel %vm1684, %v1617, 0
        %v1959 = vsel %vm1684, %v1618, 0
        %v1962 = vsel %vm1684, %v1619, 0
        %v1965 = vsel %vm1684, %v1632, 0
        %v1968 = vsel %vm1684, %v1633, 0
        %v1971 = vsel %vm1684, %v1634, 0
        %v1974 = vsel %vm1684, %v1635, 0
        %1976 = vmatprep.subr.bf16.mxu0 0
        %1977 = vmatpush1.bf16.xpose.msra.mxu0 %v1965
        %1978 = vmatprep.subr.bf16.mxu0 0
        %1979 = vmatpush1.bf16.xpose.msra.mxu0 %v1968
        %1980 = vmatprep.subr.bf16.mxu0 0
        %1981 = vmatpush1.bf16.xpose.msra.mxu0 %v1971
        %1982 = vmatprep.subr.bf16.mxu0 0
        %1983 = vmatpush1.bf16.xpose.msra.mxu0 %v1974
        %1984 = vmatprep.subr.bf16.mxu0 0
        %1985 = vmatpush1.bf16.xpose.msra.mxu0 0
        %1986 = vmatprep.subr.bf16.mxu0 0
        %1987 = vmatpush1.bf16.xpose.msra.mxu0 0
        %1988 = vmatprep.subr.bf16.mxu0 0
        %1989 = vmatpush1.bf16.xpose.msra.mxu0 0
        %1990 = vmatprep.subr.bf16.mxu0 0
        %1991 = vmatpush1.bf16.xpose.msra.mxu0 0
        %1992 = vmatprep.subr.bf16.mxu0 0
        %1993 = vmatpush1.bf16.xpose.msra.mxu0 0
        %1994 = vmatprep.subr.bf16.mxu0 0
        %1995 = vmatpush1.bf16.xpose.msra.mxu0 0
        %1996 = vmatprep.subr.bf16.mxu0 0
        %1997 = vmatpush1.bf16.xpose.msra.mxu0 0
        %1998 = vmatprep.subr.bf16.mxu0 0
        %1999 = vmatpush1.bf16.xpose.msra.mxu0 0
        %2000 = vmatprep.subr.bf16.mxu0 0
        %2001 = vmatpush1.bf16.xpose.msra.mxu0 0
        %2002 = vmatprep.subr.bf16.mxu0 0
        %2003 = vmatpush1.bf16.xpose.msra.mxu0 0
        %2004 = vmatprep.subr.bf16.mxu0 0
        %2005 = vmatpush1.bf16.xpose.msra.mxu0 0
        %2006 = vmatprep.subr.bf16.mxu0 0
        %2007 = vmatpush1.bf16.xpose.msra.mxu0 0
        %2008 = vmatprep.mubr.bf16.mxu0 0
        %2009 = vmatmul.mubr.bf16.gmra.mrb[0].mxu0 %v1953
        %v2010 = vpop.f32.mrb[0].mxu0
        %v2011 = vadd.f32 %v1676, %v2010
        %v2012 = vpop.f32.mrb[0].mxu0
        %v2013 = vpop.f32.mrb[0].mxu0
        %v2014 = vadd.f32 %v1677, %v2013
        %v2015 = vpop.f32.mrb[0].mxu0
        %2016 = vmatprep.mubr.bf16.mxu0 0
        %2017 = vmatmul.mubr.bf16.gmra.mrb[0].mxu0 %v1956
        %v2018 = vpop.f32.mrb[0].mxu0
        %v2019 = vadd.f32 %v1678, %v2018
        %v2020 = vpop.f32.mrb[0].mxu0
        %v2021 = vpop.f32.mrb[0].mxu0
        %v2022 = vadd.f32 %v1679, %v2021
        %v2023 = vpop.f32.mrb[0].mxu0
        %2024 = vmatprep.mubr.bf16.mxu0 0
        %2025 = vmatmul.mubr.bf16.gmra.mrb[0].mxu0 %v1959
        %v2026 = vpop.f32.mrb[0].mxu0
        %v2027 = vadd.f32 %v1680, %v2026
        %v2028 = vpop.f32.mrb[0].mxu0
        %v2029 = vpop.f32.mrb[0].mxu0
        %v2030 = vadd.f32 %v1681, %v2029
        %v2031 = vpop.f32.mrb[0].mxu0
        %2032 = vmatprep.mubr.bf16.mxu0 0
        %2033 = vmatmul.mubr.bf16.gmra.mrb[0].mxu0 %v1962
        %v2034 = vpop.f32.mrb[0].mxu0
        %v2035 = vadd.f32 %v1682, %v2034
        %v2036 = vpop.f32.mrb[0].mxu0
        %v2037 = vpop.f32.mrb[0].mxu0
        %v2038 = vadd.f32 %v1683, %v2037
        %v2039 = vpop.f32.mrb[0].mxu0
        %2040 = vdwg.mxu0
        %vm2041 = vcmask 523264
        %v2042 = vsel %vm2041, %v1744, -inf
        %2043 = vmax.xlane.f32.xlu0 %v2042
        %v2044 = vpop.xlane.xlu0 %2043
        %v2045 = vsel %vm2041, %v1747, -inf
        %2046 = vmax.xlane.f32.xlu0 %v2045
        %v2047 = vpop.xlane.xlu0 %2046
        %v2048 = vsel %vm2041, %v1752, -inf
        %2049 = vmax.xlane.f32.xlu0 %v2048
        %v2050 = vpop.xlane.xlu0 %2049
        %v2051 = vsel %vm2041, %v1755, -inf
        %2052 = vmax.xlane.f32.xlu0 %v2051
        %v2053 = vpop.xlane.xlu0 %2052
        %v2054 = vsel %vm2041, %v1760, -inf
        %2055 = vmax.xlane.f32.xlu0 %v2054
        %v2056 = vpop.xlane.xlu0 %2055
        %v2057 = vsel %vm2041, %v1763, -inf
        %2058 = vmax.xlane.f32.xlu0 %v2057
        %v2059 = vpop.xlane.xlu0 %2058
        %v2060 = vsel %vm2041, %v1768, -inf
        %2061 = vmax.xlane.f32.xlu0 %v2060
        %v2062 = vpop.xlane.xlu0 %2061
        %v2063 = vsel %vm2041, %v1771, -inf
        %2064 = vmax.xlane.f32.xlu0 %v2063
        %v2065 = vpop.xlane.xlu0 %2064
        %v2066 = vsel %vm2041, %v1833, -inf
        %2067 = vmax.xlane.f32.xlu0 %v2066
        %v2068 = vpop.xlane.xlu0 %2067
        %v2069 = vsel %vm2041, %v1836, -inf
        %2070 = vmax.xlane.f32.xlu0 %v2069
        %v2071 = vpop.xlane.xlu0 %2070
        %v2072 = vsel %vm2041, %v1841, -inf
        %2073 = vmax.xlane.f32.xlu0 %v2072
        %v2074 = vpop.xlane.xlu0 %2073
        %v2075 = vsel %vm2041, %v1844, -inf
        %2076 = vmax.xlane.f32.xlu0 %v2075
        %v2077 = vpop.xlane.xlu0 %2076
        %v2078 = vsel %vm2041, %v1849, -inf
        %2079 = vmax.xlane.f32.xlu0 %v2078
        %v2080 = vpop.xlane.xlu0 %2079
        %v2081 = vsel %vm2041, %v1852, -inf
        %2082 = vmax.xlane.f32.xlu0 %v2081
        %v2083 = vpop.xlane.xlu0 %2082
        %v2084 = vsel %vm2041, %v1857, -inf
        %2085 = vmax.xlane.f32.xlu0 %v2084
        %v2086 = vpop.xlane.xlu0 %2085
        %v2087 = vsel %vm2041, %v1860, -inf
        %2088 = vmax.xlane.f32.xlu0 %v2087
        %v2089 = vpop.xlane.xlu0 %2088
        %v2090 = vsel %vm2041, %v1922, -inf
        %2091 = vmax.xlane.f32.xlu0 %v2090
        %v2092 = vpop.xlane.xlu0 %2091
        %v2093 = vsel %vm2041, %v1925, -inf
        %2094 = vmax.xlane.f32.xlu0 %v2093
        %v2095 = vpop.xlane.xlu0 %2094
        %v2096 = vsel %vm2041, %v1930, -inf
        %2097 = vmax.xlane.f32.xlu0 %v2096
        %v2098 = vpop.xlane.xlu0 %2097
        %v2099 = vsel %vm2041, %v1933, -inf
        %2100 = vmax.xlane.f32.xlu0 %v2099
        %v2101 = vpop.xlane.xlu0 %2100
        %v2102 = vsel %vm2041, %v1938, -inf
        %2103 = vmax.xlane.f32.xlu0 %v2102
        %v2104 = vpop.xlane.xlu0 %2103
        %v2105 = vsel %vm2041, %v1941, -inf
        %2106 = vmax.xlane.f32.xlu0 %v2105
        %v2107 = vpop.xlane.xlu0 %2106
        %v2108 = vsel %vm2041, %v1946, -inf
        %2109 = vmax.xlane.f32.xlu0 %v2108
        %v2110 = vpop.xlane.xlu0 %2109
        %v2111 = vsel %vm2041, %v1949, -inf
        %2112 = vmax.xlane.f32.xlu0 %v2111
        %v2113 = vpop.xlane.xlu0 %2112
        %v2114 = vsel %vm2041, %v2011, -inf
        %2115 = vmax.xlane.f32.xlu0 %v2114
        %v2116 = vpop.xlane.xlu0 %2115
        %v2117 = vsel %vm2041, %v2014, -inf
        %2118 = vmax.xlane.f32.xlu0 %v2117
        %v2119 = vpop.xlane.xlu0 %2118
        %v2120 = vsel %vm2041, %v2019, -inf
        %2121 = vmax.xlane.f32.xlu0 %v2120
        %v2122 = vpop.xlane.xlu0 %2121
        %v2123 = vsel %vm2041, %v2022, -inf
        %2124 = vmax.xlane.f32.xlu0 %v2123
        %v2125 = vpop.xlane.xlu0 %2124
        %v2126 = vsel %vm2041, %v2027, -inf
        %2127 = vmax.xlane.f32.xlu0 %v2126
        %v2128 = vpop.xlane.xlu0 %2127
        %v2129 = vsel %vm2041, %v2030, -inf
        %2130 = vmax.xlane.f32.xlu0 %v2129
        %v2131 = vpop.xlane.xlu0 %2130
        %v2132 = vsel %vm2041, %v2035, -inf
        %2133 = vmax.xlane.f32.xlu0 %v2132
        %v2134 = vpop.xlane.xlu0 %2133
        %v2135 = vsel %vm2041, %v2038, -inf
        %2136 = vmax.xlane.f32.xlu0 %v2135
        %v2137 = vpop.xlane.xlu0 %2136
        %v2138 = vsub.f32 %v1744, %v2044
        %v2139 = vsub.f32 %v1747, %v2047
        %v2140 = vsub.f32 %v1752, %v2050
        %v2141 = vsub.f32 %v1755, %v2053
        %v2142 = vsub.f32 %v1760, %v2056
        %v2143 = vsub.f32 %v1763, %v2059
        %v2144 = vsub.f32 %v1768, %v2062
        %v2145 = vsub.f32 %v1771, %v2065
        %v2146 = vsub.f32 %v1833, %v2068
        %v2147 = vsub.f32 %v1836, %v2071
        %v2148 = vsub.f32 %v1841, %v2074
        %v2149 = vsub.f32 %v1844, %v2077
        %v2150 = vsub.f32 %v1849, %v2080
        %v2151 = vsub.f32 %v1852, %v2083
        %v2152 = vsub.f32 %v1857, %v2086
        %v2153 = vsub.f32 %v1860, %v2089
        %v2154 = vsub.f32 %v1922, %v2092
        %v2155 = vsub.f32 %v1925, %v2095
        %v2156 = vsub.f32 %v1930, %v2098
        %v2157 = vsub.f32 %v1933, %v2101
        %v2158 = vsub.f32 %v1938, %v2104
        %v2159 = vsub.f32 %v1941, %v2107
        %v2160 = vsub.f32 %v1946, %v2110
        %v2161 = vsub.f32 %v1949, %v2113
        %v2162 = vsub.f32 %v2011, %v2116
        %v2163 = vsub.f32 %v2014, %v2119
        %v2164 = vsub.f32 %v2019, %v2122
        %v2165 = vsub.f32 %v2022, %v2125
        %v2166 = vsub.f32 %v2027, %v2128
        %v2167 = vsub.f32 %v2030, %v2131
        %v2168 = vsub.f32 %v2035, %v2134
        %v2169 = vsub.f32 %v2038, %v2137
        %v2170 = vmul.f32 %v2138, 1.442695
        %v2171 = vpow.pop %v2170
        %v2172 = vmul.f32 %v2139, 1.442695
        %v2173 = vpow.pop %v2172
        %v2174 = vmul.f32 %v2140, 1.442695
        %v2175 = vpow.pop %v2174
        %v2176 = vmul.f32 %v2141, 1.442695
        %v2177 = vpow.pop %v2176
        %v2178 = vmul.f32 %v2142, 1.442695
        %v2179 = vpow.pop %v2178
        %v2180 = vmul.f32 %v2143, 1.442695
        %v2181 = vpow.pop %v2180
        %v2182 = vmul.f32 %v2144, 1.442695
        %v2183 = vpow.pop %v2182
        %v2184 = vmul.f32 %v2145, 1.442695
        %v2185 = vpow.pop %v2184
        %v2186 = vmul.f32 %v2146, 1.442695
        %v2187 = vpow.pop %v2186
        %v2188 = vmul.f32 %v2147, 1.442695
        %v2189 = vpow.pop %v2188
        %v2190 = vmul.f32 %v2148, 1.442695
        %v2191 = vpow.pop %v2190
        %v2192 = vmul.f32 %v2149, 1.442695
        %v2193 = vpow.pop %v2192
        %v2194 = vmul.f32 %v2150, 1.442695
        %v2195 = vpow.pop %v2194
        %v2196 = vmul.f32 %v2151, 1.442695
        %v2197 = vpow.pop %v2196
        %v2198 = vmul.f32 %v2152, 1.442695
        %v2199 = vpow.pop %v2198
        %v2200 = vmul.f32 %v2153, 1.442695
        %v2201 = vpow.pop %v2200
        %v2202 = vmul.f32 %v2154, 1.442695
        %v2203 = vpow.pop %v2202
        %v2204 = vmul.f32 %v2155, 1.442695
        %v2205 = vpow.pop %v2204
        %v2206 = vmul.f32 %v2156, 1.442695
        %v2207 = vpow.pop %v2206
        %v2208 = vmul.f32 %v2157, 1.442695
        %v2209 = vpow.pop %v2208
        %v2210 = vmul.f32 %v2158, 1.442695
        %v2211 = vpow.pop %v2210
        %v2212 = vmul.f32 %v2159, 1.442695
        %v2213 = vpow.pop %v2212
        %v2214 = vmul.f32 %v2160, 1.442695
        %v2215 = vpow.pop %v2214
        %v2216 = vmul.f32 %v2161, 1.442695
        %v2217 = vpow.pop %v2216
        %v2218 = vmul.f32 %v2162, 1.442695
        %v2219 = vpow.pop %v2218
        %v2220 = vmul.f32 %v2163, 1.442695
        %v2221 = vpow.pop %v2220
        %v2222 = vmul.f32 %v2164, 1.442695
        %v2223 = vpow.pop %v2222
        %v2224 = vmul.f32 %v2165, 1.442695
        %v2225 = vpow.pop %v2224
        %v2226 = vmul.f32 %v2166, 1.442695
        %v2227 = vpow.pop %v2226
        %v2228 = vmul.f32 %v2167, 1.442695
        %v2229 = vpow.pop %v2228
        %v2230 = vmul.f32 %v2168, 1.442695
        %v2231 = vpow.pop %v2230
        %v2232 = vmul.f32 %v2169, 1.442695
        %v2233 = vpow.pop %v2232
        %v2234 = vsel %vm2041, %v2171, 0.0
        %2235 = vadd.xlane.f32.xlu0 %v2234
        %v2236 = vpop.xlane.xlu0 %2235
        %v2237 = vsel %vm2041, %v2173, 0.0
        %2238 = vadd.xlane.f32.xlu0 %v2237
        %v2239 = vpop.xlane.xlu0 %2238
        %v2240 = vsel %vm2041, %v2175, 0.0
        %2241 = vadd.xlane.f32.xlu0 %v2240
        %v2242 = vpop.xlane.xlu0 %2241
        %v2243 = vsel %vm2041, %v2177, 0.0
        %2244 = vadd.xlane.f32.xlu0 %v2243
        %v2245 = vpop.xlane.xlu0 %2244
        %v2246 = vsel %vm2041, %v2179, 0.0
        %2247 = vadd.xlane.f32.xlu0 %v2246
        %v2248 = vpop.xlane.xlu0 %2247
        %v2249 = vsel %vm2041, %v2181, 0.0
        %2250 = vadd.xlane.f32.xlu0 %v2249
        %v2251 = vpop.xlane.xlu0 %2250
        %v2252 = vsel %vm2041, %v2183, 0.0
        %2253 = vadd.xlane.f32.xlu0 %v2252
        %v2254 = vpop.xlane.xlu0 %2253
        %v2255 = vsel %vm2041, %v2185, 0.0
        %2256 = vadd.xlane.f32.xlu0 %v2255
        %v2257 = vpop.xlane.xlu0 %2256
        %v2258 = vsel %vm2041, %v2187, 0.0
        %2259 = vadd.xlane.f32.xlu0 %v2258
        %v2260 = vpop.xlane.xlu0 %2259
        %v2261 = vsel %vm2041, %v2189, 0.0
        %2262 = vadd.xlane.f32.xlu0 %v2261
        %v2263 = vpop.xlane.xlu0 %2262
        %v2264 = vsel %vm2041, %v2191, 0.0
        %2265 = vadd.xlane.f32.xlu0 %v2264
        %v2266 = vpop.xlane.xlu0 %2265
        %v2267 = vsel %vm2041, %v2193, 0.0
        %2268 = vadd.xlane.f32.xlu0 %v2267
        %v2269 = vpop.xlane.xlu0 %2268
        %v2270 = vsel %vm2041, %v2195, 0.0
        %2271 = vadd.xlane.f32.xlu0 %v2270
        %v2272 = vpop.xlane.xlu0 %2271
        %v2273 = vsel %vm2041, %v2197, 0.0
        %2274 = vadd.xlane.f32.xlu0 %v2273
        %v2275 = vpop.xlane.xlu0 %2274
        %v2276 = vsel %vm2041, %v2199, 0.0
        %2277 = vadd.xlane.f32.xlu0 %v2276
        %v2278 = vpop.xlane.xlu0 %2277
        %v2279 = vsel %vm2041, %v2201, 0.0
        %2280 = vadd.xlane.f32.xlu0 %v2279
        %v2281 = vpop.xlane.xlu0 %2280
        %v2282 = vsel %vm2041, %v2203, 0.0
        %2283 = vadd.xlane.f32.xlu0 %v2282
        %v2284 = vpop.xlane.xlu0 %2283
        %v2285 = vsel %vm2041, %v2205, 0.0
        %2286 = vadd.xlane.f32.xlu0 %v2285
        %v2287 = vpop.xlane.xlu0 %2286
        %v2288 = vsel %vm2041, %v2207, 0.0
        %2289 = vadd.xlane.f32.xlu0 %v2288
        %v2290 = vpop.xlane.xlu0 %2289
        %v2291 = vsel %vm2041, %v2209, 0.0
        %2292 = vadd.xlane.f32.xlu0 %v2291
        %v2293 = vpop.xlane.xlu0 %2292
        %v2294 = vsel %vm2041, %v2211, 0.0
        %2295 = vadd.xlane.f32.xlu0 %v2294
        %v2296 = vpop.xlane.xlu0 %2295
        %v2297 = vsel %vm2041, %v2213, 0.0
        %2298 = vadd.xlane.f32.xlu0 %v2297
        %v2299 = vpop.xlane.xlu0 %2298
        %v2300 = vsel %vm2041, %v2215, 0.0
        %2301 = vadd.xlane.f32.xlu0 %v2300
        %v2302 = vpop.xlane.xlu0 %2301
        %v2303 = vsel %vm2041, %v2217, 0.0
        %2304 = vadd.xlane.f32.xlu0 %v2303
        %v2305 = vpop.xlane.xlu0 %2304
        %v2306 = vsel %vm2041, %v2219, 0.0
        %2307 = vadd.xlane.f32.xlu0 %v2306
        %v2308 = vpop.xlane.xlu0 %2307
        %v2309 = vsel %vm2041, %v2221, 0.0
        %2310 = vadd.xlane.f32.xlu0 %v2309
        %v2311 = vpop.xlane.xlu0 %2310
        %v2312 = vsel %vm2041, %v2223, 0.0
        %2313 = vadd.xlane.f32.xlu0 %v2312
        %v2314 = vpop.xlane.xlu0 %2313
        %v2315 = vsel %vm2041, %v2225, 0.0
        %2316 = vadd.xlane.f32.xlu0 %v2315
        %v2317 = vpop.xlane.xlu0 %2316
        %v2318 = vsel %vm2041, %v2227, 0.0
        %2319 = vadd.xlane.f32.xlu0 %v2318
        %v2320 = vpop.xlane.xlu0 %2319
        %v2321 = vsel %vm2041, %v2229, 0.0
        %2322 = vadd.xlane.f32.xlu0 %v2321
        %v2323 = vpop.xlane.xlu0 %2322
        %v2324 = vsel %vm2041, %v2231, 0.0
        %2325 = vadd.xlane.f32.xlu0 %v2324
        %v2326 = vpop.xlane.xlu0 %2325
        %v2327 = vsel %vm2041, %v2233, 0.0
        %2328 = vadd.xlane.f32.xlu0 %v2327
        %v2329 = vpop.xlane.xlu0 %2328
        %v2330 = vrcp.pop %v2236
        %v2331 = vrcp.pop %v2239
        %v2332 = vrcp.pop %v2242
        %v2333 = vrcp.pop %v2245
        %v2334 = vrcp.pop %v2248
        %v2335 = vrcp.pop %v2251
        %v2336 = vrcp.pop %v2254
        %v2337 = vrcp.pop %v2257
        %v2338 = vrcp.pop %v2260
        %v2339 = vrcp.pop %v2263
        %v2340 = vrcp.pop %v2266
        %v2341 = vrcp.pop %v2269
        %v2342 = vrcp.pop %v2272
        %v2343 = vrcp.pop %v2275
        %v2344 = vrcp.pop %v2278
        %v2345 = vrcp.pop %v2281
        %v2346 = vrcp.pop %v2284
        %v2347 = vrcp.pop %v2287
        %v2348 = vrcp.pop %v2290
        %v2349 = vrcp.pop %v2293
        %v2350 = vrcp.pop %v2296
        %v2351 = vrcp.pop %v2299
        %v2352 = vrcp.pop %v2302
        %v2353 = vrcp.pop %v2305
        %v2354 = vrcp.pop %v2308
        %v2355 = vrcp.pop %v2311
        %v2356 = vrcp.pop %v2314
        %v2357 = vrcp.pop %v2317
        %v2358 = vrcp.pop %v2320
        %v2359 = vrcp.pop %v2323
        %v2360 = vrcp.pop %v2326
        %v2361 = vrcp.pop %v2329
        %v2362 = vmul.f32 %v2171, %v2330
        %v2363 = vmul.f32 %v2173, %v2331
        %v2364 = vmul.f32 %v2175, %v2332
        %v2365 = vmul.f32 %v2177, %v2333
        %v2366 = vmul.f32 %v2179, %v2334
        %v2367 = vmul.f32 %v2181, %v2335
        %v2368 = vmul.f32 %v2183, %v2336
        %v2369 = vmul.f32 %v2185, %v2337
        %v2370 = vmul.f32 %v2187, %v2338
        %v2371 = vmul.f32 %v2189, %v2339
        %v2372 = vmul.f32 %v2191, %v2340
        %v2373 = vmul.f32 %v2193, %v2341
        %v2374 = vmul.f32 %v2195, %v2342
        %v2375 = vmul.f32 %v2197, %v2343
        %v2376 = vmul.f32 %v2199, %v2344
        %v2377 = vmul.f32 %v2201, %v2345
        %v2378 = vmul.f32 %v2203, %v2346
        %v2379 = vmul.f32 %v2205, %v2347
        %v2380 = vmul.f32 %v2207, %v2348
        %v2381 = vmul.f32 %v2209, %v2349
        %v2382 = vmul.f32 %v2211, %v2350
        %v2383 = vmul.f32 %v2213, %v2351
        %v2384 = vmul.f32 %v2215, %v2352
        %v2385 = vmul.f32 %v2217, %v2353
        %v2386 = vmul.f32 %v2219, %v2354
        %v2387 = vmul.f32 %v2221, %v2355
        %v2388 = vmul.f32 %v2223, %v2356
        %v2389 = vmul.f32 %v2225, %v2357
        %v2390 = vmul.f32 %v2227, %v2358
        %v2391 = vmul.f32 %v2229, %v2359
        %v2392 = vmul.f32 %v2231, %v2360
        %v2393 = vmul.f32 %v2233, %v2361
        %v2394 = vpack.c.bf16 %v2363, %v2362
        %v2395 = vpack.c.bf16 %v2365, %v2364
        %v2396 = vpack.c.bf16 %v2367, %v2366
        %v2397 = vpack.c.bf16 %v2369, %v2368
        %v2398 = vpack.c.bf16 %v2371, %v2370
        %v2399 = vpack.c.bf16 %v2373, %v2372
        %v2400 = vpack.c.bf16 %v2375, %v2374
        %v2401 = vpack.c.bf16 %v2377, %v2376
        %v2402 = vpack.c.bf16 %v2379, %v2378
        %v2403 = vpack.c.bf16 %v2381, %v2380
        %v2404 = vpack.c.bf16 %v2383, %v2382
        %v2405 = vpack.c.bf16 %v2385, %v2384
        %v2406 = vpack.c.bf16 %v2387, %v2386
        %v2407 = vpack.c.bf16 %v2389, %v2388
        %v2408 = vpack.c.bf16 %v2391, %v2390
        %v2409 = vpack.c.bf16 %v2393, %v2392
        %v2411 = vsel %vm2041, %v2394, 0
        %v2414 = vsel %vm2041, %v2395, 0
        %v2417 = vsel %vm2041, %v2396, 0
        %v2420 = vsel %vm2041, %v2397, 0
        %2422 = vmatprep.subr.bf16.mxu0 0
        %2423 = vmatpush1.bf16.msra.mxu0 %v1636
        %2424 = vmatprep.subr.bf16.mxu0 0
        %2425 = vmatpush1.bf16.msra.mxu0 %v1637
        %2426 = vmatprep.subr.bf16.mxu0 0
        %2427 = vmatpush1.bf16.msra.mxu0 %v1638
        %2428 = vmatprep.subr.bf16.mxu0 0
        %2429 = vmatpush1.bf16.msra.mxu0 %v1639
        %2430 = vmatprep.subr.bf16.mxu0 0
        %2431 = vmatpush1.bf16.msra.mxu0 0
        %2432 = vmatprep.subr.bf16.mxu0 0
        %2433 = vmatpush1.bf16.msra.mxu0 0
        %2434 = vmatprep.subr.bf16.mxu0 0
        %2435 = vmatpush1.bf16.msra.mxu0 0
        %2436 = vmatprep.subr.bf16.mxu0 0
        %2437 = vmatpush1.bf16.msra.mxu0 0
        %2438 = vmatprep.subr.bf16.mxu0 0
        %2439 = vmatpush1.bf16.msra.mxu0 0
        %2440 = vmatprep.subr.bf16.mxu0 0
        %2441 = vmatpush1.bf16.msra.mxu0 0
        %2442 = vmatprep.subr.bf16.mxu0 0
        %2443 = vmatpush1.bf16.msra.mxu0 0
        %2444 = vmatprep.subr.bf16.mxu0 0
        %2445 = vmatpush1.bf16.msra.mxu0 0
        %2446 = vmatprep.subr.bf16.mxu0 0
        %2447 = vmatpush1.bf16.msra.mxu0 0
        %2448 = vmatprep.subr.bf16.mxu0 0
        %2449 = vmatpush1.bf16.msra.mxu0 0
        %2450 = vmatprep.subr.bf16.mxu0 0
        %2451 = vmatpush1.bf16.msra.mxu0 0
        %2452 = vmatprep.subr.bf16.mxu0 0
        %2453 = vmatpush1.bf16.msra.mxu0 0
        %2454 = vmatprep.mubr.bf16.mxu0 0
        %2455 = vmatmul.mubr.bf16.gmra.mrb[0].mxu0 %v2411
        %v2456 = vpop.f32.mrb[0].mxu0
        %v2457 = vadd.f32 0.0, %v2456
        %v2458 = vpop.f32.mrb[0].mxu0
        %v2459 = vpop.f32.mrb[0].mxu0
        %v2460 = vadd.f32 0.0, %v2459
        %v2461 = vpop.f32.mrb[0].mxu0
        %2462 = vmatprep.mubr.bf16.mxu0 0
        %2463 = vmatmul.mubr.bf16.gmra.mrb[0].mxu0 %v2414
        %v2464 = vpop.f32.mrb[0].mxu0
        %v2465 = vadd.f32 0.0, %v2464
        %v2466 = vpop.f32.mrb[0].mxu0
        %v2467 = vpop.f32.mrb[0].mxu0
        %v2468 = vadd.f32 0.0, %v2467
        %v2469 = vpop.f32.mrb[0].mxu0
        %2470 = vmatprep.mubr.bf16.mxu0 0
        %2471 = vmatmul.mubr.bf16.gmra.mrb[0].mxu0 %v2417
        %v2472 = vpop.f32.mrb[0].mxu0
        %v2473 = vadd.f32 0.0, %v2472
        %v2474 = vpop.f32.mrb[0].mxu0
        %v2475 = vpop.f32.mrb[0].mxu0
        %v2476 = vadd.f32 0.0, %v2475
        %v2477 = vpop.f32.mrb[0].mxu0
        %2478 = vmatprep.mubr.bf16.mxu0 0
        %2479 = vmatmul.mubr.bf16.gmra.mrb[0].mxu0 %v2420
        %v2480 = vpop.f32.mrb[0].mxu0
        %v2481 = vadd.f32 0.0, %v2480
        %v2482 = vpop.f32.mrb[0].mxu0
        %v2483 = vpop.f32.mrb[0].mxu0
        %v2484 = vadd.f32 0.0, %v2483
        %v2485 = vpop.f32.mrb[0].mxu0
        %2486 = vdwg.mxu0
        %v2488 = vsel %vm2041, %v2398, 0
        %v2491 = vsel %vm2041, %v2399, 0
        %v2494 = vsel %vm2041, %v2400, 0
        %v2497 = vsel %vm2041, %v2401, 0
        %2499 = vmatprep.subr.bf16.mxu0 0
        %2500 = vmatpush1.bf16.msra.mxu0 %v1640
        %2501 = vmatprep.subr.bf16.mxu0 0
        %2502 = vmatpush1.bf16.msra.mxu0 %v1641
        %2503 = vmatprep.subr.bf16.mxu0 0
        %2504 = vmatpush1.bf16.msra.mxu0 %v1642
        %2505 = vmatprep.subr.bf16.mxu0 0
        %2506 = vmatpush1.bf16.msra.mxu0 %v1643
        %2507 = vmatprep.subr.bf16.mxu0 0
        %2508 = vmatpush1.bf16.msra.mxu0 0
        %2509 = vmatprep.subr.bf16.mxu0 0
        %2510 = vmatpush1.bf16.msra.mxu0 0
        %2511 = vmatprep.subr.bf16.mxu0 0
        %2512 = vmatpush1.bf16.msra.mxu0 0
        %2513 = vmatprep.subr.bf16.mxu0 0
        %2514 = vmatpush1.bf16.msra.mxu0 0
        %2515 = vmatprep.subr.bf16.mxu0 0
        %2516 = vmatpush1.bf16.msra.mxu0 0
        %2517 = vmatprep.subr.bf16.mxu0 0
        %2518 = vmatpush1.bf16.msra.mxu0 0
        %2519 = vmatprep.subr.bf16.mxu0 0
        %2520 = vmatpush1.bf16.msra.mxu0 0
        %2521 = vmatprep.subr.bf16.mxu0 0
        %2522 = vmatpush1.bf16.msra.mxu0 0
        %2523 = vmatprep.subr.bf16.mxu0 0
        %2524 = vmatpush1.bf16.msra.mxu0 0
        %2525 = vmatprep.subr.bf16.mxu0 0
        %2526 = vmatpush1.bf16.msra.mxu0 0
        %2527 = vmatprep.subr.bf16.mxu0 0
        %2528 = vmatpush1.bf16.msra.mxu0 0
        %2529 = vmatprep.subr.bf16.mxu0 0
        %2530 = vmatpush1.bf16.msra.mxu0 0
        %2531 = vmatprep.mubr.bf16.mxu0 0
        %2532 = vmatmul.mubr.bf16.gmra.mrb[0].mxu0 %v2488
        %v2533 = vpop.f32.mrb[0].mxu0
        %v2534 = vadd.f32 0.0, %v2533
        %v2535 = vpop.f32.mrb[0].mxu0
        %v2536 = vpop.f32.mrb[0].mxu0
        %v2537 = vadd.f32 0.0, %v2536
        %v2538 = vpop.f32.mrb[0].mxu0
        %2539 = vmatprep.mubr.bf16.mxu0 0
        %2540 = vmatmul.mubr.bf16.gmra.mrb[0].mxu0 %v2491
        %v2541 = vpop.f32.mrb[0].mxu0
        %v2542 = vadd.f32 0.0, %v2541
        %v2543 = vpop.f32.mrb[0].mxu0
        %v2544 = vpop.f32.mrb[0].mxu0
        %v2545 = vadd.f32 0.0, %v2544
        %v2546 = vpop.f32.mrb[0].mxu0
        %2547 = vmatprep.mubr.bf16.mxu0 0
        %2548 = vmatmul.mubr.bf16.gmra.mrb[0].mxu0 %v2494
        %v2549 = vpop.f32.mrb[0].mxu0
        %v2550 = vadd.f32 0.0, %v2549
        %v2551 = vpop.f32.mrb[0].mxu0
        %v2552 = vpop.f32.mrb[0].mxu0
        %v2553 = vadd.f32 0.0, %v2552
        %v2554 = vpop.f32.mrb[0].mxu0
        %2555 = vmatprep.mubr.bf16.mxu0 0
        %2556 = vmatmul.mubr.bf16.gmra.mrb[0].mxu0 %v2497
        %v2557 = vpop.f32.mrb[0].mxu0
        %v2558 = vadd.f32 0.0, %v2557
        %v2559 = vpop.f32.mrb[0].mxu0
        %v2560 = vpop.f32.mrb[0].mxu0
        %v2561 = vadd.f32 0.0, %v2560
        %v2562 = vpop.f32.mrb[0].mxu0
        %2563 = vdwg.mxu0
        %v2565 = vsel %vm2041, %v2402, 0
        %v2568 = vsel %vm2041, %v2403, 0
        %v2571 = vsel %vm2041, %v2404, 0
        %v2574 = vsel %vm2041, %v2405, 0
        %2576 = vmatprep.subr.bf16.mxu0 0
        %2577 = vmatpush1.bf16.msra.mxu0 %v1644
        %2578 = vmatprep.subr.bf16.mxu0 0
        %2579 = vmatpush1.bf16.msra.mxu0 %v1645
        %2580 = vmatprep.subr.bf16.mxu0 0
        %2581 = vmatpush1.bf16.msra.mxu0 %v1646
        %2582 = vmatprep.subr.bf16.mxu0 0
        %2583 = vmatpush1.bf16.msra.mxu0 %v1647
        %2584 = vmatprep.subr.bf16.mxu0 0
        %2585 = vmatpush1.bf16.msra.mxu0 0
        %2586 = vmatprep.subr.bf16.mxu0 0
        %2587 = vmatpush1.bf16.msra.mxu0 0
        %2588 = vmatprep.subr.bf16.mxu0 0
        %2589 = vmatpush1.bf16.msra.mxu0 0
        %2590 = vmatprep.subr.bf16.mxu0 0
        %2591 = vmatpush1.bf16.msra.mxu0 0
        %2592 = vmatprep.subr.bf16.mxu0 0
        %2593 = vmatpush1.bf16.msra.mxu0 0
        %2594 = vmatprep.subr.bf16.mxu0 0
        %2595 = vmatpush1.bf16.msra.mxu0 0
        %2596 = vmatprep.subr.bf16.mxu0 0
        %2597 = vmatpush1.bf16.msra.mxu0 0
        %2598 = vmatprep.subr.bf16.mxu0 0
        %2599 = vmatpush1.bf16.msra.mxu0 0
        %2600 = vmatprep.subr.bf16.mxu0 0
        %2601 = vmatpush1.bf16.msra.mxu0 0
        %2602 = vmatprep.subr.bf16.mxu0 0
        %2603 = vmatpush1.bf16.msra.mxu0 0
        %2604 = vmatprep.subr.bf16.mxu0 0
        %2605 = vmatpush1.bf16.msra.mxu0 0
        %2606 = vmatprep.subr.bf16.mxu0 0
        %2607 = vmatpush1.bf16.msra.mxu0 0
        %2608 = vmatprep.mubr.bf16.mxu0 0
        %2609 = vmatmul.mubr.bf16.gmra.mrb[0].mxu0 %v2565
        %v2610 = vpop.f32.mrb[0].mxu0
        %v2611 = vadd.f32 0.0, %v2610
        %v2612 = vpop.f32.mrb[0].mxu0
        %v2613 = vpop.f32.mrb[0].mxu0
        %v2614 = vadd.f32 0.0, %v2613
        %v2615 = vpop.f32.mrb[0].mxu0
        %2616 = vmatprep.mubr.bf16.mxu0 0
        %2617 = vmatmul.mubr.bf16.gmra.mrb[0].mxu0 %v2568
        %v2618 = vpop.f32.mrb[0].mxu0
        %v2619 = vadd.f32 0.0, %v2618
        %v2620 = vpop.f32.mrb[0].mxu0
        %v2621 = vpop.f32.mrb[0].mxu0
        %v2622 = vadd.f32 0.0, %v2621
        %v2623 = vpop.f32.mrb[0].mxu0
        %2624 = vmatprep.mubr.bf16.mxu0 0
        %2625 = vmatmul.mubr.bf16.gmra.mrb[0].mxu0 %v2571
        %v2626 = vpop.f32.mrb[0].mxu0
        %v2627 = vadd.f32 0.0, %v2626
        %v2628 = vpop.f32.mrb[0].mxu0
        %v2629 = vpop.f32.mrb[0].mxu0
        %v2630 = vadd.f32 0.0, %v2629
        %v2631 = vpop.f32.mrb[0].mxu0
        %2632 = vmatprep.mubr.bf16.mxu0 0
        %2633 = vmatmul.mubr.bf16.gmra.mrb[0].mxu0 %v2574
        %v2634 = vpop.f32.mrb[0].mxu0
        %v2635 = vadd.f32 0.0, %v2634
        %v2636 = vpop.f32.mrb[0].mxu0
        %v2637 = vpop.f32.mrb[0].mxu0
        %v2638 = vadd.f32 0.0, %v2637
        %v2639 = vpop.f32.mrb[0].mxu0
        %2640 = vdwg.mxu0
        %v2642 = vsel %vm2041, %v2406, 0
        %v2645 = vsel %vm2041, %v2407, 0
        %v2648 = vsel %vm2041, %v2408, 0
        %v2651 = vsel %vm2041, %v2409, 0
        %2653 = vmatprep.subr.bf16.mxu0 0
        %2654 = vmatpush1.bf16.msra.mxu0 %v1648
        %2655 = vmatprep.subr.bf16.mxu0 0
        %2656 = vmatpush1.bf16.msra.mxu0 %v1649
        %2657 = vmatprep.subr.bf16.mxu0 0
        %2658 = vmatpush1.bf16.msra.mxu0 %v1650
        %2659 = vmatprep.subr.bf16.mxu0 0
        %2660 = vmatpush1.bf16.msra.mxu0 %v1651
        %2661 = vmatprep.subr.bf16.mxu0 0
        %2662 = vmatpush1.bf16.msra.mxu0 0
        %2663 = vmatprep.subr.bf16.mxu0 0
        %2664 = vmatpush1.bf16.msra.mxu0 0
        %2665 = vmatprep.subr.bf16.mxu0 0
        %2666 = vmatpush1.bf16.msra.mxu0 0
        %2667 = vmatprep.subr.bf16.mxu0 0
        %2668 = vmatpush1.bf16.msra.mxu0 0
        %2669 = vmatprep.subr.bf16.mxu0 0
        %2670 = vmatpush1.bf16.msra.mxu0 0
        %2671 = vmatprep.subr.bf16.mxu0 0
        %2672 = vmatpush1.bf16.msra.mxu0 0
        %2673 = vmatprep.subr.bf16.mxu0 0
        %2674 = vmatpush1.bf16.msra.mxu0 0
        %2675 = vmatprep.subr.bf16.mxu0 0
        %2676 = vmatpush1.bf16.msra.mxu0 0
        %2677 = vmatprep.subr.bf16.mxu0 0
        %2678 = vmatpush1.bf16.msra.mxu0 0
        %2679 = vmatprep.subr.bf16.mxu0 0
        %2680 = vmatpush1.bf16.msra.mxu0 0
        %2681 = vmatprep.subr.bf16.mxu0 0
        %2682 = vmatpush1.bf16.msra.mxu0 0
        %2683 = vmatprep.subr.bf16.mxu0 0
        %2684 = vmatpush1.bf16.msra.mxu0 0
        %2685 = vmatprep.mubr.bf16.mxu0 0
        %2686 = vmatmul.mubr.bf16.gmra.mrb[0].mxu0 %v2642
        %v2687 = vpop.f32.mrb[0].mxu0
        %v2688 = vadd.f32 0.0, %v2687
        %v2689 = vpop.f32.mrb[0].mxu0
        %v2690 = vpop.f32.mrb[0].mxu0
        %v2691 = vadd.f32 0.0, %v2690
        %v2692 = vpop.f32.mrb[0].mxu0
        %2693 = vmatprep.mubr.bf16.mxu0 0
        %2694 = vmatmul.mubr.bf16.gmra.mrb[0].mxu0 %v2645
        %v2695 = vpop.f32.mrb[0].mxu0
        %v2696 = vadd.f32 0.0, %v2695
        %v2697 = vpop.f32.mrb[0].mxu0
        %v2698 = vpop.f32.mrb[0].mxu0
        %v2699 = vadd.f32 0.0, %v2698
        %v2700 = vpop.f32.mrb[0].mxu0
        %2701 = vmatprep.mubr.bf16.mxu0 0
        %2702 = vmatmul.mubr.bf16.gmra.mrb[0].mxu0 %v2648
        %v2703 = vpop.f32.mrb[0].mxu0
        %v2704 = vadd.f32 0.0, %v2703
        %v2705 = vpop.f32.mrb[0].mxu0
        %v2706 = vpop.f32.mrb[0].mxu0
        %v2707 = vadd.f32 0.0, %v2706
        %v2708 = vpop.f32.mrb[0].mxu0
        %2709 = vmatprep.mubr.bf16.mxu0 0
        %2710 = vmatmul.mubr.bf16.gmra.mrb[0].mxu0 %v2651
        %v2711 = vpop.f32.mrb[0].mxu0
        %v2712 = vadd.f32 0.0, %v2711
        %v2713 = vpop.f32.mrb[0].mxu0
        %v2714 = vpop.f32.mrb[0].mxu0
        %v2715 = vadd.f32 0.0, %v2714
        %v2716 = vpop.f32.mrb[0].mxu0
        %2717 = vdwg.mxu0
        %v2718 = vld [vmem:[%s7] sm:$0xff]
        %v2719 = vld [vmem:[%s7 + $0x8] sm:$0xff]
        %v2720 = vld [vmem:[%s7 + $0x10] sm:$0xff]
        %v2721 = vld [vmem:[%s7 + $0x18] sm:$0xff]
        %v2722 = vpack.c.bf16 %v2718, %v2718
        %v2723 = vpack.c.bf16 %v2719, %v2719
        %v2724 = vpack.c.bf16 %v2720, %v2720
        %v2725 = vpack.c.bf16 %v2721, %v2721
        %v2726 = vpack.c.bf16 %v2460, %v2457
        %v2727 = vpack.c.bf16 %v2468, %v2465
        %v2728 = vpack.c.bf16 %v2476, %v2473
        %v2729 = vpack.c.bf16 %v2484, %v2481
        %v2730 = vpack.c.bf16 %v2537, %v2534
        %v2731 = vpack.c.bf16 %v2545, %v2542
        %v2732 = vpack.c.bf16 %v2553, %v2550
        %v2733 = vpack.c.bf16 %v2561, %v2558
        %v2734 = vpack.c.bf16 %v2614, %v2611
        %v2735 = vpack.c.bf16 %v2622, %v2619
        %v2736 = vpack.c.bf16 %v2630, %v2627
        %v2737 = vpack.c.bf16 %v2638, %v2635
        %v2738 = vpack.c.bf16 %v2691, %v2688
        %v2739 = vpack.c.bf16 %v2699, %v2696
        %v2740 = vpack.c.bf16 %v2707, %v2704
        %v2741 = vpack.c.bf16 %v2715, %v2712
        %v2743 = vsel %vm1684, %v2726, 0
        %v2746 = vsel %vm1684, %v2727, 0
        %v2749 = vsel %vm1684, %v2728, 0
        %v2752 = vsel %vm1684, %v2729, 0
        %vm2754 = vcmask 1043456
        %v2756 = vsel %vm2754, %v2722, 0
        %2758 = vmatprep.subr.bf16.mxu0 0
        %2759 = vmatpush1.bf16.msra.mxu0 %v2756
        %2760 = vmatprep.subr.bf16.mxu0 0
        %2761 = vmatpush1.bf16.msra.mxu0 0
        %2762 = vmatprep.subr.bf16.mxu0 0
        %2763 = vmatpush1.bf16.msra.mxu0 0
        %2764 = vmatprep.subr.bf16.mxu0 0
        %2765 = vmatpush1.bf16.msra.mxu0 0
        %2766 = vmatprep.subr.bf16.mxu0 0
        %2767 = vmatpush1.bf16.msra.mxu0 0
        %2768 = vmatprep.subr.bf16.mxu0 0
        %2769 = vmatpush1.bf16.msra.mxu0 0
        %2770 = vmatprep.subr.bf16.mxu0 0
        %2771 = vmatpush1.bf16.msra.mxu0 0
        %2772 = vmatprep.subr.bf16.mxu0 0
        %2773 = vmatpush1.bf16.msra.mxu0 0
        %2774 = vmatprep.subr.bf16.mxu0 0
        %2775 = vmatpush1.bf16.msra.mxu0 0
        %2776 = vmatprep.subr.bf16.mxu0 0
        %2777 = vmatpush1.bf16.msra.mxu0 0
        %2778 = vmatprep.subr.bf16.mxu0 0
        %2779 = vmatpush1.bf16.msra.mxu0 0
        %2780 = vmatprep.subr.bf16.mxu0 0
        %2781 = vmatpush1.bf16.msra.mxu0 0
        %2782 = vmatprep.subr.bf16.mxu0 0
        %2783 = vmatpush1.bf16.msra.mxu0 0
        %2784 = vmatprep.subr.bf16.mxu0 0
        %2785 = vmatpush1.bf16.msra.mxu0 0
        %2786 = vmatprep.subr.bf16.mxu0 0
        %2787 = vmatpush1.bf16.msra.mxu0 0
        %2788 = vmatprep.subr.bf16.mxu0 0
        %2789 = vmatpush1.bf16.msra.mxu0 0
        %2790 = vmatprep.mubr.bf16.mxu0 0
        %2791 = vmatmul.mubr.bf16.gmra.mrb[0].mxu0 %v2743
        %v2792 = vpop.f32.mrb[0].mxu0
        %v2793 = vadd.f32 0.0, %v2792
        %v2794 = vpop.f32.mrb[0].mxu0
        %v2795 = vpop.f32.mrb[0].mxu0
        %v2796 = vadd.f32 0.0, %v2795
        %v2797 = vpop.f32.mrb[0].mxu0
        %2798 = vmatprep.mubr.bf16.mxu0 0
        %2799 = vmatmul.mubr.bf16.gmra.mrb[0].mxu0 %v2746
        %v2800 = vpop.f32.mrb[0].mxu0
        %v2801 = vadd.f32 0.0, %v2800
        %v2802 = vpop.f32.mrb[0].mxu0
        %v2803 = vpop.f32.mrb[0].mxu0
        %v2804 = vadd.f32 0.0, %v2803
        %v2805 = vpop.f32.mrb[0].mxu0
        %2806 = vmatprep.mubr.bf16.mxu0 0
        %2807 = vmatmul.mubr.bf16.gmra.mrb[0].mxu0 %v2749
        %v2808 = vpop.f32.mrb[0].mxu0
        %v2809 = vadd.f32 0.0, %v2808
        %v2810 = vpop.f32.mrb[0].mxu0
        %v2811 = vpop.f32.mrb[0].mxu0
        %v2812 = vadd.f32 0.0, %v2811
        %v2813 = vpop.f32.mrb[0].mxu0
        %2814 = vmatprep.mubr.bf16.mxu0 0
        %2815 = vmatmul.mubr.bf16.gmra.mrb[0].mxu0 %v2752
        %v2816 = vpop.f32.mrb[0].mxu0
        %v2817 = vadd.f32 0.0, %v2816
        %v2818 = vpop.f32.mrb[0].mxu0
        %v2819 = vpop.f32.mrb[0].mxu0
        %v2820 = vadd.f32 0.0, %v2819
        %v2821 = vpop.f32.mrb[0].mxu0
        %2822 = vdwg.mxu0
        %v2824 = vsel %vm1684, %v2730, 0
        %v2827 = vsel %vm1684, %v2731, 0
        %v2830 = vsel %vm1684, %v2732, 0
        %v2833 = vsel %vm1684, %v2733, 0
        %v2836 = vsel %vm2754, %v2723, 0
        %2838 = vmatprep.subr.bf16.mxu0 0
        %2839 = vmatpush1.bf16.msra.mxu0 %v2836
        %2840 = vmatprep.subr.bf16.mxu0 0
        %2841 = vmatpush1.bf16.msra.mxu0 0
        %2842 = vmatprep.subr.bf16.mxu0 0
        %2843 = vmatpush1.bf16.msra.mxu0 0
        %2844 = vmatprep.subr.bf16.mxu0 0
        %2845 = vmatpush1.bf16.msra.mxu0 0
        %2846 = vmatprep.subr.bf16.mxu0 0
        %2847 = vmatpush1.bf16.msra.mxu0 0
        %2848 = vmatprep.subr.bf16.mxu0 0
        %2849 = vmatpush1.bf16.msra.mxu0 0
        %2850 = vmatprep.subr.bf16.mxu0 0
        %2851 = vmatpush1.bf16.msra.mxu0 0
        %2852 = vmatprep.subr.bf16.mxu0 0
        %2853 = vmatpush1.bf16.msra.mxu0 0
        %2854 = vmatprep.subr.bf16.mxu0 0
        %2855 = vmatpush1.bf16.msra.mxu0 0
        %2856 = vmatprep.subr.bf16.mxu0 0
        %2857 = vmatpush1.bf16.msra.mxu0 0
        %2858 = vmatprep.subr.bf16.mxu0 0
        %2859 = vmatpush1.bf16.msra.mxu0 0
        %2860 = vmatprep.subr.bf16.mxu0 0
        %2861 = vmatpush1.bf16.msra.mxu0 0
        %2862 = vmatprep.subr.bf16.mxu0 0
        %2863 = vmatpush1.bf16.msra.mxu0 0
        %2864 = vmatprep.subr.bf16.mxu0 0
        %2865 = vmatpush1.bf16.msra.mxu0 0
        %2866 = vmatprep.subr.bf16.mxu0 0
        %2867 = vmatpush1.bf16.msra.mxu0 0
        %2868 = vmatprep.subr.bf16.mxu0 0
        %2869 = vmatpush1.bf16.msra.mxu0 0
        %2870 = vmatprep.mubr.bf16.mxu0 0
        %2871 = vmatmul.mubr.bf16.gmra.mrb[0].mxu0 %v2824
        %v2872 = vpop.f32.mrb[0].mxu0
        %v2873 = vadd.f32 0.0, %v2872
        %v2874 = vpop.f32.mrb[0].mxu0
        %v2875 = vpop.f32.mrb[0].mxu0
        %v2876 = vadd.f32 0.0, %v2875
        %v2877 = vpop.f32.mrb[0].mxu0
        %2878 = vmatprep.mubr.bf16.mxu0 0
        %2879 = vmatmul.mubr.bf16.gmra.mrb[0].mxu0 %v2827
        %v2880 = vpop.f32.mrb[0].mxu0
        %v2881 = vadd.f32 0.0, %v2880
        %v2882 = vpop.f32.mrb[0].mxu0
        %v2883 = vpop.f32.mrb[0].mxu0
        %v2884 = vadd.f32 0.0, %v2883
        %v2885 = vpop.f32.mrb[0].mxu0
        %2886 = vmatprep.mubr.bf16.mxu0 0
        %2887 = vmatmul.mubr.bf16.gmra.mrb[0].mxu0 %v2830
        %v2888 = vpop.f32.mrb[0].mxu0
        %v2889 = vadd.f32 0.0, %v2888
        %v2890 = vpop.f32.mrb[0].mxu0
        %v2891 = vpop.f32.mrb[0].mxu0
        %v2892 = vadd.f32 0.0, %v2891
        %v2893 = vpop.f32.mrb[0].mxu0
        %2894 = vmatprep.mubr.bf16.mxu0 0
        %2895 = vmatmul.mubr.bf16.gmra.mrb[0].mxu0 %v2833
        %v2896 = vpop.f32.mrb[0].mxu0
        %v2897 = vadd.f32 0.0, %v2896
        %v2898 = vpop.f32.mrb[0].mxu0
        %v2899 = vpop.f32.mrb[0].mxu0
        %v2900 = vadd.f32 0.0, %v2899
        %v2901 = vpop.f32.mrb[0].mxu0
        %2902 = vdwg.mxu0
        %v2904 = vsel %vm1684, %v2734, 0
        %v2907 = vsel %vm1684, %v2735, 0
        %v2910 = vsel %vm1684, %v2736, 0
        %v2913 = vsel %vm1684, %v2737, 0
        %v2916 = vsel %vm2754, %v2724, 0
        %2918 = vmatprep.subr.bf16.mxu0 0
        %2919 = vmatpush1.bf16.msra.mxu0 %v2916
        %2920 = vmatprep.subr.bf16.mxu0 0
        %2921 = vmatpush1.bf16.msra.mxu0 0
        %2922 = vmatprep.subr.bf16.mxu0 0
        %2923 = vmatpush1.bf16.msra.mxu0 0
        %2924 = vmatprep.subr.bf16.mxu0 0
        %2925 = vmatpush1.bf16.msra.mxu0 0
        %2926 = vmatprep.subr.bf16.mxu0 0
        %2927 = vmatpush1.bf16.msra.mxu0 0
        %2928 = vmatprep.subr.bf16.mxu0 0
        %2929 = vmatpush1.bf16.msra.mxu0 0
        %2930 = vmatprep.subr.bf16.mxu0 0
        %2931 = vmatpush1.bf16.msra.mxu0 0
        %2932 = vmatprep.subr.bf16.mxu0 0
        %2933 = vmatpush1.bf16.msra.mxu0 0
        %2934 = vmatprep.subr.bf16.mxu0 0
        %2935 = vmatpush1.bf16.msra.mxu0 0
        %2936 = vmatprep.subr.bf16.mxu0 0
        %2937 = vmatpush1.bf16.msra.mxu0 0
        %2938 = vmatprep.subr.bf16.mxu0 0
        %2939 = vmatpush1.bf16.msra.mxu0 0
        %2940 = vmatprep.subr.bf16.mxu0 0
        %2941 = vmatpush1.bf16.msra.mxu0 0
        %2942 = vmatprep.subr.bf16.mxu0 0
        %2943 = vmatpush1.bf16.msra.mxu0 0
        %2944 = vmatprep.subr.bf16.mxu0 0
        %2945 = vmatpush1.bf16.msra.mxu0 0
        %2946 = vmatprep.subr.bf16.mxu0 0
        %2947 = vmatpush1.bf16.msra.mxu0 0
        %2948 = vmatprep.subr.bf16.mxu0 0
        %2949 = vmatpush1.bf16.msra.mxu0 0
        %2950 = vmatprep.mubr.bf16.mxu0 0
        %2951 = vmatmul.mubr.bf16.gmra.mrb[0].mxu0 %v2904
        %v2952 = vpop.f32.mrb[0].mxu0
        %v2953 = vadd.f32 0.0, %v2952
        %v2954 = vpop.f32.mrb[0].mxu0
        %v2955 = vpop.f32.mrb[0].mxu0
        %v2956 = vadd.f32 0.0, %v2955
        %v2957 = vpop.f32.mrb[0].mxu0
        %2958 = vmatprep.mubr.bf16.mxu0 0
        %2959 = vmatmul.mubr.bf16.gmra.mrb[0].mxu0 %v2907
        %v2960 = vpop.f32.mrb[0].mxu0
        %v2961 = vadd.f32 0.0, %v2960
        %v2962 = vpop.f32.mrb[0].mxu0
        %v2963 = vpop.f32.mrb[0].mxu0
        %v2964 = vadd.f32 0.0, %v2963
        %v2965 = vpop.f32.mrb[0].mxu0
        %2966 = vmatprep.mubr.bf16.mxu0 0
        %2967 = vmatmul.mubr.bf16.gmra.mrb[0].mxu0 %v2910
        %v2968 = vpop.f32.mrb[0].mxu0
        %v2969 = vadd.f32 0.0, %v2968
        %v2970 = vpop.f32.mrb[0].mxu0
        %v2971 = vpop.f32.mrb[0].mxu0
        %v2972 = vadd.f32 0.0, %v2971
        %v2973 = vpop.f32.mrb[0].mxu0
        %2974 = vmatprep.mubr.bf16.mxu0 0
        %2975 = vmatmul.mubr.bf16.gmra.mrb[0].mxu0 %v2913
        %v2976 = vpop.f32.mrb[0].mxu0
        %v2977 = vadd.f32 0.0, %v2976
        %v2978 = vpop.f32.mrb[0].mxu0
        %v2979 = vpop.f32.mrb[0].mxu0
        %v2980 = vadd.f32 0.0, %v2979
        %v2981 = vpop.f32.mrb[0].mxu0
        %2982 = vdwg.mxu0
        %v2984 = vsel %vm1684, %v2738, 0
        %v2987 = vsel %vm1684, %v2739, 0
        %v2990 = vsel %vm1684, %v2740, 0
        %v2993 = vsel %vm1684, %v2741, 0
        %v2996 = vsel %vm2754, %v2725, 0
        %2998 = vmatprep.subr.bf16.mxu0 0
        %2999 = vmatpush1.bf16.msra.mxu0 %v2996
        %3000 = vmatprep.subr.bf16.mxu0 0
        %3001 = vmatpush1.bf16.msra.mxu0 0
        %3002 = vmatprep.subr.bf16.mxu0 0
        %3003 = vmatpush1.bf16.msra.mxu0 0
        %3004 = vmatprep.subr.bf16.mxu0 0
        %3005 = vmatpush1.bf16.msra.mxu0 0
        %3006 = vmatprep.subr.bf16.mxu0 0
        %3007 = vmatpush1.bf16.msra.mxu0 0
        %3008 = vmatprep.subr.bf16.mxu0 0
        %3009 = vmatpush1.bf16.msra.mxu0 0
        %3010 = vmatprep.subr.bf16.mxu0 0
        %3011 = vmatpush1.bf16.msra.mxu0 0
        %3012 = vmatprep.subr.bf16.mxu0 0
        %3013 = vmatpush1.bf16.msra.mxu0 0
        %3014 = vmatprep.subr.bf16.mxu0 0
        %3015 = vmatpush1.bf16.msra.mxu0 0
        %3016 = vmatprep.subr.bf16.mxu0 0
        %3017 = vmatpush1.bf16.msra.mxu0 0
        %3018 = vmatprep.subr.bf16.mxu0 0
        %3019 = vmatpush1.bf16.msra.mxu0 0
        %3020 = vmatprep.subr.bf16.mxu0 0
        %3021 = vmatpush1.bf16.msra.mxu0 0
        %3022 = vmatprep.subr.bf16.mxu0 0
        %3023 = vmatpush1.bf16.msra.mxu0 0
        %3024 = vmatprep.subr.bf16.mxu0 0
        %3025 = vmatpush1.bf16.msra.mxu0 0
        %3026 = vmatprep.subr.bf16.mxu0 0
        %3027 = vmatpush1.bf16.msra.mxu0 0
        %3028 = vmatprep.subr.bf16.mxu0 0
        %3029 = vmatpush1.bf16.msra.mxu0 0
        %3030 = vmatprep.mubr.bf16.mxu0 0
        %3031 = vmatmul.mubr.bf16.gmra.mrb[0].mxu0 %v2984
        %v3032 = vpop.f32.mrb[0].mxu0
        %v3033 = vadd.f32 0.0, %v3032
        %v3034 = vpop.f32.mrb[0].mxu0
        %v3035 = vpop.f32.mrb[0].mxu0
        %v3036 = vadd.f32 0.0, %v3035
        %v3037 = vpop.f32.mrb[0].mxu0
        %3038 = vmatprep.mubr.bf16.mxu0 0
        %3039 = vmatmul.mubr.bf16.gmra.mrb[0].mxu0 %v2987
        %v3040 = vpop.f32.mrb[0].mxu0
        %v3041 = vadd.f32 0.0, %v3040
        %v3042 = vpop.f32.mrb[0].mxu0
        %v3043 = vpop.f32.mrb[0].mxu0
        %v3044 = vadd.f32 0.0, %v3043
        %v3045 = vpop.f32.mrb[0].mxu0
        %3046 = vmatprep.mubr.bf16.mxu0 0
        %3047 = vmatmul.mubr.bf16.gmra.mrb[0].mxu0 %v2990
        %v3048 = vpop.f32.mrb[0].mxu0
        %v3049 = vadd.f32 0.0, %v3048
        %v3050 = vpop.f32.mrb[0].mxu0
        %v3051 = vpop.f32.mrb[0].mxu0
        %v3052 = vadd.f32 0.0, %v3051
        %v3053 = vpop.f32.mrb[0].mxu0
        %3054 = vmatprep.mubr.bf16.mxu0 0
        %3055 = vmatmul.mubr.bf16.gmra.mrb[0].mxu0 %v2993
        %v3056 = vpop.f32.mrb[0].mxu0
        %v3057 = vadd.f32 0.0, %v3056
        %v3058 = vpop.f32.mrb[0].mxu0
        %v3059 = vpop.f32.mrb[0].mxu0
        %v3060 = vadd.f32 0.0, %v3059
        %v3061 = vpop.f32.mrb[0].mxu0
        %3062 = vdwg.mxu0
        %v3063 = vsel %vm602, %v2793, 0.0
        %v3064 = vsel %vm602, %v2873, 0.0
        %v3065 = vadd.f32 %v3063, %v3064
        %v3066 = vsel %vm602, %v2953, 0.0
        %v3067 = vadd.f32 %v3065, %v3066
        %v3068 = vsel %vm602, %v3033, 0.0
        %v3069 = vadd.f32 %v3067, %v3068
        %v3070 = vsel %vm602, %v2796, 0.0
        %v3071 = vsel %vm602, %v2876, 0.0
        %v3072 = vadd.f32 %v3070, %v3071
        %v3073 = vsel %vm602, %v2956, 0.0
        %v3074 = vadd.f32 %v3072, %v3073
        %v3075 = vsel %vm602, %v3036, 0.0
        %v3076 = vadd.f32 %v3074, %v3075
        %v3077 = vsel %vm602, %v2801, 0.0
        %v3078 = vsel %vm602, %v2881, 0.0
        %v3079 = vadd.f32 %v3077, %v3078
        %v3080 = vsel %vm602, %v2961, 0.0
        %v3081 = vadd.f32 %v3079, %v3080
        %v3082 = vsel %vm602, %v3041, 0.0
        %v3083 = vadd.f32 %v3081, %v3082
        %v3084 = vsel %vm602, %v2804, 0.0
        %v3085 = vsel %vm602, %v2884, 0.0
        %v3086 = vadd.f32 %v3084, %v3085
        %v3087 = vsel %vm602, %v2964, 0.0
        %v3088 = vadd.f32 %v3086, %v3087
        %v3089 = vsel %vm602, %v3044, 0.0
        %v3090 = vadd.f32 %v3088, %v3089
        %v3091 = vsel %vm602, %v2809, 0.0
        %v3092 = vsel %vm602, %v2889, 0.0
        %v3093 = vadd.f32 %v3091, %v3092
        %v3094 = vsel %vm602, %v2969, 0.0
        %v3095 = vadd.f32 %v3093, %v3094
        %v3096 = vsel %vm602, %v3049, 0.0
        %v3097 = vadd.f32 %v3095, %v3096
        %v3098 = vsel %vm602, %v2812, 0.0
        %v3099 = vsel %vm602, %v2892, 0.0
        %v3100 = vadd.f32 %v3098, %v3099
        %v3101 = vsel %vm602, %v2972, 0.0
        %v3102 = vadd.f32 %v3100, %v3101
        %v3103 = vsel %vm602, %v3052, 0.0
        %v3104 = vadd.f32 %v3102, %v3103
        %v3105 = vsel %vm602, %v2817, 0.0
        %v3106 = vsel %vm602, %v2897, 0.0
        %v3107 = vadd.f32 %v3105, %v3106
        %v3108 = vsel %vm602, %v2977, 0.0
        %v3109 = vadd.f32 %v3107, %v3108
        %v3110 = vsel %vm602, %v3057, 0.0
        %v3111 = vadd.f32 %v3109, %v3110
        %v3112 = vsel %vm602, %v2820, 0.0
        %v3113 = vsel %vm602, %v2900, 0.0
        %v3114 = vadd.f32 %v3112, %v3113
        %v3115 = vsel %vm602, %v2980, 0.0
        %v3116 = vadd.f32 %v3114, %v3115
        %v3117 = vsel %vm602, %v3060, 0.0
        %v3118 = vadd.f32 %v3116, %v3117
        %v3119 = vadd.f32 %v570, %v3069
        %v3120 = vadd.f32 %v573, %v3076
        %v3121 = vadd.f32 %v578, %v3083
        %v3122 = vadd.f32 %v581, %v3090
        %v3123 = vadd.f32 %v586, %v3097
        %v3124 = vadd.f32 %v589, %v3104
        %v3125 = vadd.f32 %v594, %v3111
        %v3126 = vadd.f32 %v597, %v3118
        %v3127 = vld [vmem:[%s8] sm:$0x1]
        %v3129 = vlaneseq
        %v3130 = vshrl.u32 %v3129, 7
        %v3131 = vsub.s32 0, %v3130
        %v3132 = vrot.slane %v3127, %v3131
        %v3134 = vadd.f32 %v3119, %v3132
        %v3135 = vadd.f32 %v3120, %v3132
        %v3136 = vadd.f32 %v3121, %v3132
        %v3137 = vadd.f32 %v3122, %v3132
        %v3138 = vadd.f32 %v3123, %v3132
        %v3139 = vadd.f32 %v3124, %v3132
        %v3140 = vadd.f32 %v3125, %v3132
        %v3141 = vadd.f32 %v3126, %v3132
        %v3142 = vld [vmem:[%s9] sm:$0x1]
        %v3143 = vld [vmem:[%s10] sm:$0x1]
        %v3144 = vsel %vm602, %v3134, 0.0
        %3145 = vadd.xlane.f32.xlu0 %v3144
        %v3146 = vpop.xlane.xlu0 %3145
        %v3147 = vsel %vm602, %v3135, 0.0
        %3148 = vadd.xlane.f32.xlu0 %v3147
        %v3149 = vpop.xlane.xlu0 %3148
        %v3150 = vsel %vm602, %v3136, 0.0
        %3151 = vadd.xlane.f32.xlu0 %v3150
        %v3152 = vpop.xlane.xlu0 %3151
        %v3153 = vsel %vm602, %v3137, 0.0
        %3154 = vadd.xlane.f32.xlu0 %v3153
        %v3155 = vpop.xlane.xlu0 %3154
        %v3156 = vsel %vm602, %v3138, 0.0
        %3157 = vadd.xlane.f32.xlu0 %v3156
        %v3158 = vpop.xlane.xlu0 %3157
        %v3159 = vsel %vm602, %v3139, 0.0
        %3160 = vadd.xlane.f32.xlu0 %v3159
        %v3161 = vpop.xlane.xlu0 %3160
        %v3162 = vsel %vm602, %v3140, 0.0
        %3163 = vadd.xlane.f32.xlu0 %v3162
        %v3164 = vpop.xlane.xlu0 %3163
        %v3165 = vsel %vm602, %v3141, 0.0
        %3166 = vadd.xlane.f32.xlu0 %v3165
        %v3167 = vpop.xlane.xlu0 %3166
        %v3168 = vmul.f32 %v3146, %v627
        %v3169 = vmul.f32 %v3149, %v627
        %v3170 = vmul.f32 %v3152, %v627
        %v3171 = vmul.f32 %v3155, %v627
        %v3172 = vmul.f32 %v3158, %v627
        %v3173 = vmul.f32 %v3161, %v627
        %v3174 = vmul.f32 %v3164, %v627
        %v3175 = vmul.f32 %v3167, %v627
        %v3176 = vsub.f32 %v3134, %v3168
        %v3177 = vsub.f32 %v3135, %v3169
        %v3178 = vsub.f32 %v3136, %v3170
        %v3179 = vsub.f32 %v3137, %v3171
        %v3180 = vsub.f32 %v3138, %v3172
        %v3181 = vsub.f32 %v3139, %v3173
        %v3182 = vsub.f32 %v3140, %v3174
        %v3183 = vsub.f32 %v3141, %v3175
        %v3184 = vmul.f32 %v3176, %v3176
        %v3185 = vmul.f32 %v3177, %v3177
        %v3186 = vmul.f32 %v3178, %v3178
        %v3187 = vmul.f32 %v3179, %v3179
        %v3188 = vmul.f32 %v3180, %v3180
        %v3189 = vmul.f32 %v3181, %v3181
        %v3190 = vmul.f32 %v3182, %v3182
        %v3191 = vmul.f32 %v3183, %v3183
        %v3192 = vsel %vm602, %v3184, 0.0
        %3193 = vadd.xlane.f32.xlu0 %v3192
        %v3194 = vpop.xlane.xlu0 %3193
        %v3195 = vsel %vm602, %v3185, 0.0
        %3196 = vadd.xlane.f32.xlu0 %v3195
        %v3197 = vpop.xlane.xlu0 %3196
        %v3198 = vsel %vm602, %v3186, 0.0
        %3199 = vadd.xlane.f32.xlu0 %v3198
        %v3200 = vpop.xlane.xlu0 %3199
        %v3201 = vsel %vm602, %v3187, 0.0
        %3202 = vadd.xlane.f32.xlu0 %v3201
        %v3203 = vpop.xlane.xlu0 %3202
        %v3204 = vsel %vm602, %v3188, 0.0
        %3205 = vadd.xlane.f32.xlu0 %v3204
        %v3206 = vpop.xlane.xlu0 %3205
        %v3207 = vsel %vm602, %v3189, 0.0
        %3208 = vadd.xlane.f32.xlu0 %v3207
        %v3209 = vpop.xlane.xlu0 %3208
        %v3210 = vsel %vm602, %v3190, 0.0
        %3211 = vadd.xlane.f32.xlu0 %v3210
        %v3212 = vpop.xlane.xlu0 %3211
        %v3213 = vsel %vm602, %v3191, 0.0
        %3214 = vadd.xlane.f32.xlu0 %v3213
        %v3215 = vpop.xlane.xlu0 %3214
        %v3216 = vmul.f32 %v3194, %v627
        %v3217 = vmul.f32 %v3197, %v627
        %v3218 = vmul.f32 %v3200, %v627
        %v3219 = vmul.f32 %v3203, %v627
        %v3220 = vmul.f32 %v3206, %v627
        %v3221 = vmul.f32 %v3209, %v627
        %v3222 = vmul.f32 %v3212, %v627
        %v3223 = vmul.f32 %v3215, %v627
        %v3224 = vadd.f32 %v3216, 1e-05
        %v3225 = vadd.f32 %v3217, 1e-05
        %v3226 = vadd.f32 %v3218, 1e-05
        %v3227 = vadd.f32 %v3219, 1e-05
        %v3228 = vadd.f32 %v3220, 1e-05
        %v3229 = vadd.f32 %v3221, 1e-05
        %v3230 = vadd.f32 %v3222, 1e-05
        %v3231 = vadd.f32 %v3223, 1e-05
        %v3232 = vrsqrt.pop %v3224
        %v3233 = vrsqrt.pop %v3225
        %v3234 = vrsqrt.pop %v3226
        %v3235 = vrsqrt.pop %v3227
        %v3236 = vrsqrt.pop %v3228
        %v3237 = vrsqrt.pop %v3229
        %v3238 = vrsqrt.pop %v3230
        %v3239 = vrsqrt.pop %v3231
        %v3240 = vmul.f32 %v3176, %v3232
        %v3241 = vmul.f32 %v3177, %v3233
        %v3242 = vmul.f32 %v3178, %v3234
        %v3243 = vmul.f32 %v3179, %v3235
        %v3244 = vmul.f32 %v3180, %v3236
        %v3245 = vmul.f32 %v3181, %v3237
        %v3246 = vmul.f32 %v3182, %v3238
        %v3247 = vmul.f32 %v3183, %v3239
        %v3249 = vlaneseq
        %v3250 = vshrl.u32 %v3249, 7
        %v3251 = vsub.s32 0, %v3250
        %v3252 = vrot.slane %v3142, %v3251
        %v3254 = vmul.f32 %v3240, %v3252
        %v3255 = vmul.f32 %v3241, %v3252
        %v3256 = vmul.f32 %v3242, %v3252
        %v3257 = vmul.f32 %v3243, %v3252
        %v3258 = vmul.f32 %v3244, %v3252
        %v3259 = vmul.f32 %v3245, %v3252
        %v3260 = vmul.f32 %v3246, %v3252
        %v3261 = vmul.f32 %v3247, %v3252
        %v3263 = vlaneseq
        %v3264 = vshrl.u32 %v3263, 7
        %v3265 = vsub.s32 0, %v3264
        %v3266 = vrot.slane %v3143, %v3265
        %v3268 = vadd.f32 %v3254, %v3266
        %v3269 = vadd.f32 %v3255, %v3266
        %v3270 = vadd.f32 %v3256, %v3266
        %v3271 = vadd.f32 %v3257, %v3266
        %v3272 = vadd.f32 %v3258, %v3266
        %v3273 = vadd.f32 %v3259, %v3266
        %v3274 = vadd.f32 %v3260, %v3266
        %v3275 = vadd.f32 %v3261, %v3266
        %v3276 = vpack.c.bf16 %v3269, %v3268
        %v3277 = vpack.c.bf16 %v3271, %v3270
        %v3278 = vpack.c.bf16 %v3273, %v3272
        %v3279 = vpack.c.bf16 %v3275, %v3274
        %v3280 = vld [vmem:[%s11] sm:$0xf]
        %v3281 = vld [vmem:[%s11 + $0x4] sm:$0xf]
        %v3282 = vld [vmem:[%s11 + $0x8] sm:$0xf]
        %v3283 = vld [vmem:[%s11 + $0xc] sm:$0xf]
        %v3284 = vld [vmem:[%s12] sm:$0x1]
        %v3286 = vlaneseq
        %v3287 = vshrl.u32 %v3286, 7
        %v3288 = vsub.s32 0, %v3287
        %v3289 = vrot.slane %v3284, %v3288
        %v3295 = vunpack.c.l.b16 %v3280
        %v3296 = vunpack.c.l.b16 %v3281
        %v3297 = vunpack.c.l.b16 %v3282
        %v3298 = vunpack.c.l.b16 %v3283
        %v3299 = vpack.c.b16 %v3296, %v3295
        %v3300 = vpack.c.b16 %v3298, %v3297
        %v3304 = vsel %vm602, %v3276, 0
        %v3307 = vsel %vm602, %v3277, 0
        %v3310 = vsel %vm602, %v3278, 0
        %v3313 = vsel %vm602, %v3279, 0
        %3315 = vmatprep.subr.bf16.mxu0 0
        %3316 = vmatpush1.bf16.msra.mxu0 %v3299
        %3317 = vmatprep.subr.bf16.mxu0 0
        %3318 = vmatpush1.bf16.msra.mxu0 %v3300
        %3319 = vmatprep.subr.bf16.mxu0 0
        %3320 = vmatpush1.bf16.msra.mxu0 0
        %3321 = vmatprep.subr.bf16.mxu0 0
        %3322 = vmatpush1.bf16.msra.mxu0 0
        %3323 = vmatprep.subr.bf16.mxu0 0
        %3324 = vmatpush1.bf16.msra.mxu0 0
        %3325 = vmatprep.subr.bf16.mxu0 0
        %3326 = vmatpush1.bf16.msra.mxu0 0
        %3327 = vmatprep.subr.bf16.mxu0 0
        %3328 = vmatpush1.bf16.msra.mxu0 0
        %3329 = vmatprep.subr.bf16.mxu0 0
        %3330 = vmatpush1.bf16.msra.mxu0 0
        %3331 = vmatprep.subr.bf16.mxu0 0
        %3332 = vmatpush1.bf16.msra.mxu0 0
        %3333 = vmatprep.subr.bf16.mxu0 0
        %3334 = vmatpush1.bf16.msra.mxu0 0
        %3335 = vmatprep.subr.bf16.mxu0 0
        %3336 = vmatpush1.bf16.msra.mxu0 0
        %3337 = vmatprep.subr.bf16.mxu0 0
        %3338 = vmatpush1.bf16.msra.mxu0 0
        %3339 = vmatprep.subr.bf16.mxu0 0
        %3340 = vmatpush1.bf16.msra.mxu0 0
        %3341 = vmatprep.subr.bf16.mxu0 0
        %3342 = vmatpush1.bf16.msra.mxu0 0
        %3343 = vmatprep.subr.bf16.mxu0 0
        %3344 = vmatpush1.bf16.msra.mxu0 0
        %3345 = vmatprep.subr.bf16.mxu0 0
        %3346 = vmatpush1.bf16.msra.mxu0 0
        %3347 = vmatprep.mubr.bf16.mxu0 0
        %3348 = vmatmul.mubr.bf16.gmra.mrb[0].mxu0 %v3304
        %v3349 = vpop.f32.mrb[0].mxu0
        %v3350 = vadd.f32 %v3289, %v3349
        %v3351 = vpop.f32.mrb[0].mxu0
        %v3352 = vpop.f32.mrb[0].mxu0
        %v3353 = vadd.f32 %v3289, %v3352
        %v3354 = vpop.f32.mrb[0].mxu0
        %3355 = vmatprep.mubr.bf16.mxu0 0
        %3356 = vmatmul.mubr.bf16.gmra.mrb[0].mxu0 %v3307
        %v3357 = vpop.f32.mrb[0].mxu0
        %v3358 = vadd.f32 %v3289, %v3357
        %v3359 = vpop.f32.mrb[0].mxu0
        %v3360 = vpop.f32.mrb[0].mxu0
        %v3361 = vadd.f32 %v3289, %v3360
        %v3362 = vpop.f32.mrb[0].mxu0
        %3363 = vmatprep.mubr.bf16.mxu0 0
        %3364 = vmatmul.mubr.bf16.gmra.mrb[0].mxu0 %v3310
        %v3365 = vpop.f32.mrb[0].mxu0
        %v3366 = vadd.f32 %v3289, %v3365
        %v3367 = vpop.f32.mrb[0].mxu0
        %v3368 = vpop.f32.mrb[0].mxu0
        %v3369 = vadd.f32 %v3289, %v3368
        %v3370 = vpop.f32.mrb[0].mxu0
        %3371 = vmatprep.mubr.bf16.mxu0 0
        %3372 = vmatmul.mubr.bf16.gmra.mrb[0].mxu0 %v3313
        %v3373 = vpop.f32.mrb[0].mxu0
        %v3374 = vadd.f32 %v3289, %v3373
        %v3375 = vpop.f32.mrb[0].mxu0
        %v3376 = vpop.f32.mrb[0].mxu0
        %v3377 = vadd.f32 %v3289, %v3376
        %v3378 = vpop.f32.mrb[0].mxu0
        %3379 = vdwg.mxu0
        %v3380 = vmul.f32 %v3350, 0.5
        %v3381 = vmul.f32 %v3353, 0.5
        %v3382 = vmul.f32 %v3358, 0.5
        %v3383 = vmul.f32 %v3361, 0.5
        %v3384 = vmul.f32 %v3366, 0.5
        %v3385 = vmul.f32 %v3369, 0.5
        %v3386 = vmul.f32 %v3374, 0.5
        %v3387 = vmul.f32 %v3377, 0.5
        %v3388 = vmul.f32 %v3350, 0.70710677
        %v3389 = vmul.f32 %v3353, 0.70710677
        %v3390 = vmul.f32 %v3358, 0.70710677
        %v3391 = vmul.f32 %v3361, 0.70710677
        %v3392 = vmul.f32 %v3366, 0.70710677
        %v3393 = vmul.f32 %v3369, 0.70710677
        %v3394 = vmul.f32 %v3374, 0.70710677
        %v3395 = vmul.f32 %v3377, 0.70710677
        %vm3396 = vcmp.ge.f32.partialorder %v3388, 0.0
        %vm3397 = vcmp.ge.f32.partialorder %v3389, 0.0
        %vm3398 = vcmp.ge.f32.partialorder %v3390, 0.0
        %vm3399 = vcmp.ge.f32.partialorder %v3391, 0.0
        %vm3400 = vcmp.ge.f32.partialorder %v3392, 0.0
        %vm3401 = vcmp.ge.f32.partialorder %v3393, 0.0
        %vm3402 = vcmp.ge.f32.partialorder %v3394, 0.0
        %vm3403 = vcmp.ge.f32.partialorder %v3395, 0.0
        %v3404 = vsel %vm3396, 1.0, -1.0
        %v3405 = vsel %vm3397, 1.0, -1.0
        %v3406 = vsel %vm3398, 1.0, -1.0
        %v3407 = vsel %vm3399, 1.0, -1.0
        %v3408 = vsel %vm3400, 1.0, -1.0
        %v3409 = vsel %vm3401, 1.0, -1.0
        %v3410 = vsel %vm3402, 1.0, -1.0
        %v3411 = vsel %vm3403, 1.0, -1.0
        %v3412 = vand.u32 2147483647, %v3388
        %v3413 = vand.u32 2147483647, %v3389
        %v3414 = vand.u32 2147483647, %v3390
        %v3415 = vand.u32 2147483647, %v3391
        %v3416 = vand.u32 2147483647, %v3392
        %v3417 = vand.u32 2147483647, %v3393
        %v3418 = vand.u32 2147483647, %v3394
        %v3419 = vand.u32 2147483647, %v3395
        %v3420 = vmul.f32 %v3412, 0.3275911
        %v3421 = vmul.f32 %v3413, 0.3275911
        %v3422 = vmul.f32 %v3414, 0.3275911
        %v3423 = vmul.f32 %v3415, 0.3275911
        %v3424 = vmul.f32 %v3416, 0.3275911
        %v3425 = vmul.f32 %v3417, 0.3275911
        %v3426 = vmul.f32 %v3418, 0.3275911
        %v3427 = vmul.f32 %v3419, 0.3275911
        %v3428 = vadd.f32 %v3420, 1.0
        %v3429 = vadd.f32 %v3421, 1.0
        %v3430 = vadd.f32 %v3422, 1.0
        %v3431 = vadd.f32 %v3423, 1.0
        %v3432 = vadd.f32 %v3424, 1.0
        %v3433 = vadd.f32 %v3425, 1.0
        %v3434 = vadd.f32 %v3426, 1.0
        %v3435 = vadd.f32 %v3427, 1.0
        %v3436 = vrcp.pop %v3428
        %v3437 = vmul.f32 1.0, %v3436
        %v3438 = vrcp.pop %v3429
        %v3439 = vmul.f32 1.0, %v3438
        %v3440 = vrcp.pop %v3430
        %v3441 = vmul.f32 1.0, %v3440
        %v3442 = vrcp.pop %v3431
        %v3443 = vmul.f32 1.0, %v3442
        %v3444 = vrcp.pop %v3432
        %v3445 = vmul.f32 1.0, %v3444
        %v3446 = vrcp.pop %v3433
        %v3447 = vmul.f32 1.0, %v3446
        %v3448 = vrcp.pop %v3434
        %v3449 = vmul.f32 1.0, %v3448
        %v3450 = vrcp.pop %v3435
        %v3451 = vmul.f32 1.0, %v3450
        %v3452 = vmul.f32 %v3437, 1.0614054
        %v3453 = vmul.f32 %v3439, 1.0614054
        %v3454 = vmul.f32 %v3441, 1.0614054
        %v3455 = vmul.f32 %v3443, 1.0614054
        %v3456 = vmul.f32 %v3445, 1.0614054
        %v3457 = vmul.f32 %v3447, 1.0614054
        %v3458 = vmul.f32 %v3449, 1.0614054
        %v3459 = vmul.f32 %v3451, 1.0614054
        %v3460 = vadd.f32 %v3452, -1.4531521
        %v3461 = vadd.f32 %v3453, -1.4531521
        %v3462 = vadd.f32 %v3454, -1.4531521
        %v3463 = vadd.f32 %v3455, -1.4531521
        %v3464 = vadd.f32 %v3456, -1.4531521
        %v3465 = vadd.f32 %v3457, -1.4531521
        %v3466 = vadd.f32 %v3458, -1.4531521
        %v3467 = vadd.f32 %v3459, -1.4531521
        %v3468 = vmul.f32 %v3460, %v3437
        %v3469 = vmul.f32 %v3461, %v3439
        %v3470 = vmul.f32 %v3462, %v3441
        %v3471 = vmul.f32 %v3463, %v3443
        %v3472 = vmul.f32 %v3464, %v3445
        %v3473 = vmul.f32 %v3465, %v3447
        %v3474 = vmul.f32 %v3466, %v3449
        %v3475 = vmul.f32 %v3467, %v3451
        %v3476 = vadd.f32 %v3468, 1.4214138
        %v3477 = vadd.f32 %v3469, 1.4214138
        %v3478 = vadd.f32 %v3470, 1.4214138
        %v3479 = vadd.f32 %v3471, 1.4214138
        %v3480 = vadd.f32 %v3472, 1.4214138
        %v3481 = vadd.f32 %v3473, 1.4214138
        %v3482 = vadd.f32 %v3474, 1.4214138
        %v3483 = vadd.f32 %v3475, 1.4214138
        %v3484 = vmul.f32 %v3476, %v3437
        %v3485 = vmul.f32 %v3477, %v3439
        %v3486 = vmul.f32 %v3478, %v3441
        %v3487 = vmul.f32 %v3479, %v3443
        %v3488 = vmul.f32 %v3480, %v3445
        %v3489 = vmul.f32 %v3481, %v3447
        %v3490 = vmul.f32 %v3482, %v3449
        %v3491 = vmul.f32 %v3483, %v3451
        %v3492 = vadd.f32 %v3484, -0.28449672
        %v3493 = vadd.f32 %v3485, -0.28449672
        %v3494 = vadd.f32 %v3486, -0.28449672
        %v3495 = vadd.f32 %v3487, -0.28449672
        %v3496 = vadd.f32 %v3488, -0.28449672
        %v3497 = vadd.f32 %v3489, -0.28449672
        %v3498 = vadd.f32 %v3490, -0.28449672
        %v3499 = vadd.f32 %v3491, -0.28449672
        %v3500 = vmul.f32 %v3492, %v3437
        %v3501 = vmul.f32 %v3493, %v3439
        %v3502 = vmul.f32 %v3494, %v3441
        %v3503 = vmul.f32 %v3495, %v3443
        %v3504 = vmul.f32 %v3496, %v3445
        %v3505 = vmul.f32 %v3497, %v3447
        %v3506 = vmul.f32 %v3498, %v3449
        %v3507 = vmul.f32 %v3499, %v3451
        %v3508 = vadd.f32 %v3500, 0.2548296
        %v3509 = vadd.f32 %v3501, 0.2548296
        %v3510 = vadd.f32 %v3502, 0.2548296
        %v3511 = vadd.f32 %v3503, 0.2548296
        %v3512 = vadd.f32 %v3504, 0.2548296
        %v3513 = vadd.f32 %v3505, 0.2548296
        %v3514 = vadd.f32 %v3506, 0.2548296
        %v3515 = vadd.f32 %v3507, 0.2548296
        %v3516 = vmul.f32 %v3508, %v3437
        %v3517 = vmul.f32 %v3509, %v3439
        %v3518 = vmul.f32 %v3510, %v3441
        %v3519 = vmul.f32 %v3511, %v3443
        %v3520 = vmul.f32 %v3512, %v3445
        %v3521 = vmul.f32 %v3513, %v3447
        %v3522 = vmul.f32 %v3514, %v3449
        %v3523 = vmul.f32 %v3515, %v3451
        %v3524 = vsub.f32 0.0, %v3412
        %v3525 = vsub.f32 0.0, %v3413
        %v3526 = vsub.f32 0.0, %v3414
        %v3527 = vsub.f32 0.0, %v3415
        %v3528 = vsub.f32 0.0, %v3416
        %v3529 = vsub.f32 0.0, %v3417
        %v3530 = vsub.f32 0.0, %v3418
        %v3531 = vsub.f32 0.0, %v3419
        %v3532 = vmul.f32 %v3524, %v3412
        %v3533 = vmul.f32 %v3525, %v3413
        %v3534 = vmul.f32 %v3526, %v3414
        %v3535 = vmul.f32 %v3527, %v3415
        %v3536 = vmul.f32 %v3528, %v3416
        %v3537 = vmul.f32 %v3529, %v3417
        %v3538 = vmul.f32 %v3530, %v3418
        %v3539 = vmul.f32 %v3531, %v3419
        %v3540 = vmul.f32 %v3532, 1.442695
        %v3541 = vpow.pop %v3540
        %v3542 = vmul.f32 %v3533, 1.442695
        %v3543 = vpow.pop %v3542
        %v3544 = vmul.f32 %v3534, 1.442695
        %v3545 = vpow.pop %v3544
        %v3546 = vmul.f32 %v3535, 1.442695
        %v3547 = vpow.pop %v3546
        %v3548 = vmul.f32 %v3536, 1.442695
        %v3549 = vpow.pop %v3548
        %v3550 = vmul.f32 %v3537, 1.442695
        %v3551 = vpow.pop %v3550
        %v3552 = vmul.f32 %v3538, 1.442695
        %v3553 = vpow.pop %v3552
        %v3554 = vmul.f32 %v3539, 1.442695
        %v3555 = vpow.pop %v3554
        %v3556 = vmul.f32 %v3516, %v3541
        %v3557 = vmul.f32 %v3517, %v3543
        %v3558 = vmul.f32 %v3518, %v3545
        %v3559 = vmul.f32 %v3519, %v3547
        %v3560 = vmul.f32 %v3520, %v3549
        %v3561 = vmul.f32 %v3521, %v3551
        %v3562 = vmul.f32 %v3522, %v3553
        %v3563 = vmul.f32 %v3523, %v3555
        %v3564 = vsub.f32 1.0, %v3556
        %v3565 = vsub.f32 1.0, %v3557
        %v3566 = vsub.f32 1.0, %v3558
        %v3567 = vsub.f32 1.0, %v3559
        %v3568 = vsub.f32 1.0, %v3560
        %v3569 = vsub.f32 1.0, %v3561
        %v3570 = vsub.f32 1.0, %v3562
        %v3571 = vsub.f32 1.0, %v3563
        %v3572 = vmul.f32 %v3404, %v3564
        %v3573 = vmul.f32 %v3405, %v3565
        %v3574 = vmul.f32 %v3406, %v3566
        %v3575 = vmul.f32 %v3407, %v3567
        %v3576 = vmul.f32 %v3408, %v3568
        %v3577 = vmul.f32 %v3409, %v3569
        %v3578 = vmul.f32 %v3410, %v3570
        %v3579 = vmul.f32 %v3411, %v3571
        %v3580 = vadd.f32 %v3572, 1.0
        %v3581 = vadd.f32 %v3573, 1.0
        %v3582 = vadd.f32 %v3574, 1.0
        %v3583 = vadd.f32 %v3575, 1.0
        %v3584 = vadd.f32 %v3576, 1.0
        %v3585 = vadd.f32 %v3577, 1.0
        %v3586 = vadd.f32 %v3578, 1.0
        %v3587 = vadd.f32 %v3579, 1.0
        %v3588 = vmul.f32 %v3380, %v3580
        %v3589 = vmul.f32 %v3381, %v3581
        %v3590 = vmul.f32 %v3382, %v3582
        %v3591 = vmul.f32 %v3383, %v3583
        %v3592 = vmul.f32 %v3384, %v3584
        %v3593 = vmul.f32 %v3385, %v3585
        %v3594 = vmul.f32 %v3386, %v3586
        %v3595 = vmul.f32 %v3387, %v3587
        %v3596 = vpack.c.bf16 %v3589, %v3588
        %v3597 = vpack.c.bf16 %v3591, %v3590
        %v3598 = vpack.c.bf16 %v3593, %v3592
        %v3599 = vpack.c.bf16 %v3595, %v3594
        %v3600 = vld [vmem:[%s13] sm:$0xf]
        %v3601 = vld [vmem:[%s13 + $0x4] sm:$0xf]
        %v3602 = vld [vmem:[%s13 + $0x8] sm:$0xf]
        %v3603 = vld [vmem:[%s13 + $0xc] sm:$0xf]
        %v3604 = vld [vmem:[%s13 + $0x10] sm:$0xf]
        %v3605 = vld [vmem:[%s13 + $0x14] sm:$0xf]
        %v3606 = vld [vmem:[%s13 + $0x18] sm:$0xf]
        %v3607 = vld [vmem:[%s13 + $0x1c] sm:$0xf]
        %v3608 = vld [vmem:[%s13 + $0x20] sm:$0xf]
        %v3609 = vld [vmem:[%s13 + $0x24] sm:$0xf]
        %v3610 = vld [vmem:[%s13 + $0x28] sm:$0xf]
        %v3611 = vld [vmem:[%s13 + $0x2c] sm:$0xf]
        %v3612 = vld [vmem:[%s13 + $0x30] sm:$0xf]
        %v3613 = vld [vmem:[%s13 + $0x34] sm:$0xf]
        %v3614 = vld [vmem:[%s13 + $0x38] sm:$0xf]
        %v3615 = vld [vmem:[%s13 + $0x3c] sm:$0xf]
        %v3616 = vld [vmem:[%s14] sm:$0x1]
        %v3618 = vlaneseq
        %v3619 = vshrl.u32 %v3618, 7
        %v3620 = vsub.s32 0, %v3619
        %v3621 = vrot.slane %v3616, %v3620
        %v3639 = vunpack.c.l.b16 %v3600
        %v3640 = vunpack.c.l.b16 %v3601
        %v3641 = vunpack.c.l.b16 %v3602
        %v3642 = vunpack.c.l.b16 %v3603
        %v3643 = vunpack.c.l.b16 %v3604
        %v3644 = vunpack.c.l.b16 %v3605
        %v3645 = vunpack.c.l.b16 %v3606
        %v3646 = vunpack.c.l.b16 %v3607
        %v3647 = vunpack.c.l.b16 %v3608
        %v3648 = vunpack.c.l.b16 %v3609
        %v3649 = vunpack.c.l.b16 %v3610
        %v3650 = vunpack.c.l.b16 %v3611
        %v3651 = vunpack.c.l.b16 %v3612
        %v3652 = vunpack.c.l.b16 %v3613
        %v3653 = vunpack.c.l.b16 %v3614
        %v3654 = vunpack.c.l.b16 %v3615
        %v3655 = vpack.c.b16 %v3640, %v3639
        %v3656 = vpack.c.b16 %v3642, %v3641
        %v3657 = vpack.c.b16 %v3644, %v3643
        %v3658 = vpack.c.b16 %v3646, %v3645
        %v3659 = vpack.c.b16 %v3648, %v3647
        %v3660 = vpack.c.b16 %v3650, %v3649
        %v3661 = vpack.c.b16 %v3652, %v3651
        %v3662 = vpack.c.b16 %v3654, %v3653
        %3671 = vmatprep.subr.bf16.mxu0 0
        %3672 = vmatpush1.bf16.msra.mxu0 %v3655
        %3673 = vmatprep.subr.bf16.mxu0 0
        %3674 = vmatpush1.bf16.msra.mxu0 %v3656
        %3675 = vmatprep.subr.bf16.mxu0 0
        %3676 = vmatpush1.bf16.msra.mxu0 %v3657
        %3677 = vmatprep.subr.bf16.mxu0 0
        %3678 = vmatpush1.bf16.msra.mxu0 %v3658
        %3679 = vmatprep.subr.bf16.mxu0 0
        %3680 = vmatpush1.bf16.msra.mxu0 %v3659
        %3681 = vmatprep.subr.bf16.mxu0 0
        %3682 = vmatpush1.bf16.msra.mxu0 %v3660
        %3683 = vmatprep.subr.bf16.mxu0 0
        %3684 = vmatpush1.bf16.msra.mxu0 %v3661
        %3685 = vmatprep.subr.bf16.mxu0 0
        %3686 = vmatpush1.bf16.msra.mxu0 %v3662
        %3687 = vmatprep.subr.bf16.mxu0 0
        %3688 = vmatpush1.bf16.msra.mxu0 0
        %3689 = vmatprep.subr.bf16.mxu0 0
        %3690 = vmatpush1.bf16.msra.mxu0 0
        %3691 = vmatprep.subr.bf16.mxu0 0
        %3692 = vmatpush1.bf16.msra.mxu0 0
        %3693 = vmatprep.subr.bf16.mxu0 0
        %3694 = vmatpush1.bf16.msra.mxu0 0
        %3695 = vmatprep.subr.bf16.mxu0 0
        %3696 = vmatpush1.bf16.msra.mxu0 0
        %3697 = vmatprep.subr.bf16.mxu0 0
        %3698 = vmatpush1.bf16.msra.mxu0 0
        %3699 = vmatprep.subr.bf16.mxu0 0
        %3700 = vmatpush1.bf16.msra.mxu0 0
        %3701 = vmatprep.subr.bf16.mxu0 0
        %3702 = vmatpush1.bf16.msra.mxu0 0
        %3703 = vmatprep.mubr.bf16.mxu0 0
        %3704 = vmatmul.mubr.bf16.gmra.mrb[0].mxu0 %v3596
        %v3705 = vpop.f32.mrb[0].mxu0
        %v3706 = vadd.f32 %v3621, %v3705
        %v3707 = vpop.f32.mrb[0].mxu0
        %v3708 = vpop.f32.mrb[0].mxu0
        %v3709 = vadd.f32 %v3621, %v3708
        %v3710 = vpop.f32.mrb[0].mxu0
        %3711 = vmatprep.mubr.bf16.mxu0 0
        %3712 = vmatmul.mubr.bf16.gmra.mrb[0].mxu0 %v3597
        %v3713 = vpop.f32.mrb[0].mxu0
        %v3714 = vadd.f32 %v3621, %v3713
        %v3715 = vpop.f32.mrb[0].mxu0
        %v3716 = vpop.f32.mrb[0].mxu0
        %v3717 = vadd.f32 %v3621, %v3716
        %v3718 = vpop.f32.mrb[0].mxu0
        %3719 = vmatprep.mubr.bf16.mxu0 0
        %3720 = vmatmul.mubr.bf16.gmra.mrb[0].mxu0 %v3598
        %v3721 = vpop.f32.mrb[0].mxu0
        %v3722 = vadd.f32 %v3621, %v3721
        %v3723 = vpop.f32.mrb[0].mxu0
        %v3724 = vpop.f32.mrb[0].mxu0
        %v3725 = vadd.f32 %v3621, %v3724
        %v3726 = vpop.f32.mrb[0].mxu0
        %3727 = vmatprep.mubr.bf16.mxu0 0
        %3728 = vmatmul.mubr.bf16.gmra.mrb[0].mxu0 %v3599
        %v3729 = vpop.f32.mrb[0].mxu0
        %v3730 = vadd.f32 %v3621, %v3729
        %v3731 = vpop.f32.mrb[0].mxu0
        %v3732 = vpop.f32.mrb[0].mxu0
        %v3733 = vadd.f32 %v3621, %v3732
        %v3734 = vpop.f32.mrb[0].mxu0
        %3735 = vdwg.mxu0
        %v3736 = vadd.f32 %v3134, %v3706
        %v3737 = vadd.f32 %v3135, %v3709
        %v3738 = vadd.f32 %v3136, %v3714
        %v3739 = vadd.f32 %v3137, %v3717
        %v3740 = vadd.f32 %v3138, %v3722
        %v3741 = vadd.f32 %v3139, %v3725
        %v3742 = vadd.f32 %v3140, %v3730
        %v3743 = vadd.f32 %v3141, %v3733
        %s3744 = scalar_lea.vmem %s4, 1
        %v3745 = vld [vmem:[%s3744] sm:$0x1]
        %s3746 = scalar_lea.vmem %s5, 1
        %v3747 = vld [vmem:[%s3746] sm:$0x1]
        %v3748 = vsel %vm602, %v3736, 0.0
        %3749 = vadd.xlane.f32.xlu0 %v3748
        %v3750 = vpop.xlane.xlu0 %3749
        %v3751 = vsel %vm602, %v3737, 0.0
        %3752 = vadd.xlane.f32.xlu0 %v3751
        %v3753 = vpop.xlane.xlu0 %3752
        %v3754 = vsel %vm602, %v3738, 0.0
        %3755 = vadd.xlane.f32.xlu0 %v3754
        %v3756 = vpop.xlane.xlu0 %3755
        %v3757 = vsel %vm602, %v3739, 0.0
        %3758 = vadd.xlane.f32.xlu0 %v3757
        %v3759 = vpop.xlane.xlu0 %3758
        %v3760 = vsel %vm602, %v3740, 0.0
        %3761 = vadd.xlane.f32.xlu0 %v3760
        %v3762 = vpop.xlane.xlu0 %3761
        %v3763 = vsel %vm602, %v3741, 0.0
        %3764 = vadd.xlane.f32.xlu0 %v3763
        %v3765 = vpop.xlane.xlu0 %3764
        %v3766 = vsel %vm602, %v3742, 0.0
        %3767 = vadd.xlane.f32.xlu0 %v3766
        %v3768 = vpop.xlane.xlu0 %3767
        %v3769 = vsel %vm602, %v3743, 0.0
        %3770 = vadd.xlane.f32.xlu0 %v3769
        %v3771 = vpop.xlane.xlu0 %3770
        %v3772 = vmul.f32 %v3750, %v627
        %v3773 = vmul.f32 %v3753, %v627
        %v3774 = vmul.f32 %v3756, %v627
        %v3775 = vmul.f32 %v3759, %v627
        %v3776 = vmul.f32 %v3762, %v627
        %v3777 = vmul.f32 %v3765, %v627
        %v3778 = vmul.f32 %v3768, %v627
        %v3779 = vmul.f32 %v3771, %v627
        %v3780 = vsub.f32 %v3736, %v3772
        %v3781 = vsub.f32 %v3737, %v3773
        %v3782 = vsub.f32 %v3738, %v3774
        %v3783 = vsub.f32 %v3739, %v3775
        %v3784 = vsub.f32 %v3740, %v3776
        %v3785 = vsub.f32 %v3741, %v3777
        %v3786 = vsub.f32 %v3742, %v3778
        %v3787 = vsub.f32 %v3743, %v3779
        %v3788 = vmul.f32 %v3780, %v3780
        %v3789 = vmul.f32 %v3781, %v3781
        %v3790 = vmul.f32 %v3782, %v3782
        %v3791 = vmul.f32 %v3783, %v3783
        %v3792 = vmul.f32 %v3784, %v3784
        %v3793 = vmul.f32 %v3785, %v3785
        %v3794 = vmul.f32 %v3786, %v3786
        %v3795 = vmul.f32 %v3787, %v3787
        %v3796 = vsel %vm602, %v3788, 0.0
        %3797 = vadd.xlane.f32.xlu0 %v3796
        %v3798 = vpop.xlane.xlu0 %3797
        %v3799 = vsel %vm602, %v3789, 0.0
        %3800 = vadd.xlane.f32.xlu0 %v3799
        %v3801 = vpop.xlane.xlu0 %3800
        %v3802 = vsel %vm602, %v3790, 0.0
        %3803 = vadd.xlane.f32.xlu0 %v3802
        %v3804 = vpop.xlane.xlu0 %3803
        %v3805 = vsel %vm602, %v3791, 0.0
        %3806 = vadd.xlane.f32.xlu0 %v3805
        %v3807 = vpop.xlane.xlu0 %3806
        %v3808 = vsel %vm602, %v3792, 0.0
        %3809 = vadd.xlane.f32.xlu0 %v3808
        %v3810 = vpop.xlane.xlu0 %3809
        %v3811 = vsel %vm602, %v3793, 0.0
        %3812 = vadd.xlane.f32.xlu0 %v3811
        %v3813 = vpop.xlane.xlu0 %3812
        %v3814 = vsel %vm602, %v3794, 0.0
        %3815 = vadd.xlane.f32.xlu0 %v3814
        %v3816 = vpop.xlane.xlu0 %3815
        %v3817 = vsel %vm602, %v3795, 0.0
        %3818 = vadd.xlane.f32.xlu0 %v3817
        %v3819 = vpop.xlane.xlu0 %3818
        %v3820 = vmul.f32 %v3798, %v627
        %v3821 = vmul.f32 %v3801, %v627
        %v3822 = vmul.f32 %v3804, %v627
        %v3823 = vmul.f32 %v3807, %v627
        %v3824 = vmul.f32 %v3810, %v627
        %v3825 = vmul.f32 %v3813, %v627
        %v3826 = vmul.f32 %v3816, %v627
        %v3827 = vmul.f32 %v3819, %v627
        %v3828 = vadd.f32 %v3820, 1e-05
        %v3829 = vadd.f32 %v3821, 1e-05
        %v3830 = vadd.f32 %v3822, 1e-05
        %v3831 = vadd.f32 %v3823, 1e-05
        %v3832 = vadd.f32 %v3824, 1e-05
        %v3833 = vadd.f32 %v3825, 1e-05
        %v3834 = vadd.f32 %v3826, 1e-05
        %v3835 = vadd.f32 %v3827, 1e-05
        %v3836 = vrsqrt.pop %v3828
        %v3837 = vrsqrt.pop %v3829
        %v3838 = vrsqrt.pop %v3830
        %v3839 = vrsqrt.pop %v3831
        %v3840 = vrsqrt.pop %v3832
        %v3841 = vrsqrt.pop %v3833
        %v3842 = vrsqrt.pop %v3834
        %v3843 = vrsqrt.pop %v3835
        %v3844 = vmul.f32 %v3780, %v3836
        %v3845 = vmul.f32 %v3781, %v3837
        %v3846 = vmul.f32 %v3782, %v3838
        %v3847 = vmul.f32 %v3783, %v3839
        %v3848 = vmul.f32 %v3784, %v3840
        %v3849 = vmul.f32 %v3785, %v3841
        %v3850 = vmul.f32 %v3786, %v3842
        %v3851 = vmul.f32 %v3787, %v3843
        %v3853 = vlaneseq
        %v3854 = vshrl.u32 %v3853, 7
        %v3855 = vsub.s32 0, %v3854
        %v3856 = vrot.slane %v3745, %v3855
        %v3858 = vmul.f32 %v3844, %v3856
        %v3859 = vmul.f32 %v3845, %v3856
        %v3860 = vmul.f32 %v3846, %v3856
        %v3861 = vmul.f32 %v3847, %v3856
        %v3862 = vmul.f32 %v3848, %v3856
        %v3863 = vmul.f32 %v3849, %v3856
        %v3864 = vmul.f32 %v3850, %v3856
        %v3865 = vmul.f32 %v3851, %v3856
        %v3867 = vlaneseq
        %v3868 = vshrl.u32 %v3867, 7
        %v3869 = vsub.s32 0, %v3868
        %v3870 = vrot.slane %v3747, %v3869
        %v3872 = vadd.f32 %v3858, %v3870
        %v3873 = vadd.f32 %v3859, %v3870
        %v3874 = vadd.f32 %v3860, %v3870
        %v3875 = vadd.f32 %v3861, %v3870
        %v3876 = vadd.f32 %v3862, %v3870
        %v3877 = vadd.f32 %v3863, %v3870
        %v3878 = vadd.f32 %v3864, %v3870
        %v3879 = vadd.f32 %v3865, %v3870
        %v3880 = vpack.c.bf16 %v3873, %v3872
        %v3881 = vpack.c.bf16 %v3875, %v3874
        %v3882 = vpack.c.bf16 %v3877, %v3876
        %v3883 = vpack.c.bf16 %v3879, %v3878
        %s3884 = scalar_lea.vmem %s6, 384
        %v3885 = vld [vmem:[%s3884] sm:$0xff]
        %v3886 = vld [vmem:[%s3884 + $0x8] sm:$0xff]
        %v3887 = vld [vmem:[%s3884 + $0x10] sm:$0xff]
        %v3888 = vld [vmem:[%s3884 + $0x18] sm:$0xff]
        %v3889 = vld [vmem:[%s3884 + $0x20] sm:$0xff]
        %v3890 = vld [vmem:[%s3884 + $0x28] sm:$0xff]
        %v3891 = vld [vmem:[%s3884 + $0x30] sm:$0xff]
        %v3892 = vld [vmem:[%s3884 + $0x38] sm:$0xff]
        %v3893 = vld [vmem:[%s3884 + $0x40] sm:$0xff]
        %v3894 = vld [vmem:[%s3884 + $0x48] sm:$0xff]
        %v3895 = vld [vmem:[%s3884 + $0x50] sm:$0xff]
        %v3896 = vld [vmem:[%s3884 + $0x58] sm:$0xff]
        %v3897 = vld [vmem:[%s3884 + $0x60] sm:$0xff]
        %v3898 = vld [vmem:[%s3884 + $0x68] sm:$0xff]
        %v3899 = vld [vmem:[%s3884 + $0x70] sm:$0xff]
        %v3900 = vld [vmem:[%s3884 + $0x78] sm:$0xff]
        %v3901 = vld [vmem:[%s3884 + $0x80] sm:$0xff]
        %v3902 = vld [vmem:[%s3884 + $0x88] sm:$0xff]
        %v3903 = vld [vmem:[%s3884 + $0x90] sm:$0xff]
        %v3904 = vld [vmem:[%s3884 + $0x98] sm:$0xff]
        %v3905 = vld [vmem:[%s3884 + $0xa0] sm:$0xff]
        %v3906 = vld [vmem:[%s3884 + $0xa8] sm:$0xff]
        %v3907 = vld [vmem:[%s3884 + $0xb0] sm:$0xff]
        %v3908 = vld [vmem:[%s3884 + $0xb8] sm:$0xff]
        %v3909 = vld [vmem:[%s3884 + $0xc0] sm:$0xff]
        %v3910 = vld [vmem:[%s3884 + $0xc8] sm:$0xff]
        %v3911 = vld [vmem:[%s3884 + $0xd0] sm:$0xff]
        %v3912 = vld [vmem:[%s3884 + $0xd8] sm:$0xff]
        %v3913 = vld [vmem:[%s3884 + $0xe0] sm:$0xff]
        %v3914 = vld [vmem:[%s3884 + $0xe8] sm:$0xff]
        %v3915 = vld [vmem:[%s3884 + $0xf0] sm:$0xff]
        %v3916 = vld [vmem:[%s3884 + $0xf8] sm:$0xff]
        %v3917 = vld [vmem:[%s3884 + $0x100] sm:$0xff]
        %v3918 = vld [vmem:[%s3884 + $0x108] sm:$0xff]
        %v3919 = vld [vmem:[%s3884 + $0x110] sm:$0xff]
        %v3920 = vld [vmem:[%s3884 + $0x118] sm:$0xff]
        %v3921 = vld [vmem:[%s3884 + $0x120] sm:$0xff]
        %v3922 = vld [vmem:[%s3884 + $0x128] sm:$0xff]
        %v3923 = vld [vmem:[%s3884 + $0x130] sm:$0xff]
        %v3924 = vld [vmem:[%s3884 + $0x138] sm:$0xff]
        %v3925 = vld [vmem:[%s3884 + $0x140] sm:$0xff]
        %v3926 = vld [vmem:[%s3884 + $0x148] sm:$0xff]
        %v3927 = vld [vmem:[%s3884 + $0x150] sm:$0xff]
        %v3928 = vld [vmem:[%s3884 + $0x158] sm:$0xff]
        %v3929 = vld [vmem:[%s3884 + $0x160] sm:$0xff]
        %v3930 = vld [vmem:[%s3884 + $0x168] sm:$0xff]
        %v3931 = vld [vmem:[%s3884 + $0x170] sm:$0xff]
        %v3932 = vld [vmem:[%s3884 + $0x178] sm:$0xff]
        %v3933 = vpack.c.bf16 %v3886, %v3885
        %v3934 = vpack.c.bf16 %v3888, %v3887
        %v3935 = vpack.c.bf16 %v3890, %v3889
        %v3936 = vpack.c.bf16 %v3892, %v3891
        %v3937 = vpack.c.bf16 %v3894, %v3893
        %v3938 = vpack.c.bf16 %v3896, %v3895
        %v3939 = vpack.c.bf16 %v3898, %v3897
        %v3940 = vpack.c.bf16 %v3900, %v3899
        %v3941 = vpack.c.bf16 %v3902, %v3901
        %v3942 = vpack.c.bf16 %v3904, %v3903
        %v3943 = vpack.c.bf16 %v3906, %v3905
        %v3944 = vpack.c.bf16 %v3908, %v3907
        %v3945 = vpack.c.bf16 %v3910, %v3909
        %v3946 = vpack.c.bf16 %v3912, %v3911
        %v3947 = vpack.c.bf16 %v3914, %v3913
        %v3948 = vpack.c.bf16 %v3916, %v3915
        %v3949 = vpack.c.bf16 %v3918, %v3917
        %v3950 = vpack.c.bf16 %v3920, %v3919
        %v3951 = vpack.c.bf16 %v3922, %v3921
        %v3952 = vpack.c.bf16 %v3924, %v3923
        %v3953 = vpack.c.bf16 %v3926, %v3925
        %v3954 = vpack.c.bf16 %v3928, %v3927
        %v3955 = vpack.c.bf16 %v3930, %v3929
        %v3956 = vpack.c.bf16 %v3932, %v3931
        %v3958 = vsel %vm602, %v3880, 0
        %v3961 = vsel %vm602, %v3881, 0
        %v3964 = vsel %vm602, %v3882, 0
        %v3967 = vsel %vm602, %v3883, 0
        %3969 = vmatprep.subr.bf16.mxu0 0
        %3970 = vmatpush1.bf16.msra.mxu0 %v3933
        %3971 = vmatprep.subr.bf16.mxu0 0
        %3972 = vmatpush1.bf16.msra.mxu0 %v3934
        %3973 = vmatprep.subr.bf16.mxu0 0
        %3974 = vmatpush1.bf16.msra.mxu0 0
        %3975 = vmatprep.subr.bf16.mxu0 0
        %3976 = vmatpush1.bf16.msra.mxu0 0
        %3977 = vmatprep.subr.bf16.mxu0 0
        %3978 = vmatpush1.bf16.msra.mxu0 0
        %3979 = vmatprep.subr.bf16.mxu0 0
        %3980 = vmatpush1.bf16.msra.mxu0 0
        %3981 = vmatprep.subr.bf16.mxu0 0
        %3982 = vmatpush1.bf16.msra.mxu0 0
        %3983 = vmatprep.subr.bf16.mxu0 0
        %3984 = vmatpush1.bf16.msra.mxu0 0
        %3985 = vmatprep.subr.bf16.mxu0 0
        %3986 = vmatpush1.bf16.msra.mxu0 0
        %3987 = vmatprep.subr.bf16.mxu0 0
        %3988 = vmatpush1.bf16.msra.mxu0 0
        %3989 = vmatprep.subr.bf16.mxu0 0
        %3990 = vmatpush1.bf16.msra.mxu0 0
        %3991 = vmatprep.subr.bf16.mxu0 0
        %3992 = vmatpush1.bf16.msra.mxu0 0
        %3993 = vmatprep.subr.bf16.mxu0 0
        %3994 = vmatpush1.bf16.msra.mxu0 0
        %3995 = vmatprep.subr.bf16.mxu0 0
        %3996 = vmatpush1.bf16.msra.mxu0 0
        %3997 = vmatprep.subr.bf16.mxu0 0
        %3998 = vmatpush1.bf16.msra.mxu0 0
        %3999 = vmatprep.subr.bf16.mxu0 0
        %4000 = vmatpush1.bf16.msra.mxu0 0
        %4001 = vmatprep.mubr.bf16.mxu0 0
        %4002 = vmatmul.mubr.bf16.gmra.mrb[0].mxu0 %v3958
        %v4003 = vpop.f32.mrb[0].mxu0
        %v4004 = vadd.f32 0.0, %v4003
        %v4005 = vpop.f32.mrb[0].mxu0
        %v4006 = vpop.f32.mrb[0].mxu0
        %v4007 = vadd.f32 0.0, %v4006
        %v4008 = vpop.f32.mrb[0].mxu0
        %4009 = vmatprep.mubr.bf16.mxu0 0
        %4010 = vmatmul.mubr.bf16.gmra.mrb[0].mxu0 %v3961
        %v4011 = vpop.f32.mrb[0].mxu0
        %v4012 = vadd.f32 0.0, %v4011
        %v4013 = vpop.f32.mrb[0].mxu0
        %v4014 = vpop.f32.mrb[0].mxu0
        %v4015 = vadd.f32 0.0, %v4014
        %v4016 = vpop.f32.mrb[0].mxu0
        %4017 = vmatprep.mubr.bf16.mxu0 0
        %4018 = vmatmul.mubr.bf16.gmra.mrb[0].mxu0 %v3964
        %v4019 = vpop.f32.mrb[0].mxu0
        %v4020 = vadd.f32 0.0, %v4019
        %v4021 = vpop.f32.mrb[0].mxu0
        %v4022 = vpop.f32.mrb[0].mxu0
        %v4023 = vadd.f32 0.0, %v4022
        %v4024 = vpop.f32.mrb[0].mxu0
        %4025 = vmatprep.mubr.bf16.mxu0 0
        %4026 = vmatmul.mubr.bf16.gmra.mrb[0].mxu0 %v3967
        %v4027 = vpop.f32.mrb[0].mxu0
        %v4028 = vadd.f32 0.0, %v4027
        %v4029 = vpop.f32.mrb[0].mxu0
        %v4030 = vpop.f32.mrb[0].mxu0
        %v4031 = vadd.f32 0.0, %v4030
        %v4032 = vpop.f32.mrb[0].mxu0
        %4033 = vdwg.mxu0
        %4034 = vmatprep.subr.bf16.mxu0 0
        %4035 = vmatpush1.bf16.msra.mxu0 %v3935
        %4036 = vmatprep.subr.bf16.mxu0 0
        %4037 = vmatpush1.bf16.msra.mxu0 %v3936
        %4038 = vmatprep.subr.bf16.mxu0 0
        %4039 = vmatpush1.bf16.msra.mxu0 0
        %4040 = vmatprep.subr.bf16.mxu0 0
        %4041 = vmatpush1.bf16.msra.mxu0 0
        %4042 = vmatprep.subr.bf16.mxu0 0
        %4043 = vmatpush1.bf16.msra.mxu0 0
        %4044 = vmatprep.subr.bf16.mxu0 0
        %4045 = vmatpush1.bf16.msra.mxu0 0
        %4046 = vmatprep.subr.bf16.mxu0 0
        %4047 = vmatpush1.bf16.msra.mxu0 0
        %4048 = vmatprep.subr.bf16.mxu0 0
        %4049 = vmatpush1.bf16.msra.mxu0 0
        %4050 = vmatprep.subr.bf16.mxu0 0
        %4051 = vmatpush1.bf16.msra.mxu0 0
        %4052 = vmatprep.subr.bf16.mxu0 0
        %4053 = vmatpush1.bf16.msra.mxu0 0
        %4054 = vmatprep.subr.bf16.mxu0 0
        %4055 = vmatpush1.bf16.msra.mxu0 0
        %4056 = vmatprep.subr.bf16.mxu0 0
        %4057 = vmatpush1.bf16.msra.mxu0 0
        %4058 = vmatprep.subr.bf16.mxu0 0
        %4059 = vmatpush1.bf16.msra.mxu0 0
        %4060 = vmatprep.subr.bf16.mxu0 0
        %4061 = vmatpush1.bf16.msra.mxu0 0
        %4062 = vmatprep.subr.bf16.mxu0 0
        %4063 = vmatpush1.bf16.msra.mxu0 0
        %4064 = vmatprep.subr.bf16.mxu0 0
        %4065 = vmatpush1.bf16.msra.mxu0 0
        %4066 = vmatprep.mubr.bf16.mxu0 0
        %4067 = vmatmul.mubr.bf16.gmra.mrb[0].mxu0 %v3958
        %v4068 = vpop.f32.mrb[0].mxu0
        %v4069 = vadd.f32 0.0, %v4068
        %v4070 = vpop.f32.mrb[0].mxu0
        %v4071 = vpop.f32.mrb[0].mxu0
        %v4072 = vadd.f32 0.0, %v4071
        %v4073 = vpop.f32.mrb[0].mxu0
        %4074 = vmatprep.mubr.bf16.mxu0 0
        %4075 = vmatmul.mubr.bf16.gmra.mrb[0].mxu0 %v3961
        %v4076 = vpop.f32.mrb[0].mxu0
        %v4077 = vadd.f32 0.0, %v4076
        %v4078 = vpop.f32.mrb[0].mxu0
        %v4079 = vpop.f32.mrb[0].mxu0
        %v4080 = vadd.f32 0.0, %v4079
        %v4081 = vpop.f32.mrb[0].mxu0
        %4082 = vmatprep.mubr.bf16.mxu0 0
        %4083 = vmatmul.mubr.bf16.gmra.mrb[0].mxu0 %v3964
        %v4084 = vpop.f32.mrb[0].mxu0
        %v4085 = vadd.f32 0.0, %v4084
        %v4086 = vpop.f32.mrb[0].mxu0
        %v4087 = vpop.f32.mrb[0].mxu0
        %v4088 = vadd.f32 0.0, %v4087
        %v4089 = vpop.f32.mrb[0].mxu0
        %4090 = vmatprep.mubr.bf16.mxu0 0
        %4091 = vmatmul.mubr.bf16.gmra.mrb[0].mxu0 %v3967
        %v4092 = vpop.f32.mrb[0].mxu0
        %v4093 = vadd.f32 0.0, %v4092
        %v4094 = vpop.f32.mrb[0].mxu0
        %v4095 = vpop.f32.mrb[0].mxu0
        %v4096 = vadd.f32 0.0, %v4095
        %v4097 = vpop.f32.mrb[0].mxu0
        %4098 = vdwg.mxu0
        %4099 = vmatprep.subr.bf16.mxu0 0
        %4100 = vmatpush1.bf16.msra.mxu0 %v3937
        %4101 = vmatprep.subr.bf16.mxu0 0
        %4102 = vmatpush1.bf16.msra.mxu0 %v3938
        %4103 = vmatprep.subr.bf16.mxu0 0
        %4104 = vmatpush1.bf16.msra.mxu0 0
        %4105 = vmatprep.subr.bf16.mxu0 0
        %4106 = vmatpush1.bf16.msra.mxu0 0
        %4107 = vmatprep.subr.bf16.mxu0 0
        %4108 = vmatpush1.bf16.msra.mxu0 0
        %4109 = vmatprep.subr.bf16.mxu0 0
        %4110 = vmatpush1.bf16.msra.mxu0 0
        %4111 = vmatprep.subr.bf16.mxu0 0
        %4112 = vmatpush1.bf16.msra.mxu0 0
        %4113 = vmatprep.subr.bf16.mxu0 0
        %4114 = vmatpush1.bf16.msra.mxu0 0
        %4115 = vmatprep.subr.bf16.mxu0 0
        %4116 = vmatpush1.bf16.msra.mxu0 0
        %4117 = vmatprep.subr.bf16.mxu0 0
        %4118 = vmatpush1.bf16.msra.mxu0 0
        %4119 = vmatprep.subr.bf16.mxu0 0
        %4120 = vmatpush1.bf16.msra.mxu0 0
        %4121 = vmatprep.subr.bf16.mxu0 0
        %4122 = vmatpush1.bf16.msra.mxu0 0
        %4123 = vmatprep.subr.bf16.mxu0 0
        %4124 = vmatpush1.bf16.msra.mxu0 0
        %4125 = vmatprep.subr.bf16.mxu0 0
        %4126 = vmatpush1.bf16.msra.mxu0 0
        %4127 = vmatprep.subr.bf16.mxu0 0
        %4128 = vmatpush1.bf16.msra.mxu0 0
        %4129 = vmatprep.subr.bf16.mxu0 0
        %4130 = vmatpush1.bf16.msra.mxu0 0
        %4131 = vmatprep.mubr.bf16.mxu0 0
        %4132 = vmatmul.mubr.bf16.gmra.mrb[0].mxu0 %v3958
        %v4133 = vpop.f32.mrb[0].mxu0
        %v4134 = vadd.f32 0.0, %v4133
        %v4135 = vpop.f32.mrb[0].mxu0
        %v4136 = vpop.f32.mrb[0].mxu0
        %v4137 = vadd.f32 0.0, %v4136
        %v4138 = vpop.f32.mrb[0].mxu0
        %4139 = vmatprep.mubr.bf16.mxu0 0
        %4140 = vmatmul.mubr.bf16.gmra.mrb[0].mxu0 %v3961
        %v4141 = vpop.f32.mrb[0].mxu0
        %v4142 = vadd.f32 0.0, %v4141
        %v4143 = vpop.f32.mrb[0].mxu0
        %v4144 = vpop.f32.mrb[0].mxu0
        %v4145 = vadd.f32 0.0, %v4144
        %v4146 = vpop.f32.mrb[0].mxu0
        %4147 = vmatprep.mubr.bf16.mxu0 0
        %4148 = vmatmul.mubr.bf16.gmra.mrb[0].mxu0 %v3964
        %v4149 = vpop.f32.mrb[0].mxu0
        %v4150 = vadd.f32 0.0, %v4149
        %v4151 = vpop.f32.mrb[0].mxu0
        %v4152 = vpop.f32.mrb[0].mxu0
        %v4153 = vadd.f32 0.0, %v4152
        %v4154 = vpop.f32.mrb[0].mxu0
        %4155 = vmatprep.mubr.bf16.mxu0 0
        %4156 = vmatmul.mubr.bf16.gmra.mrb[0].mxu0 %v3967
        %v4157 = vpop.f32.mrb[0].mxu0
        %v4158 = vadd.f32 0.0, %v4157
        %v4159 = vpop.f32.mrb[0].mxu0
        %v4160 = vpop.f32.mrb[0].mxu0
        %v4161 = vadd.f32 0.0, %v4160
        %v4162 = vpop.f32.mrb[0].mxu0
        %4163 = vdwg.mxu0
        %4164 = vmatprep.subr.bf16.mxu0 0
        %4165 = vmatpush1.bf16.msra.mxu0 %v3939
        %4166 = vmatprep.subr.bf16.mxu0 0
        %4167 = vmatpush1.bf16.msra.mxu0 %v3940
        %4168 = vmatprep.subr.bf16.mxu0 0
        %4169 = vmatpush1.bf16.msra.mxu0 0
        %4170 = vmatprep.subr.bf16.mxu0 0
        %4171 = vmatpush1.bf16.msra.mxu0 0
        %4172 = vmatprep.subr.bf16.mxu0 0
        %4173 = vmatpush1.bf16.msra.mxu0 0
        %4174 = vmatprep.subr.bf16.mxu0 0
        %4175 = vmatpush1.bf16.msra.mxu0 0
        %4176 = vmatprep.subr.bf16.mxu0 0
        %4177 = vmatpush1.bf16.msra.mxu0 0
        %4178 = vmatprep.subr.bf16.mxu0 0
        %4179 = vmatpush1.bf16.msra.mxu0 0
        %4180 = vmatprep.subr.bf16.mxu0 0
        %4181 = vmatpush1.bf16.msra.mxu0 0
        %4182 = vmatprep.subr.bf16.mxu0 0
        %4183 = vmatpush1.bf16.msra.mxu0 0
        %4184 = vmatprep.subr.bf16.mxu0 0
        %4185 = vmatpush1.bf16.msra.mxu0 0
        %4186 = vmatprep.subr.bf16.mxu0 0
        %4187 = vmatpush1.bf16.msra.mxu0 0
        %4188 = vmatprep.subr.bf16.mxu0 0
        %4189 = vmatpush1.bf16.msra.mxu0 0
        %4190 = vmatprep.subr.bf16.mxu0 0
        %4191 = vmatpush1.bf16.msra.mxu0 0
        %4192 = vmatprep.subr.bf16.mxu0 0
        %4193 = vmatpush1.bf16.msra.mxu0 0
        %4194 = vmatprep.subr.bf16.mxu0 0
        %4195 = vmatpush1.bf16.msra.mxu0 0
        %4196 = vmatprep.mubr.bf16.mxu0 0
        %4197 = vmatmul.mubr.bf16.gmra.mrb[0].mxu0 %v3958
        %v4198 = vpop.f32.mrb[0].mxu0
        %v4199 = vadd.f32 0.0, %v4198
        %v4200 = vpop.f32.mrb[0].mxu0
        %v4201 = vpop.f32.mrb[0].mxu0
        %v4202 = vadd.f32 0.0, %v4201
        %v4203 = vpop.f32.mrb[0].mxu0
        %4204 = vmatprep.mubr.bf16.mxu0 0
        %4205 = vmatmul.mubr.bf16.gmra.mrb[0].mxu0 %v3961
        %v4206 = vpop.f32.mrb[0].mxu0
        %v4207 = vadd.f32 0.0, %v4206
        %v4208 = vpop.f32.mrb[0].mxu0
        %v4209 = vpop.f32.mrb[0].mxu0
        %v4210 = vadd.f32 0.0, %v4209
        %v4211 = vpop.f32.mrb[0].mxu0
        %4212 = vmatprep.mubr.bf16.mxu0 0
        %4213 = vmatmul.mubr.bf16.gmra.mrb[0].mxu0 %v3964
        %v4214 = vpop.f32.mrb[0].mxu0
        %v4215 = vadd.f32 0.0, %v4214
        %v4216 = vpop.f32.mrb[0].mxu0
        %v4217 = vpop.f32.mrb[0].mxu0
        %v4218 = vadd.f32 0.0, %v4217
        %v4219 = vpop.f32.mrb[0].mxu0
        %4220 = vmatprep.mubr.bf16.mxu0 0
        %4221 = vmatmul.mubr.bf16.gmra.mrb[0].mxu0 %v3967
        %v4222 = vpop.f32.mrb[0].mxu0
        %v4223 = vadd.f32 0.0, %v4222
        %v4224 = vpop.f32.mrb[0].mxu0
        %v4225 = vpop.f32.mrb[0].mxu0
        %v4226 = vadd.f32 0.0, %v4225
        %v4227 = vpop.f32.mrb[0].mxu0
        %4228 = vdwg.mxu0
        %4229 = vmatprep.subr.bf16.mxu0 0
        %4230 = vmatpush1.bf16.msra.mxu0 %v3941
        %4231 = vmatprep.subr.bf16.mxu0 0
        %4232 = vmatpush1.bf16.msra.mxu0 %v3942
        %4233 = vmatprep.subr.bf16.mxu0 0
        %4234 = vmatpush1.bf16.msra.mxu0 0
        %4235 = vmatprep.subr.bf16.mxu0 0
        %4236 = vmatpush1.bf16.msra.mxu0 0
        %4237 = vmatprep.subr.bf16.mxu0 0
        %4238 = vmatpush1.bf16.msra.mxu0 0
        %4239 = vmatprep.subr.bf16.mxu0 0
        %4240 = vmatpush1.bf16.msra.mxu0 0
        %4241 = vmatprep.subr.bf16.mxu0 0
        %4242 = vmatpush1.bf16.msra.mxu0 0
        %4243 = vmatprep.subr.bf16.mxu0 0
        %4244 = vmatpush1.bf16.msra.mxu0 0
        %4245 = vmatprep.subr.bf16.mxu0 0
        %4246 = vmatpush1.bf16.msra.mxu0 0
        %4247 = vmatprep.subr.bf16.mxu0 0
        %4248 = vmatpush1.bf16.msra.mxu0 0
        %4249 = vmatprep.subr.bf16.mxu0 0
        %4250 = vmatpush1.bf16.msra.mxu0 0
        %4251 = vmatprep.subr.bf16.mxu0 0
        %4252 = vmatpush1.bf16.msra.mxu0 0
        %4253 = vmatprep.subr.bf16.mxu0 0
        %4254 = vmatpush1.bf16.msra.mxu0 0
        %4255 = vmatprep.subr.bf16.mxu0 0
        %4256 = vmatpush1.bf16.msra.mxu0 0
        %4257 = vmatprep.subr.bf16.mxu0 0
        %4258 = vmatpush1.bf16.msra.mxu0 0
        %4259 = vmatprep.subr.bf16.mxu0 0
        %4260 = vmatpush1.bf16.msra.mxu0 0
        %4261 = vmatprep.mubr.bf16.mxu0 0
        %4262 = vmatmul.mubr.bf16.gmra.mrb[0].mxu0 %v3958
        %v4263 = vpop.f32.mrb[0].mxu0
        %v4264 = vadd.f32 0.0, %v4263
        %v4265 = vpop.f32.mrb[0].mxu0
        %v4266 = vpop.f32.mrb[0].mxu0
        %v4267 = vadd.f32 0.0, %v4266
        %v4268 = vpop.f32.mrb[0].mxu0
        %4269 = vmatprep.mubr.bf16.mxu0 0
        %4270 = vmatmul.mubr.bf16.gmra.mrb[0].mxu0 %v3961
        %v4271 = vpop.f32.mrb[0].mxu0
        %v4272 = vadd.f32 0.0, %v4271
        %v4273 = vpop.f32.mrb[0].mxu0
        %v4274 = vpop.f32.mrb[0].mxu0
        %v4275 = vadd.f32 0.0, %v4274
        %v4276 = vpop.f32.mrb[0].mxu0
        %4277 = vmatprep.mubr.bf16.mxu0 0
        %4278 = vmatmul.mubr.bf16.gmra.mrb[0].mxu0 %v3964
        %v4279 = vpop.f32.mrb[0].mxu0
        %v4280 = vadd.f32 0.0, %v4279
        %v4281 = vpop.f32.mrb[0].mxu0
        %v4282 = vpop.f32.mrb[0].mxu0
        %v4283 = vadd.f32 0.0, %v4282
        %v4284 = vpop.f32.mrb[0].mxu0
        %4285 = vmatprep.mubr.bf16.mxu0 0
        %4286 = vmatmul.mubr.bf16.gmra.mrb[0].mxu0 %v3967
        %v4287 = vpop.f32.mrb[0].mxu0
        %v4288 = vadd.f32 0.0, %v4287
        %v4289 = vpop.f32.mrb[0].mxu0
        %v4290 = vpop.f32.mrb[0].mxu0
        %v4291 = vadd.f32 0.0, %v4290
        %v4292 = vpop.f32.mrb[0].mxu0
        %4293 = vdwg.mxu0
        %4294 = vmatprep.subr.bf16.mxu0 0
        %4295 = vmatpush1.bf16.msra.mxu0 %v3943
        %4296 = vmatprep.subr.bf16.mxu0 0
        %4297 = vmatpush1.bf16.msra.mxu0 %v3944
        %4298 = vmatprep.subr.bf16.mxu0 0
        %4299 = vmatpush1.bf16.msra.mxu0 0
        %4300 = vmatprep.subr.bf16.mxu0 0
        %4301 = vmatpush1.bf16.msra.mxu0 0
        %4302 = vmatprep.subr.bf16.mxu0 0
        %4303 = vmatpush1.bf16.msra.mxu0 0
        %4304 = vmatprep.subr.bf16.mxu0 0
        %4305 = vmatpush1.bf16.msra.mxu0 0
        %4306 = vmatprep.subr.bf16.mxu0 0
        %4307 = vmatpush1.bf16.msra.mxu0 0
        %4308 = vmatprep.subr.bf16.mxu0 0
        %4309 = vmatpush1.bf16.msra.mxu0 0
        %4310 = vmatprep.subr.bf16.mxu0 0
        %4311 = vmatpush1.bf16.msra.mxu0 0
        %4312 = vmatprep.subr.bf16.mxu0 0
        %4313 = vmatpush1.bf16.msra.mxu0 0
        %4314 = vmatprep.subr.bf16.mxu0 0
        %4315 = vmatpush1.bf16.msra.mxu0 0
        %4316 = vmatprep.subr.bf16.mxu0 0
        %4317 = vmatpush1.bf16.msra.mxu0 0
        %4318 = vmatprep.subr.bf16.mxu0 0
        %4319 = vmatpush1.bf16.msra.mxu0 0
        %4320 = vmatprep.subr.bf16.mxu0 0
        %4321 = vmatpush1.bf16.msra.mxu0 0
        %4322 = vmatprep.subr.bf16.mxu0 0
        %4323 = vmatpush1.bf16.msra.mxu0 0
        %4324 = vmatprep.subr.bf16.mxu0 0
        %4325 = vmatpush1.bf16.msra.mxu0 0
        %4326 = vmatprep.mubr.bf16.mxu0 0
        %4327 = vmatmul.mubr.bf16.gmra.mrb[0].mxu0 %v3958
        %v4328 = vpop.f32.mrb[0].mxu0
        %v4329 = vadd.f32 0.0, %v4328
        %v4330 = vpop.f32.mrb[0].mxu0
        %v4331 = vpop.f32.mrb[0].mxu0
        %v4332 = vadd.f32 0.0, %v4331
        %v4333 = vpop.f32.mrb[0].mxu0
        %4334 = vmatprep.mubr.bf16.mxu0 0
        %4335 = vmatmul.mubr.bf16.gmra.mrb[0].mxu0 %v3961
        %v4336 = vpop.f32.mrb[0].mxu0
        %v4337 = vadd.f32 0.0, %v4336
        %v4338 = vpop.f32.mrb[0].mxu0
        %v4339 = vpop.f32.mrb[0].mxu0
        %v4340 = vadd.f32 0.0, %v4339
        %v4341 = vpop.f32.mrb[0].mxu0
        %4342 = vmatprep.mubr.bf16.mxu0 0
        %4343 = vmatmul.mubr.bf16.gmra.mrb[0].mxu0 %v3964
        %v4344 = vpop.f32.mrb[0].mxu0
        %v4345 = vadd.f32 0.0, %v4344
        %v4346 = vpop.f32.mrb[0].mxu0
        %v4347 = vpop.f32.mrb[0].mxu0
        %v4348 = vadd.f32 0.0, %v4347
        %v4349 = vpop.f32.mrb[0].mxu0
        %4350 = vmatprep.mubr.bf16.mxu0 0
        %4351 = vmatmul.mubr.bf16.gmra.mrb[0].mxu0 %v3967
        %v4352 = vpop.f32.mrb[0].mxu0
        %v4353 = vadd.f32 0.0, %v4352
        %v4354 = vpop.f32.mrb[0].mxu0
        %v4355 = vpop.f32.mrb[0].mxu0
        %v4356 = vadd.f32 0.0, %v4355
        %v4357 = vpop.f32.mrb[0].mxu0
        %4358 = vdwg.mxu0
        %4359 = vmatprep.subr.bf16.mxu0 0
        %4360 = vmatpush1.bf16.msra.mxu0 %v3945
        %4361 = vmatprep.subr.bf16.mxu0 0
        %4362 = vmatpush1.bf16.msra.mxu0 %v3946
        %4363 = vmatprep.subr.bf16.mxu0 0
        %4364 = vmatpush1.bf16.msra.mxu0 0
        %4365 = vmatprep.subr.bf16.mxu0 0
        %4366 = vmatpush1.bf16.msra.mxu0 0
        %4367 = vmatprep.subr.bf16.mxu0 0
        %4368 = vmatpush1.bf16.msra.mxu0 0
        %4369 = vmatprep.subr.bf16.mxu0 0
        %4370 = vmatpush1.bf16.msra.mxu0 0
        %4371 = vmatprep.subr.bf16.mxu0 0
        %4372 = vmatpush1.bf16.msra.mxu0 0
        %4373 = vmatprep.subr.bf16.mxu0 0
        %4374 = vmatpush1.bf16.msra.mxu0 0
        %4375 = vmatprep.subr.bf16.mxu0 0
        %4376 = vmatpush1.bf16.msra.mxu0 0
        %4377 = vmatprep.subr.bf16.mxu0 0
        %4378 = vmatpush1.bf16.msra.mxu0 0
        %4379 = vmatprep.subr.bf16.mxu0 0
        %4380 = vmatpush1.bf16.msra.mxu0 0
        %4381 = vmatprep.subr.bf16.mxu0 0
        %4382 = vmatpush1.bf16.msra.mxu0 0
        %4383 = vmatprep.subr.bf16.mxu0 0
        %4384 = vmatpush1.bf16.msra.mxu0 0
        %4385 = vmatprep.subr.bf16.mxu0 0
        %4386 = vmatpush1.bf16.msra.mxu0 0
        %4387 = vmatprep.subr.bf16.mxu0 0
        %4388 = vmatpush1.bf16.msra.mxu0 0
        %4389 = vmatprep.subr.bf16.mxu0 0
        %4390 = vmatpush1.bf16.msra.mxu0 0
        %4391 = vmatprep.mubr.bf16.mxu0 0
        %4392 = vmatmul.mubr.bf16.gmra.mrb[0].mxu0 %v3958
        %v4393 = vpop.f32.mrb[0].mxu0
        %v4394 = vadd.f32 0.0, %v4393
        %v4395 = vpop.f32.mrb[0].mxu0
        %v4396 = vpop.f32.mrb[0].mxu0
        %v4397 = vadd.f32 0.0, %v4396
        %v4398 = vpop.f32.mrb[0].mxu0
        %4399 = vmatprep.mubr.bf16.mxu0 0
        %4400 = vmatmul.mubr.bf16.gmra.mrb[0].mxu0 %v3961
        %v4401 = vpop.f32.mrb[0].mxu0
        %v4402 = vadd.f32 0.0, %v4401
        %v4403 = vpop.f32.mrb[0].mxu0
        %v4404 = vpop.f32.mrb[0].mxu0
        %v4405 = vadd.f32 0.0, %v4404
        %v4406 = vpop.f32.mrb[0].mxu0
        %4407 = vmatprep.mubr.bf16.mxu0 0
        %4408 = vmatmul.mubr.bf16.gmra.mrb[0].mxu0 %v3964
        %v4409 = vpop.f32.mrb[0].mxu0
        %v4410 = vadd.f32 0.0, %v4409
        %v4411 = vpop.f32.mrb[0].mxu0
        %v4412 = vpop.f32.mrb[0].mxu0
        %v4413 = vadd.f32 0.0, %v4412
        %v4414 = vpop.f32.mrb[0].mxu0
        %4415 = vmatprep.mubr.bf16.mxu0 0
        %4416 = vmatmul.mubr.bf16.gmra.mrb[0].mxu0 %v3967
        %v4417 = vpop.f32.mrb[0].mxu0
        %v4418 = vadd.f32 0.0, %v4417
        %v4419 = vpop.f32.mrb[0].mxu0
        %v4420 = vpop.f32.mrb[0].mxu0
        %v4421 = vadd.f32 0.0, %v4420
        %v4422 = vpop.f32.mrb[0].mxu0
        %4423 = vdwg.mxu0
        %4424 = vmatprep.subr.bf16.mxu0 0
        %4425 = vmatpush1.bf16.msra.mxu0 %v3947
        %4426 = vmatprep.subr.bf16.mxu0 0
        %4427 = vmatpush1.bf16.msra.mxu0 %v3948
        %4428 = vmatprep.subr.bf16.mxu0 0
        %4429 = vmatpush1.bf16.msra.mxu0 0
        %4430 = vmatprep.subr.bf16.mxu0 0
        %4431 = vmatpush1.bf16.msra.mxu0 0
        %4432 = vmatprep.subr.bf16.mxu0 0
        %4433 = vmatpush1.bf16.msra.mxu0 0
        %4434 = vmatprep.subr.bf16.mxu0 0
        %4435 = vmatpush1.bf16.msra.mxu0 0
        %4436 = vmatprep.subr.bf16.mxu0 0
        %4437 = vmatpush1.bf16.msra.mxu0 0
        %4438 = vmatprep.subr.bf16.mxu0 0
        %4439 = vmatpush1.bf16.msra.mxu0 0
        %4440 = vmatprep.subr.bf16.mxu0 0
        %4441 = vmatpush1.bf16.msra.mxu0 0
        %4442 = vmatprep.subr.bf16.mxu0 0
        %4443 = vmatpush1.bf16.msra.mxu0 0
        %4444 = vmatprep.subr.bf16.mxu0 0
        %4445 = vmatpush1.bf16.msra.mxu0 0
        %4446 = vmatprep.subr.bf16.mxu0 0
        %4447 = vmatpush1.bf16.msra.mxu0 0
        %4448 = vmatprep.subr.bf16.mxu0 0
        %4449 = vmatpush1.bf16.msra.mxu0 0
        %4450 = vmatprep.subr.bf16.mxu0 0
        %4451 = vmatpush1.bf16.msra.mxu0 0
        %4452 = vmatprep.subr.bf16.mxu0 0
        %4453 = vmatpush1.bf16.msra.mxu0 0
        %4454 = vmatprep.subr.bf16.mxu0 0
        %4455 = vmatpush1.bf16.msra.mxu0 0
        %4456 = vmatprep.mubr.bf16.mxu0 0
        %4457 = vmatmul.mubr.bf16.gmra.mrb[0].mxu0 %v3958
        %v4458 = vpop.f32.mrb[0].mxu0
        %v4459 = vadd.f32 0.0, %v4458
        %v4460 = vpop.f32.mrb[0].mxu0
        %v4461 = vpop.f32.mrb[0].mxu0
        %v4462 = vadd.f32 0.0, %v4461
        %v4463 = vpop.f32.mrb[0].mxu0
        %4464 = vmatprep.mubr.bf16.mxu0 0
        %4465 = vmatmul.mubr.bf16.gmra.mrb[0].mxu0 %v3961
        %v4466 = vpop.f32.mrb[0].mxu0
        %v4467 = vadd.f32 0.0, %v4466
        %v4468 = vpop.f32.mrb[0].mxu0
        %v4469 = vpop.f32.mrb[0].mxu0
        %v4470 = vadd.f32 0.0, %v4469
        %v4471 = vpop.f32.mrb[0].mxu0
        %4472 = vmatprep.mubr.bf16.mxu0 0
        %4473 = vmatmul.mubr.bf16.gmra.mrb[0].mxu0 %v3964
        %v4474 = vpop.f32.mrb[0].mxu0
        %v4475 = vadd.f32 0.0, %v4474
        %v4476 = vpop.f32.mrb[0].mxu0
        %v4477 = vpop.f32.mrb[0].mxu0
        %v4478 = vadd.f32 0.0, %v4477
        %v4479 = vpop.f32.mrb[0].mxu0
        %4480 = vmatprep.mubr.bf16.mxu0 0
        %4481 = vmatmul.mubr.bf16.gmra.mrb[0].mxu0 %v3967
        %v4482 = vpop.f32.mrb[0].mxu0
        %v4483 = vadd.f32 0.0, %v4482
        %v4484 = vpop.f32.mrb[0].mxu0
        %v4485 = vpop.f32.mrb[0].mxu0
        %v4486 = vadd.f32 0.0, %v4485
        %v4487 = vpop.f32.mrb[0].mxu0
        %4488 = vdwg.mxu0
        %4489 = vmatprep.subr.bf16.mxu0 0
        %4490 = vmatpush1.bf16.msra.mxu0 %v3949
        %4491 = vmatprep.subr.bf16.mxu0 0
        %4492 = vmatpush1.bf16.msra.mxu0 %v3950
        %4493 = vmatprep.subr.bf16.mxu0 0
        %4494 = vmatpush1.bf16.msra.mxu0 0
        %4495 = vmatprep.subr.bf16.mxu0 0
        %4496 = vmatpush1.bf16.msra.mxu0 0
        %4497 = vmatprep.subr.bf16.mxu0 0
        %4498 = vmatpush1.bf16.msra.mxu0 0
        %4499 = vmatprep.subr.bf16.mxu0 0
        %4500 = vmatpush1.bf16.msra.mxu0 0
        %4501 = vmatprep.subr.bf16.mxu0 0
        %4502 = vmatpush1.bf16.msra.mxu0 0
        %4503 = vmatprep.subr.bf16.mxu0 0
        %4504 = vmatpush1.bf16.msra.mxu0 0
        %4505 = vmatprep.subr.bf16.mxu0 0
        %4506 = vmatpush1.bf16.msra.mxu0 0
        %4507 = vmatprep.subr.bf16.mxu0 0
        %4508 = vmatpush1.bf16.msra.mxu0 0
        %4509 = vmatprep.subr.bf16.mxu0 0
        %4510 = vmatpush1.bf16.msra.mxu0 0
        %4511 = vmatprep.subr.bf16.mxu0 0
        %4512 = vmatpush1.bf16.msra.mxu0 0
        %4513 = vmatprep.subr.bf16.mxu0 0
        %4514 = vmatpush1.bf16.msra.mxu0 0
        %4515 = vmatprep.subr.bf16.mxu0 0
        %4516 = vmatpush1.bf16.msra.mxu0 0
        %4517 = vmatprep.subr.bf16.mxu0 0
        %4518 = vmatpush1.bf16.msra.mxu0 0
        %4519 = vmatprep.subr.bf16.mxu0 0
        %4520 = vmatpush1.bf16.msra.mxu0 0
        %4521 = vmatprep.mubr.bf16.mxu0 0
        %4522 = vmatmul.mubr.bf16.gmra.mrb[0].mxu0 %v3958
        %v4523 = vpop.f32.mrb[0].mxu0
        %v4524 = vadd.f32 0.0, %v4523
        %v4525 = vpop.f32.mrb[0].mxu0
        %v4526 = vpop.f32.mrb[0].mxu0
        %v4527 = vadd.f32 0.0, %v4526
        %v4528 = vpop.f32.mrb[0].mxu0
        %4529 = vmatprep.mubr.bf16.mxu0 0
        %4530 = vmatmul.mubr.bf16.gmra.mrb[0].mxu0 %v3961
        %v4531 = vpop.f32.mrb[0].mxu0
        %v4532 = vadd.f32 0.0, %v4531
        %v4533 = vpop.f32.mrb[0].mxu0
        %v4534 = vpop.f32.mrb[0].mxu0
        %v4535 = vadd.f32 0.0, %v4534
        %v4536 = vpop.f32.mrb[0].mxu0
        %4537 = vmatprep.mubr.bf16.mxu0 0
        %4538 = vmatmul.mubr.bf16.gmra.mrb[0].mxu0 %v3964
        %v4539 = vpop.f32.mrb[0].mxu0
        %v4540 = vadd.f32 0.0, %v4539
        %v4541 = vpop.f32.mrb[0].mxu0
        %v4542 = vpop.f32.mrb[0].mxu0
        %v4543 = vadd.f32 0.0, %v4542
        %v4544 = vpop.f32.mrb[0].mxu0
        %4545 = vmatprep.mubr.bf16.mxu0 0
        %4546 = vmatmul.mubr.bf16.gmra.mrb[0].mxu0 %v3967
        %v4547 = vpop.f32.mrb[0].mxu0
        %v4548 = vadd.f32 0.0, %v4547
        %v4549 = vpop.f32.mrb[0].mxu0
        %v4550 = vpop.f32.mrb[0].mxu0
        %v4551 = vadd.f32 0.0, %v4550
        %v4552 = vpop.f32.mrb[0].mxu0
        %4553 = vdwg.mxu0
        %4554 = vmatprep.subr.bf16.mxu0 0
        %4555 = vmatpush1.bf16.msra.mxu0 %v3951
        %4556 = vmatprep.subr.bf16.mxu0 0
        %4557 = vmatpush1.bf16.msra.mxu0 %v3952
        %4558 = vmatprep.subr.bf16.mxu0 0
        %4559 = vmatpush1.bf16.msra.mxu0 0
        %4560 = vmatprep.subr.bf16.mxu0 0
        %4561 = vmatpush1.bf16.msra.mxu0 0
        %4562 = vmatprep.subr.bf16.mxu0 0
        %4563 = vmatpush1.bf16.msra.mxu0 0
        %4564 = vmatprep.subr.bf16.mxu0 0
        %4565 = vmatpush1.bf16.msra.mxu0 0
        %4566 = vmatprep.subr.bf16.mxu0 0
        %4567 = vmatpush1.bf16.msra.mxu0 0
        %4568 = vmatprep.subr.bf16.mxu0 0
        %4569 = vmatpush1.bf16.msra.mxu0 0
        %4570 = vmatprep.subr.bf16.mxu0 0
        %4571 = vmatpush1.bf16.msra.mxu0 0
        %4572 = vmatprep.subr.bf16.mxu0 0
        %4573 = vmatpush1.bf16.msra.mxu0 0
        %4574 = vmatprep.subr.bf16.mxu0 0
        %4575 = vmatpush1.bf16.msra.mxu0 0
        %4576 = vmatprep.subr.bf16.mxu0 0
        %4577 = vmatpush1.bf16.msra.mxu0 0
        %4578 = vmatprep.subr.bf16.mxu0 0
        %4579 = vmatpush1.bf16.msra.mxu0 0
        %4580 = vmatprep.subr.bf16.mxu0 0
        %4581 = vmatpush1.bf16.msra.mxu0 0
        %4582 = vmatprep.subr.bf16.mxu0 0
        %4583 = vmatpush1.bf16.msra.mxu0 0
        %4584 = vmatprep.subr.bf16.mxu0 0
        %4585 = vmatpush1.bf16.msra.mxu0 0
        %4586 = vmatprep.mubr.bf16.mxu0 0
        %4587 = vmatmul.mubr.bf16.gmra.mrb[0].mxu0 %v3958
        %v4588 = vpop.f32.mrb[0].mxu0
        %v4589 = vadd.f32 0.0, %v4588
        %v4590 = vpop.f32.mrb[0].mxu0
        %v4591 = vpop.f32.mrb[0].mxu0
        %v4592 = vadd.f32 0.0, %v4591
        %v4593 = vpop.f32.mrb[0].mxu0
        %4594 = vmatprep.mubr.bf16.mxu0 0
        %4595 = vmatmul.mubr.bf16.gmra.mrb[0].mxu0 %v3961
        %v4596 = vpop.f32.mrb[0].mxu0
        %v4597 = vadd.f32 0.0, %v4596
        %v4598 = vpop.f32.mrb[0].mxu0
        %v4599 = vpop.f32.mrb[0].mxu0
        %v4600 = vadd.f32 0.0, %v4599
        %v4601 = vpop.f32.mrb[0].mxu0
        %4602 = vmatprep.mubr.bf16.mxu0 0
        %4603 = vmatmul.mubr.bf16.gmra.mrb[0].mxu0 %v3964
        %v4604 = vpop.f32.mrb[0].mxu0
        %v4605 = vadd.f32 0.0, %v4604
        %v4606 = vpop.f32.mrb[0].mxu0
        %v4607 = vpop.f32.mrb[0].mxu0
        %v4608 = vadd.f32 0.0, %v4607
        %v4609 = vpop.f32.mrb[0].mxu0
        %4610 = vmatprep.mubr.bf16.mxu0 0
        %4611 = vmatmul.mubr.bf16.gmra.mrb[0].mxu0 %v3967
        %v4612 = vpop.f32.mrb[0].mxu0
        %v4613 = vadd.f32 0.0, %v4612
        %v4614 = vpop.f32.mrb[0].mxu0
        %v4615 = vpop.f32.mrb[0].mxu0
        %v4616 = vadd.f32 0.0, %v4615
        %v4617 = vpop.f32.mrb[0].mxu0
        %4618 = vdwg.mxu0
        %4619 = vmatprep.subr.bf16.mxu0 0
        %4620 = vmatpush1.bf16.msra.mxu0 %v3953
        %4621 = vmatprep.subr.bf16.mxu0 0
        %4622 = vmatpush1.bf16.msra.mxu0 %v3954
        %4623 = vmatprep.subr.bf16.mxu0 0
        %4624 = vmatpush1.bf16.msra.mxu0 0
        %4625 = vmatprep.subr.bf16.mxu0 0
        %4626 = vmatpush1.bf16.msra.mxu0 0
        %4627 = vmatprep.subr.bf16.mxu0 0
        %4628 = vmatpush1.bf16.msra.mxu0 0
        %4629 = vmatprep.subr.bf16.mxu0 0
        %4630 = vmatpush1.bf16.msra.mxu0 0
        %4631 = vmatprep.subr.bf16.mxu0 0
        %4632 = vmatpush1.bf16.msra.mxu0 0
        %4633 = vmatprep.subr.bf16.mxu0 0
        %4634 = vmatpush1.bf16.msra.mxu0 0
        %4635 = vmatprep.subr.bf16.mxu0 0
        %4636 = vmatpush1.bf16.msra.mxu0 0
        %4637 = vmatprep.subr.bf16.mxu0 0
        %4638 = vmatpush1.bf16.msra.mxu0 0
        %4639 = vmatprep.subr.bf16.mxu0 0
        %4640 = vmatpush1.bf16.msra.mxu0 0
        %4641 = vmatprep.subr.bf16.mxu0 0
        %4642 = vmatpush1.bf16.msra.mxu0 0
        %4643 = vmatprep.subr.bf16.mxu0 0
        %4644 = vmatpush1.bf16.msra.mxu0 0
        %4645 = vmatprep.subr.bf16.mxu0 0
        %4646 = vmatpush1.bf16.msra.mxu0 0
        %4647 = vmatprep.subr.bf16.mxu0 0
        %4648 = vmatpush1.bf16.msra.mxu0 0
        %4649 = vmatprep.subr.bf16.mxu0 0
        %4650 = vmatpush1.bf16.msra.mxu0 0
        %4651 = vmatprep.mubr.bf16.mxu0 0
        %4652 = vmatmul.mubr.bf16.gmra.mrb[0].mxu0 %v3958
        %v4653 = vpop.f32.mrb[0].mxu0
        %v4654 = vadd.f32 0.0, %v4653
        %v4655 = vpop.f32.mrb[0].mxu0
        %v4656 = vpop.f32.mrb[0].mxu0
        %v4657 = vadd.f32 0.0, %v4656
        %v4658 = vpop.f32.mrb[0].mxu0
        %4659 = vmatprep.mubr.bf16.mxu0 0
        %4660 = vmatmul.mubr.bf16.gmra.mrb[0].mxu0 %v3961
        %v4661 = vpop.f32.mrb[0].mxu0
        %v4662 = vadd.f32 0.0, %v4661
        %v4663 = vpop.f32.mrb[0].mxu0
        %v4664 = vpop.f32.mrb[0].mxu0
        %v4665 = vadd.f32 0.0, %v4664
        %v4666 = vpop.f32.mrb[0].mxu0
        %4667 = vmatprep.mubr.bf16.mxu0 0
        %4668 = vmatmul.mubr.bf16.gmra.mrb[0].mxu0 %v3964
        %v4669 = vpop.f32.mrb[0].mxu0
        %v4670 = vadd.f32 0.0, %v4669
        %v4671 = vpop.f32.mrb[0].mxu0
        %v4672 = vpop.f32.mrb[0].mxu0
        %v4673 = vadd.f32 0.0, %v4672
        %v4674 = vpop.f32.mrb[0].mxu0
        %4675 = vmatprep.mubr.bf16.mxu0 0
        %4676 = vmatmul.mubr.bf16.gmra.mrb[0].mxu0 %v3967
        %v4677 = vpop.f32.mrb[0].mxu0
        %v4678 = vadd.f32 0.0, %v4677
        %v4679 = vpop.f32.mrb[0].mxu0
        %v4680 = vpop.f32.mrb[0].mxu0
        %v4681 = vadd.f32 0.0, %v4680
        %v4682 = vpop.f32.mrb[0].mxu0
        %4683 = vdwg.mxu0
        %4684 = vmatprep.subr.bf16.mxu0 0
        %4685 = vmatpush1.bf16.msra.mxu0 %v3955
        %4686 = vmatprep.subr.bf16.mxu0 0
        %4687 = vmatpush1.bf16.msra.mxu0 %v3956
        %4688 = vmatprep.subr.bf16.mxu0 0
        %4689 = vmatpush1.bf16.msra.mxu0 0
        %4690 = vmatprep.subr.bf16.mxu0 0
        %4691 = vmatpush1.bf16.msra.mxu0 0
        %4692 = vmatprep.subr.bf16.mxu0 0
        %4693 = vmatpush1.bf16.msra.mxu0 0
        %4694 = vmatprep.subr.bf16.mxu0 0
        %4695 = vmatpush1.bf16.msra.mxu0 0
        %4696 = vmatprep.subr.bf16.mxu0 0
        %4697 = vmatpush1.bf16.msra.mxu0 0
        %4698 = vmatprep.subr.bf16.mxu0 0
        %4699 = vmatpush1.bf16.msra.mxu0 0
        %4700 = vmatprep.subr.bf16.mxu0 0
        %4701 = vmatpush1.bf16.msra.mxu0 0
        %4702 = vmatprep.subr.bf16.mxu0 0
        %4703 = vmatpush1.bf16.msra.mxu0 0
        %4704 = vmatprep.subr.bf16.mxu0 0
        %4705 = vmatpush1.bf16.msra.mxu0 0
        %4706 = vmatprep.subr.bf16.mxu0 0
        %4707 = vmatpush1.bf16.msra.mxu0 0
        %4708 = vmatprep.subr.bf16.mxu0 0
        %4709 = vmatpush1.bf16.msra.mxu0 0
        %4710 = vmatprep.subr.bf16.mxu0 0
        %4711 = vmatpush1.bf16.msra.mxu0 0
        %4712 = vmatprep.subr.bf16.mxu0 0
        %4713 = vmatpush1.bf16.msra.mxu0 0
        %4714 = vmatprep.subr.bf16.mxu0 0
        %4715 = vmatpush1.bf16.msra.mxu0 0
        %4716 = vmatprep.mubr.bf16.mxu0 0
        %4717 = vmatmul.mubr.bf16.gmra.mrb[0].mxu0 %v3958
        %v4718 = vpop.f32.mrb[0].mxu0
        %v4719 = vadd.f32 0.0, %v4718
        %v4720 = vpop.f32.mrb[0].mxu0
        %v4721 = vpop.f32.mrb[0].mxu0
        %v4722 = vadd.f32 0.0, %v4721
        %v4723 = vpop.f32.mrb[0].mxu0
        %4724 = vmatprep.mubr.bf16.mxu0 0
        %4725 = vmatmul.mubr.bf16.gmra.mrb[0].mxu0 %v3961
        %v4726 = vpop.f32.mrb[0].mxu0
        %v4727 = vadd.f32 0.0, %v4726
        %v4728 = vpop.f32.mrb[0].mxu0
        %v4729 = vpop.f32.mrb[0].mxu0
        %v4730 = vadd.f32 0.0, %v4729
        %v4731 = vpop.f32.mrb[0].mxu0
        %4732 = vmatprep.mubr.bf16.mxu0 0
        %4733 = vmatmul.mubr.bf16.gmra.mrb[0].mxu0 %v3964
        %v4734 = vpop.f32.mrb[0].mxu0
        %v4735 = vadd.f32 0.0, %v4734
        %v4736 = vpop.f32.mrb[0].mxu0
        %v4737 = vpop.f32.mrb[0].mxu0
        %v4738 = vadd.f32 0.0, %v4737
        %v4739 = vpop.f32.mrb[0].mxu0
        %4740 = vmatprep.mubr.bf16.mxu0 0
        %4741 = vmatmul.mubr.bf16.gmra.mrb[0].mxu0 %v3967
        %v4742 = vpop.f32.mrb[0].mxu0
        %v4743 = vadd.f32 0.0, %v4742
        %v4744 = vpop.f32.mrb[0].mxu0
        %v4745 = vpop.f32.mrb[0].mxu0
        %v4746 = vadd.f32 0.0, %v4745
        %v4747 = vpop.f32.mrb[0].mxu0
        %4748 = vdwg.mxu0
        %v4749 = vpack.c.bf16 %v4007, %v4004
        %v4750 = vpack.c.bf16 %v4015, %v4012
        %v4751 = vpack.c.bf16 %v4023, %v4020
        %v4752 = vpack.c.bf16 %v4031, %v4028
        %v4753 = vpack.c.bf16 %v4072, %v4069
        %v4754 = vpack.c.bf16 %v4080, %v4077
        %v4755 = vpack.c.bf16 %v4088, %v4085
        %v4756 = vpack.c.bf16 %v4096, %v4093
        %v4757 = vpack.c.bf16 %v4137, %v4134
        %v4758 = vpack.c.bf16 %v4145, %v4142
        %v4759 = vpack.c.bf16 %v4153, %v4150
        %v4760 = vpack.c.bf16 %v4161, %v4158
        %v4761 = vpack.c.bf16 %v4202, %v4199
        %v4762 = vpack.c.bf16 %v4210, %v4207
        %v4763 = vpack.c.bf16 %v4218, %v4215
        %v4764 = vpack.c.bf16 %v4226, %v4223
        %v4765 = vpack.c.bf16 %v4267, %v4264
        %v4766 = vpack.c.bf16 %v4275, %v4272
        %v4767 = vpack.c.bf16 %v4283, %v4280
        %v4768 = vpack.c.bf16 %v4291, %v4288
        %v4769 = vpack.c.bf16 %v4332, %v4329
        %v4770 = vpack.c.bf16 %v4340, %v4337
        %v4771 = vpack.c.bf16 %v4348, %v4345
        %v4772 = vpack.c.bf16 %v4356, %v4353
        %v4773 = vpack.c.bf16 %v4397, %v4394
        %v4774 = vpack.c.bf16 %v4405, %v4402
        %v4775 = vpack.c.bf16 %v4413, %v4410
        %v4776 = vpack.c.bf16 %v4421, %v4418
        %v4777 = vpack.c.bf16 %v4462, %v4459
        %v4778 = vpack.c.bf16 %v4470, %v4467
        %v4779 = vpack.c.bf16 %v4478, %v4475
        %v4780 = vpack.c.bf16 %v4486, %v4483
        %v4781 = vpack.c.bf16 %v4527, %v4524
        %v4782 = vpack.c.bf16 %v4535, %v4532
        %v4783 = vpack.c.bf16 %v4543, %v4540
        %v4784 = vpack.c.bf16 %v4551, %v4548
        %v4785 = vpack.c.bf16 %v4592, %v4589
        %v4786 = vpack.c.bf16 %v4600, %v4597
        %v4787 = vpack.c.bf16 %v4608, %v4605
        %v4788 = vpack.c.bf16 %v4616, %v4613
        %v4789 = vpack.c.bf16 %v4657, %v4654
        %v4790 = vpack.c.bf16 %v4665, %v4662
        %v4791 = vpack.c.bf16 %v4673, %v4670
        %v4792 = vpack.c.bf16 %v4681, %v4678
        %v4793 = vpack.c.bf16 %v4722, %v4719
        %v4794 = vpack.c.bf16 %v4730, %v4727
        %v4795 = vpack.c.bf16 %v4738, %v4735
        %v4796 = vpack.c.bf16 %v4746, %v4743
        %s4797 = scalar_lea.vmem %s3, 256
        %v4798 = vld [vmem:[%s4797] sm:$0xff]
        %v4799 = vld [vmem:[%s4797 + $0x8] sm:$0xff]
        %v4800 = vld [vmem:[%s4797 + $0x10] sm:$0xff]
        %v4801 = vld [vmem:[%s4797 + $0x18] sm:$0xff]
        %v4802 = vld [vmem:[%s4797 + $0x20] sm:$0xff]
        %v4803 = vld [vmem:[%s4797 + $0x28] sm:$0xff]
        %v4804 = vld [vmem:[%s4797 + $0x30] sm:$0xff]
        %v4805 = vld [vmem:[%s4797 + $0x38] sm:$0xff]
        %v4806 = vld [vmem:[%s4797 + $0x40] sm:$0xff]
        %v4807 = vld [vmem:[%s4797 + $0x48] sm:$0xff]
        %v4808 = vld [vmem:[%s4797 + $0x50] sm:$0xff]
        %v4809 = vld [vmem:[%s4797 + $0x58] sm:$0xff]
        %v4810 = vld [vmem:[%s4797 + $0x60] sm:$0xff]
        %v4811 = vld [vmem:[%s4797 + $0x68] sm:$0xff]
        %v4812 = vld [vmem:[%s4797 + $0x70] sm:$0xff]
        %v4813 = vld [vmem:[%s4797 + $0x78] sm:$0xff]
        %v4814 = vld [vmem:[%s4797 + $0x80] sm:$0xff]
        %v4815 = vld [vmem:[%s4797 + $0x88] sm:$0xff]
        %v4816 = vld [vmem:[%s4797 + $0x90] sm:$0xff]
        %v4817 = vld [vmem:[%s4797 + $0x98] sm:$0xff]
        %v4818 = vld [vmem:[%s4797 + $0xa0] sm:$0xff]
        %v4819 = vld [vmem:[%s4797 + $0xa8] sm:$0xff]
        %v4820 = vld [vmem:[%s4797 + $0xb0] sm:$0xff]
        %v4821 = vld [vmem:[%s4797 + $0xb8] sm:$0xff]
        %v4822 = vld [vmem:[%s4797 + $0xc0] sm:$0xff]
        %v4823 = vld [vmem:[%s4797 + $0xc8] sm:$0xff]
        %v4824 = vld [vmem:[%s4797 + $0xd0] sm:$0xff]
        %v4825 = vld [vmem:[%s4797 + $0xd8] sm:$0xff]
        %v4826 = vld [vmem:[%s4797 + $0xe0] sm:$0xff]
        %v4827 = vld [vmem:[%s4797 + $0xe8] sm:$0xff]
        %v4828 = vld [vmem:[%s4797 + $0xf0] sm:$0xff]
        %v4829 = vld [vmem:[%s4797 + $0xf8] sm:$0xff]
        %v4831 = vsel %vm1684, %v4749, 0
        %v4834 = vsel %vm1684, %v4750, 0
        %v4837 = vsel %vm1684, %v4751, 0
        %v4840 = vsel %vm1684, %v4752, 0
        %v4843 = vsel %vm1684, %v4765, 0
        %v4846 = vsel %vm1684, %v4766, 0
        %v4849 = vsel %vm1684, %v4767, 0
        %v4852 = vsel %vm1684, %v4768, 0
        %4854 = vmatprep.subr.bf16.mxu0 0
        %4855 = vmatpush1.bf16.xpose.msra.mxu0 %v4843
        %4856 = vmatprep.subr.bf16.mxu0 0
        %4857 = vmatpush1.bf16.xpose.msra.mxu0 %v4846
        %4858 = vmatprep.subr.bf16.mxu0 0
        %4859 = vmatpush1.bf16.xpose.msra.mxu0 %v4849
        %4860 = vmatprep.subr.bf16.mxu0 0
        %4861 = vmatpush1.bf16.xpose.msra.mxu0 %v4852
        %4862 = vmatprep.subr.bf16.mxu0 0
        %4863 = vmatpush1.bf16.xpose.msra.mxu0 0
        %4864 = vmatprep.subr.bf16.mxu0 0
        %4865 = vmatpush1.bf16.xpose.msra.mxu0 0
        %4866 = vmatprep.subr.bf16.mxu0 0
        %4867 = vmatpush1.bf16.xpose.msra.mxu0 0
        %4868 = vmatprep.subr.bf16.mxu0 0
        %4869 = vmatpush1.bf16.xpose.msra.mxu0 0
        %4870 = vmatprep.subr.bf16.mxu0 0
        %4871 = vmatpush1.bf16.xpose.msra.mxu0 0
        %4872 = vmatprep.subr.bf16.mxu0 0
        %4873 = vmatpush1.bf16.xpose.msra.mxu0 0
        %4874 = vmatprep.subr.bf16.mxu0 0
        %4875 = vmatpush1.bf16.xpose.msra.mxu0 0
        %4876 = vmatprep.subr.bf16.mxu0 0
        %4877 = vmatpush1.bf16.xpose.msra.mxu0 0
        %4878 = vmatprep.subr.bf16.mxu0 0
        %4879 = vmatpush1.bf16.xpose.msra.mxu0 0
        %4880 = vmatprep.subr.bf16.mxu0 0
        %4881 = vmatpush1.bf16.xpose.msra.mxu0 0
        %4882 = vmatprep.subr.bf16.mxu0 0
        %4883 = vmatpush1.bf16.xpose.msra.mxu0 0
        %4884 = vmatprep.subr.bf16.mxu0 0
        %4885 = vmatpush1.bf16.xpose.msra.mxu0 0
        %4886 = vmatprep.mubr.bf16.mxu0 0
        %4887 = vmatmul.mubr.bf16.gmra.mrb[0].mxu0 %v4831
        %v4888 = vpop.f32.mrb[0].mxu0
        %v4889 = vadd.f32 %v4798, %v4888
        %v4890 = vpop.f32.mrb[0].mxu0
        %v4891 = vpop.f32.mrb[0].mxu0
        %v4892 = vadd.f32 %v4799, %v4891
        %v4893 = vpop.f32.mrb[0].mxu0
        %4894 = vmatprep.mubr.bf16.mxu0 0
        %4895 = vmatmul.mubr.bf16.gmra.mrb[0].mxu0 %v4834
        %v4896 = vpop.f32.mrb[0].mxu0
        %v4897 = vadd.f32 %v4800, %v4896
        %v4898 = vpop.f32.mrb[0].mxu0
        %v4899 = vpop.f32.mrb[0].mxu0
        %v4900 = vadd.f32 %v4801, %v4899
        %v4901 = vpop.f32.mrb[0].mxu0
        %4902 = vmatprep.mubr.bf16.mxu0 0
        %4903 = vmatmul.mubr.bf16.gmra.mrb[0].mxu0 %v4837
        %v4904 = vpop.f32.mrb[0].mxu0
        %v4905 = vadd.f32 %v4802, %v4904
        %v4906 = vpop.f32.mrb[0].mxu0
        %v4907 = vpop.f32.mrb[0].mxu0
        %v4908 = vadd.f32 %v4803, %v4907
        %v4909 = vpop.f32.mrb[0].mxu0
        %4910 = vmatprep.mubr.bf16.mxu0 0
        %4911 = vmatmul.mubr.bf16.gmra.mrb[0].mxu0 %v4840
        %v4912 = vpop.f32.mrb[0].mxu0
        %v4913 = vadd.f32 %v4804, %v4912
        %v4914 = vpop.f32.mrb[0].mxu0
        %v4915 = vpop.f32.mrb[0].mxu0
        %v4916 = vadd.f32 %v4805, %v4915
        %v4917 = vpop.f32.mrb[0].mxu0
        %4918 = vdwg.mxu0
        %v4920 = vsel %vm1684, %v4753, 0
        %v4923 = vsel %vm1684, %v4754, 0
        %v4926 = vsel %vm1684, %v4755, 0
        %v4929 = vsel %vm1684, %v4756, 0
        %v4932 = vsel %vm1684, %v4769, 0
        %v4935 = vsel %vm1684, %v4770, 0
        %v4938 = vsel %vm1684, %v4771, 0
        %v4941 = vsel %vm1684, %v4772, 0
        %4943 = vmatprep.subr.bf16.mxu0 0
        %4944 = vmatpush1.bf16.xpose.msra.mxu0 %v4932
        %4945 = vmatprep.subr.bf16.mxu0 0
        %4946 = vmatpush1.bf16.xpose.msra.mxu0 %v4935
        %4947 = vmatprep.subr.bf16.mxu0 0
        %4948 = vmatpush1.bf16.xpose.msra.mxu0 %v4938
        %4949 = vmatprep.subr.bf16.mxu0 0
        %4950 = vmatpush1.bf16.xpose.msra.mxu0 %v4941
        %4951 = vmatprep.subr.bf16.mxu0 0
        %4952 = vmatpush1.bf16.xpose.msra.mxu0 0
        %4953 = vmatprep.subr.bf16.mxu0 0
        %4954 = vmatpush1.bf16.xpose.msra.mxu0 0
        %4955 = vmatprep.subr.bf16.mxu0 0
        %4956 = vmatpush1.bf16.xpose.msra.mxu0 0
        %4957 = vmatprep.subr.bf16.mxu0 0
        %4958 = vmatpush1.bf16.xpose.msra.mxu0 0
        %4959 = vmatprep.subr.bf16.mxu0 0
        %4960 = vmatpush1.bf16.xpose.msra.mxu0 0
        %4961 = vmatprep.subr.bf16.mxu0 0
        %4962 = vmatpush1.bf16.xpose.msra.mxu0 0
        %4963 = vmatprep.subr.bf16.mxu0 0
        %4964 = vmatpush1.bf16.xpose.msra.mxu0 0
        %4965 = vmatprep.subr.bf16.mxu0 0
        %4966 = vmatpush1.bf16.xpose.msra.mxu0 0
        %4967 = vmatprep.subr.bf16.mxu0 0
        %4968 = vmatpush1.bf16.xpose.msra.mxu0 0
        %4969 = vmatprep.subr.bf16.mxu0 0
        %4970 = vmatpush1.bf16.xpose.msra.mxu0 0
        %4971 = vmatprep.subr.bf16.mxu0 0
        %4972 = vmatpush1.bf16.xpose.msra.mxu0 0
        %4973 = vmatprep.subr.bf16.mxu0 0
        %4974 = vmatpush1.bf16.xpose.msra.mxu0 0
        %4975 = vmatprep.mubr.bf16.mxu0 0
        %4976 = vmatmul.mubr.bf16.gmra.mrb[0].mxu0 %v4920
        %v4977 = vpop.f32.mrb[0].mxu0
        %v4978 = vadd.f32 %v4806, %v4977
        %v4979 = vpop.f32.mrb[0].mxu0
        %v4980 = vpop.f32.mrb[0].mxu0
        %v4981 = vadd.f32 %v4807, %v4980
        %v4982 = vpop.f32.mrb[0].mxu0
        %4983 = vmatprep.mubr.bf16.mxu0 0
        %4984 = vmatmul.mubr.bf16.gmra.mrb[0].mxu0 %v4923
        %v4985 = vpop.f32.mrb[0].mxu0
        %v4986 = vadd.f32 %v4808, %v4985
        %v4987 = vpop.f32.mrb[0].mxu0
        %v4988 = vpop.f32.mrb[0].mxu0
        %v4989 = vadd.f32 %v4809, %v4988
        %v4990 = vpop.f32.mrb[0].mxu0
        %4991 = vmatprep.mubr.bf16.mxu0 0
        %4992 = vmatmul.mubr.bf16.gmra.mrb[0].mxu0 %v4926
        %v4993 = vpop.f32.mrb[0].mxu0
        %v4994 = vadd.f32 %v4810, %v4993
        %v4995 = vpop.f32.mrb[0].mxu0
        %v4996 = vpop.f32.mrb[0].mxu0
        %v4997 = vadd.f32 %v4811, %v4996
        %v4998 = vpop.f32.mrb[0].mxu0
        %4999 = vmatprep.mubr.bf16.mxu0 0
        %5000 = vmatmul.mubr.bf16.gmra.mrb[0].mxu0 %v4929
        %v5001 = vpop.f32.mrb[0].mxu0
        %v5002 = vadd.f32 %v4812, %v5001
        %v5003 = vpop.f32.mrb[0].mxu0
        %v5004 = vpop.f32.mrb[0].mxu0
        %v5005 = vadd.f32 %v4813, %v5004
        %v5006 = vpop.f32.mrb[0].mxu0
        %5007 = vdwg.mxu0
        %v5009 = vsel %vm1684, %v4757, 0
        %v5012 = vsel %vm1684, %v4758, 0
        %v5015 = vsel %vm1684, %v4759, 0
        %v5018 = vsel %vm1684, %v4760, 0
        %v5021 = vsel %vm1684, %v4773, 0
        %v5024 = vsel %vm1684, %v4774, 0
        %v5027 = vsel %vm1684, %v4775, 0
        %v5030 = vsel %vm1684, %v4776, 0
        %5032 = vmatprep.subr.bf16.mxu0 0
        %5033 = vmatpush1.bf16.xpose.msra.mxu0 %v5021
        %5034 = vmatprep.subr.bf16.mxu0 0
        %5035 = vmatpush1.bf16.xpose.msra.mxu0 %v5024
        %5036 = vmatprep.subr.bf16.mxu0 0
        %5037 = vmatpush1.bf16.xpose.msra.mxu0 %v5027
        %5038 = vmatprep.subr.bf16.mxu0 0
        %5039 = vmatpush1.bf16.xpose.msra.mxu0 %v5030
        %5040 = vmatprep.subr.bf16.mxu0 0
        %5041 = vmatpush1.bf16.xpose.msra.mxu0 0
        %5042 = vmatprep.subr.bf16.mxu0 0
        %5043 = vmatpush1.bf16.xpose.msra.mxu0 0
        %5044 = vmatprep.subr.bf16.mxu0 0
        %5045 = vmatpush1.bf16.xpose.msra.mxu0 0
        %5046 = vmatprep.subr.bf16.mxu0 0
        %5047 = vmatpush1.bf16.xpose.msra.mxu0 0
        %5048 = vmatprep.subr.bf16.mxu0 0
        %5049 = vmatpush1.bf16.xpose.msra.mxu0 0
        %5050 = vmatprep.subr.bf16.mxu0 0
        %5051 = vmatpush1.bf16.xpose.msra.mxu0 0
        %5052 = vmatprep.subr.bf16.mxu0 0
        %5053 = vmatpush1.bf16.xpose.msra.mxu0 0
        %5054 = vmatprep.subr.bf16.mxu0 0
        %5055 = vmatpush1.bf16.xpose.msra.mxu0 0
        %5056 = vmatprep.subr.bf16.mxu0 0
        %5057 = vmatpush1.bf16.xpose.msra.mxu0 0
        %5058 = vmatprep.subr.bf16.mxu0 0
        %5059 = vmatpush1.bf16.xpose.msra.mxu0 0
        %5060 = vmatprep.subr.bf16.mxu0 0
        %5061 = vmatpush1.bf16.xpose.msra.mxu0 0
        %5062 = vmatprep.subr.bf16.mxu0 0
        %5063 = vmatpush1.bf16.xpose.msra.mxu0 0
        %5064 = vmatprep.mubr.bf16.mxu0 0
        %5065 = vmatmul.mubr.bf16.gmra.mrb[0].mxu0 %v5009
        %v5066 = vpop.f32.mrb[0].mxu0
        %v5067 = vadd.f32 %v4814, %v5066
        %v5068 = vpop.f32.mrb[0].mxu0
        %v5069 = vpop.f32.mrb[0].mxu0
        %v5070 = vadd.f32 %v4815, %v5069
        %v5071 = vpop.f32.mrb[0].mxu0
        %5072 = vmatprep.mubr.bf16.mxu0 0
        %5073 = vmatmul.mubr.bf16.gmra.mrb[0].mxu0 %v5012
        %v5074 = vpop.f32.mrb[0].mxu0
        %v5075 = vadd.f32 %v4816, %v5074
        %v5076 = vpop.f32.mrb[0].mxu0
        %v5077 = vpop.f32.mrb[0].mxu0
        %v5078 = vadd.f32 %v4817, %v5077
        %v5079 = vpop.f32.mrb[0].mxu0
        %5080 = vmatprep.mubr.bf16.mxu0 0
        %5081 = vmatmul.mubr.bf16.gmra.mrb[0].mxu0 %v5015
        %v5082 = vpop.f32.mrb[0].mxu0
        %v5083 = vadd.f32 %v4818, %v5082
        %v5084 = vpop.f32.mrb[0].mxu0
        %v5085 = vpop.f32.mrb[0].mxu0
        %v5086 = vadd.f32 %v4819, %v5085
        %v5087 = vpop.f32.mrb[0].mxu0
        %5088 = vmatprep.mubr.bf16.mxu0 0
        %5089 = vmatmul.mubr.bf16.gmra.mrb[0].mxu0 %v5018
        %v5090 = vpop.f32.mrb[0].mxu0
        %v5091 = vadd.f32 %v4820, %v5090
        %v5092 = vpop.f32.mrb[0].mxu0
        %v5093 = vpop.f32.mrb[0].mxu0
        %v5094 = vadd.f32 %v4821, %v5093
        %v5095 = vpop.f32.mrb[0].mxu0
        %5096 = vdwg.mxu0
        %v5098 = vsel %vm1684, %v4761, 0
        %v5101 = vsel %vm1684, %v4762, 0
        %v5104 = vsel %vm1684, %v4763, 0
        %v5107 = vsel %vm1684, %v4764, 0
        %v5110 = vsel %vm1684, %v4777, 0
        %v5113 = vsel %vm1684, %v4778, 0
        %v5116 = vsel %vm1684, %v4779, 0
        %v5119 = vsel %vm1684, %v4780, 0
        %5121 = vmatprep.subr.bf16.mxu0 0
        %5122 = vmatpush1.bf16.xpose.msra.mxu0 %v5110
        %5123 = vmatprep.subr.bf16.mxu0 0
        %5124 = vmatpush1.bf16.xpose.msra.mxu0 %v5113
        %5125 = vmatprep.subr.bf16.mxu0 0
        %5126 = vmatpush1.bf16.xpose.msra.mxu0 %v5116
        %5127 = vmatprep.subr.bf16.mxu0 0
        %5128 = vmatpush1.bf16.xpose.msra.mxu0 %v5119
        %5129 = vmatprep.subr.bf16.mxu0 0
        %5130 = vmatpush1.bf16.xpose.msra.mxu0 0
        %5131 = vmatprep.subr.bf16.mxu0 0
        %5132 = vmatpush1.bf16.xpose.msra.mxu0 0
        %5133 = vmatprep.subr.bf16.mxu0 0
        %5134 = vmatpush1.bf16.xpose.msra.mxu0 0
        %5135 = vmatprep.subr.bf16.mxu0 0
        %5136 = vmatpush1.bf16.xpose.msra.mxu0 0
        %5137 = vmatprep.subr.bf16.mxu0 0
        %5138 = vmatpush1.bf16.xpose.msra.mxu0 0
        %5139 = vmatprep.subr.bf16.mxu0 0
        %5140 = vmatpush1.bf16.xpose.msra.mxu0 0
        %5141 = vmatprep.subr.bf16.mxu0 0
        %5142 = vmatpush1.bf16.xpose.msra.mxu0 0
        %5143 = vmatprep.subr.bf16.mxu0 0
        %5144 = vmatpush1.bf16.xpose.msra.mxu0 0
        %5145 = vmatprep.subr.bf16.mxu0 0
        %5146 = vmatpush1.bf16.xpose.msra.mxu0 0
        %5147 = vmatprep.subr.bf16.mxu0 0
        %5148 = vmatpush1.bf16.xpose.msra.mxu0 0
        %5149 = vmatprep.subr.bf16.mxu0 0
        %5150 = vmatpush1.bf16.xpose.msra.mxu0 0
        %5151 = vmatprep.subr.bf16.mxu0 0
        %5152 = vmatpush1.bf16.xpose.msra.mxu0 0
        %5153 = vmatprep.mubr.bf16.mxu0 0
        %5154 = vmatmul.mubr.bf16.gmra.mrb[0].mxu0 %v5098
        %v5155 = vpop.f32.mrb[0].mxu0
        %v5156 = vadd.f32 %v4822, %v5155
        %v5157 = vpop.f32.mrb[0].mxu0
        %v5158 = vpop.f32.mrb[0].mxu0
        %v5159 = vadd.f32 %v4823, %v5158
        %v5160 = vpop.f32.mrb[0].mxu0
        %5161 = vmatprep.mubr.bf16.mxu0 0
        %5162 = vmatmul.mubr.bf16.gmra.mrb[0].mxu0 %v5101
        %v5163 = vpop.f32.mrb[0].mxu0
        %v5164 = vadd.f32 %v4824, %v5163
        %v5165 = vpop.f32.mrb[0].mxu0
        %v5166 = vpop.f32.mrb[0].mxu0
        %v5167 = vadd.f32 %v4825, %v5166
        %v5168 = vpop.f32.mrb[0].mxu0
        %5169 = vmatprep.mubr.bf16.mxu0 0
        %5170 = vmatmul.mubr.bf16.gmra.mrb[0].mxu0 %v5104
        %v5171 = vpop.f32.mrb[0].mxu0
        %v5172 = vadd.f32 %v4826, %v5171
        %v5173 = vpop.f32.mrb[0].mxu0
        %v5174 = vpop.f32.mrb[0].mxu0
        %v5175 = vadd.f32 %v4827, %v5174
        %v5176 = vpop.f32.mrb[0].mxu0
        %5177 = vmatprep.mubr.bf16.mxu0 0
        %5178 = vmatmul.mubr.bf16.gmra.mrb[0].mxu0 %v5107
        %v5179 = vpop.f32.mrb[0].mxu0
        %v5180 = vadd.f32 %v4828, %v5179
        %v5181 = vpop.f32.mrb[0].mxu0
        %v5182 = vpop.f32.mrb[0].mxu0
        %v5183 = vadd.f32 %v4829, %v5182
        %v5184 = vpop.f32.mrb[0].mxu0
        %5185 = vdwg.mxu0
        %v5186 = vsel %vm2041, %v4889, -inf
        %5187 = vmax.xlane.f32.xlu0 %v5186
        %v5188 = vpop.xlane.xlu0 %5187
        %v5189 = vsel %vm2041, %v4892, -inf
        %5190 = vmax.xlane.f32.xlu0 %v5189
        %v5191 = vpop.xlane.xlu0 %5190
        %v5192 = vsel %vm2041, %v4897, -inf
        %5193 = vmax.xlane.f32.xlu0 %v5192
        %v5194 = vpop.xlane.xlu0 %5193
        %v5195 = vsel %vm2041, %v4900, -inf
        %5196 = vmax.xlane.f32.xlu0 %v5195
        %v5197 = vpop.xlane.xlu0 %5196
        %v5198 = vsel %vm2041, %v4905, -inf
        %5199 = vmax.xlane.f32.xlu0 %v5198
        %v5200 = vpop.xlane.xlu0 %5199
        %v5201 = vsel %vm2041, %v4908, -inf
        %5202 = vmax.xlane.f32.xlu0 %v5201
        %v5203 = vpop.xlane.xlu0 %5202
        %v5204 = vsel %vm2041, %v4913, -inf
        %5205 = vmax.xlane.f32.xlu0 %v5204
        %v5206 = vpop.xlane.xlu0 %5205
        %v5207 = vsel %vm2041, %v4916, -inf
        %5208 = vmax.xlane.f32.xlu0 %v5207
        %v5209 = vpop.xlane.xlu0 %5208
        %v5210 = vsel %vm2041, %v4978, -inf
        %5211 = vmax.xlane.f32.xlu0 %v5210
        %v5212 = vpop.xlane.xlu0 %5211
        %v5213 = vsel %vm2041, %v4981, -inf
        %5214 = vmax.xlane.f32.xlu0 %v5213
        %v5215 = vpop.xlane.xlu0 %5214
        %v5216 = vsel %vm2041, %v4986, -inf
        %5217 = vmax.xlane.f32.xlu0 %v5216
        %v5218 = vpop.xlane.xlu0 %5217
        %v5219 = vsel %vm2041, %v4989, -inf
        %5220 = vmax.xlane.f32.xlu0 %v5219
        %v5221 = vpop.xlane.xlu0 %5220
        %v5222 = vsel %vm2041, %v4994, -inf
        %5223 = vmax.xlane.f32.xlu0 %v5222
        %v5224 = vpop.xlane.xlu0 %5223
        %v5225 = vsel %vm2041, %v4997, -inf
        %5226 = vmax.xlane.f32.xlu0 %v5225
        %v5227 = vpop.xlane.xlu0 %5226
        %v5228 = vsel %vm2041, %v5002, -inf
        %5229 = vmax.xlane.f32.xlu0 %v5228
        %v5230 = vpop.xlane.xlu0 %5229
        %v5231 = vsel %vm2041, %v5005, -inf
        %5232 = vmax.xlane.f32.xlu0 %v5231
        %v5233 = vpop.xlane.xlu0 %5232
        %v5234 = vsel %vm2041, %v5067, -inf
        %5235 = vmax.xlane.f32.xlu0 %v5234
        %v5236 = vpop.xlane.xlu0 %5235
        %v5237 = vsel %vm2041, %v5070, -inf
        %5238 = vmax.xlane.f32.xlu0 %v5237
        %v5239 = vpop.xlane.xlu0 %5238
        %v5240 = vsel %vm2041, %v5075, -inf
        %5241 = vmax.xlane.f32.xlu0 %v5240
        %v5242 = vpop.xlane.xlu0 %5241
        %v5243 = vsel %vm2041, %v5078, -inf
        %5244 = vmax.xlane.f32.xlu0 %v5243
        %v5245 = vpop.xlane.xlu0 %5244
        %v5246 = vsel %vm2041, %v5083, -inf
        %5247 = vmax.xlane.f32.xlu0 %v5246
        %v5248 = vpop.xlane.xlu0 %5247
        %v5249 = vsel %vm2041, %v5086, -inf
        %5250 = vmax.xlane.f32.xlu0 %v5249
        %v5251 = vpop.xlane.xlu0 %5250
        %v5252 = vsel %vm2041, %v5091, -inf
        %5253 = vmax.xlane.f32.xlu0 %v5252
        %v5254 = vpop.xlane.xlu0 %5253
        %v5255 = vsel %vm2041, %v5094, -inf
        %5256 = vmax.xlane.f32.xlu0 %v5255
        %v5257 = vpop.xlane.xlu0 %5256
        %v5258 = vsel %vm2041, %v5156, -inf
        %5259 = vmax.xlane.f32.xlu0 %v5258
        %v5260 = vpop.xlane.xlu0 %5259
        %v5261 = vsel %vm2041, %v5159, -inf
        %5262 = vmax.xlane.f32.xlu0 %v5261
        %v5263 = vpop.xlane.xlu0 %5262
        %v5264 = vsel %vm2041, %v5164, -inf
        %5265 = vmax.xlane.f32.xlu0 %v5264
        %v5266 = vpop.xlane.xlu0 %5265
        %v5267 = vsel %vm2041, %v5167, -inf
        %5268 = vmax.xlane.f32.xlu0 %v5267
        %v5269 = vpop.xlane.xlu0 %5268
        %v5270 = vsel %vm2041, %v5172, -inf
        %5271 = vmax.xlane.f32.xlu0 %v5270
        %v5272 = vpop.xlane.xlu0 %5271
        %v5273 = vsel %vm2041, %v5175, -inf
        %5274 = vmax.xlane.f32.xlu0 %v5273
        %v5275 = vpop.xlane.xlu0 %5274
        %v5276 = vsel %vm2041, %v5180, -inf
        %5277 = vmax.xlane.f32.xlu0 %v5276
        %v5278 = vpop.xlane.xlu0 %5277
        %v5279 = vsel %vm2041, %v5183, -inf
        %5280 = vmax.xlane.f32.xlu0 %v5279
        %v5281 = vpop.xlane.xlu0 %5280
        %v5282 = vsub.f32 %v4889, %v5188
        %v5283 = vsub.f32 %v4892, %v5191
        %v5284 = vsub.f32 %v4897, %v5194
        %v5285 = vsub.f32 %v4900, %v5197
        %v5286 = vsub.f32 %v4905, %v5200
        %v5287 = vsub.f32 %v4908, %v5203
        %v5288 = vsub.f32 %v4913, %v5206
        %v5289 = vsub.f32 %v4916, %v5209
        %v5290 = vsub.f32 %v4978, %v5212
        %v5291 = vsub.f32 %v4981, %v5215
        %v5292 = vsub.f32 %v4986, %v5218
        %v5293 = vsub.f32 %v4989, %v5221
        %v5294 = vsub.f32 %v4994, %v5224
        %v5295 = vsub.f32 %v4997, %v5227
        %v5296 = vsub.f32 %v5002, %v5230
        %v5297 = vsub.f32 %v5005, %v5233
        %v5298 = vsub.f32 %v5067, %v5236
        %v5299 = vsub.f32 %v5070, %v5239
        %v5300 = vsub.f32 %v5075, %v5242
        %v5301 = vsub.f32 %v5078, %v5245
        %v5302 = vsub.f32 %v5083, %v5248
        %v5303 = vsub.f32 %v5086, %v5251
        %v5304 = vsub.f32 %v5091, %v5254
        %v5305 = vsub.f32 %v5094, %v5257
        %v5306 = vsub.f32 %v5156, %v5260
        %v5307 = vsub.f32 %v5159, %v5263
        %v5308 = vsub.f32 %v5164, %v5266
        %v5309 = vsub.f32 %v5167, %v5269
        %v5310 = vsub.f32 %v5172, %v5272
        %v5311 = vsub.f32 %v5175, %v5275
        %v5312 = vsub.f32 %v5180, %v5278
        %v5313 = vsub.f32 %v5183, %v5281
        %v5314 = vmul.f32 %v5282, 1.442695
        %v5315 = vpow.pop %v5314
        %v5316 = vmul.f32 %v5283, 1.442695
        %v5317 = vpow.pop %v5316
        %v5318 = vmul.f32 %v5284, 1.442695
        %v5319 = vpow.pop %v5318
        %v5320 = vmul.f32 %v5285, 1.442695
        %v5321 = vpow.pop %v5320
        %v5322 = vmul.f32 %v5286, 1.442695
        %v5323 = vpow.pop %v5322
        %v5324 = vmul.f32 %v5287, 1.442695
        %v5325 = vpow.pop %v5324
        %v5326 = vmul.f32 %v5288, 1.442695
        %v5327 = vpow.pop %v5326
        %v5328 = vmul.f32 %v5289, 1.442695
        %v5329 = vpow.pop %v5328
        %v5330 = vmul.f32 %v5290, 1.442695
        %v5331 = vpow.pop %v5330
        %v5332 = vmul.f32 %v5291, 1.442695
        %v5333 = vpow.pop %v5332
        %v5334 = vmul.f32 %v5292, 1.442695
        %v5335 = vpow.pop %v5334
        %v5336 = vmul.f32 %v5293, 1.442695
        %v5337 = vpow.pop %v5336
        %v5338 = vmul.f32 %v5294, 1.442695
        %v5339 = vpow.pop %v5338
        %v5340 = vmul.f32 %v5295, 1.442695
        %v5341 = vpow.pop %v5340
        %v5342 = vmul.f32 %v5296, 1.442695
        %v5343 = vpow.pop %v5342
        %v5344 = vmul.f32 %v5297, 1.442695
        %v5345 = vpow.pop %v5344
        %v5346 = vmul.f32 %v5298, 1.442695
        %v5347 = vpow.pop %v5346
        %v5348 = vmul.f32 %v5299, 1.442695
        %v5349 = vpow.pop %v5348
        %v5350 = vmul.f32 %v5300, 1.442695
        %v5351 = vpow.pop %v5350
        %v5352 = vmul.f32 %v5301, 1.442695
        %v5353 = vpow.pop %v5352
        %v5354 = vmul.f32 %v5302, 1.442695
        %v5355 = vpow.pop %v5354
        %v5356 = vmul.f32 %v5303, 1.442695
        %v5357 = vpow.pop %v5356
        %v5358 = vmul.f32 %v5304, 1.442695
        %v5359 = vpow.pop %v5358
        %v5360 = vmul.f32 %v5305, 1.442695
        %v5361 = vpow.pop %v5360
        %v5362 = vmul.f32 %v5306, 1.442695
        %v5363 = vpow.pop %v5362
        %v5364 = vmul.f32 %v5307, 1.442695
        %v5365 = vpow.pop %v5364
        %v5366 = vmul.f32 %v5308, 1.442695
        %v5367 = vpow.pop %v5366
        %v5368 = vmul.f32 %v5309, 1.442695
        %v5369 = vpow.pop %v5368
        %v5370 = vmul.f32 %v5310, 1.442695
        %v5371 = vpow.pop %v5370
        %v5372 = vmul.f32 %v5311, 1.442695
        %v5373 = vpow.pop %v5372
        %v5374 = vmul.f32 %v5312, 1.442695
        %v5375 = vpow.pop %v5374
        %v5376 = vmul.f32 %v5313, 1.442695
        %v5377 = vpow.pop %v5376
        %v5378 = vsel %vm2041, %v5315, 0.0
        %5379 = vadd.xlane.f32.xlu0 %v5378
        %v5380 = vpop.xlane.xlu0 %5379
        %v5381 = vsel %vm2041, %v5317, 0.0
        %5382 = vadd.xlane.f32.xlu0 %v5381
        %v5383 = vpop.xlane.xlu0 %5382
        %v5384 = vsel %vm2041, %v5319, 0.0
        %5385 = vadd.xlane.f32.xlu0 %v5384
        %v5386 = vpop.xlane.xlu0 %5385
        %v5387 = vsel %vm2041, %v5321, 0.0
        %5388 = vadd.xlane.f32.xlu0 %v5387
        %v5389 = vpop.xlane.xlu0 %5388
        %v5390 = vsel %vm2041, %v5323, 0.0
        %5391 = vadd.xlane.f32.xlu0 %v5390
        %v5392 = vpop.xlane.xlu0 %5391
        %v5393 = vsel %vm2041, %v5325, 0.0
        %5394 = vadd.xlane.f32.xlu0 %v5393
        %v5395 = vpop.xlane.xlu0 %5394
        %v5396 = vsel %vm2041, %v5327, 0.0
        %5397 = vadd.xlane.f32.xlu0 %v5396
        %v5398 = vpop.xlane.xlu0 %5397
        %v5399 = vsel %vm2041, %v5329, 0.0
        %5400 = vadd.xlane.f32.xlu0 %v5399
        %v5401 = vpop.xlane.xlu0 %5400
        %v5402 = vsel %vm2041, %v5331, 0.0
        %5403 = vadd.xlane.f32.xlu0 %v5402
        %v5404 = vpop.xlane.xlu0 %5403
        %v5405 = vsel %vm2041, %v5333, 0.0
        %5406 = vadd.xlane.f32.xlu0 %v5405
        %v5407 = vpop.xlane.xlu0 %5406
        %v5408 = vsel %vm2041, %v5335, 0.0
        %5409 = vadd.xlane.f32.xlu0 %v5408
        %v5410 = vpop.xlane.xlu0 %5409
        %v5411 = vsel %vm2041, %v5337, 0.0
        %5412 = vadd.xlane.f32.xlu0 %v5411
        %v5413 = vpop.xlane.xlu0 %5412
        %v5414 = vsel %vm2041, %v5339, 0.0
        %5415 = vadd.xlane.f32.xlu0 %v5414
        %v5416 = vpop.xlane.xlu0 %5415
        %v5417 = vsel %vm2041, %v5341, 0.0
        %5418 = vadd.xlane.f32.xlu0 %v5417
        %v5419 = vpop.xlane.xlu0 %5418
        %v5420 = vsel %vm2041, %v5343, 0.0
        %5421 = vadd.xlane.f32.xlu0 %v5420
        %v5422 = vpop.xlane.xlu0 %5421
        %v5423 = vsel %vm2041, %v5345, 0.0
        %5424 = vadd.xlane.f32.xlu0 %v5423
        %v5425 = vpop.xlane.xlu0 %5424
        %v5426 = vsel %vm2041, %v5347, 0.0
        %5427 = vadd.xlane.f32.xlu0 %v5426
        %v5428 = vpop.xlane.xlu0 %5427
        %v5429 = vsel %vm2041, %v5349, 0.0
        %5430 = vadd.xlane.f32.xlu0 %v5429
        %v5431 = vpop.xlane.xlu0 %5430
        %v5432 = vsel %vm2041, %v5351, 0.0
        %5433 = vadd.xlane.f32.xlu0 %v5432
        %v5434 = vpop.xlane.xlu0 %5433
        %v5435 = vsel %vm2041, %v5353, 0.0
        %5436 = vadd.xlane.f32.xlu0 %v5435
        %v5437 = vpop.xlane.xlu0 %5436
        %v5438 = vsel %vm2041, %v5355, 0.0
        %5439 = vadd.xlane.f32.xlu0 %v5438
        %v5440 = vpop.xlane.xlu0 %5439
        %v5441 = vsel %vm2041, %v5357, 0.0
        %5442 = vadd.xlane.f32.xlu0 %v5441
        %v5443 = vpop.xlane.xlu0 %5442
        %v5444 = vsel %vm2041, %v5359, 0.0
        %5445 = vadd.xlane.f32.xlu0 %v5444
        %v5446 = vpop.xlane.xlu0 %5445
        %v5447 = vsel %vm2041, %v5361, 0.0
        %5448 = vadd.xlane.f32.xlu0 %v5447
        %v5449 = vpop.xlane.xlu0 %5448
        %v5450 = vsel %vm2041, %v5363, 0.0
        %5451 = vadd.xlane.f32.xlu0 %v5450
        %v5452 = vpop.xlane.xlu0 %5451
        %v5453 = vsel %vm2041, %v5365, 0.0
        %5454 = vadd.xlane.f32.xlu0 %v5453
        %v5455 = vpop.xlane.xlu0 %5454
        %v5456 = vsel %vm2041, %v5367, 0.0
        %5457 = vadd.xlane.f32.xlu0 %v5456
        %v5458 = vpop.xlane.xlu0 %5457
        %v5459 = vsel %vm2041, %v5369, 0.0
        %5460 = vadd.xlane.f32.xlu0 %v5459
        %v5461 = vpop.xlane.xlu0 %5460
        %v5462 = vsel %vm2041, %v5371, 0.0
        %5463 = vadd.xlane.f32.xlu0 %v5462
        %v5464 = vpop.xlane.xlu0 %5463
        %v5465 = vsel %vm2041, %v5373, 0.0
        %5466 = vadd.xlane.f32.xlu0 %v5465
        %v5467 = vpop.xlane.xlu0 %5466
        %v5468 = vsel %vm2041, %v5375, 0.0
        %5469 = vadd.xlane.f32.xlu0 %v5468
        %v5470 = vpop.xlane.xlu0 %5469
        %v5471 = vsel %vm2041, %v5377, 0.0
        %5472 = vadd.xlane.f32.xlu0 %v5471
        %v5473 = vpop.xlane.xlu0 %5472
        %v5474 = vrcp.pop %v5380
        %v5475 = vrcp.pop %v5383
        %v5476 = vrcp.pop %v5386
        %v5477 = vrcp.pop %v5389
        %v5478 = vrcp.pop %v5392
        %v5479 = vrcp.pop %v5395
        %v5480 = vrcp.pop %v5398
        %v5481 = vrcp.pop %v5401
        %v5482 = vrcp.pop %v5404
        %v5483 = vrcp.pop %v5407
        %v5484 = vrcp.pop %v5410
        %v5485 = vrcp.pop %v5413
        %v5486 = vrcp.pop %v5416
        %v5487 = vrcp.pop %v5419
        %v5488 = vrcp.pop %v5422
        %v5489 = vrcp.pop %v5425
        %v5490 = vrcp.pop %v5428
        %v5491 = vrcp.pop %v5431
        %v5492 = vrcp.pop %v5434
        %v5493 = vrcp.pop %v5437
        %v5494 = vrcp.pop %v5440
        %v5495 = vrcp.pop %v5443
        %v5496 = vrcp.pop %v5446
        %v5497 = vrcp.pop %v5449
        %v5498 = vrcp.pop %v5452
        %v5499 = vrcp.pop %v5455
        %v5500 = vrcp.pop %v5458
        %v5501 = vrcp.pop %v5461
        %v5502 = vrcp.pop %v5464
        %v5503 = vrcp.pop %v5467
        %v5504 = vrcp.pop %v5470
        %v5505 = vrcp.pop %v5473
        %v5506 = vmul.f32 %v5315, %v5474
        %v5507 = vmul.f32 %v5317, %v5475
        %v5508 = vmul.f32 %v5319, %v5476
        %v5509 = vmul.f32 %v5321, %v5477
        %v5510 = vmul.f32 %v5323, %v5478
        %v5511 = vmul.f32 %v5325, %v5479
        %v5512 = vmul.f32 %v5327, %v5480
        %v5513 = vmul.f32 %v5329, %v5481
        %v5514 = vmul.f32 %v5331, %v5482
        %v5515 = vmul.f32 %v5333, %v5483
        %v5516 = vmul.f32 %v5335, %v5484
        %v5517 = vmul.f32 %v5337, %v5485
        %v5518 = vmul.f32 %v5339, %v5486
        %v5519 = vmul.f32 %v5341, %v5487
        %v5520 = vmul.f32 %v5343, %v5488
        %v5521 = vmul.f32 %v5345, %v5489
        %v5522 = vmul.f32 %v5347, %v5490
        %v5523 = vmul.f32 %v5349, %v5491
        %v5524 = vmul.f32 %v5351, %v5492
        %v5525 = vmul.f32 %v5353, %v5493
        %v5526 = vmul.f32 %v5355, %v5494
        %v5527 = vmul.f32 %v5357, %v5495
        %v5528 = vmul.f32 %v5359, %v5496
        %v5529 = vmul.f32 %v5361, %v5497
        %v5530 = vmul.f32 %v5363, %v5498
        %v5531 = vmul.f32 %v5365, %v5499
        %v5532 = vmul.f32 %v5367, %v5500
        %v5533 = vmul.f32 %v5369, %v5501
        %v5534 = vmul.f32 %v5371, %v5502
        %v5535 = vmul.f32 %v5373, %v5503
        %v5536 = vmul.f32 %v5375, %v5504
        %v5537 = vmul.f32 %v5377, %v5505
        %v5538 = vpack.c.bf16 %v5507, %v5506
        %v5539 = vpack.c.bf16 %v5509, %v5508
        %v5540 = vpack.c.bf16 %v5511, %v5510
        %v5541 = vpack.c.bf16 %v5513, %v5512
        %v5542 = vpack.c.bf16 %v5515, %v5514
        %v5543 = vpack.c.bf16 %v5517, %v5516
        %v5544 = vpack.c.bf16 %v5519, %v5518
        %v5545 = vpack.c.bf16 %v5521, %v5520
        %v5546 = vpack.c.bf16 %v5523, %v5522
        %v5547 = vpack.c.bf16 %v5525, %v5524
        %v5548 = vpack.c.bf16 %v5527, %v5526
        %v5549 = vpack.c.bf16 %v5529, %v5528
        %v5550 = vpack.c.bf16 %v5531, %v5530
        %v5551 = vpack.c.bf16 %v5533, %v5532
        %v5552 = vpack.c.bf16 %v5535, %v5534
        %v5553 = vpack.c.bf16 %v5537, %v5536
        %v5555 = vsel %vm2041, %v5538, 0
        %v5558 = vsel %vm2041, %v5539, 0
        %v5561 = vsel %vm2041, %v5540, 0
        %v5564 = vsel %vm2041, %v5541, 0
        %5566 = vmatprep.subr.bf16.mxu0 0
        %5567 = vmatpush1.bf16.msra.mxu0 %v4781
        %5568 = vmatprep.subr.bf16.mxu0 0
        %5569 = vmatpush1.bf16.msra.mxu0 %v4782
        %5570 = vmatprep.subr.bf16.mxu0 0
        %5571 = vmatpush1.bf16.msra.mxu0 %v4783
        %5572 = vmatprep.subr.bf16.mxu0 0
        %5573 = vmatpush1.bf16.msra.mxu0 %v4784
        %5574 = vmatprep.subr.bf16.mxu0 0
        %5575 = vmatpush1.bf16.msra.mxu0 0
        %5576 = vmatprep.subr.bf16.mxu0 0
        %5577 = vmatpush1.bf16.msra.mxu0 0
        %5578 = vmatprep.subr.bf16.mxu0 0
        %5579 = vmatpush1.bf16.msra.mxu0 0
        %5580 = vmatprep.subr.bf16.mxu0 0
        %5581 = vmatpush1.bf16.msra.mxu0 0
        %5582 = vmatprep.subr.bf16.mxu0 0
        %5583 = vmatpush1.bf16.msra.mxu0 0
        %5584 = vmatprep.subr.bf16.mxu0 0
        %5585 = vmatpush1.bf16.msra.mxu0 0
        %5586 = vmatprep.subr.bf16.mxu0 0
        %5587 = vmatpush1.bf16.msra.mxu0 0
        %5588 = vmatprep.subr.bf16.mxu0 0
        %5589 = vmatpush1.bf16.msra.mxu0 0
        %5590 = vmatprep.subr.bf16.mxu0 0
        %5591 = vmatpush1.bf16.msra.mxu0 0
        %5592 = vmatprep.subr.bf16.mxu0 0
        %5593 = vmatpush1.bf16.msra.mxu0 0
        %5594 = vmatprep.subr.bf16.mxu0 0
        %5595 = vmatpush1.bf16.msra.mxu0 0
        %5596 = vmatprep.subr.bf16.mxu0 0
        %5597 = vmatpush1.bf16.msra.mxu0 0
        %5598 = vmatprep.mubr.bf16.mxu0 0
        %5599 = vmatmul.mubr.bf16.gmra.mrb[0].mxu0 %v5555
        %v5600 = vpop.f32.mrb[0].mxu0
        %v5601 = vadd.f32 0.0, %v5600
        %v5602 = vpop.f32.mrb[0].mxu0
        %v5603 = vpop.f32.mrb[0].mxu0
        %v5604 = vadd.f32 0.0, %v5603
        %v5605 = vpop.f32.mrb[0].mxu0
        %5606 = vmatprep.mubr.bf16.mxu0 0
        %5607 = vmatmul.mubr.bf16.gmra.mrb[0].mxu0 %v5558
        %v5608 = vpop.f32.mrb[0].mxu0
        %v5609 = vadd.f32 0.0, %v5608
        %v5610 = vpop.f32.mrb[0].mxu0
        %v5611 = vpop.f32.mrb[0].mxu0
        %v5612 = vadd.f32 0.0, %v5611
        %v5613 = vpop.f32.mrb[0].mxu0
        %5614 = vmatprep.mubr.bf16.mxu0 0
        %5615 = vmatmul.mubr.bf16.gmra.mrb[0].mxu0 %v5561
        %v5616 = vpop.f32.mrb[0].mxu0
        %v5617 = vadd.f32 0.0, %v5616
        %v5618 = vpop.f32.mrb[0].mxu0
        %v5619 = vpop.f32.mrb[0].mxu0
        %v5620 = vadd.f32 0.0, %v5619
        %v5621 = vpop.f32.mrb[0].mxu0
        %5622 = vmatprep.mubr.bf16.mxu0 0
        %5623 = vmatmul.mubr.bf16.gmra.mrb[0].mxu0 %v5564
        %v5624 = vpop.f32.mrb[0].mxu0
        %v5625 = vadd.f32 0.0, %v5624
        %v5626 = vpop.f32.mrb[0].mxu0
        %v5627 = vpop.f32.mrb[0].mxu0
        %v5628 = vadd.f32 0.0, %v5627
        %v5629 = vpop.f32.mrb[0].mxu0
        %5630 = vdwg.mxu0
        %v5632 = vsel %vm2041, %v5542, 0
        %v5635 = vsel %vm2041, %v5543, 0
        %v5638 = vsel %vm2041, %v5544, 0
        %v5641 = vsel %vm2041, %v5545, 0
        %5643 = vmatprep.subr.bf16.mxu0 0
        %5644 = vmatpush1.bf16.msra.mxu0 %v4785
        %5645 = vmatprep.subr.bf16.mxu0 0
        %5646 = vmatpush1.bf16.msra.mxu0 %v4786
        %5647 = vmatprep.subr.bf16.mxu0 0
        %5648 = vmatpush1.bf16.msra.mxu0 %v4787
        %5649 = vmatprep.subr.bf16.mxu0 0
        %5650 = vmatpush1.bf16.msra.mxu0 %v4788
        %5651 = vmatprep.subr.bf16.mxu0 0
        %5652 = vmatpush1.bf16.msra.mxu0 0
        %5653 = vmatprep.subr.bf16.mxu0 0
        %5654 = vmatpush1.bf16.msra.mxu0 0
        %5655 = vmatprep.subr.bf16.mxu0 0
        %5656 = vmatpush1.bf16.msra.mxu0 0
        %5657 = vmatprep.subr.bf16.mxu0 0
        %5658 = vmatpush1.bf16.msra.mxu0 0
        %5659 = vmatprep.subr.bf16.mxu0 0
        %5660 = vmatpush1.bf16.msra.mxu0 0
        %5661 = vmatprep.subr.bf16.mxu0 0
        %5662 = vmatpush1.bf16.msra.mxu0 0
        %5663 = vmatprep.subr.bf16.mxu0 0
        %5664 = vmatpush1.bf16.msra.mxu0 0
        %5665 = vmatprep.subr.bf16.mxu0 0
        %5666 = vmatpush1.bf16.msra.mxu0 0
        %5667 = vmatprep.subr.bf16.mxu0 0
        %5668 = vmatpush1.bf16.msra.mxu0 0
        %5669 = vmatprep.subr.bf16.mxu0 0
        %5670 = vmatpush1.bf16.msra.mxu0 0
        %5671 = vmatprep.subr.bf16.mxu0 0
        %5672 = vmatpush1.bf16.msra.mxu0 0
        %5673 = vmatprep.subr.bf16.mxu0 0
        %5674 = vmatpush1.bf16.msra.mxu0 0
        %5675 = vmatprep.mubr.bf16.mxu0 0
        %5676 = vmatmul.mubr.bf16.gmra.mrb[0].mxu0 %v5632
        %v5677 = vpop.f32.mrb[0].mxu0
        %v5678 = vadd.f32 0.0, %v5677
        %v5679 = vpop.f32.mrb[0].mxu0
        %v5680 = vpop.f32.mrb[0].mxu0
        %v5681 = vadd.f32 0.0, %v5680
        %v5682 = vpop.f32.mrb[0].mxu0
        %5683 = vmatprep.mubr.bf16.mxu0 0
        %5684 = vmatmul.mubr.bf16.gmra.mrb[0].mxu0 %v5635
        %v5685 = vpop.f32.mrb[0].mxu0
        %v5686 = vadd.f32 0.0, %v5685
        %v5687 = vpop.f32.mrb[0].mxu0
        %v5688 = vpop.f32.mrb[0].mxu0
        %v5689 = vadd.f32 0.0, %v5688
        %v5690 = vpop.f32.mrb[0].mxu0
        %5691 = vmatprep.mubr.bf16.mxu0 0
        %5692 = vmatmul.mubr.bf16.gmra.mrb[0].mxu0 %v5638
        %v5693 = vpop.f32.mrb[0].mxu0
        %v5694 = vadd.f32 0.0, %v5693
        %v5695 = vpop.f32.mrb[0].mxu0
        %v5696 = vpop.f32.mrb[0].mxu0
        %v5697 = vadd.f32 0.0, %v5696
        %v5698 = vpop.f32.mrb[0].mxu0
        %5699 = vmatprep.mubr.bf16.mxu0 0
        %5700 = vmatmul.mubr.bf16.gmra.mrb[0].mxu0 %v5641
        %v5701 = vpop.f32.mrb[0].mxu0
        %v5702 = vadd.f32 0.0, %v5701
        %v5703 = vpop.f32.mrb[0].mxu0
        %v5704 = vpop.f32.mrb[0].mxu0
        %v5705 = vadd.f32 0.0, %v5704
        %v5706 = vpop.f32.mrb[0].mxu0
        %5707 = vdwg.mxu0
        %v5709 = vsel %vm2041, %v5546, 0
        %v5712 = vsel %vm2041, %v5547, 0
        %v5715 = vsel %vm2041, %v5548, 0
        %v5718 = vsel %vm2041, %v5549, 0
        %5720 = vmatprep.subr.bf16.mxu0 0
        %5721 = vmatpush1.bf16.msra.mxu0 %v4789
        %5722 = vmatprep.subr.bf16.mxu0 0
        %5723 = vmatpush1.bf16.msra.mxu0 %v4790
        %5724 = vmatprep.subr.bf16.mxu0 0
        %5725 = vmatpush1.bf16.msra.mxu0 %v4791
        %5726 = vmatprep.subr.bf16.mxu0 0
        %5727 = vmatpush1.bf16.msra.mxu0 %v4792
        %5728 = vmatprep.subr.bf16.mxu0 0
        %5729 = vmatpush1.bf16.msra.mxu0 0
        %5730 = vmatprep.subr.bf16.mxu0 0
        %5731 = vmatpush1.bf16.msra.mxu0 0
        %5732 = vmatprep.subr.bf16.mxu0 0
        %5733 = vmatpush1.bf16.msra.mxu0 0
        %5734 = vmatprep.subr.bf16.mxu0 0
        %5735 = vmatpush1.bf16.msra.mxu0 0
        %5736 = vmatprep.subr.bf16.mxu0 0
        %5737 = vmatpush1.bf16.msra.mxu0 0
        %5738 = vmatprep.subr.bf16.mxu0 0
        %5739 = vmatpush1.bf16.msra.mxu0 0
        %5740 = vmatprep.subr.bf16.mxu0 0
        %5741 = vmatpush1.bf16.msra.mxu0 0
        %5742 = vmatprep.subr.bf16.mxu0 0
        %5743 = vmatpush1.bf16.msra.mxu0 0
        %5744 = vmatprep.subr.bf16.mxu0 0
        %5745 = vmatpush1.bf16.msra.mxu0 0
        %5746 = vmatprep.subr.bf16.mxu0 0
        %5747 = vmatpush1.bf16.msra.mxu0 0
        %5748 = vmatprep.subr.bf16.mxu0 0
        %5749 = vmatpush1.bf16.msra.mxu0 0
        %5750 = vmatprep.subr.bf16.mxu0 0
        %5751 = vmatpush1.bf16.msra.mxu0 0
        %5752 = vmatprep.mubr.bf16.mxu0 0
        %5753 = vmatmul.mubr.bf16.gmra.mrb[0].mxu0 %v5709
        %v5754 = vpop.f32.mrb[0].mxu0
        %v5755 = vadd.f32 0.0, %v5754
        %v5756 = vpop.f32.mrb[0].mxu0
        %v5757 = vpop.f32.mrb[0].mxu0
        %v5758 = vadd.f32 0.0, %v5757
        %v5759 = vpop.f32.mrb[0].mxu0
        %5760 = vmatprep.mubr.bf16.mxu0 0
        %5761 = vmatmul.mubr.bf16.gmra.mrb[0].mxu0 %v5712
        %v5762 = vpop.f32.mrb[0].mxu0
        %v5763 = vadd.f32 0.0, %v5762
        %v5764 = vpop.f32.mrb[0].mxu0
        %v5765 = vpop.f32.mrb[0].mxu0
        %v5766 = vadd.f32 0.0, %v5765
        %v5767 = vpop.f32.mrb[0].mxu0
        %5768 = vmatprep.mubr.bf16.mxu0 0
        %5769 = vmatmul.mubr.bf16.gmra.mrb[0].mxu0 %v5715
        %v5770 = vpop.f32.mrb[0].mxu0
        %v5771 = vadd.f32 0.0, %v5770
        %v5772 = vpop.f32.mrb[0].mxu0
        %v5773 = vpop.f32.mrb[0].mxu0
        %v5774 = vadd.f32 0.0, %v5773
        %v5775 = vpop.f32.mrb[0].mxu0
        %5776 = vmatprep.mubr.bf16.mxu0 0
        %5777 = vmatmul.mubr.bf16.gmra.mrb[0].mxu0 %v5718
        %v5778 = vpop.f32.mrb[0].mxu0
        %v5779 = vadd.f32 0.0, %v5778
        %v5780 = vpop.f32.mrb[0].mxu0
        %v5781 = vpop.f32.mrb[0].mxu0
        %v5782 = vadd.f32 0.0, %v5781
        %v5783 = vpop.f32.mrb[0].mxu0
        %5784 = vdwg.mxu0
        %v5786 = vsel %vm2041, %v5550, 0
        %v5789 = vsel %vm2041, %v5551, 0
        %v5792 = vsel %vm2041, %v5552, 0
        %v5795 = vsel %vm2041, %v5553, 0
        %5797 = vmatprep.subr.bf16.mxu0 0
        %5798 = vmatpush1.bf16.msra.mxu0 %v4793
        %5799 = vmatprep.subr.bf16.mxu0 0
        %5800 = vmatpush1.bf16.msra.mxu0 %v4794
        %5801 = vmatprep.subr.bf16.mxu0 0
        %5802 = vmatpush1.bf16.msra.mxu0 %v4795
        %5803 = vmatprep.subr.bf16.mxu0 0
        %5804 = vmatpush1.bf16.msra.mxu0 %v4796
        %5805 = vmatprep.subr.bf16.mxu0 0
        %5806 = vmatpush1.bf16.msra.mxu0 0
        %5807 = vmatprep.subr.bf16.mxu0 0
        %5808 = vmatpush1.bf16.msra.mxu0 0
        %5809 = vmatprep.subr.bf16.mxu0 0
        %5810 = vmatpush1.bf16.msra.mxu0 0
        %5811 = vmatprep.subr.bf16.mxu0 0
        %5812 = vmatpush1.bf16.msra.mxu0 0
        %5813 = vmatprep.subr.bf16.mxu0 0
        %5814 = vmatpush1.bf16.msra.mxu0 0
        %5815 = vmatprep.subr.bf16.mxu0 0
        %5816 = vmatpush1.bf16.msra.mxu0 0
        %5817 = vmatprep.subr.bf16.mxu0 0
        %5818 = vmatpush1.bf16.msra.mxu0 0
        %5819 = vmatprep.subr.bf16.mxu0 0
        %5820 = vmatpush1.bf16.msra.mxu0 0
        %5821 = vmatprep.subr.bf16.mxu0 0
        %5822 = vmatpush1.bf16.msra.mxu0 0
        %5823 = vmatprep.subr.bf16.mxu0 0
        %5824 = vmatpush1.bf16.msra.mxu0 0
        %5825 = vmatprep.subr.bf16.mxu0 0
        %5826 = vmatpush1.bf16.msra.mxu0 0
        %5827 = vmatprep.subr.bf16.mxu0 0
        %5828 = vmatpush1.bf16.msra.mxu0 0
        %5829 = vmatprep.mubr.bf16.mxu0 0
        %5830 = vmatmul.mubr.bf16.gmra.mrb[0].mxu0 %v5786
        %v5831 = vpop.f32.mrb[0].mxu0
        %v5832 = vadd.f32 0.0, %v5831
        %v5833 = vpop.f32.mrb[0].mxu0
        %v5834 = vpop.f32.mrb[0].mxu0
        %v5835 = vadd.f32 0.0, %v5834
        %v5836 = vpop.f32.mrb[0].mxu0
        %5837 = vmatprep.mubr.bf16.mxu0 0
        %5838 = vmatmul.mubr.bf16.gmra.mrb[0].mxu0 %v5789
        %v5839 = vpop.f32.mrb[0].mxu0
        %v5840 = vadd.f32 0.0, %v5839
        %v5841 = vpop.f32.mrb[0].mxu0
        %v5842 = vpop.f32.mrb[0].mxu0
        %v5843 = vadd.f32 0.0, %v5842
        %v5844 = vpop.f32.mrb[0].mxu0
        %5845 = vmatprep.mubr.bf16.mxu0 0
        %5846 = vmatmul.mubr.bf16.gmra.mrb[0].mxu0 %v5792
        %v5847 = vpop.f32.mrb[0].mxu0
        %v5848 = vadd.f32 0.0, %v5847
        %v5849 = vpop.f32.mrb[0].mxu0
        %v5850 = vpop.f32.mrb[0].mxu0
        %v5851 = vadd.f32 0.0, %v5850
        %v5852 = vpop.f32.mrb[0].mxu0
        %5853 = vmatprep.mubr.bf16.mxu0 0
        %5854 = vmatmul.mubr.bf16.gmra.mrb[0].mxu0 %v5795
        %v5855 = vpop.f32.mrb[0].mxu0
        %v5856 = vadd.f32 0.0, %v5855
        %v5857 = vpop.f32.mrb[0].mxu0
        %v5858 = vpop.f32.mrb[0].mxu0
        %v5859 = vadd.f32 0.0, %v5858
        %v5860 = vpop.f32.mrb[0].mxu0
        %5861 = vdwg.mxu0
        %s5862 = scalar_lea.vmem %s7, 32
        %v5863 = vld [vmem:[%s5862] sm:$0xff]
        %v5864 = vld [vmem:[%s5862 + $0x8] sm:$0xff]
        %v5865 = vld [vmem:[%s5862 + $0x10] sm:$0xff]
        %v5866 = vld [vmem:[%s5862 + $0x18] sm:$0xff]
        %v5867 = vpack.c.bf16 %v5863, %v5863
        %v5868 = vpack.c.bf16 %v5864, %v5864
        %v5869 = vpack.c.bf16 %v5865, %v5865
        %v5870 = vpack.c.bf16 %v5866, %v5866
        %v5871 = vpack.c.bf16 %v5604, %v5601
        %v5872 = vpack.c.bf16 %v5612, %v5609
        %v5873 = vpack.c.bf16 %v5620, %v5617
        %v5874 = vpack.c.bf16 %v5628, %v5625
        %v5875 = vpack.c.bf16 %v5681, %v5678
        %v5876 = vpack.c.bf16 %v5689, %v5686
        %v5877 = vpack.c.bf16 %v5697, %v5694
        %v5878 = vpack.c.bf16 %v5705, %v5702
        %v5879 = vpack.c.bf16 %v5758, %v5755
        %v5880 = vpack.c.bf16 %v5766, %v5763
        %v5881 = vpack.c.bf16 %v5774, %v5771
        %v5882 = vpack.c.bf16 %v5782, %v5779
        %v5883 = vpack.c.bf16 %v5835, %v5832
        %v5884 = vpack.c.bf16 %v5843, %v5840
        %v5885 = vpack.c.bf16 %v5851, %v5848
        %v5886 = vpack.c.bf16 %v5859, %v5856
        %v5888 = vsel %vm1684, %v5871, 0
        %v5891 = vsel %vm1684, %v5872, 0
        %v5894 = vsel %vm1684, %v5873, 0
        %v5897 = vsel %vm1684, %v5874, 0
        %v5900 = vsel %vm2754, %v5867, 0
        %5902 = vmatprep.subr.bf16.mxu0 0
        %5903 = vmatpush1.bf16.msra.mxu0 %v5900
        %5904 = vmatprep.subr.bf16.mxu0 0
        %5905 = vmatpush1.bf16.msra.mxu0 0
        %5906 = vmatprep.subr.bf16.mxu0 0
        %5907 = vmatpush1.bf16.msra.mxu0 0
        %5908 = vmatprep.subr.bf16.mxu0 0
        %5909 = vmatpush1.bf16.msra.mxu0 0
        %5910 = vmatprep.subr.bf16.mxu0 0
        %5911 = vmatpush1.bf16.msra.mxu0 0
        %5912 = vmatprep.subr.bf16.mxu0 0
        %5913 = vmatpush1.bf16.msra.mxu0 0
        %5914 = vmatprep.subr.bf16.mxu0 0
        %5915 = vmatpush1.bf16.msra.mxu0 0
        %5916 = vmatprep.subr.bf16.mxu0 0
        %5917 = vmatpush1.bf16.msra.mxu0 0
        %5918 = vmatprep.subr.bf16.mxu0 0
        %5919 = vmatpush1.bf16.msra.mxu0 0
        %5920 = vmatprep.subr.bf16.mxu0 0
        %5921 = vmatpush1.bf16.msra.mxu0 0
        %5922 = vmatprep.subr.bf16.mxu0 0
        %5923 = vmatpush1.bf16.msra.mxu0 0
        %5924 = vmatprep.subr.bf16.mxu0 0
        %5925 = vmatpush1.bf16.msra.mxu0 0
        %5926 = vmatprep.subr.bf16.mxu0 0
        %5927 = vmatpush1.bf16.msra.mxu0 0
        %5928 = vmatprep.subr.bf16.mxu0 0
        %5929 = vmatpush1.bf16.msra.mxu0 0
        %5930 = vmatprep.subr.bf16.mxu0 0
        %5931 = vmatpush1.bf16.msra.mxu0 0
        %5932 = vmatprep.subr.bf16.mxu0 0
        %5933 = vmatpush1.bf16.msra.mxu0 0
        %5934 = vmatprep.mubr.bf16.mxu0 0
        %5935 = vmatmul.mubr.bf16.gmra.mrb[0].mxu0 %v5888
        %v5936 = vpop.f32.mrb[0].mxu0
        %v5937 = vadd.f32 0.0, %v5936
        %v5938 = vpop.f32.mrb[0].mxu0
        %v5939 = vpop.f32.mrb[0].mxu0
        %v5940 = vadd.f32 0.0, %v5939
        %v5941 = vpop.f32.mrb[0].mxu0
        %5942 = vmatprep.mubr.bf16.mxu0 0
        %5943 = vmatmul.mubr.bf16.gmra.mrb[0].mxu0 %v5891
        %v5944 = vpop.f32.mrb[0].mxu0
        %v5945 = vadd.f32 0.0, %v5944
        %v5946 = vpop.f32.mrb[0].mxu0
        %v5947 = vpop.f32.mrb[0].mxu0
        %v5948 = vadd.f32 0.0, %v5947
        %v5949 = vpop.f32.mrb[0].mxu0
        %5950 = vmatprep.mubr.bf16.mxu0 0
        %5951 = vmatmul.mubr.bf16.gmra.mrb[0].mxu0 %v5894
        %v5952 = vpop.f32.mrb[0].mxu0
        %v5953 = vadd.f32 0.0, %v5952
        %v5954 = vpop.f32.mrb[0].mxu0
        %v5955 = vpop.f32.mrb[0].mxu0
        %v5956 = vadd.f32 0.0, %v5955
        %v5957 = vpop.f32.mrb[0].mxu0
        %5958 = vmatprep.mubr.bf16.mxu0 0
        %5959 = vmatmul.mubr.bf16.gmra.mrb[0].mxu0 %v5897
        %v5960 = vpop.f32.mrb[0].mxu0
        %v5961 = vadd.f32 0.0, %v5960
        %v5962 = vpop.f32.mrb[0].mxu0
        %v5963 = vpop.f32.mrb[0].mxu0
        %v5964 = vadd.f32 0.0, %v5963
        %v5965 = vpop.f32.mrb[0].mxu0
        %5966 = vdwg.mxu0
        %v5968 = vsel %vm1684, %v5875, 0
        %v5971 = vsel %vm1684, %v5876, 0
        %v5974 = vsel %vm1684, %v5877, 0
        %v5977 = vsel %vm1684, %v5878, 0
        %v5980 = vsel %vm2754, %v5868, 0
        %5982 = vmatprep.subr.bf16.mxu0 0
        %5983 = vmatpush1.bf16.msra.mxu0 %v5980
        %5984 = vmatprep.subr.bf16.mxu0 0
        %5985 = vmatpush1.bf16.msra.mxu0 0
        %5986 = vmatprep.subr.bf16.mxu0 0
        %5987 = vmatpush1.bf16.msra.mxu0 0
        %5988 = vmatprep.subr.bf16.mxu0 0
        %5989 = vmatpush1.bf16.msra.mxu0 0
        %5990 = vmatprep.subr.bf16.mxu0 0
        %5991 = vmatpush1.bf16.msra.mxu0 0
        %5992 = vmatprep.subr.bf16.mxu0 0
        %5993 = vmatpush1.bf16.msra.mxu0 0
        %5994 = vmatprep.subr.bf16.mxu0 0
        %5995 = vmatpush1.bf16.msra.mxu0 0
        %5996 = vmatprep.subr.bf16.mxu0 0
        %5997 = vmatpush1.bf16.msra.mxu0 0
        %5998 = vmatprep.subr.bf16.mxu0 0
        %5999 = vmatpush1.bf16.msra.mxu0 0
        %6000 = vmatprep.subr.bf16.mxu0 0
        %6001 = vmatpush1.bf16.msra.mxu0 0
        %6002 = vmatprep.subr.bf16.mxu0 0
        %6003 = vmatpush1.bf16.msra.mxu0 0
        %6004 = vmatprep.subr.bf16.mxu0 0
        %6005 = vmatpush1.bf16.msra.mxu0 0
        %6006 = vmatprep.subr.bf16.mxu0 0
        %6007 = vmatpush1.bf16.msra.mxu0 0
        %6008 = vmatprep.subr.bf16.mxu0 0
        %6009 = vmatpush1.bf16.msra.mxu0 0
        %6010 = vmatprep.subr.bf16.mxu0 0
        %6011 = vmatpush1.bf16.msra.mxu0 0
        %6012 = vmatprep.subr.bf16.mxu0 0
        %6013 = vmatpush1.bf16.msra.mxu0 0
        %6014 = vmatprep.mubr.bf16.mxu0 0
        %6015 = vmatmul.mubr.bf16.gmra.mrb[0].mxu0 %v5968
        %v6016 = vpop.f32.mrb[0].mxu0
        %v6017 = vadd.f32 0.0, %v6016
        %v6018 = vpop.f32.mrb[0].mxu0
        %v6019 = vpop.f32.mrb[0].mxu0
        %v6020 = vadd.f32 0.0, %v6019
        %v6021 = vpop.f32.mrb[0].mxu0
        %6022 = vmatprep.mubr.bf16.mxu0 0
        %6023 = vmatmul.mubr.bf16.gmra.mrb[0].mxu0 %v5971
        %v6024 = vpop.f32.mrb[0].mxu0
        %v6025 = vadd.f32 0.0, %v6024
        %v6026 = vpop.f32.mrb[0].mxu0
        %v6027 = vpop.f32.mrb[0].mxu0
        %v6028 = vadd.f32 0.0, %v6027
        %v6029 = vpop.f32.mrb[0].mxu0
        %6030 = vmatprep.mubr.bf16.mxu0 0
        %6031 = vmatmul.mubr.bf16.gmra.mrb[0].mxu0 %v5974
        %v6032 = vpop.f32.mrb[0].mxu0
        %v6033 = vadd.f32 0.0, %v6032
        %v6034 = vpop.f32.mrb[0].mxu0
        %v6035 = vpop.f32.mrb[0].mxu0
        %v6036 = vadd.f32 0.0, %v6035
        %v6037 = vpop.f32.mrb[0].mxu0
        %6038 = vmatprep.mubr.bf16.mxu0 0
        %6039 = vmatmul.mubr.bf16.gmra.mrb[0].mxu0 %v5977
        %v6040 = vpop.f32.mrb[0].mxu0
        %v6041 = vadd.f32 0.0, %v6040
        %v6042 = vpop.f32.mrb[0].mxu0
        %v6043 = vpop.f32.mrb[0].mxu0
        %v6044 = vadd.f32 0.0, %v6043
        %v6045 = vpop.f32.mrb[0].mxu0
        %6046 = vdwg.mxu0
        %v6048 = vsel %vm1684, %v5879, 0
        %v6051 = vsel %vm1684, %v5880, 0
        %v6054 = vsel %vm1684, %v5881, 0
        %v6057 = vsel %vm1684, %v5882, 0
        %v6060 = vsel %vm2754, %v5869, 0
        %6062 = vmatprep.subr.bf16.mxu0 0
        %6063 = vmatpush1.bf16.msra.mxu0 %v6060
        %6064 = vmatprep.subr.bf16.mxu0 0
        %6065 = vmatpush1.bf16.msra.mxu0 0
        %6066 = vmatprep.subr.bf16.mxu0 0
        %6067 = vmatpush1.bf16.msra.mxu0 0
        %6068 = vmatprep.subr.bf16.mxu0 0
        %6069 = vmatpush1.bf16.msra.mxu0 0
        %6070 = vmatprep.subr.bf16.mxu0 0
        %6071 = vmatpush1.bf16.msra.mxu0 0
        %6072 = vmatprep.subr.bf16.mxu0 0
        %6073 = vmatpush1.bf16.msra.mxu0 0
        %6074 = vmatprep.subr.bf16.mxu0 0
        %6075 = vmatpush1.bf16.msra.mxu0 0
        %6076 = vmatprep.subr.bf16.mxu0 0
        %6077 = vmatpush1.bf16.msra.mxu0 0
        %6078 = vmatprep.subr.bf16.mxu0 0
        %6079 = vmatpush1.bf16.msra.mxu0 0
        %6080 = vmatprep.subr.bf16.mxu0 0
        %6081 = vmatpush1.bf16.msra.mxu0 0
        %6082 = vmatprep.subr.bf16.mxu0 0
        %6083 = vmatpush1.bf16.msra.mxu0 0
        %6084 = vmatprep.subr.bf16.mxu0 0
        %6085 = vmatpush1.bf16.msra.mxu0 0
        %6086 = vmatprep.subr.bf16.mxu0 0
        %6087 = vmatpush1.bf16.msra.mxu0 0
        %6088 = vmatprep.subr.bf16.mxu0 0
        %6089 = vmatpush1.bf16.msra.mxu0 0
        %6090 = vmatprep.subr.bf16.mxu0 0
        %6091 = vmatpush1.bf16.msra.mxu0 0
        %6092 = vmatprep.subr.bf16.mxu0 0
        %6093 = vmatpush1.bf16.msra.mxu0 0
        %6094 = vmatprep.mubr.bf16.mxu0 0
        %6095 = vmatmul.mubr.bf16.gmra.mrb[0].mxu0 %v6048
        %v6096 = vpop.f32.mrb[0].mxu0
        %v6097 = vadd.f32 0.0, %v6096
        %v6098 = vpop.f32.mrb[0].mxu0
        %v6099 = vpop.f32.mrb[0].mxu0
        %v6100 = vadd.f32 0.0, %v6099
        %v6101 = vpop.f32.mrb[0].mxu0
        %6102 = vmatprep.mubr.bf16.mxu0 0
        %6103 = vmatmul.mubr.bf16.gmra.mrb[0].mxu0 %v6051
        %v6104 = vpop.f32.mrb[0].mxu0
        %v6105 = vadd.f32 0.0, %v6104
        %v6106 = vpop.f32.mrb[0].mxu0
        %v6107 = vpop.f32.mrb[0].mxu0
        %v6108 = vadd.f32 0.0, %v6107
        %v6109 = vpop.f32.mrb[0].mxu0
        %6110 = vmatprep.mubr.bf16.mxu0 0
        %6111 = vmatmul.mubr.bf16.gmra.mrb[0].mxu0 %v6054
        %v6112 = vpop.f32.mrb[0].mxu0
        %v6113 = vadd.f32 0.0, %v6112
        %v6114 = vpop.f32.mrb[0].mxu0
        %v6115 = vpop.f32.mrb[0].mxu0
        %v6116 = vadd.f32 0.0, %v6115
        %v6117 = vpop.f32.mrb[0].mxu0
        %6118 = vmatprep.mubr.bf16.mxu0 0
        %6119 = vmatmul.mubr.bf16.gmra.mrb[0].mxu0 %v6057
        %v6120 = vpop.f32.mrb[0].mxu0
        %v6121 = vadd.f32 0.0, %v6120
        %v6122 = vpop.f32.mrb[0].mxu0
        %v6123 = vpop.f32.mrb[0].mxu0
        %v6124 = vadd.f32 0.0, %v6123
        %v6125 = vpop.f32.mrb[0].mxu0
        %6126 = vdwg.mxu0
        %v6128 = vsel %vm1684, %v5883, 0
        %v6131 = vsel %vm1684, %v5884, 0
        %v6134 = vsel %vm1684, %v5885, 0
        %v6137 = vsel %vm1684, %v5886, 0
        %v6140 = vsel %vm2754, %v5870, 0
        %6142 = vmatprep.subr.bf16.mxu0 0
        %6143 = vmatpush1.bf16.msra.mxu0 %v6140
        %6144 = vmatprep.subr.bf16.mxu0 0
        %6145 = vmatpush1.bf16.msra.mxu0 0
        %6146 = vmatprep.subr.bf16.mxu0 0
        %6147 = vmatpush1.bf16.msra.mxu0 0
        %6148 = vmatprep.subr.bf16.mxu0 0
        %6149 = vmatpush1.bf16.msra.mxu0 0
        %6150 = vmatprep.subr.bf16.mxu0 0
        %6151 = vmatpush1.bf16.msra.mxu0 0
        %6152 = vmatprep.subr.bf16.mxu0 0
        %6153 = vmatpush1.bf16.msra.mxu0 0
        %6154 = vmatprep.subr.bf16.mxu0 0
        %6155 = vmatpush1.bf16.msra.mxu0 0
        %6156 = vmatprep.subr.bf16.mxu0 0
        %6157 = vmatpush1.bf16.msra.mxu0 0
        %6158 = vmatprep.subr.bf16.mxu0 0
        %6159 = vmatpush1.bf16.msra.mxu0 0
        %6160 = vmatprep.subr.bf16.mxu0 0
        %6161 = vmatpush1.bf16.msra.mxu0 0
        %6162 = vmatprep.subr.bf16.mxu0 0
        %6163 = vmatpush1.bf16.msra.mxu0 0
        %6164 = vmatprep.subr.bf16.mxu0 0
        %6165 = vmatpush1.bf16.msra.mxu0 0
        %6166 = vmatprep.subr.bf16.mxu0 0
        %6167 = vmatpush1.bf16.msra.mxu0 0
        %6168 = vmatprep.subr.bf16.mxu0 0
        %6169 = vmatpush1.bf16.msra.mxu0 0
        %6170 = vmatprep.subr.bf16.mxu0 0
        %6171 = vmatpush1.bf16.msra.mxu0 0
        %6172 = vmatprep.subr.bf16.mxu0 0
        %6173 = vmatpush1.bf16.msra.mxu0 0
        %6174 = vmatprep.mubr.bf16.mxu0 0
        %6175 = vmatmul.mubr.bf16.gmra.mrb[0].mxu0 %v6128
        %v6176 = vpop.f32.mrb[0].mxu0
        %v6177 = vadd.f32 0.0, %v6176
        %v6178 = vpop.f32.mrb[0].mxu0
        %v6179 = vpop.f32.mrb[0].mxu0
        %v6180 = vadd.f32 0.0, %v6179
        %v6181 = vpop.f32.mrb[0].mxu0
        %6182 = vmatprep.mubr.bf16.mxu0 0
        %6183 = vmatmul.mubr.bf16.gmra.mrb[0].mxu0 %v6131
        %v6184 = vpop.f32.mrb[0].mxu0
        %v6185 = vadd.f32 0.0, %v6184
        %v6186 = vpop.f32.mrb[0].mxu0
        %v6187 = vpop.f32.mrb[0].mxu0
        %v6188 = vadd.f32 0.0, %v6187
        %v6189 = vpop.f32.mrb[0].mxu0
        %6190 = vmatprep.mubr.bf16.mxu0 0
        %6191 = vmatmul.mubr.bf16.gmra.mrb[0].mxu0 %v6134
        %v6192 = vpop.f32.mrb[0].mxu0
        %v6193 = vadd.f32 0.0, %v6192
        %v6194 = vpop.f32.mrb[0].mxu0
        %v6195 = vpop.f32.mrb[0].mxu0
        %v6196 = vadd.f32 0.0, %v6195
        %v6197 = vpop.f32.mrb[0].mxu0
        %6198 = vmatprep.mubr.bf16.mxu0 0
        %6199 = vmatmul.mubr.bf16.gmra.mrb[0].mxu0 %v6137
        %v6200 = vpop.f32.mrb[0].mxu0
        %v6201 = vadd.f32 0.0, %v6200
        %v6202 = vpop.f32.mrb[0].mxu0
        %v6203 = vpop.f32.mrb[0].mxu0
        %v6204 = vadd.f32 0.0, %v6203
        %v6205 = vpop.f32.mrb[0].mxu0
        %6206 = vdwg.mxu0
        %v6207 = vsel %vm602, %v5937, 0.0
        %v6208 = vsel %vm602, %v6017, 0.0
        %v6209 = vadd.f32 %v6207, %v6208
        %v6210 = vsel %vm602, %v6097, 0.0
        %v6211 = vadd.f32 %v6209, %v6210
        %v6212 = vsel %vm602, %v6177, 0.0
        %v6213 = vadd.f32 %v6211, %v6212
        %v6214 = vsel %vm602, %v5940, 0.0
        %v6215 = vsel %vm602, %v6020, 0.0
        %v6216 = vadd.f32 %v6214, %v6215
        %v6217 = vsel %vm602, %v6100, 0.0
        %v6218 = vadd.f32 %v6216, %v6217
        %v6219 = vsel %vm602, %v6180, 0.0
        %v6220 = vadd.f32 %v6218, %v6219
        %v6221 = vsel %vm602, %v5945, 0.0
        %v6222 = vsel %vm602, %v6025, 0.0
        %v6223 = vadd.f32 %v6221, %v6222
        %v6224 = vsel %vm602, %v6105, 0.0
        %v6225 = vadd.f32 %v6223, %v6224
        %v6226 = vsel %vm602, %v6185, 0.0
        %v6227 = vadd.f32 %v6225, %v6226
        %v6228 = vsel %vm602, %v5948, 0.0
        %v6229 = vsel %vm602, %v6028, 0.0
        %v6230 = vadd.f32 %v6228, %v6229
        %v6231 = vsel %vm602, %v6108, 0.0
        %v6232 = vadd.f32 %v6230, %v6231
        %v6233 = vsel %vm602, %v6188, 0.0
        %v6234 = vadd.f32 %v6232, %v6233
        %v6235 = vsel %vm602, %v5953, 0.0
        %v6236 = vsel %vm602, %v6033, 0.0
        %v6237 = vadd.f32 %v6235, %v6236
        %v6238 = vsel %vm602, %v6113, 0.0
        %v6239 = vadd.f32 %v6237, %v6238
        %v6240 = vsel %vm602, %v6193, 0.0
        %v6241 = vadd.f32 %v6239, %v6240
        %v6242 = vsel %vm602, %v5956, 0.0
        %v6243 = vsel %vm602, %v6036, 0.0
        %v6244 = vadd.f32 %v6242, %v6243
        %v6245 = vsel %vm602, %v6116, 0.0
        %v6246 = vadd.f32 %v6244, %v6245
        %v6247 = vsel %vm602, %v6196, 0.0
        %v6248 = vadd.f32 %v6246, %v6247
        %v6249 = vsel %vm602, %v5961, 0.0
        %v6250 = vsel %vm602, %v6041, 0.0
        %v6251 = vadd.f32 %v6249, %v6250
        %v6252 = vsel %vm602, %v6121, 0.0
        %v6253 = vadd.f32 %v6251, %v6252
        %v6254 = vsel %vm602, %v6201, 0.0
        %v6255 = vadd.f32 %v6253, %v6254
        %v6256 = vsel %vm602, %v5964, 0.0
        %v6257 = vsel %vm602, %v6044, 0.0
        %v6258 = vadd.f32 %v6256, %v6257
        %v6259 = vsel %vm602, %v6124, 0.0
        %v6260 = vadd.f32 %v6258, %v6259
        %v6261 = vsel %vm602, %v6204, 0.0
        %v6262 = vadd.f32 %v6260, %v6261
        %v6263 = vadd.f32 %v3736, %v6213
        %v6264 = vadd.f32 %v3737, %v6220
        %v6265 = vadd.f32 %v3738, %v6227
        %v6266 = vadd.f32 %v3739, %v6234
        %v6267 = vadd.f32 %v3740, %v6241
        %v6268 = vadd.f32 %v3741, %v6248
        %v6269 = vadd.f32 %v3742, %v6255
        %v6270 = vadd.f32 %v3743, %v6262
        %s6271 = scalar_lea.vmem %s8, 1
        %v6272 = vld [vmem:[%s6271] sm:$0x1]
        %v6274 = vlaneseq
        %v6275 = vshrl.u32 %v6274, 7
        %v6276 = vsub.s32 0, %v6275
        %v6277 = vrot.slane %v6272, %v6276
        %v6279 = vadd.f32 %v6263, %v6277
        %v6280 = vadd.f32 %v6264, %v6277
        %v6281 = vadd.f32 %v6265, %v6277
        %v6282 = vadd.f32 %v6266, %v6277
        %v6283 = vadd.f32 %v6267, %v6277
        %v6284 = vadd.f32 %v6268, %v6277
        %v6285 = vadd.f32 %v6269, %v6277
        %v6286 = vadd.f32 %v6270, %v6277
        %s6287 = scalar_lea.vmem %s9, 1
        %v6288 = vld [vmem:[%s6287] sm:$0x1]
        %s6289 = scalar_lea.vmem %s10, 1
        %v6290 = vld [vmem:[%s6289] sm:$0x1]
        %v6291 = vsel %vm602, %v6279, 0.0
        %6292 = vadd.xlane.f32.xlu0 %v6291
        %v6293 = vpop.xlane.xlu0 %6292
        %v6294 = vsel %vm602, %v6280, 0.0
        %6295 = vadd.xlane.f32.xlu0 %v6294
        %v6296 = vpop.xlane.xlu0 %6295
        %v6297 = vsel %vm602, %v6281, 0.0
        %6298 = vadd.xlane.f32.xlu0 %v6297
        %v6299 = vpop.xlane.xlu0 %6298
        %v6300 = vsel %vm602, %v6282, 0.0
        %6301 = vadd.xlane.f32.xlu0 %v6300
        %v6302 = vpop.xlane.xlu0 %6301
        %v6303 = vsel %vm602, %v6283, 0.0
        %6304 = vadd.xlane.f32.xlu0 %v6303
        %v6305 = vpop.xlane.xlu0 %6304
        %v6306 = vsel %vm602, %v6284, 0.0
        %6307 = vadd.xlane.f32.xlu0 %v6306
        %v6308 = vpop.xlane.xlu0 %6307
        %v6309 = vsel %vm602, %v6285, 0.0
        %6310 = vadd.xlane.f32.xlu0 %v6309
        %v6311 = vpop.xlane.xlu0 %6310
        %v6312 = vsel %vm602, %v6286, 0.0
        %6313 = vadd.xlane.f32.xlu0 %v6312
        %v6314 = vpop.xlane.xlu0 %6313
        %v6315 = vmul.f32 %v6293, %v627
        %v6316 = vmul.f32 %v6296, %v627
        %v6317 = vmul.f32 %v6299, %v627
        %v6318 = vmul.f32 %v6302, %v627
        %v6319 = vmul.f32 %v6305, %v627
        %v6320 = vmul.f32 %v6308, %v627
        %v6321 = vmul.f32 %v6311, %v627
        %v6322 = vmul.f32 %v6314, %v627
        %v6323 = vsub.f32 %v6279, %v6315
        %v6324 = vsub.f32 %v6280, %v6316
        %v6325 = vsub.f32 %v6281, %v6317
        %v6326 = vsub.f32 %v6282, %v6318
        %v6327 = vsub.f32 %v6283, %v6319
        %v6328 = vsub.f32 %v6284, %v6320
        %v6329 = vsub.f32 %v6285, %v6321
        %v6330 = vsub.f32 %v6286, %v6322
        %v6331 = vmul.f32 %v6323, %v6323
        %v6332 = vmul.f32 %v6324, %v6324
        %v6333 = vmul.f32 %v6325, %v6325
        %v6334 = vmul.f32 %v6326, %v6326
        %v6335 = vmul.f32 %v6327, %v6327
        %v6336 = vmul.f32 %v6328, %v6328
        %v6337 = vmul.f32 %v6329, %v6329
        %v6338 = vmul.f32 %v6330, %v6330
        %v6339 = vsel %vm602, %v6331, 0.0
        %6340 = vadd.xlane.f32.xlu0 %v6339
        %v6341 = vpop.xlane.xlu0 %6340
        %v6342 = vsel %vm602, %v6332, 0.0
        %6343 = vadd.xlane.f32.xlu0 %v6342
        %v6344 = vpop.xlane.xlu0 %6343
        %v6345 = vsel %vm602, %v6333, 0.0
        %6346 = vadd.xlane.f32.xlu0 %v6345
        %v6347 = vpop.xlane.xlu0 %6346
        %v6348 = vsel %vm602, %v6334, 0.0
        %6349 = vadd.xlane.f32.xlu0 %v6348
        %v6350 = vpop.xlane.xlu0 %6349
        %v6351 = vsel %vm602, %v6335, 0.0
        %6352 = vadd.xlane.f32.xlu0 %v6351
        %v6353 = vpop.xlane.xlu0 %6352
        %v6354 = vsel %vm602, %v6336, 0.0
        %6355 = vadd.xlane.f32.xlu0 %v6354
        %v6356 = vpop.xlane.xlu0 %6355
        %v6357 = vsel %vm602, %v6337, 0.0
        %6358 = vadd.xlane.f32.xlu0 %v6357
        %v6359 = vpop.xlane.xlu0 %6358
        %v6360 = vsel %vm602, %v6338, 0.0
        %6361 = vadd.xlane.f32.xlu0 %v6360
        %v6362 = vpop.xlane.xlu0 %6361
        %v6363 = vmul.f32 %v6341, %v627
        %v6364 = vmul.f32 %v6344, %v627
        %v6365 = vmul.f32 %v6347, %v627
        %v6366 = vmul.f32 %v6350, %v627
        %v6367 = vmul.f32 %v6353, %v627
        %v6368 = vmul.f32 %v6356, %v627
        %v6369 = vmul.f32 %v6359, %v627
        %v6370 = vmul.f32 %v6362, %v627
        %v6371 = vadd.f32 %v6363, 1e-05
        %v6372 = vadd.f32 %v6364, 1e-05
        %v6373 = vadd.f32 %v6365, 1e-05
        %v6374 = vadd.f32 %v6366, 1e-05
        %v6375 = vadd.f32 %v6367, 1e-05
        %v6376 = vadd.f32 %v6368, 1e-05
        %v6377 = vadd.f32 %v6369, 1e-05
        %v6378 = vadd.f32 %v6370, 1e-05
        %v6379 = vrsqrt.pop %v6371
        %v6380 = vrsqrt.pop %v6372
        %v6381 = vrsqrt.pop %v6373
        %v6382 = vrsqrt.pop %v6374
        %v6383 = vrsqrt.pop %v6375
        %v6384 = vrsqrt.pop %v6376
        %v6385 = vrsqrt.pop %v6377
        %v6386 = vrsqrt.pop %v6378
        %v6387 = vmul.f32 %v6323, %v6379
        %v6388 = vmul.f32 %v6324, %v6380
        %v6389 = vmul.f32 %v6325, %v6381
        %v6390 = vmul.f32 %v6326, %v6382
        %v6391 = vmul.f32 %v6327, %v6383
        %v6392 = vmul.f32 %v6328, %v6384
        %v6393 = vmul.f32 %v6329, %v6385
        %v6394 = vmul.f32 %v6330, %v6386
        %v6396 = vlaneseq
        %v6397 = vshrl.u32 %v6396, 7
        %v6398 = vsub.s32 0, %v6397
        %v6399 = vrot.slane %v6288, %v6398
        %v6401 = vmul.f32 %v6387, %v6399
        %v6402 = vmul.f32 %v6388, %v6399
        %v6403 = vmul.f32 %v6389, %v6399
        %v6404 = vmul.f32 %v6390, %v6399
        %v6405 = vmul.f32 %v6391, %v6399
        %v6406 = vmul.f32 %v6392, %v6399
        %v6407 = vmul.f32 %v6393, %v6399
        %v6408 = vmul.f32 %v6394, %v6399
        %v6410 = vlaneseq
        %v6411 = vshrl.u32 %v6410, 7
        %v6412 = vsub.s32 0, %v6411
        %v6413 = vrot.slane %v6290, %v6412
        %v6415 = vadd.f32 %v6401, %v6413
        %v6416 = vadd.f32 %v6402, %v6413
        %v6417 = vadd.f32 %v6403, %v6413
        %v6418 = vadd.f32 %v6404, %v6413
        %v6419 = vadd.f32 %v6405, %v6413
        %v6420 = vadd.f32 %v6406, %v6413
        %v6421 = vadd.f32 %v6407, %v6413
        %v6422 = vadd.f32 %v6408, %v6413
        %v6423 = vpack.c.bf16 %v6416, %v6415
        %v6424 = vpack.c.bf16 %v6418, %v6417
        %v6425 = vpack.c.bf16 %v6420, %v6419
        %v6426 = vpack.c.bf16 %v6422, %v6421
        %s6427 = scalar_lea.vmem %s11, 16
        %v6428 = vld [vmem:[%s6427] sm:$0xf]
        %v6429 = vld [vmem:[%s6427 + $0x4] sm:$0xf]
        %v6430 = vld [vmem:[%s6427 + $0x8] sm:$0xf]
        %v6431 = vld [vmem:[%s6427 + $0xc] sm:$0xf]
        %s6432 = scalar_lea.vmem %s12, 1
        %v6433 = vld [vmem:[%s6432] sm:$0x1]
        %v6435 = vlaneseq
        %v6436 = vshrl.u32 %v6435, 7
        %v6437 = vsub.s32 0, %v6436
        %v6438 = vrot.slane %v6433, %v6437
        %v6444 = vunpack.c.l.b16 %v6428
        %v6445 = vunpack.c.l.b16 %v6429
        %v6446 = vunpack.c.l.b16 %v6430
        %v6447 = vunpack.c.l.b16 %v6431
        %v6448 = vpack.c.b16 %v6445, %v6444
        %v6449 = vpack.c.b16 %v6447, %v6446
        %v6453 = vsel %vm602, %v6423, 0
        %v6456 = vsel %vm602, %v6424, 0
        %v6459 = vsel %vm602, %v6425, 0
        %v6462 = vsel %vm602, %v6426, 0
        %6464 = vmatprep.subr.bf16.mxu0 0
        %6465 = vmatpush1.bf16.msra.mxu0 %v6448
        %6466 = vmatprep.subr.bf16.mxu0 0
        %6467 = vmatpush1.bf16.msra.mxu0 %v6449
        %6468 = vmatprep.subr.bf16.mxu0 0
        %6469 = vmatpush1.bf16.msra.mxu0 0
        %6470 = vmatprep.subr.bf16.mxu0 0
        %6471 = vmatpush1.bf16.msra.mxu0 0
        %6472 = vmatprep.subr.bf16.mxu0 0
        %6473 = vmatpush1.bf16.msra.mxu0 0
        %6474 = vmatprep.subr.bf16.mxu0 0
        %6475 = vmatpush1.bf16.msra.mxu0 0
        %6476 = vmatprep.subr.bf16.mxu0 0
        %6477 = vmatpush1.bf16.msra.mxu0 0
        %6478 = vmatprep.subr.bf16.mxu0 0
        %6479 = vmatpush1.bf16.msra.mxu0 0
        %6480 = vmatprep.subr.bf16.mxu0 0
        %6481 = vmatpush1.bf16.msra.mxu0 0
        %6482 = vmatprep.subr.bf16.mxu0 0
        %6483 = vmatpush1.bf16.msra.mxu0 0
        %6484 = vmatprep.subr.bf16.mxu0 0
        %6485 = vmatpush1.bf16.msra.mxu0 0
        %6486 = vmatprep.subr.bf16.mxu0 0
        %6487 = vmatpush1.bf16.msra.mxu0 0
        %6488 = vmatprep.subr.bf16.mxu0 0
        %6489 = vmatpush1.bf16.msra.mxu0 0
        %6490 = vmatprep.subr.bf16.mxu0 0
        %6491 = vmatpush1.bf16.msra.mxu0 0
        %6492 = vmatprep.subr.bf16.mxu0 0
        %6493 = vmatpush1.bf16.msra.mxu0 0
        %6494 = vmatprep.subr.bf16.mxu0 0
        %6495 = vmatpush1.bf16.msra.mxu0 0
        %6496 = vmatprep.mubr.bf16.mxu0 0
        %6497 = vmatmul.mubr.bf16.gmra.mrb[0].mxu0 %v6453
        %v6498 = vpop.f32.mrb[0].mxu0
        %v6499 = vadd.f32 %v6438, %v6498
        %v6500 = vpop.f32.mrb[0].mxu0
        %v6501 = vpop.f32.mrb[0].mxu0
        %v6502 = vadd.f32 %v6438, %v6501
        %v6503 = vpop.f32.mrb[0].mxu0
        %6504 = vmatprep.mubr.bf16.mxu0 0
        %6505 = vmatmul.mubr.bf16.gmra.mrb[0].mxu0 %v6456
        %v6506 = vpop.f32.mrb[0].mxu0
        %v6507 = vadd.f32 %v6438, %v6506
        %v6508 = vpop.f32.mrb[0].mxu0
        %v6509 = vpop.f32.mrb[0].mxu0
        %v6510 = vadd.f32 %v6438, %v6509
        %v6511 = vpop.f32.mrb[0].mxu0
        %6512 = vmatprep.mubr.bf16.mxu0 0
        %6513 = vmatmul.mubr.bf16.gmra.mrb[0].mxu0 %v6459
        %v6514 = vpop.f32.mrb[0].mxu0
        %v6515 = vadd.f32 %v6438, %v6514
        %v6516 = vpop.f32.mrb[0].mxu0
        %v6517 = vpop.f32.mrb[0].mxu0
        %v6518 = vadd.f32 %v6438, %v6517
        %v6519 = vpop.f32.mrb[0].mxu0
        %6520 = vmatprep.mubr.bf16.mxu0 0
        %6521 = vmatmul.mubr.bf16.gmra.mrb[0].mxu0 %v6462
        %v6522 = vpop.f32.mrb[0].mxu0
        %v6523 = vadd.f32 %v6438, %v6522
        %v6524 = vpop.f32.mrb[0].mxu0
        %v6525 = vpop.f32.mrb[0].mxu0
        %v6526 = vadd.f32 %v6438, %v6525
        %v6527 = vpop.f32.mrb[0].mxu0
        %6528 = vdwg.mxu0
        %v6529 = vmul.f32 %v6499, 0.5
        %v6530 = vmul.f32 %v6502, 0.5
        %v6531 = vmul.f32 %v6507, 0.5
        %v6532 = vmul.f32 %v6510, 0.5
        %v6533 = vmul.f32 %v6515, 0.5
        %v6534 = vmul.f32 %v6518, 0.5
        %v6535 = vmul.f32 %v6523, 0.5
        %v6536 = vmul.f32 %v6526, 0.5
        %v6537 = vmul.f32 %v6499, 0.70710677
        %v6538 = vmul.f32 %v6502, 0.70710677
        %v6539 = vmul.f32 %v6507, 0.70710677
        %v6540 = vmul.f32 %v6510, 0.70710677
        %v6541 = vmul.f32 %v6515, 0.70710677
        %v6542 = vmul.f32 %v6518, 0.70710677
        %v6543 = vmul.f32 %v6523, 0.70710677
        %v6544 = vmul.f32 %v6526, 0.70710677
        %vm6545 = vcmp.ge.f32.partialorder %v6537, 0.0
        %vm6546 = vcmp.ge.f32.partialorder %v6538, 0.0
        %vm6547 = vcmp.ge.f32.partialorder %v6539, 0.0
        %vm6548 = vcmp.ge.f32.partialorder %v6540, 0.0
        %vm6549 = vcmp.ge.f32.partialorder %v6541, 0.0
        %vm6550 = vcmp.ge.f32.partialorder %v6542, 0.0
        %vm6551 = vcmp.ge.f32.partialorder %v6543, 0.0
        %vm6552 = vcmp.ge.f32.partialorder %v6544, 0.0
        %v6553 = vsel %vm6545, 1.0, -1.0
        %v6554 = vsel %vm6546, 1.0, -1.0
        %v6555 = vsel %vm6547, 1.0, -1.0
        %v6556 = vsel %vm6548, 1.0, -1.0
        %v6557 = vsel %vm6549, 1.0, -1.0
        %v6558 = vsel %vm6550, 1.0, -1.0
        %v6559 = vsel %vm6551, 1.0, -1.0
        %v6560 = vsel %vm6552, 1.0, -1.0
        %v6561 = vand.u32 2147483647, %v6537
        %v6562 = vand.u32 2147483647, %v6538
        %v6563 = vand.u32 2147483647, %v6539
        %v6564 = vand.u32 2147483647, %v6540
        %v6565 = vand.u32 2147483647, %v6541
        %v6566 = vand.u32 2147483647, %v6542
        %v6567 = vand.u32 2147483647, %v6543
        %v6568 = vand.u32 2147483647, %v6544
        %v6569 = vmul.f32 %v6561, 0.3275911
        %v6570 = vmul.f32 %v6562, 0.3275911
        %v6571 = vmul.f32 %v6563, 0.3275911
        %v6572 = vmul.f32 %v6564, 0.3275911
        %v6573 = vmul.f32 %v6565, 0.3275911
        %v6574 = vmul.f32 %v6566, 0.3275911
        %v6575 = vmul.f32 %v6567, 0.3275911
        %v6576 = vmul.f32 %v6568, 0.3275911
        %v6577 = vadd.f32 %v6569, 1.0
        %v6578 = vadd.f32 %v6570, 1.0
        %v6579 = vadd.f32 %v6571, 1.0
        %v6580 = vadd.f32 %v6572, 1.0
        %v6581 = vadd.f32 %v6573, 1.0
        %v6582 = vadd.f32 %v6574, 1.0
        %v6583 = vadd.f32 %v6575, 1.0
        %v6584 = vadd.f32 %v6576, 1.0
        %v6585 = vrcp.pop %v6577
        %v6586 = vmul.f32 1.0, %v6585
        %v6587 = vrcp.pop %v6578
        %v6588 = vmul.f32 1.0, %v6587
        %v6589 = vrcp.pop %v6579
        %v6590 = vmul.f32 1.0, %v6589
        %v6591 = vrcp.pop %v6580
        %v6592 = vmul.f32 1.0, %v6591
        %v6593 = vrcp.pop %v6581
        %v6594 = vmul.f32 1.0, %v6593
        %v6595 = vrcp.pop %v6582
        %v6596 = vmul.f32 1.0, %v6595
        %v6597 = vrcp.pop %v6583
        %v6598 = vmul.f32 1.0, %v6597
        %v6599 = vrcp.pop %v6584
        %v6600 = vmul.f32 1.0, %v6599
        %v6601 = vmul.f32 %v6586, 1.0614054
        %v6602 = vmul.f32 %v6588, 1.0614054
        %v6603 = vmul.f32 %v6590, 1.0614054
        %v6604 = vmul.f32 %v6592, 1.0614054
        %v6605 = vmul.f32 %v6594, 1.0614054
        %v6606 = vmul.f32 %v6596, 1.0614054
        %v6607 = vmul.f32 %v6598, 1.0614054
        %v6608 = vmul.f32 %v6600, 1.0614054
        %v6609 = vadd.f32 %v6601, -1.4531521
        %v6610 = vadd.f32 %v6602, -1.4531521
        %v6611 = vadd.f32 %v6603, -1.4531521
        %v6612 = vadd.f32 %v6604, -1.4531521
        %v6613 = vadd.f32 %v6605, -1.4531521
        %v6614 = vadd.f32 %v6606, -1.4531521
        %v6615 = vadd.f32 %v6607, -1.4531521
        %v6616 = vadd.f32 %v6608, -1.4531521
        %v6617 = vmul.f32 %v6609, %v6586
        %v6618 = vmul.f32 %v6610, %v6588
        %v6619 = vmul.f32 %v6611, %v6590
        %v6620 = vmul.f32 %v6612, %v6592
        %v6621 = vmul.f32 %v6613, %v6594
        %v6622 = vmul.f32 %v6614, %v6596
        %v6623 = vmul.f32 %v6615, %v6598
        %v6624 = vmul.f32 %v6616, %v6600
        %v6625 = vadd.f32 %v6617, 1.4214138
        %v6626 = vadd.f32 %v6618, 1.4214138
        %v6627 = vadd.f32 %v6619, 1.4214138
        %v6628 = vadd.f32 %v6620, 1.4214138
        %v6629 = vadd.f32 %v6621, 1.4214138
        %v6630 = vadd.f32 %v6622, 1.4214138
        %v6631 = vadd.f32 %v6623, 1.4214138
        %v6632 = vadd.f32 %v6624, 1.4214138
        %v6633 = vmul.f32 %v6625, %v6586
        %v6634 = vmul.f32 %v6626, %v6588
        %v6635 = vmul.f32 %v6627, %v6590
        %v6636 = vmul.f32 %v6628, %v6592
        %v6637 = vmul.f32 %v6629, %v6594
        %v6638 = vmul.f32 %v6630, %v6596
        %v6639 = vmul.f32 %v6631, %v6598
        %v6640 = vmul.f32 %v6632, %v6600
        %v6641 = vadd.f32 %v6633, -0.28449672
        %v6642 = vadd.f32 %v6634, -0.28449672
        %v6643 = vadd.f32 %v6635, -0.28449672
        %v6644 = vadd.f32 %v6636, -0.28449672
        %v6645 = vadd.f32 %v6637, -0.28449672
        %v6646 = vadd.f32 %v6638, -0.28449672
        %v6647 = vadd.f32 %v6639, -0.28449672
        %v6648 = vadd.f32 %v6640, -0.28449672
        %v6649 = vmul.f32 %v6641, %v6586
        %v6650 = vmul.f32 %v6642, %v6588
        %v6651 = vmul.f32 %v6643, %v6590
        %v6652 = vmul.f32 %v6644, %v6592
        %v6653 = vmul.f32 %v6645, %v6594
        %v6654 = vmul.f32 %v6646, %v6596
        %v6655 = vmul.f32 %v6647, %v6598
        %v6656 = vmul.f32 %v6648, %v6600
        %v6657 = vadd.f32 %v6649, 0.2548296
        %v6658 = vadd.f32 %v6650, 0.2548296
        %v6659 = vadd.f32 %v6651, 0.2548296
        %v6660 = vadd.f32 %v6652, 0.2548296
        %v6661 = vadd.f32 %v6653, 0.2548296
        %v6662 = vadd.f32 %v6654, 0.2548296
        %v6663 = vadd.f32 %v6655, 0.2548296
        %v6664 = vadd.f32 %v6656, 0.2548296
        %v6665 = vmul.f32 %v6657, %v6586
        %v6666 = vmul.f32 %v6658, %v6588
        %v6667 = vmul.f32 %v6659, %v6590
        %v6668 = vmul.f32 %v6660, %v6592
        %v6669 = vmul.f32 %v6661, %v6594
        %v6670 = vmul.f32 %v6662, %v6596
        %v6671 = vmul.f32 %v6663, %v6598
        %v6672 = vmul.f32 %v6664, %v6600
        %v6673 = vsub.f32 0.0, %v6561
        %v6674 = vsub.f32 0.0, %v6562
        %v6675 = vsub.f32 0.0, %v6563
        %v6676 = vsub.f32 0.0, %v6564
        %v6677 = vsub.f32 0.0, %v6565
        %v6678 = vsub.f32 0.0, %v6566
        %v6679 = vsub.f32 0.0, %v6567
        %v6680 = vsub.f32 0.0, %v6568
        %v6681 = vmul.f32 %v6673, %v6561
        %v6682 = vmul.f32 %v6674, %v6562
        %v6683 = vmul.f32 %v6675, %v6563
        %v6684 = vmul.f32 %v6676, %v6564
        %v6685 = vmul.f32 %v6677, %v6565
        %v6686 = vmul.f32 %v6678, %v6566
        %v6687 = vmul.f32 %v6679, %v6567
        %v6688 = vmul.f32 %v6680, %v6568
        %v6689 = vmul.f32 %v6681, 1.442695
        %v6690 = vpow.pop %v6689
        %v6691 = vmul.f32 %v6682, 1.442695
        %v6692 = vpow.pop %v6691
        %v6693 = vmul.f32 %v6683, 1.442695
        %v6694 = vpow.pop %v6693
        %v6695 = vmul.f32 %v6684, 1.442695
        %v6696 = vpow.pop %v6695
        %v6697 = vmul.f32 %v6685, 1.442695
        %v6698 = vpow.pop %v6697
        %v6699 = vmul.f32 %v6686, 1.442695
        %v6700 = vpow.pop %v6699
        %v6701 = vmul.f32 %v6687, 1.442695
        %v6702 = vpow.pop %v6701
        %v6703 = vmul.f32 %v6688, 1.442695
        %v6704 = vpow.pop %v6703
        %v6705 = vmul.f32 %v6665, %v6690
        %v6706 = vmul.f32 %v6666, %v6692
        %v6707 = vmul.f32 %v6667, %v6694
        %v6708 = vmul.f32 %v6668, %v6696
        %v6709 = vmul.f32 %v6669, %v6698
        %v6710 = vmul.f32 %v6670, %v6700
        %v6711 = vmul.f32 %v6671, %v6702
        %v6712 = vmul.f32 %v6672, %v6704
        %v6713 = vsub.f32 1.0, %v6705
        %v6714 = vsub.f32 1.0, %v6706
        %v6715 = vsub.f32 1.0, %v6707
        %v6716 = vsub.f32 1.0, %v6708
        %v6717 = vsub.f32 1.0, %v6709
        %v6718 = vsub.f32 1.0, %v6710
        %v6719 = vsub.f32 1.0, %v6711
        %v6720 = vsub.f32 1.0, %v6712
        %v6721 = vmul.f32 %v6553, %v6713
        %v6722 = vmul.f32 %v6554, %v6714
        %v6723 = vmul.f32 %v6555, %v6715
        %v6724 = vmul.f32 %v6556, %v6716
        %v6725 = vmul.f32 %v6557, %v6717
        %v6726 = vmul.f32 %v6558, %v6718
        %v6727 = vmul.f32 %v6559, %v6719
        %v6728 = vmul.f32 %v6560, %v6720
        %v6729 = vadd.f32 %v6721, 1.0
        %v6730 = vadd.f32 %v6722, 1.0
        %v6731 = vadd.f32 %v6723, 1.0
        %v6732 = vadd.f32 %v6724, 1.0
        %v6733 = vadd.f32 %v6725, 1.0
        %v6734 = vadd.f32 %v6726, 1.0
        %v6735 = vadd.f32 %v6727, 1.0
        %v6736 = vadd.f32 %v6728, 1.0
        %v6737 = vmul.f32 %v6529, %v6729
        %v6738 = vmul.f32 %v6530, %v6730
        %v6739 = vmul.f32 %v6531, %v6731
        %v6740 = vmul.f32 %v6532, %v6732
        %v6741 = vmul.f32 %v6533, %v6733
        %v6742 = vmul.f32 %v6534, %v6734
        %v6743 = vmul.f32 %v6535, %v6735
        %v6744 = vmul.f32 %v6536, %v6736
        %v6745 = vpack.c.bf16 %v6738, %v6737
        %v6746 = vpack.c.bf16 %v6740, %v6739
        %v6747 = vpack.c.bf16 %v6742, %v6741
        %v6748 = vpack.c.bf16 %v6744, %v6743
        %s6749 = scalar_lea.vmem %s13, 64
        %v6750 = vld [vmem:[%s6749] sm:$0xf]
        %v6751 = vld [vmem:[%s6749 + $0x4] sm:$0xf]
        %v6752 = vld [vmem:[%s6749 + $0x8] sm:$0xf]
        %v6753 = vld [vmem:[%s6749 + $0xc] sm:$0xf]
        %v6754 = vld [vmem:[%s6749 + $0x10] sm:$0xf]
        %v6755 = vld [vmem:[%s6749 + $0x14] sm:$0xf]
        %v6756 = vld [vmem:[%s6749 + $0x18] sm:$0xf]
        %v6757 = vld [vmem:[%s6749 + $0x1c] sm:$0xf]
        %v6758 = vld [vmem:[%s6749 + $0x20] sm:$0xf]
        %v6759 = vld [vmem:[%s6749 + $0x24] sm:$0xf]
        %v6760 = vld [vmem:[%s6749 + $0x28] sm:$0xf]
        %v6761 = vld [vmem:[%s6749 + $0x2c] sm:$0xf]
        %v6762 = vld [vmem:[%s6749 + $0x30] sm:$0xf]
        %v6763 = vld [vmem:[%s6749 + $0x34] sm:$0xf]
        %v6764 = vld [vmem:[%s6749 + $0x38] sm:$0xf]
        %v6765 = vld [vmem:[%s6749 + $0x3c] sm:$0xf]
        %s6766 = scalar_lea.vmem %s14, 1
        %v6767 = vld [vmem:[%s6766] sm:$0x1]
        %v6769 = vlaneseq
        %v6770 = vshrl.u32 %v6769, 7
        %v6771 = vsub.s32 0, %v6770
        %v6772 = vrot.slane %v6767, %v6771
        %v6790 = vunpack.c.l.b16 %v6750
        %v6791 = vunpack.c.l.b16 %v6751
        %v6792 = vunpack.c.l.b16 %v6752
        %v6793 = vunpack.c.l.b16 %v6753
        %v6794 = vunpack.c.l.b16 %v6754
        %v6795 = vunpack.c.l.b16 %v6755
        %v6796 = vunpack.c.l.b16 %v6756
        %v6797 = vunpack.c.l.b16 %v6757
        %v6798 = vunpack.c.l.b16 %v6758
        %v6799 = vunpack.c.l.b16 %v6759
        %v6800 = vunpack.c.l.b16 %v6760
        %v6801 = vunpack.c.l.b16 %v6761
        %v6802 = vunpack.c.l.b16 %v6762
        %v6803 = vunpack.c.l.b16 %v6763
        %v6804 = vunpack.c.l.b16 %v6764
        %v6805 = vunpack.c.l.b16 %v6765
        %v6806 = vpack.c.b16 %v6791, %v6790
        %v6807 = vpack.c.b16 %v6793, %v6792
        %v6808 = vpack.c.b16 %v6795, %v6794
        %v6809 = vpack.c.b16 %v6797, %v6796
        %v6810 = vpack.c.b16 %v6799, %v6798
        %v6811 = vpack.c.b16 %v6801, %v6800
        %v6812 = vpack.c.b16 %v6803, %v6802
        %v6813 = vpack.c.b16 %v6805, %v6804
        %6822 = vmatprep.subr.bf16.mxu0 0
        %6823 = vmatpush1.bf16.msra.mxu0 %v6806
        %6824 = vmatprep.subr.bf16.mxu0 0
        %6825 = vmatpush1.bf16.msra.mxu0 %v6807
        %6826 = vmatprep.subr.bf16.mxu0 0
        %6827 = vmatpush1.bf16.msra.mxu0 %v6808
        %6828 = vmatprep.subr.bf16.mxu0 0
        %6829 = vmatpush1.bf16.msra.mxu0 %v6809
        %6830 = vmatprep.subr.bf16.mxu0 0
        %6831 = vmatpush1.bf16.msra.mxu0 %v6810
        %6832 = vmatprep.subr.bf16.mxu0 0
        %6833 = vmatpush1.bf16.msra.mxu0 %v6811
        %6834 = vmatprep.subr.bf16.mxu0 0
        %6835 = vmatpush1.bf16.msra.mxu0 %v6812
        %6836 = vmatprep.subr.bf16.mxu0 0
        %6837 = vmatpush1.bf16.msra.mxu0 %v6813
        %6838 = vmatprep.subr.bf16.mxu0 0
        %6839 = vmatpush1.bf16.msra.mxu0 0
        %6840 = vmatprep.subr.bf16.mxu0 0
        %6841 = vmatpush1.bf16.msra.mxu0 0
        %6842 = vmatprep.subr.bf16.mxu0 0
        %6843 = vmatpush1.bf16.msra.mxu0 0
        %6844 = vmatprep.subr.bf16.mxu0 0
        %6845 = vmatpush1.bf16.msra.mxu0 0
        %6846 = vmatprep.subr.bf16.mxu0 0
        %6847 = vmatpush1.bf16.msra.mxu0 0
        %6848 = vmatprep.subr.bf16.mxu0 0
        %6849 = vmatpush1.bf16.msra.mxu0 0
        %6850 = vmatprep.subr.bf16.mxu0 0
        %6851 = vmatpush1.bf16.msra.mxu0 0
        %6852 = vmatprep.subr.bf16.mxu0 0
        %6853 = vmatpush1.bf16.msra.mxu0 0
        %6854 = vmatprep.mubr.bf16.mxu0 0
        %6855 = vmatmul.mubr.bf16.gmra.mrb[0].mxu0 %v6745
        %v6856 = vpop.f32.mrb[0].mxu0
        %v6857 = vadd.f32 %v6772, %v6856
        %v6858 = vpop.f32.mrb[0].mxu0
        %v6859 = vpop.f32.mrb[0].mxu0
        %v6860 = vadd.f32 %v6772, %v6859
        %v6861 = vpop.f32.mrb[0].mxu0
        %6862 = vmatprep.mubr.bf16.mxu0 0
        %6863 = vmatmul.mubr.bf16.gmra.mrb[0].mxu0 %v6746
        %v6864 = vpop.f32.mrb[0].mxu0
        %v6865 = vadd.f32 %v6772, %v6864
        %v6866 = vpop.f32.mrb[0].mxu0
        %v6867 = vpop.f32.mrb[0].mxu0
        %v6868 = vadd.f32 %v6772, %v6867
        %v6869 = vpop.f32.mrb[0].mxu0
        %6870 = vmatprep.mubr.bf16.mxu0 0
        %6871 = vmatmul.mubr.bf16.gmra.mrb[0].mxu0 %v6747
        %v6872 = vpop.f32.mrb[0].mxu0
        %v6873 = vadd.f32 %v6772, %v6872
        %v6874 = vpop.f32.mrb[0].mxu0
        %v6875 = vpop.f32.mrb[0].mxu0
        %v6876 = vadd.f32 %v6772, %v6875
        %v6877 = vpop.f32.mrb[0].mxu0
        %6878 = vmatprep.mubr.bf16.mxu0 0
        %6879 = vmatmul.mubr.bf16.gmra.mrb[0].mxu0 %v6748
        %v6880 = vpop.f32.mrb[0].mxu0
        %v6881 = vadd.f32 %v6772, %v6880
        %v6882 = vpop.f32.mrb[0].mxu0
        %v6883 = vpop.f32.mrb[0].mxu0
        %v6884 = vadd.f32 %v6772, %v6883
        %v6885 = vpop.f32.mrb[0].mxu0
        %6886 = vdwg.mxu0
        %v6887 = vadd.f32 %v6279, %v6857
        %v6888 = vadd.f32 %v6280, %v6860
        %v6889 = vadd.f32 %v6281, %v6865
        %v6890 = vadd.f32 %v6282, %v6868
        %v6891 = vadd.f32 %v6283, %v6873
        %v6892 = vadd.f32 %v6284, %v6876
        %v6893 = vadd.f32 %v6285, %v6881
        %v6894 = vadd.f32 %v6286, %v6884
        %6895 = vst.msk [vmem:[%s487] sm:$0xff] %vm602, %v6887
        %6896 = vst.msk [vmem:[%s487 + $0x8] sm:$0xff] %vm602, %v6888
        %6897 = vst.msk [vmem:[%s487 + $0x10] sm:$0xff] %vm602, %v6889
        %6898 = vst.msk [vmem:[%s487 + $0x18] sm:$0xff] %vm602, %v6890
        %6899 = vst.msk [vmem:[%s487 + $0x20] sm:$0xff] %vm602, %v6891
        %6900 = vst.msk [vmem:[%s487 + $0x28] sm:$0xff] %vm602, %v6892
        %6901 = vst.msk [vmem:[%s487 + $0x30] sm:$0xff] %vm602, %v6893
        %6902 = vst.msk [vmem:[%s487 + $0x38] sm:$0xff] %vm602, %v6894
        %s6903 = sand.u32 %s357, 1
        %s6904 = scalar_lea.sflag [#allocation3], %s6903
        %s6905 = sand.u32 %s357, 1
        %s6906 = smul.addr %s6905, 64
        %s6907 = scalar_lea.vmem [#allocation2], %s6906
        // Predicated region
        $region81: #{swin_vit_forward.1} parent=79 // pred_check
          %p6908 = pneg %p367
        $region82: #{swin_vit_forward.1} parent=79 // pred_check_branch
          %6910 = sbr.rel (%p6908) target = $region84
        $region83: #{swin_vit_forward.1} parent=79 // pred_region
          %s6912 = ssub.s32 1024, 1024
          %6913 = vsyncadd %s6904, %s6912
          %s6914 = smul.addr %s29, 8
          %s6915 = smul.addr %s6914, 128
          %s6916 = scalar_lea.hbm %s15, %s6915
          %s6917 = sshll.u32 %s6907, 4
          %s6918 = int_to_ptr.vmem [resolvable:$true] %s6917
          %6923 = dma.vmem_to_hbm [thread:$0]  %s6918, 1024, %s6916, %s6904, 128, 128, 8
        $region84: #{swin_vit_forward.1} parent=79 // pred_fallthru
          _
      $region80: #{swin_vit_forward.1} parent=5 // pred_fallthru
        _
      %p6924 = scmp.le.s32.totalorder 2, %s24
      // Predicated region
      $region85: #{swin_vit_forward.1} parent=5 // pred_check
        %p6925 = pneg %p6924
      $region86: #{swin_vit_forward.1} parent=5 // pred_check_branch
        %6927 = sbr.rel (%p6925) target = $region88
      $region87: #{swin_vit_forward.1} parent=5 // pred_region
        %s6928 = ssub.s32 %s24, 2
        // Predicated region
        $region89: #{swin_vit_forward.1} parent=87 // pred_check
          %p6929 = pneg %p373
        $region90: #{swin_vit_forward.1} parent=87 // pred_check_branch
          %6931 = sbr.rel (%p6929) target = $region92
        $region91: #{swin_vit_forward.1} parent=87 // pred_region
          %s6932 = sand.u32 %s358, 1
          %s6933 = scalar_lea.sflag [#allocation3], %s6932
          %s6934 = sand.u32 %s358, 1
          %s6935 = smul.addr %s6934, 64
          %s6936 = scalar_lea.vmem [#allocation2], %s6935
          %6937 = dma.done %s6933, 1024
        $region92: #{swin_vit_forward.1} parent=87 // pred_fallthru
          _
      $region88: #{swin_vit_forward.1} parent=5 // pred_fallthru
        _
    $region6: #{swin_vit_forward.1} parent=1 // loop_footer
      %s28 = sadd.s32 1, %s24
    $region7: #{swin_vit_forward.1} parent=1 // loop_footer_branch
      %23 = sbr.rel target = $region3
    $region8: #{swin_vit_forward.1} parent=1 // loop_exit
      _
    %6938 = vsyncpa [#allocation3], 1
    %s6939 = scalar_lea.sflag [#allocation3], 1
    %6940 = vsyncpa %s6939, 1

</llo_original>
